<compile_context>
chip_gen: v5e
topology: v5e:2x2
jax: 0.10.0
libtpu: 0.0.40
codegen_flags: <defaults>
</compile_context>

<pallas_src>
import functools

import jax
import jax.numpy as jnp
from jax import lax
from jax.experimental import pallas as pl
from jax.experimental.pallas import tpu as pltpu


_PHASES = ((0, 0), (0, 1), (1, 0), (1, 1))   # (ph, pw) output parity
_TAPS = ((0, 0), (0, 1), (1, 0), (1, 1))     # (dh, dw) 2x2 input neighbourhood


# -----------------------------------------------------------------------------
# Pallas kernels
# -----------------------------------------------------------------------------

def _l1_kernel(x_ref, w_ref, y_ref, st_ref, *, c1):
    """Layer 1: (N, D) @ (D, 16*c1) GEMM + per-channel sum/sumsq over (rows x 16
    spatial groups) for the following BatchNorm.  Single grid step."""
    acc = jnp.dot(x_ref[...], w_ref[...], preferred_element_type=jnp.float32)
    y_ref[...] = acc.astype(y_ref.dtype)

    rs = jnp.sum(acc, axis=0, keepdims=True)            # (1, 16*c1)
    rq = jnp.sum(acc * acc, axis=0, keepdims=True)
    s = jnp.zeros((1, c1), jnp.float32)
    q = jnp.zeros((1, c1), jnp.float32)
    for g in range(16):                                  # columns are (h, w, c)
        s = s + rs[:, g * c1:(g + 1) * c1]
        q = q + rq[:, g * c1:(g + 1) * c1]
    st_ref[0:1, :] = s
    st_ref[1:2, :] = q


def _deconv_kernel(*refs, H, W, cin, apply_tanh, has_bias):
    """Fused [BN(scale/shift)+ReLU] -> stride-2 ConvTranspose2d -> epilogue.

    One grid step == one image.  refs:
      x   (H, W, cin)  bf16   raw pre-BN activation (read once from HBM)
      s,t (1, cin)     f32    folded BatchNorm scale / shift
      w   (9*cin, npad) bf16  phase/tap-fused weight (zero-filled unused slots)
      [b] (1, npad)    f32    conv bias, phase-tiled (final layer only)
      y   (H*W, npad)         phase-grouped output (ph*2+pw)*C_out + co
      st  (2, npad)    f32    per-column sum / sumsq of the f32 accumulator
      a   (H*W, 9*cin) bf16   VMEM scratch: zero-padded 3x3-tap im2col
    """
    if has_bias:
        x_ref, s_ref, t_ref, w_ref, b_ref, y_ref, st_ref, a_ref = refs
    else:
        x_ref, s_ref, t_ref, w_ref, y_ref, st_ref, a_ref = refs
        b_ref = None

    # Folded training-mode BatchNorm + ReLU on the raw input (f32 math).
    x = x_ref[...].astype(jnp.float32)                            # (H, W, cin)
    xb = jnp.maximum(x * s_ref[...] + t_ref[...], 0.0).astype(jnp.bfloat16)

    # Build the zero-padded 3x3-tap im2col in VMEM.  Unfilled positions are the
    # ConvTranspose padding zeros (so BN-shift never leaks into the border).
    a_ref[...] = jnp.zeros_like(a_ref)
    for a in range(3):
        h_lo, h_hi = max(0, 1 - a), min(H, H + 1 - a)
        for b in range(3):
            w_lo, w_hi = max(0, 1 - b), min(W, W + 1 - b)
            col = (a * 3 + b) * cin
            for h in range(h_lo, h_hi):
                a_ref[h * W + w_lo:h * W + w_hi, col:col + cin] = (
                    xb[h + a - 1, w_lo + b - 1:w_hi + b - 1, :])

    # Single MXU matmul: K = 9*cin, N = 4*C_out padded to a 128-lane multiple.
    acc = jnp.dot(a_ref[...], w_ref[...], preferred_element_type=jnp.float32)

    if has_bias:
        acc = acc + b_ref[...]
    if apply_tanh:
        acc = jnp.tanh(acc)

    y_ref[...] = acc.astype(y_ref.dtype)
    st_ref[0:1, :] = jnp.sum(acc, axis=0, keepdims=True)
    st_ref[1:2, :] = jnp.sum(acc * acc, axis=0, keepdims=True)


# -----------------------------------------------------------------------------
# Pallas wrappers
# -----------------------------------------------------------------------------

def l1_matmul(x_bf16, w_bf16, c1):
    N, D = x_bf16.shape
    K16 = w_bf16.shape[1]
    return pl.pallas_call(
        functools.partial(_l1_kernel, c1=c1),
        out_shape=(jax.ShapeDtypeStruct((N, K16), jnp.bfloat16),
                   jax.ShapeDtypeStruct((2, c1), jnp.float32)),
        grid=(1,),
        in_specs=[pl.BlockSpec((N, D), lambda i: (0, 0)),
                  pl.BlockSpec((D, K16), lambda i: (0, 0))],
        out_specs=(pl.BlockSpec((N, K16), lambda i: (0, 0)),
                   pl.BlockSpec((2, c1), lambda i: (0, 0))),
    )(x_bf16, w_bf16)


def deconv_bn_layer(x_nhwc, scale, shift, wc, *, ngrp, bias=None,
                    apply_tanh=False, out_dtype=jnp.bfloat16):
    """Fused BN-apply + ReLU + ConvTranspose2d(4, stride 2, pad 1), one image
    per grid step.  Returns (y_pg (N, H*W, npad), stats (N, 2, npad))."""
    N, H, W, Cin = x_nhwc.shape
    M = H * W
    npad = wc.shape[1]

    kernel = functools.partial(_deconv_kernel, H=H, W=W, cin=Cin,
                               apply_tanh=apply_tanh, has_bias=bias is not None)

    in_specs = [
        pl.BlockSpec((None, H, W, Cin), lambda n: (n, 0, 0, 0)),
        pl.BlockSpec((1, Cin), lambda n: (0, 0)),
        pl.BlockSpec((1, Cin), lambda n: (0, 0)),
        pl.BlockSpec((9 * Cin, npad), lambda n: (0, 0)),
    ]
    args = [x_nhwc.astype(jnp.bfloat16), scale, shift, wc]
    if bias is not None:
        bias_pg = jnp.zeros((1, npad), jnp.float32).at[0, :ngrp].set(
            jnp.tile(bias.astype(jnp.float32), 4))
        in_specs.append(pl.BlockSpec((1, npad), lambda n: (0, 0)))
        args.append(bias_pg)

    y, st = pl.pallas_call(
        kernel,
        out_shape=(jax.ShapeDtypeStruct((N, M, npad), out_dtype),
                   jax.ShapeDtypeStruct((N, 2, npad), jnp.float32)),
        grid=(N,),
        in_specs=in_specs,
        out_specs=(pl.BlockSpec((None, M, npad), lambda n: (n, 0, 0)),
                   pl.BlockSpec((None, 2, npad), lambda n: (n, 0, 0))),
        scratch_shapes=[pltpu.VMEM((M, 9 * Cin), jnp.bfloat16)],
        compiler_params=pltpu.CompilerParams(
            dimension_semantics=("parallel",)),
    )(*args)
    return y, st


# -----------------------------------------------------------------------------
# Small JAX-side helpers (weight fusion, BN stats -> scale/shift, relayout)
# -----------------------------------------------------------------------------

def combined_weight(W):
    """(C_in, C_out, 4, 4) ConvTranspose2d weight -> (9*C_in, npad) bf16 matrix
    with taps fused into K and the 4 output parities fused into lane-dense
    columns (unused (tap, phase) slots and padding columns are zero)."""
    Cin, Cout = W.shape[0], W.shape[1]
    ngrp = 4 * Cout
    npad = max(128, 128 * ((ngrp + 127) // 128))
    w9 = jnp.zeros((3, 3, Cin, 4, Cout), jnp.float32)
    for p, (ph, pw) in enumerate(_PHASES):
        for (dh, dw) in _TAPS:
            a, b = ph + dh, pw + dw
            w9 = w9.at[a, b, :, p, :].set(W[:, :, 3 - ph - 2 * dh, 3 - pw - 2 * dw])
    wc = w9.reshape(9 * Cin, ngrp)
    if npad > ngrp:
        wc = jnp.pad(wc, ((0, 0), (0, npad - ngrp)))
    return wc.astype(jnp.bfloat16)


def _scale_shift(ssum, ssq, count, gamma, beta):
    """Training-mode BatchNorm folded into per-channel scale/shift."""
    mean = ssum.astype(jnp.float32) / count
    var = jnp.maximum(ssq.astype(jnp.float32) / count - mean * mean, 0.0)
    sc = gamma.astype(jnp.float32) * lax.rsqrt(var + 1e-5)
    sh = beta.astype(jnp.float32) - mean * sc
    return sc.reshape(1, -1), sh.reshape(1, -1)


def _pg_scale_shift(st, cout, count, gamma, beta):
    """Reduce phase-grouped per-image stats (N, 2, npad) to per-channel BN."""
    s = st[:, :, :4 * cout].reshape(st.shape[0], 2, 4, cout).sum(axis=(0, 2))
    return _scale_shift(s[0], s[1], count, gamma, beta)


def depth_to_space(y_pg, N, H, W, C):
    """(N, H*W, 4*C) phase-grouped -> (N, 2H, 2W, C) NHWC."""
    return (y_pg.reshape(N, H, W, 2, 2, C)
            .transpose(0, 1, 3, 2, 4, 5)
            .reshape(N, 2 * H, 2 * W, C))


# -----------------------------------------------------------------------------
# Generator
# -----------------------------------------------------------------------------

def init_generator_params(key, z_dim, text_dim, img_channels=1, feature_maps=64):
    input_dim = z_dim + text_dim
    f = feature_maps
    dims = [(input_dim, 4 * f), (4 * f, 2 * f), (2 * f, f), (f, img_channels)]
    keys = jax.random.split(key, 4 * len(dims))
    params, idx = {}, 0
    for i, (cin, cout) in enumerate(dims, start=1):
        params[f"w{i}"] = 0.1 * jax.random.normal(keys[idx], (cin, cout, 4, 4)); idx += 1
        params[f"b{i}"] = 0.1 * jax.random.normal(keys[idx], (cout,)); idx += 1
        if i < 4:  # BatchNorm affine params
            params[f"g{i}"] = 1.0 + 0.1 * jax.random.normal(keys[idx], (cout,)); idx += 1
            params[f"be{i}"] = 0.1 * jax.random.normal(keys[idx], (cout,)); idx += 1
    return params


@jax.jit
def generator_forward(z, text_embed, params):
    x = jnp.concatenate([z, text_embed], axis=1).astype(jnp.float32)
    N, D = x.shape
    c1 = params["w1"].shape[1]
    c2 = params["w2"].shape[1]
    c3 = params["w3"].shape[1]
    c4 = params["w4"].shape[1]

    # ---- layer 1: ConvT(D, c1, 4, 1, 0) on a 1x1 input == GEMM.  Bias b1 is
    # exactly cancelled by the training-mode BN and is dropped.
    w1r = params["w1"].transpose(0, 2, 3, 1).reshape(D, 16 * c1).astype(jnp.bfloat16)
    y1, st1 = l1_matmul(x.astype(jnp.bfloat16), w1r, c1)        # (N, 16*c1) bf16
    s1, t1 = _scale_shift(st1[0], st1[1], N * 16, params["g1"], params["be1"])
    h1 = y1.reshape(N, 4, 4, c1)                                 # raw NHWC, bf16

    # ---- layer 2: BN1+ReLU folded in; ConvT(c1, c2, 4, 2, 1) -> (N, 8, 8, c2)
    y2, st2 = deconv_bn_layer(h1, s1, t1, combined_weight(params["w2"]), ngrp=4 * c2)
    s2, t2 = _pg_scale_shift(st2, c2, N * 64, params["g2"], params["be2"])
    h2 = depth_to_space(y2[:, :, :4 * c2], N, 4, 4, c2)

    # ---- layer 3: BN2+ReLU folded in; ConvT(c2, c3, 4, 2, 1) -> (N, 16, 16, c3)
    y3, st3 = deconv_bn_layer(h2, s2, t2, combined_weight(params["w3"]), ngrp=4 * c3)
    s3, t3 = _pg_scale_shift(st3, c3, N * 256, params["g3"], params["be3"])
    h3 = depth_to_space(y3[:, :, :4 * c3], N, 8, 8, c3)

    # ---- layer 4: BN3+ReLU folded in; ConvT(c3, c4, 4, 2, 1) + bias + tanh
    y4, _ = deconv_bn_layer(h3, s3, t3, combined_weight(params["w4"]), ngrp=4 * c4,
                            bias=params["b4"], apply_tanh=True, out_dtype=jnp.float32)
    img = depth_to_space(y4[:, :, :4 * c4], N, 16, 16, c4)       # (N, 32, 32, c4)
    return img.transpose(0, 3, 1, 2)                             # NCHW


# -----------------------------------------------------------------------------
# Pure-JAX f32 reference (NCHW, straight from the ConvTranspose2d definition)
# -----------------------------------------------------------------------------

def _ref_deconv_s2(x, W, b):
    N, C_in, H, Wd = x.shape
    C_out = W.shape[1]
    big = jnp.zeros((N, C_out, 2 * H + 2, 2 * Wd + 2), jnp.float32)
    for kh in range(4):
        for kw in range(4):
            contrib = jnp.einsum("nchw,cd->ndhw", x, W[:, :, kh, kw])
            big = big.at[:, :, kh:kh + 2 * H:2, kw:kw + 2 * Wd:2].add(contrib)
    return big[:, :, 1:1 + 2 * H, 1:1 + 2 * Wd] + b.reshape(1, C_out, 1, 1)


def _ref_bn_relu(x, g, b):
    mean = x.mean(axis=(0, 2, 3), keepdims=True)
    var = ((x - mean) ** 2).mean(axis=(0, 2, 3), keepdims=True)
    y = (x - mean) / jnp.sqrt(var + 1e-5) * g.reshape(1, -1, 1, 1) + b.reshape(1, -1, 1, 1)
    return jnp.maximum(y, 0.0)


def _ref_generator(z, text_embed, params):
    x = jnp.concatenate([z, text_embed], axis=1)
    h = jnp.einsum("nc,cdhw->ndhw", x, params["w1"]) + params["b1"].reshape(1, -1, 1, 1)
    h = _ref_bn_relu(h, params["g1"], params["be1"])
    h = _ref_bn_relu(_ref_deconv_s2(h, params["w2"], params["b2"]), params["g2"], params["be2"])
    h = _ref_bn_relu(_ref_deconv_s2(h, params["w3"], params["b3"]), params["g3"], params["be3"])
    return jnp.tanh(_ref_deconv_s2(h, params["w4"], params["b4"]))


if __name__ == "__main__":
    batch, z_dim, text_dim = 2, 16, 16
    img_channels, feature_maps = 1, 16

    key = jax.random.PRNGKey(0)
    k_z, k_t, k_p = jax.random.split(key, 3)
    z = jax.random.normal(k_z, (batch, z_dim), jnp.float32)
    text_embed = jax.random.normal(k_t, (batch, text_dim), jnp.float32)
    params = init_generator_params(k_p, z_dim, text_dim, img_channels, feature_maps)

    out = jax.block_until_ready(generator_forward(z, text_embed, params))
    assert out.shape == (batch, img_channels, 32, 32), out.shape
    assert bool(jnp.all(jnp.isfinite(out)))

    ref = jax.block_until_ready(_ref_generator(z, text_embed, params))
    max_err = float(jnp.max(jnp.abs(out - ref)))
    assert max_err < 5e-2, f"max |pallas - ref| = {max_err}"

    print("KERNEL_OK")
</pallas_src>

<mosaic_0001>
module attributes {stable_mosaic.version = 11 : i64} {
  func.func @_l1_kernel(%arg0: i32, %arg1: memref<2x32xbf16, #tpu.memory_space<vmem>>, %arg2: memref<32x1024xbf16, #tpu.memory_space<vmem>>, %arg3: memref<2x1024xbf16, #tpu.memory_space<vmem>>, %arg4: memref<2x64xf32, #tpu.memory_space<vmem>>) attributes {dimension_semantics = [#tpu.dimension_semantics<arbitrary>], iteration_bounds = array<i64: 1>, scalar_prefetch = 0 : i64, scratch_operands = 0 : i64, tpu.core_type = #tpu.core_type<tc>, window_params = [{pipeline_mode = #tpu.pipeline_mode<synchronous>, transform_indices = @transform_0, window_bounds = array<i64: 2, 32>}, {pipeline_mode = #tpu.pipeline_mode<synchronous>, transform_indices = @transform_1, window_bounds = array<i64: 32, 1024>}, {pipeline_mode = #tpu.pipeline_mode<synchronous>, transform_indices = @transform_2, window_bounds = array<i64: 2, 1024>}, {pipeline_mode = #tpu.pipeline_mode<synchronous>, transform_indices = @transform_3, window_bounds = array<i64: 2, 64>}]} {
    %c0 = arith.constant 0 : index
    %c0_0 = arith.constant 0 : index
    %0 = vector.load %arg1[%c0, %c0_0] : memref<2x32xbf16, #tpu.memory_space<vmem>>, vector<2x32xbf16>
    %c0_1 = arith.constant 0 : index
    %c0_2 = arith.constant 0 : index
    %1 = vector.load %arg2[%c0_1, %c0_2] : memref<32x1024xbf16, #tpu.memory_space<vmem>>, vector<32x1024xbf16>
    %cst = arith.constant dense<0.000000e+00> : vector<2x1024xf32>
    %2 = tpu.matmul %0, %1, %cst {dimension_numbers = #tpu.dot_dimension_numbers<[1], [0], [0], [1], [0, 0, 1, 1], [], []>} : vector<2x32xbf16>, vector<32x1024xbf16>, vector<2x1024xf32> -> vector<2x1024xf32>
    %3 = arith.truncf %2 : vector<2x1024xf32> to vector<2x1024xbf16>
    %c0_3 = arith.constant 0 : index
    %c0_4 = arith.constant 0 : index
    %4 = vector.load %arg3[%c0_3, %c0_4] : memref<2x1024xbf16, #tpu.memory_space<vmem>>, vector<2x1024xbf16>
    tpu.vector_store %arg3[%c0_3, %c0_4], %3 {strides = array<i32>} : memref<2x1024xbf16, #tpu.memory_space<vmem>>, vector<2x1024xbf16>,
    %cst_5 = arith.constant dense<0.000000e+00> : vector<1024xf32>
    %5 = vector.multi_reduction <add>, %2, %cst_5 [0] : vector<2x1024xf32> to vector<1024xf32>
    %6 = vector.shape_cast %5 : vector<1024xf32> to vector<1x1024xf32>
    %7 = arith.mulf %2, %2 : vector<2x1024xf32>
    %cst_6 = arith.constant dense<0.000000e+00> : vector<1024xf32>
    %8 = vector.multi_reduction <add>, %7, %cst_6 [0] : vector<2x1024xf32> to vector<1024xf32>
    %9 = vector.shape_cast %8 : vector<1024xf32> to vector<1x1024xf32>
    %cst_7 = arith.constant 0.000000e+00 : f32
    %10 = vector.broadcast %cst_7 : f32 to vector<1x64xf32>
    %cst_8 = arith.constant 0.000000e+00 : f32
    %11 = vector.broadcast %cst_8 : f32 to vector<1x64xf32>
    %12 = vector.extract_strided_slice %6 {offsets = [0, 0], sizes = [1, 64], strides = [1, 1]} : vector<1x1024xf32> to vector<1x64xf32>
    %13 = arith.addf %10, %12 : vector<1x64xf32>
    %14 = vector.extract_strided_slice %9 {offsets = [0, 0], sizes = [1, 64], strides = [1, 1]} : vector<1x1024xf32> to vector<1x64xf32>
    %15 = arith.addf %11, %14 : vector<1x64xf32>
    %16 = vector.extract_strided_slice %6 {offsets = [0, 64], sizes = [1, 64], strides = [1, 1]} : vector<1x1024xf32> to vector<1x64xf32>
    %17 = arith.addf %13, %16 : vector<1x64xf32>
    %18 = vector.extract_strided_slice %9 {offsets = [0, 64], sizes = [1, 64], strides = [1, 1]} : vector<1x1024xf32> to vector<1x64xf32>
    %19 = arith.addf %15, %18 : vector<1x64xf32>
    %20 = vector.extract_strided_slice %6 {offsets = [0, 128], sizes = [1, 64], strides = [1, 1]} : vector<1x1024xf32> to vector<1x64xf32>
    %21 = arith.addf %17, %20 : vector<1x64xf32>
    %22 = vector.extract_strided_slice %9 {offsets = [0, 128], sizes = [1, 64], strides = [1, 1]} : vector<1x1024xf32> to vector<1x64xf32>
    %23 = arith.addf %19, %22 : vector<1x64xf32>
    %24 = vector.extract_strided_slice %6 {offsets = [0, 192], sizes = [1, 64], strides = [1, 1]} : vector<1x1024xf32> to vector<1x64xf32>
    %25 = arith.addf %21, %24 : vector<1x64xf32>
    %26 = vector.extract_strided_slice %9 {offsets = [0, 192], sizes = [1, 64], strides = [1, 1]} : vector<1x1024xf32> to vector<1x64xf32>
    %27 = arith.addf %23, %26 : vector<1x64xf32>
    %28 = vector.extract_strided_slice %6 {offsets = [0, 256], sizes = [1, 64], strides = [1, 1]} : vector<1x1024xf32> to vector<1x64xf32>
    %29 = arith.addf %25, %28 : vector<1x64xf32>
    %30 = vector.extract_strided_slice %9 {offsets = [0, 256], sizes = [1, 64], strides = [1, 1]} : vector<1x1024xf32> to vector<1x64xf32>
    %31 = arith.addf %27, %30 : vector<1x64xf32>
    %32 = vector.extract_strided_slice %6 {offsets = [0, 320], sizes = [1, 64], strides = [1, 1]} : vector<1x1024xf32> to vector<1x64xf32>
    %33 = arith.addf %29, %32 : vector<1x64xf32>
    %34 = vector.extract_strided_slice %9 {offsets = [0, 320], sizes = [1, 64], strides = [1, 1]} : vector<1x1024xf32> to vector<1x64xf32>
    %35 = arith.addf %31, %34 : vector<1x64xf32>
    %36 = vector.extract_strided_slice %6 {offsets = [0, 384], sizes = [1, 64], strides = [1, 1]} : vector<1x1024xf32> to vector<1x64xf32>
    %37 = arith.addf %33, %36 : vector<1x64xf32>
    %38 = vector.extract_strided_slice %9 {offsets = [0, 384], sizes = [1, 64], strides = [1, 1]} : vector<1x1024xf32> to vector<1x64xf32>
    %39 = arith.addf %35, %38 : vector<1x64xf32>
    %40 = vector.extract_strided_slice %6 {offsets = [0, 448], sizes = [1, 64], strides = [1, 1]} : vector<1x1024xf32> to vector<1x64xf32>
    %41 = arith.addf %37, %40 : vector<1x64xf32>
    %42 = vector.extract_strided_slice %9 {offsets = [0, 448], sizes = [1, 64], strides = [1, 1]} : vector<1x1024xf32> to vector<1x64xf32>
    %43 = arith.addf %39, %42 : vector<1x64xf32>
    %44 = vector.extract_strided_slice %6 {offsets = [0, 512], sizes = [1, 64], strides = [1, 1]} : vector<1x1024xf32> to vector<1x64xf32>
    %45 = arith.addf %41, %44 : vector<1x64xf32>
    %46 = vector.extract_strided_slice %9 {offsets = [0, 512], sizes = [1, 64], strides = [1, 1]} : vector<1x1024xf32> to vector<1x64xf32>
    %47 = arith.addf %43, %46 : vector<1x64xf32>
    %48 = vector.extract_strided_slice %6 {offsets = [0, 576], sizes = [1, 64], strides = [1, 1]} : vector<1x1024xf32> to vector<1x64xf32>
    %49 = arith.addf %45, %48 : vector<1x64xf32>
    %50 = vector.extract_strided_slice %9 {offsets = [0, 576], sizes = [1, 64], strides = [1, 1]} : vector<1x1024xf32> to vector<1x64xf32>
    %51 = arith.addf %47, %50 : vector<1x64xf32>
    %52 = vector.extract_strided_slice %6 {offsets = [0, 640], sizes = [1, 64], strides = [1, 1]} : vector<1x1024xf32> to vector<1x64xf32>
    %53 = arith.addf %49, %52 : vector<1x64xf32>
    %54 = vector.extract_strided_slice %9 {offsets = [0, 640], sizes = [1, 64], strides = [1, 1]} : vector<1x1024xf32> to vector<1x64xf32>
    %55 = arith.addf %51, %54 : vector<1x64xf32>
    %56 = vector.extract_strided_slice %6 {offsets = [0, 704], sizes = [1, 64], strides = [1, 1]} : vector<1x1024xf32> to vector<1x64xf32>
    %57 = arith.addf %53, %56 : vector<1x64xf32>
    %58 = vector.extract_strided_slice %9 {offsets = [0, 704], sizes = [1, 64], strides = [1, 1]} : vector<1x1024xf32> to vector<1x64xf32>
    %59 = arith.addf %55, %58 : vector<1x64xf32>
    %60 = vector.extract_strided_slice %6 {offsets = [0, 768], sizes = [1, 64], strides = [1, 1]} : vector<1x1024xf32> to vector<1x64xf32>
    %61 = arith.addf %57, %60 : vector<1x64xf32>
    %62 = vector.extract_strided_slice %9 {offsets = [0, 768], sizes = [1, 64], strides = [1, 1]} : vector<1x1024xf32> to vector<1x64xf32>
    %63 = arith.addf %59, %62 : vector<1x64xf32>
    %64 = vector.extract_strided_slice %6 {offsets = [0, 832], sizes = [1, 64], strides = [1, 1]} : vector<1x1024xf32> to vector<1x64xf32>
    %65 = arith.addf %61, %64 : vector<1x64xf32>
    %66 = vector.extract_strided_slice %9 {offsets = [0, 832], sizes = [1, 64], strides = [1, 1]} : vector<1x1024xf32> to vector<1x64xf32>
    %67 = arith.addf %63, %66 : vector<1x64xf32>
    %68 = vector.extract_strided_slice %6 {offsets = [0, 896], sizes = [1, 64], strides = [1, 1]} : vector<1x1024xf32> to vector<1x64xf32>
    %69 = arith.addf %65, %68 : vector<1x64xf32>
    %70 = vector.extract_strided_slice %9 {offsets = [0, 896], sizes = [1, 64], strides = [1, 1]} : vector<1x1024xf32> to vector<1x64xf32>
    %71 = arith.addf %67, %70 : vector<1x64xf32>
    %72 = vector.extract_strided_slice %6 {offsets = [0, 960], sizes = [1, 64], strides = [1, 1]} : vector<1x1024xf32> to vector<1x64xf32>
    %73 = arith.addf %69, %72 : vector<1x64xf32>
    %74 = vector.extract_strided_slice %9 {offsets = [0, 960], sizes = [1, 64], strides = [1, 1]} : vector<1x1024xf32> to vector<1x64xf32>
    %75 = arith.addf %71, %74 : vector<1x64xf32>
    %c0_9 = arith.constant 0 : index
    %c0_10 = arith.constant 0 : index
    %76 = vector.load %arg4[%c0_9, %c0_10] : memref<2x64xf32, #tpu.memory_space<vmem>>, vector<1x64xf32>
    tpu.vector_store %arg4[%c0_9, %c0_10], %73 {strides = array<i32>} : memref<2x64xf32, #tpu.memory_space<vmem>>, vector<1x64xf32>,
    %c1 = arith.constant 1 : index
    %c0_11 = arith.constant 0 : index
    %77 = vector.load %arg4[%c1, %c0_11] : memref<2x64xf32, #tpu.memory_space<vmem>>, vector<1x64xf32>
    tpu.vector_store %arg4[%c1, %c0_11], %75 {strides = array<i32>} : memref<2x64xf32, #tpu.memory_space<vmem>>, vector<1x64xf32>,
    return
  }
  func.func @transform_0(%arg0: i32) -> (i32, i32) {
    %c0_i32 = arith.constant 0 : i32
    %c0_i32_0 = arith.constant 0 : i32
    %c0_i32_1 = arith.constant 0 : i32
    return %c0_i32, %c0_i32_0 : i32, i32
  }
  func.func @transform_1(%arg0: i32) -> (i32, i32) {
    %c0_i32 = arith.constant 0 : i32
    %c0_i32_0 = arith.constant 0 : i32
    %c0_i32_1 = arith.constant 0 : i32
    return %c0_i32, %c0_i32_0 : i32, i32
  }
  func.func @transform_2(%arg0: i32) -> (i32, i32) {
    %c0_i32 = arith.constant 0 : i32
    %c0_i32_0 = arith.constant 0 : i32
    %c0_i32_1 = arith.constant 0 : i32
    return %c0_i32, %c0_i32_0 : i32, i32
  }
  func.func @transform_3(%arg0: i32) -> (i32, i32) {
    %c0_i32 = arith.constant 0 : i32
    %c0_i32_0 = arith.constant 0 : i32
    %c0_i32_1 = arith.constant 0 : i32
    return %c0_i32, %c0_i32_0 : i32, i32
  }
}

module attributes {stable_mosaic.version = 11 : i64} {
  func.func @_deconv_kernel(%arg0: i32, %arg1: memref<1x4x4x64xbf16, #tpu.memory_space<vmem>>, %arg2: memref<1x64xf32, #tpu.memory_space<vmem>>, %arg3: memref<1x64xf32, #tpu.memory_space<vmem>>, %arg4: memref<576x128xbf16, #tpu.memory_space<vmem>>, %arg5: memref<1x16x128xbf16, #tpu.memory_space<vmem>>, %arg6: memref<1x2x128xf32, #tpu.memory_space<vmem>>, %arg7: memref<16x576xbf16, #tpu.memory_space<vmem>>) attributes {dimension_semantics = [#tpu.dimension_semantics<parallel>], iteration_bounds = array<i64: 2>, scalar_prefetch = 0 : i64, scratch_operands = 1 : i64, tpu.core_type = #tpu.core_type<tc>, window_params = [{transform_indices = @transform_0, window_bounds = array<i64: 1, 4, 4, 64>}, {pipeline_mode = #tpu.pipeline_mode<synchronous>, transform_indices = @transform_1, window_bounds = array<i64: 1, 64>}, {pipeline_mode = #tpu.pipeline_mode<synchronous>, transform_indices = @transform_2, window_bounds = array<i64: 1, 64>}, {pipeline_mode = #tpu.pipeline_mode<synchronous>, transform_indices = @transform_3, window_bounds = array<i64: 576, 128>}, {transform_indices = @transform_4, window_bounds = array<i64: 1, 16, 128>}, {transform_indices = @transform_5, window_bounds = array<i64: 1, 2, 128>}]} {
    %c0 = arith.constant 0 : index
    %c0_0 = arith.constant 0 : index
    %c0_1 = arith.constant 0 : index
    %c0_2 = arith.constant 0 : index
    %0 = vector.load %arg1[%c0, %c0_0, %c0_1, %c0_2] : memref<1x4x4x64xbf16, #tpu.memory_space<vmem>>, vector<1x4x4x64xbf16>
    %1 = vector.shape_cast %0 : vector<1x4x4x64xbf16> to vector<4x4x64xbf16>
    %2 = arith.extf %1 : vector<4x4x64xbf16> to vector<4x4x64xf32>
    %c0_3 = arith.constant 0 : index
    %c0_4 = arith.constant 0 : index
    %3 = vector.load %arg2[%c0_3, %c0_4] : memref<1x64xf32, #tpu.memory_space<vmem>>, vector<1x64xf32>
    %4 = vector.shape_cast %3 : vector<1x64xf32> to vector<1x1x64xf32>
    %5 = vector.broadcast %4 : vector<1x1x64xf32> to vector<4x4x64xf32>
    %6 = arith.mulf %2, %5 : vector<4x4x64xf32>
    %c0_5 = arith.constant 0 : index
    %c0_6 = arith.constant 0 : index
    %7 = vector.load %arg3[%c0_5, %c0_6] : memref<1x64xf32, #tpu.memory_space<vmem>>, vector<1x64xf32>
    %8 = vector.shape_cast %7 : vector<1x64xf32> to vector<1x1x64xf32>
    %9 = vector.broadcast %8 : vector<1x1x64xf32> to vector<4x4x64xf32>
    %10 = arith.addf %6, %9 : vector<4x4x64xf32>
    %cst = arith.constant 0.000000e+00 : f32
    %11 = vector.broadcast %cst : f32 to vector<4x4x64xf32>
    %12 = arith.maximumf %10, %11 : vector<4x4x64xf32>
    %13 = arith.truncf %12 : vector<4x4x64xf32> to vector<4x4x64xbf16>
    %cst_7 = arith.constant 0.000000e+00 : bf16
    %14 = vector.broadcast %cst_7 : bf16 to vector<16x576xbf16>
    %c0_8 = arith.constant 0 : index
    %c0_9 = arith.constant 0 : index
    %15 = vector.load %arg7[%c0_8, %c0_9] : memref<16x576xbf16, #tpu.memory_space<vmem>>, vector<16x576xbf16>
    tpu.vector_store %arg7[%c0_8, %c0_9], %14 {strides = array<i32>} : memref<16x576xbf16, #tpu.memory_space<vmem>>, vector<16x576xbf16>,
    %16 = vector.extract_strided_slice %13 {offsets = [0, 0, 0], sizes = [1, 3, 64], strides = [1, 1, 1]} : vector<4x4x64xbf16> to vector<1x3x64xbf16>
    %17 = vector.shape_cast %16 : vector<1x3x64xbf16> to vector<3x64xbf16>
    %c5 = arith.constant 5 : index
    %c0_10 = arith.constant 0 : index
    %18 = vector.load %arg7[%c5, %c0_10] : memref<16x576xbf16, #tpu.memory_space<vmem>>, vector<3x64xbf16>
    tpu.vector_store %arg7[%c5, %c0_10], %17 {strides = array<i32>} : memref<16x576xbf16, #tpu.memory_space<vmem>>, vector<3x64xbf16>,
    %19 = vector.extract_strided_slice %13 {offsets = [1, 0, 0], sizes = [1, 3, 64], strides = [1, 1, 1]} : vector<4x4x64xbf16> to vector<1x3x64xbf16>
    %20 = vector.shape_cast %19 : vector<1x3x64xbf16> to vector<3x64xbf16>
    %c9 = arith.constant 9 : index
    %c0_11 = arith.constant 0 : index
    %21 = vector.load %arg7[%c9, %c0_11] : memref<16x576xbf16, #tpu.memory_space<vmem>>, vector<3x64xbf16>
    tpu.vector_store %arg7[%c9, %c0_11], %20 {strides = array<i32>} : memref<16x576xbf16, #tpu.memory_space<vmem>>, vector<3x64xbf16>,
    %22 = vector.extract_strided_slice %13 {offsets = [2, 0, 0], sizes = [1, 3, 64], strides = [1, 1, 1]} : vector<4x4x64xbf16> to vector<1x3x64xbf16>
    %23 = vector.shape_cast %22 : vector<1x3x64xbf16> to vector<3x64xbf16>
    %c13 = arith.constant 13 : index
    %c0_12 = arith.constant 0 : index
    %24 = vector.load %arg7[%c13, %c0_12] : memref<16x576xbf16, #tpu.memory_space<vmem>>, vector<3x64xbf16>
    tpu.vector_store %arg7[%c13, %c0_12], %23 {strides = array<i32>} : memref<16x576xbf16, #tpu.memory_space<vmem>>, vector<3x64xbf16>,
    %25 = vector.extract_strided_slice %13 {offsets = [0, 0, 0], sizes = [1, 4, 64], strides = [1, 1, 1]} : vector<4x4x64xbf16> to vector<1x4x64xbf16>
    %26 = vector.shape_cast %25 : vector<1x4x64xbf16> to vector<4x64xbf16>
    %c4 = arith.constant 4 : index
    %c64 = arith.constant 64 : index
    %27 = vector.load %arg7[%c4, %c64] : memref<16x576xbf16, #tpu.memory_space<vmem>>, vector<4x64xbf16>
    tpu.vector_store %arg7[%c4, %c64], %26 {strides = array<i32>} : memref<16x576xbf16, #tpu.memory_space<vmem>>, vector<4x64xbf16>,
    %28 = vector.extract_strided_slice %13 {offsets = [1, 0, 0], sizes = [1, 4, 64], strides = [1, 1, 1]} : vector<4x4x64xbf16> to vector<1x4x64xbf16>
    %29 = vector.shape_cast %28 : vector<1x4x64xbf16> to vector<4x64xbf16>
    %c8 = arith.constant 8 : index
    %c64_13 = arith.constant 64 : index
    %30 = vector.load %arg7[%c8, %c64_13] : memref<16x576xbf16, #tpu.memory_space<vmem>>, vector<4x64xbf16>
    tpu.vector_store %arg7[%c8, %c64_13], %29 {strides = array<i32>} : memref<16x576xbf16, #tpu.memory_space<vmem>>, vector<4x64xbf16>,
    %31 = vector.extract_strided_slice %13 {offsets = [2, 0, 0], sizes = [1, 4, 64], strides = [1, 1, 1]} : vector<4x4x64xbf16> to vector<1x4x64xbf16>
    %32 = vector.shape_cast %31 : vector<1x4x64xbf16> to vector<4x64xbf16>
    %c12 = arith.constant 12 : index
    %c64_14 = arith.constant 64 : index
    %33 = vector.load %arg7[%c12, %c64_14] : memref<16x576xbf16, #tpu.memory_space<vmem>>, vector<4x64xbf16>
    tpu.vector_store %arg7[%c12, %c64_14], %32 {strides = array<i32>} : memref<16x576xbf16, #tpu.memory_space<vmem>>, vector<4x64xbf16>,
    %34 = vector.extract_strided_slice %13 {offsets = [0, 1, 0], sizes = [1, 3, 64], strides = [1, 1, 1]} : vector<4x4x64xbf16> to vector<1x3x64xbf16>
    %35 = vector.shape_cast %34 : vector<1x3x64xbf16> to vector<3x64xbf16>
    %c4_15 = arith.constant 4 : index
    %c128 = arith.constant 128 : index
    %36 = vector.load %arg7[%c4_15, %c128] : memref<16x576xbf16, #tpu.memory_space<vmem>>, vector<3x64xbf16>
    tpu.vector_store %arg7[%c4_15, %c128], %35 {strides = array<i32>} : memref<16x576xbf16, #tpu.memory_space<vmem>>, vector<3x64xbf16>,
    %37 = vector.extract_strided_slice %13 {offsets = [1, 1, 0], sizes = [1, 3, 64], strides = [1, 1, 1]} : vector<4x4x64xbf16> to vector<1x3x64xbf16>
    %38 = vector.shape_cast %37 : vector<1x3x64xbf16> to vector<3x64xbf16>
    %c8_16 = arith.constant 8 : index
    %c128_17 = arith.constant 128 : index
    %39 = vector.load %arg7[%c8_16, %c128_17] : memref<16x576xbf16, #tpu.memory_space<vmem>>, vector<3x64xbf16>
    tpu.vector_store %arg7[%c8_16, %c128_17], %38 {strides = array<i32>} : memref<16x576xbf16, #tpu.memory_space<vmem>>, vector<3x64xbf16>,
    %40 = vector.extract_strided_slice %13 {offsets = [2, 1, 0], sizes = [1, 3, 64], strides = [1, 1, 1]} : vector<4x4x64xbf16> to vector<1x3x64xbf16>
    %41 = vector.shape_cast %40 : vector<1x3x64xbf16> to vector<3x64xbf16>
    %c12_18 = arith.constant 12 : index
    %c128_19 = arith.constant 128 : index
    %42 = vector.load %arg7[%c12_18, %c128_19] : memref<16x576xbf16, #tpu.memory_space<vmem>>, vector<3x64xbf16>
    tpu.vector_store %arg7[%c12_18, %c128_19], %41 {strides = array<i32>} : memref<16x576xbf16, #tpu.memory_space<vmem>>, vector<3x64xbf16>,
    %43 = vector.extract_strided_slice %13 {offsets = [0, 0, 0], sizes = [1, 3, 64], strides = [1, 1, 1]} : vector<4x4x64xbf16> to vector<1x3x64xbf16>
    %44 = vector.shape_cast %43 : vector<1x3x64xbf16> to vector<3x64xbf16>
    %c1 = arith.constant 1 : index
    %c192 = arith.constant 192 : index
    %45 = vector.load %arg7[%c1, %c192] : memref<16x576xbf16, #tpu.memory_space<vmem>>, vector<3x64xbf16>
    tpu.vector_store %arg7[%c1, %c192], %44 {strides = array<i32>} : memref<16x576xbf16, #tpu.memory_space<vmem>>, vector<3x64xbf16>,
    %46 = vector.extract_strided_slice %13 {offsets = [1, 0, 0], sizes = [1, 3, 64], strides = [1, 1, 1]} : vector<4x4x64xbf16> to vector<1x3x64xbf16>
    %47 = vector.shape_cast %46 : vector<1x3x64xbf16> to vector<3x64xbf16>
    %c5_20 = arith.constant 5 : index
    %c192_21 = arith.constant 192 : index
    %48 = vector.load %arg7[%c5_20, %c192_21] : memref<16x576xbf16, #tpu.memory_space<vmem>>, vector<3x64xbf16>
    tpu.vector_store %arg7[%c5_20, %c192_21], %47 {strides = array<i32>} : memref<16x576xbf16, #tpu.memory_space<vmem>>, vector<3x64xbf16>,
    %49 = vector.extract_strided_slice %13 {offsets = [2, 0, 0], sizes = [1, 3, 64], strides = [1, 1, 1]} : vector<4x4x64xbf16> to vector<1x3x64xbf16>
    %50 = vector.shape_cast %49 : vector<1x3x64xbf16> to vector<3x64xbf16>
    %c9_22 = arith.constant 9 : index
    %c192_23 = arith.constant 192 : index
    %51 = vector.load %arg7[%c9_22, %c192_23] : memref<16x576xbf16, #tpu.memory_space<vmem>>, vector<3x64xbf16>
    tpu.vector_store %arg7[%c9_22, %c192_23], %50 {strides = array<i32>} : memref<16x576xbf16, #tpu.memory_space<vmem>>, vector<3x64xbf16>,
    %52 = vector.extract_strided_slice %13 {offsets = [3, 0, 0], sizes = [1, 3, 64], strides = [1, 1, 1]} : vector<4x4x64xbf16> to vector<1x3x64xbf16>
    %53 = vector.shape_cast %52 : vector<1x3x64xbf16> to vector<3x64xbf16>
    %c13_24 = arith.constant 13 : index
    %c192_25 = arith.constant 192 : index
    %54 = vector.load %arg7[%c13_24, %c192_25] : memref<16x576xbf16, #tpu.memory_space<vmem>>, vector<3x64xbf16>
    tpu.vector_store %arg7[%c13_24, %c192_25], %53 {strides = array<i32>} : memref<16x576xbf16, #tpu.memory_space<vmem>>, vector<3x64xbf16>,
    %55 = vector.extract_strided_slice %13 {offsets = [0, 0, 0], sizes = [1, 4, 64], strides = [1, 1, 1]} : vector<4x4x64xbf16> to vector<1x4x64xbf16>
    %56 = vector.shape_cast %55 : vector<1x4x64xbf16> to vector<4x64xbf16>
    %c0_26 = arith.constant 0 : index
    %c256 = arith.constant 256 : index
    %57 = vector.load %arg7[%c0_26, %c256] : memref<16x576xbf16, #tpu.memory_space<vmem>>, vector<4x64xbf16>
    tpu.vector_store %arg7[%c0_26, %c256], %56 {strides = array<i32>} : memref<16x576xbf16, #tpu.memory_space<vmem>>, vector<4x64xbf16>,
    %58 = vector.extract_strided_slice %13 {offsets = [1, 0, 0], sizes = [1, 4, 64], strides = [1, 1, 1]} : vector<4x4x64xbf16> to vector<1x4x64xbf16>
    %59 = vector.shape_cast %58 : vector<1x4x64xbf16> to vector<4x64xbf16>
    %c4_27 = arith.constant 4 : index
    %c256_28 = arith.constant 256 : index
    %60 = vector.load %arg7[%c4_27, %c256_28] : memref<16x576xbf16, #tpu.memory_space<vmem>>, vector<4x64xbf16>
    tpu.vector_store %arg7[%c4_27, %c256_28], %59 {strides = array<i32>} : memref<16x576xbf16, #tpu.memory_space<vmem>>, vector<4x64xbf16>,
    %61 = vector.extract_strided_slice %13 {offsets = [2, 0, 0], sizes = [1, 4, 64], strides = [1, 1, 1]} : vector<4x4x64xbf16> to vector<1x4x64xbf16>
    %62 = vector.shape_cast %61 : vector<1x4x64xbf16> to vector<4x64xbf16>
    %c8_29 = arith.constant 8 : index
    %c256_30 = arith.constant 256 : index
    %63 = vector.load %arg7[%c8_29, %c256_30] : memref<16x576xbf16, #tpu.memory_space<vmem>>, vector<4x64xbf16>
    tpu.vector_store %arg7[%c8_29, %c256_30], %62 {strides = array<i32>} : memref<16x576xbf16, #tpu.memory_space<vmem>>, vector<4x64xbf16>,
    %64 = vector.extract_strided_slice %13 {offsets = [3, 0, 0], sizes = [1, 4, 64], strides = [1, 1, 1]} : vector<4x4x64xbf16> to vector<1x4x64xbf16>
    %65 = vector.shape_cast %64 : vector<1x4x64xbf16> to vector<4x64xbf16>
    %c12_31 = arith.constant 12 : index
    %c256_32 = arith.constant 256 : index
    %66 = vector.load %arg7[%c12_31, %c256_32] : memref<16x576xbf16, #tpu.memory_space<vmem>>, vector<4x64xbf16>
    tpu.vector_store %arg7[%c12_31, %c256_32], %65 {strides = array<i32>} : memref<16x576xbf16, #tpu.memory_space<vmem>>, vector<4x64xbf16>,
    %67 = vector.extract_strided_slice %13 {offsets = [0, 1, 0], sizes = [1, 3, 64], strides = [1, 1, 1]} : vector<4x4x64xbf16> to vector<1x3x64xbf16>
    %68 = vector.shape_cast %67 : vector<1x3x64xbf16> to vector<3x64xbf16>
    %c0_33 = arith.constant 0 : index
    %c320 = arith.constant 320 : index
    %69 = vector.load %arg7[%c0_33, %c320] : memref<16x576xbf16, #tpu.memory_space<vmem>>, vector<3x64xbf16>
    tpu.vector_store %arg7[%c0_33, %c320], %68 {strides = array<i32>} : memref<16x576xbf16, #tpu.memory_space<vmem>>, vector<3x64xbf16>,
    %70 = vector.extract_strided_slice %13 {offsets = [1, 1, 0], sizes = [1, 3, 64], strides = [1, 1, 1]} : vector<4x4x64xbf16> to vector<1x3x64xbf16>
    %71 = vector.shape_cast %70 : vector<1x3x64xbf16> to vector<3x64xbf16>
    %c4_34 = arith.constant 4 : index
    %c320_35 = arith.constant 320 : index
    %72 = vector.load %arg7[%c4_34, %c320_35] : memref<16x576xbf16, #tpu.memory_space<vmem>>, vector<3x64xbf16>
    tpu.vector_store %arg7[%c4_34, %c320_35], %71 {strides = array<i32>} : memref<16x576xbf16, #tpu.memory_space<vmem>>, vector<3x64xbf16>,
    %73 = vector.extract_strided_slice %13 {offsets = [2, 1, 0], sizes = [1, 3, 64], strides = [1, 1, 1]} : vector<4x4x64xbf16> to vector<1x3x64xbf16>
    %74 = vector.shape_cast %73 : vector<1x3x64xbf16> to vector<3x64xbf16>
    %c8_36 = arith.constant 8 : index
    %c320_37 = arith.constant 320 : index
    %75 = vector.load %arg7[%c8_36, %c320_37] : memref<16x576xbf16, #tpu.memory_space<vmem>>, vector<3x64xbf16>
    tpu.vector_store %arg7[%c8_36, %c320_37], %74 {strides = array<i32>} : memref<16x576xbf16, #tpu.memory_space<vmem>>, vector<3x64xbf16>,
    %76 = vector.extract_strided_slice %13 {offsets = [3, 1, 0], sizes = [1, 3, 64], strides = [1, 1, 1]} : vector<4x4x64xbf16> to vector<1x3x64xbf16>
    %77 = vector.shape_cast %76 : vector<1x3x64xbf16> to vector<3x64xbf16>
    %c12_38 = arith.constant 12 : index
    %c320_39 = arith.constant 320 : index
    %78 = vector.load %arg7[%c12_38, %c320_39] : memref<16x576xbf16, #tpu.memory_space<vmem>>, vector<3x64xbf16>
    tpu.vector_store %arg7[%c12_38, %c320_39], %77 {strides = array<i32>} : memref<16x576xbf16, #tpu.memory_space<vmem>>, vector<3x64xbf16>,
    %79 = vector.extract_strided_slice %13 {offsets = [1, 0, 0], sizes = [1, 3, 64], strides = [1, 1, 1]} : vector<4x4x64xbf16> to vector<1x3x64xbf16>
    %80 = vector.shape_cast %79 : vector<1x3x64xbf16> to vector<3x64xbf16>
    %c1_40 = arith.constant 1 : index
    %c384 = arith.constant 384 : index
    %81 = vector.load %arg7[%c1_40, %c384] : memref<16x576xbf16, #tpu.memory_space<vmem>>, vector<3x64xbf16>
    tpu.vector_store %arg7[%c1_40, %c384], %80 {strides = array<i32>} : memref<16x576xbf16, #tpu.memory_space<vmem>>, vector<3x64xbf16>,
    %82 = vector.extract_strided_slice %13 {offsets = [2, 0, 0], sizes = [1, 3, 64], strides = [1, 1, 1]} : vector<4x4x64xbf16> to vector<1x3x64xbf16>
    %83 = vector.shape_cast %82 : vector<1x3x64xbf16> to vector<3x64xbf16>
    %c5_41 = arith.constant 5 : index
    %c384_42 = arith.constant 384 : index
    %84 = vector.load %arg7[%c5_41, %c384_42] : memref<16x576xbf16, #tpu.memory_space<vmem>>, vector<3x64xbf16>
    tpu.vector_store %arg7[%c5_41, %c384_42], %83 {strides = array<i32>} : memref<16x576xbf16, #tpu.memory_space<vmem>>, vector<3x64xbf16>,
    %85 = vector.extract_strided_slice %13 {offsets = [3, 0, 0], sizes = [1, 3, 64], strides = [1, 1, 1]} : vector<4x4x64xbf16> to vector<1x3x64xbf16>
    %86 = vector.shape_cast %85 : vector<1x3x64xbf16> to vector<3x64xbf16>
    %c9_43 = arith.constant 9 : index
    %c384_44 = arith.constant 384 : index
    %87 = vector.load %arg7[%c9_43, %c384_44] : memref<16x576xbf16, #tpu.memory_space<vmem>>, vector<3x64xbf16>
    tpu.vector_store %arg7[%c9_43, %c384_44], %86 {strides = array<i32>} : memref<16x576xbf16, #tpu.memory_space<vmem>>, vector<3x64xbf16>,
    %88 = vector.extract_strided_slice %13 {offsets = [1, 0, 0], sizes = [1, 4, 64], strides = [1, 1, 1]} : vector<4x4x64xbf16> to vector<1x4x64xbf16>
    %89 = vector.shape_cast %88 : vector<1x4x64xbf16> to vector<4x64xbf16>
    %c0_45 = arith.constant 0 : index
    %c448 = arith.constant 448 : index
    %90 = vector.load %arg7[%c0_45, %c448] : memref<16x576xbf16, #tpu.memory_space<vmem>>, vector<4x64xbf16>
    tpu.vector_store %arg7[%c0_45, %c448], %89 {strides = array<i32>} : memref<16x576xbf16, #tpu.memory_space<vmem>>, vector<4x64xbf16>,
    %91 = vector.extract_strided_slice %13 {offsets = [2, 0, 0], sizes = [1, 4, 64], strides = [1, 1, 1]} : vector<4x4x64xbf16> to vector<1x4x64xbf16>
    %92 = vector.shape_cast %91 : vector<1x4x64xbf16> to vector<4x64xbf16>
    %c4_46 = arith.constant 4 : index
    %c448_47 = arith.constant 448 : index
    %93 = vector.load %arg7[%c4_46, %c448_47] : memref<16x576xbf16, #tpu.memory_space<vmem>>, vector<4x64xbf16>
    tpu.vector_store %arg7[%c4_46, %c448_47], %92 {strides = array<i32>} : memref<16x576xbf16, #tpu.memory_space<vmem>>, vector<4x64xbf16>,
    %94 = vector.extract_strided_slice %13 {offsets = [3, 0, 0], sizes = [1, 4, 64], strides = [1, 1, 1]} : vector<4x4x64xbf16> to vector<1x4x64xbf16>
    %95 = vector.shape_cast %94 : vector<1x4x64xbf16> to vector<4x64xbf16>
    %c8_48 = arith.constant 8 : index
    %c448_49 = arith.constant 448 : index
    %96 = vector.load %arg7[%c8_48, %c448_49] : memref<16x576xbf16, #tpu.memory_space<vmem>>, vector<4x64xbf16>
    tpu.vector_store %arg7[%c8_48, %c448_49], %95 {strides = array<i32>} : memref<16x576xbf16, #tpu.memory_space<vmem>>, vector<4x64xbf16>,
    %97 = vector.extract_strided_slice %13 {offsets = [1, 1, 0], sizes = [1, 3, 64], strides = [1, 1, 1]} : vector<4x4x64xbf16> to vector<1x3x64xbf16>
    %98 = vector.shape_cast %97 : vector<1x3x64xbf16> to vector<3x64xbf16>
    %c0_50 = arith.constant 0 : index
    %c512 = arith.constant 512 : index
    %99 = vector.load %arg7[%c0_50, %c512] : memref<16x576xbf16, #tpu.memory_space<vmem>>, vector<3x64xbf16>
    tpu.vector_store %arg7[%c0_50, %c512], %98 {strides = array<i32>} : memref<16x576xbf16, #tpu.memory_space<vmem>>, vector<3x64xbf16>,
    %100 = vector.extract_strided_slice %13 {offsets = [2, 1, 0], sizes = [1, 3, 64], strides = [1, 1, 1]} : vector<4x4x64xbf16> to vector<1x3x64xbf16>
    %101 = vector.shape_cast %100 : vector<1x3x64xbf16> to vector<3x64xbf16>
    %c4_51 = arith.constant 4 : index
    %c512_52 = arith.constant 512 : index
    %102 = vector.load %arg7[%c4_51, %c512_52] : memref<16x576xbf16, #tpu.memory_space<vmem>>, vector<3x64xbf16>
    tpu.vector_store %arg7[%c4_51, %c512_52], %101 {strides = array<i32>} : memref<16x576xbf16, #tpu.memory_space<vmem>>, vector<3x64xbf16>,
    %103 = vector.extract_strided_slice %13 {offsets = [3, 1, 0], sizes = [1, 3, 64], strides = [1, 1, 1]} : vector<4x4x64xbf16> to vector<1x3x64xbf16>
    %104 = vector.shape_cast %103 : vector<1x3x64xbf16> to vector<3x64xbf16>
    %c8_53 = arith.constant 8 : index
    %c512_54 = arith.constant 512 : index
    %105 = vector.load %arg7[%c8_53, %c512_54] : memref<16x576xbf16, #tpu.memory_space<vmem>>, vector<3x64xbf16>
    tpu.vector_store %arg7[%c8_53, %c512_54], %104 {strides = array<i32>} : memref<16x576xbf16, #tpu.memory_space<vmem>>, vector<3x64xbf16>,
    %c0_55 = arith.constant 0 : index
    %c0_56 = arith.constant 0 : index
    %106 = vector.load %arg7[%c0_55, %c0_56] : memref<16x576xbf16, #tpu.memory_space<vmem>>, vector<16x576xbf16>
    %c0_57 = arith.constant 0 : index
    %c0_58 = arith.constant 0 : index
    %107 = vector.load %arg4[%c0_57, %c0_58] : memref<576x128xbf16, #tpu.memory_space<vmem>>, vector<576x128xbf16>
    %cst_59 = arith.constant dense<0.000000e+00> : vector<16x128xf32>
    %108 = tpu.matmul %106, %107, %cst_59 {dimension_numbers = #tpu.dot_dimension_numbers<[1], [0], [0], [1], [0, 0, 1, 1], [], []>} : vector<16x576xbf16>, vector<576x128xbf16>, vector<16x128xf32> -> vector<16x128xf32>
    %109 = arith.truncf %108 : vector<16x128xf32> to vector<16x128xbf16>
    %c0_60 = arith.constant 0 : index
    %c0_61 = arith.constant 0 : index
    %c0_62 = arith.constant 0 : index
    %110 = vector.load %arg5[%c0_60, %c0_61, %c0_62] : memref<1x16x128xbf16, #tpu.memory_space<vmem>>, vector<1x16x128xbf16>
    %111 = vector.shape_cast %110 : vector<1x16x128xbf16> to vector<16x128xbf16>
    %112 = vector.shape_cast %109 : vector<16x128xbf16> to vector<1x16x128xbf16>
    tpu.vector_store %arg5[%c0_60, %c0_61, %c0_62], %112 {strides = array<i32>} : memref<1x16x128xbf16, #tpu.memory_space<vmem>>, vector<1x16x128xbf16>,
    %cst_63 = arith.constant dense<0.000000e+00> : vector<128xf32>
    %113 = vector.multi_reduction <add>, %108, %cst_63 [0] : vector<16x128xf32> to vector<128xf32>
    %114 = vector.shape_cast %113 : vector<128xf32> to vector<1x128xf32>
    %c0_64 = arith.constant 0 : index
    %c0_65 = arith.constant 0 : index
    %c0_66 = arith.constant 0 : index
    %115 = vector.load %arg6[%c0_64, %c0_65, %c0_66] : memref<1x2x128xf32, #tpu.memory_space<vmem>>, vector<1x1x128xf32>
    %116 = vector.shape_cast %115 : vector<1x1x128xf32> to vector<1x128xf32>
    %117 = vector.shape_cast %114 : vector<1x128xf32> to vector<1x1x128xf32>
    tpu.vector_store %arg6[%c0_64, %c0_65, %c0_66], %117 {strides = array<i32>} : memref<1x2x128xf32, #tpu.memory_space<vmem>>, vector<1x1x128xf32>,
    %118 = arith.mulf %108, %108 : vector<16x128xf32>
    %cst_67 = arith.constant dense<0.000000e+00> : vector<128xf32>
    %119 = vector.multi_reduction <add>, %118, %cst_67 [0] : vector<16x128xf32> to vector<128xf32>
    %120 = vector.shape_cast %119 : vector<128xf32> to vector<1x128xf32>
    %c0_68 = arith.constant 0 : index
    %c1_69 = arith.constant 1 : index
    %c0_70 = arith.constant 0 : index
    %121 = vector.load %arg6[%c0_68, %c1_69, %c0_70] : memref<1x2x128xf32, #tpu.memory_space<vmem>>, vector<1x1x128xf32>
    %122 = vector.shape_cast %121 : vector<1x1x128xf32> to vector<1x128xf32>
    %123 = vector.shape_cast %120 : vector<1x128xf32> to vector<1x1x128xf32>
    tpu.vector_store %arg6[%c0_68, %c1_69, %c0_70], %123 {strides = array<i32>} : memref<1x2x128xf32, #tpu.memory_space<vmem>>, vector<1x1x128xf32>,
    return
  }
  func.func @transform_0(%arg0: i32) -> (i32, i32, i32, i32) {
    %c0_i32 = arith.constant 0 : i32
    %c0_i32_0 = arith.constant 0 : i32
    %c0_i32_1 = arith.constant 0 : i32
    %c0_i32_2 = arith.constant 0 : i32
    return %arg0, %c0_i32, %c0_i32_0, %c0_i32_1 : i32, i32, i32, i32
  }
  func.func @transform_1(%arg0: i32) -> (i32, i32) {
    %c0_i32 = arith.constant 0 : i32
    %c0_i32_0 = arith.constant 0 : i32
    %c0_i32_1 = arith.constant 0 : i32
    return %c0_i32, %c0_i32_0 : i32, i32
  }
  func.func @transform_2(%arg0: i32) -> (i32, i32) {
    %c0_i32 = arith.constant 0 : i32
    %c0_i32_0 = arith.constant 0 : i32
    %c0_i32_1 = arith.constant 0 : i32
    return %c0_i32, %c0_i32_0 : i32, i32
  }
  func.func @transform_3(%arg0: i32) -> (i32, i32) {
    %c0_i32 = arith.constant 0 : i32
    %c0_i32_0 = arith.constant 0 : i32
    %c0_i32_1 = arith.constant 0 : i32
    return %c0_i32, %c0_i32_0 : i32, i32
  }
  func.func @transform_4(%arg0: i32) -> (i32, i32, i32) {
    %c0_i32 = arith.constant 0 : i32
    %c0_i32_0 = arith.constant 0 : i32
    %c0_i32_1 = arith.constant 0 : i32
    return %arg0, %c0_i32, %c0_i32_0 : i32, i32, i32
  }
  func.func @transform_5(%arg0: i32) -> (i32, i32, i32) {
    %c0_i32 = arith.constant 0 : i32
    %c0_i32_0 = arith.constant 0 : i32
    %c0_i32_1 = arith.constant 0 : i32
    return %arg0, %c0_i32, %c0_i32_0 : i32, i32, i32
  }
}

module attributes {stable_mosaic.version = 11 : i64} {
  func.func @_deconv_kernel(%arg0: i32, %arg1: memref<1x8x8x32xbf16, #tpu.memory_space<vmem>>, %arg2: memref<1x32xf32, #tpu.memory_space<vmem>>, %arg3: memref<1x32xf32, #tpu.memory_space<vmem>>, %arg4: memref<288x128xbf16, #tpu.memory_space<vmem>>, %arg5: memref<1x64x128xbf16, #tpu.memory_space<vmem>>, %arg6: memref<1x2x128xf32, #tpu.memory_space<vmem>>, %arg7: memref<64x288xbf16, #tpu.memory_space<vmem>>) attributes {dimension_semantics = [#tpu.dimension_semantics<parallel>], iteration_bounds = array<i64: 2>, scalar_prefetch = 0 : i64, scratch_operands = 1 : i64, tpu.core_type = #tpu.core_type<tc>, window_params = [{transform_indices = @transform_0, window_bounds = array<i64: 1, 8, 8, 32>}, {pipeline_mode = #tpu.pipeline_mode<synchronous>, transform_indices = @transform_1, window_bounds = array<i64: 1, 32>}, {pipeline_mode = #tpu.pipeline_mode<synchronous>, transform_indices = @transform_2, window_bounds = array<i64: 1, 32>}, {pipeline_mode = #tpu.pipeline_mode<synchronous>, transform_indices = @transform_3, window_bounds = array<i64: 288, 128>}, {transform_indices = @transform_4, window_bounds = array<i64: 1, 64, 128>}, {transform_indices = @transform_5, window_bounds = array<i64: 1, 2, 128>}]} {
    %c0 = arith.constant 0 : index
    %c0_0 = arith.constant 0 : index
    %c0_1 = arith.constant 0 : index
    %c0_2 = arith.constant 0 : index
    %0 = vector.load %arg1[%c0, %c0_0, %c0_1, %c0_2] : memref<1x8x8x32xbf16, #tpu.memory_space<vmem>>, vector<1x8x8x32xbf16>
    %1 = vector.shape_cast %0 : vector<1x8x8x32xbf16> to vector<8x8x32xbf16>
    %2 = arith.extf %1 : vector<8x8x32xbf16> to vector<8x8x32xf32>
    %c0_3 = arith.constant 0 : index
    %c0_4 = arith.constant 0 : index
    %3 = vector.load %arg2[%c0_3, %c0_4] : memref<1x32xf32, #tpu.memory_space<vmem>>, vector<1x32xf32>
    %4 = vector.shape_cast %3 : vector<1x32xf32> to vector<1x1x32xf32>
    %5 = vector.broadcast %4 : vector<1x1x32xf32> to vector<8x8x32xf32>
    %6 = arith.mulf %2, %5 : vector<8x8x32xf32>
    %c0_5 = arith.constant 0 : index
    %c0_6 = arith.constant 0 : index
    %7 = vector.load %arg3[%c0_5, %c0_6] : memref<1x32xf32, #tpu.memory_space<vmem>>, vector<1x32xf32>
    %8 = vector.shape_cast %7 : vector<1x32xf32> to vector<1x1x32xf32>
    %9 = vector.broadcast %8 : vector<1x1x32xf32> to vector<8x8x32xf32>
    %10 = arith.addf %6, %9 : vector<8x8x32xf32>
    %cst = arith.constant 0.000000e+00 : f32
    %11 = vector.broadcast %cst : f32 to vector<8x8x32xf32>
    %12 = arith.maximumf %10, %11 : vector<8x8x32xf32>
    %13 = arith.truncf %12 : vector<8x8x32xf32> to vector<8x8x32xbf16>
    %cst_7 = arith.constant 0.000000e+00 : bf16
    %14 = vector.broadcast %cst_7 : bf16 to vector<64x288xbf16>
    %c0_8 = arith.constant 0 : index
    %c0_9 = arith.constant 0 : index
    %15 = vector.load %arg7[%c0_8, %c0_9] : memref<64x288xbf16, #tpu.memory_space<vmem>>, vector<64x288xbf16>
    tpu.vector_store %arg7[%c0_8, %c0_9], %14 {strides = array<i32>} : memref<64x288xbf16, #tpu.memory_space<vmem>>, vector<64x288xbf16>,
    %16 = vector.extract_strided_slice %13 {offsets = [0, 0, 0], sizes = [1, 7, 32], strides = [1, 1, 1]} : vector<8x8x32xbf16> to vector<1x7x32xbf16>
    %17 = vector.shape_cast %16 : vector<1x7x32xbf16> to vector<7x32xbf16>
    %c9 = arith.constant 9 : index
    %c0_10 = arith.constant 0 : index
    %18 = vector.load %arg7[%c9, %c0_10] : memref<64x288xbf16, #tpu.memory_space<vmem>>, vector<7x32xbf16>
    tpu.vector_store %arg7[%c9, %c0_10], %17 {strides = array<i32>} : memref<64x288xbf16, #tpu.memory_space<vmem>>, vector<7x32xbf16>,
    %19 = vector.extract_strided_slice %13 {offsets = [1, 0, 0], sizes = [1, 7, 32], strides = [1, 1, 1]} : vector<8x8x32xbf16> to vector<1x7x32xbf16>
    %20 = vector.shape_cast %19 : vector<1x7x32xbf16> to vector<7x32xbf16>
    %c17 = arith.constant 17 : index
    %c0_11 = arith.constant 0 : index
    %21 = vector.load %arg7[%c17, %c0_11] : memref<64x288xbf16, #tpu.memory_space<vmem>>, vector<7x32xbf16>
    tpu.vector_store %arg7[%c17, %c0_11], %20 {strides = array<i32>} : memref<64x288xbf16, #tpu.memory_space<vmem>>, vector<7x32xbf16>,
    %22 = vector.extract_strided_slice %13 {offsets = [2, 0, 0], sizes = [1, 7, 32], strides = [1, 1, 1]} : vector<8x8x32xbf16> to vector<1x7x32xbf16>
    %23 = vector.shape_cast %22 : vector<1x7x32xbf16> to vector<7x32xbf16>
    %c25 = arith.constant 25 : index
    %c0_12 = arith.constant 0 : index
    %24 = vector.load %arg7[%c25, %c0_12] : memref<64x288xbf16, #tpu.memory_space<vmem>>, vector<7x32xbf16>
    tpu.vector_store %arg7[%c25, %c0_12], %23 {strides = array<i32>} : memref<64x288xbf16, #tpu.memory_space<vmem>>, vector<7x32xbf16>,
    %25 = vector.extract_strided_slice %13 {offsets = [3, 0, 0], sizes = [1, 7, 32], strides = [1, 1, 1]} : vector<8x8x32xbf16> to vector<1x7x32xbf16>
    %26 = vector.shape_cast %25 : vector<1x7x32xbf16> to vector<7x32xbf16>
    %c33 = arith.constant 33 : index
    %c0_13 = arith.constant 0 : index
    %27 = vector.load %arg7[%c33, %c0_13] : memref<64x288xbf16, #tpu.memory_space<vmem>>, vector<7x32xbf16>
    tpu.vector_store %arg7[%c33, %c0_13], %26 {strides = array<i32>} : memref<64x288xbf16, #tpu.memory_space<vmem>>, vector<7x32xbf16>,
    %28 = vector.extract_strided_slice %13 {offsets = [4, 0, 0], sizes = [1, 7, 32], strides = [1, 1, 1]} : vector<8x8x32xbf16> to vector<1x7x32xbf16>
    %29 = vector.shape_cast %28 : vector<1x7x32xbf16> to vector<7x32xbf16>
    %c41 = arith.constant 41 : index
    %c0_14 = arith.constant 0 : index
    %30 = vector.load %arg7[%c41, %c0_14] : memref<64x288xbf16, #tpu.memory_space<vmem>>, vector<7x32xbf16>
    tpu.vector_store %arg7[%c41, %c0_14], %29 {strides = array<i32>} : memref<64x288xbf16, #tpu.memory_space<vmem>>, vector<7x32xbf16>,
    %31 = vector.extract_strided_slice %13 {offsets = [5, 0, 0], sizes = [1, 7, 32], strides = [1, 1, 1]} : vector<8x8x32xbf16> to vector<1x7x32xbf16>
    %32 = vector.shape_cast %31 : vector<1x7x32xbf16> to vector<7x32xbf16>
    %c49 = arith.constant 49 : index
    %c0_15 = arith.constant 0 : index
    %33 = vector.load %arg7[%c49, %c0_15] : memref<64x288xbf16, #tpu.memory_space<vmem>>, vector<7x32xbf16>
    tpu.vector_store %arg7[%c49, %c0_15], %32 {strides = array<i32>} : memref<64x288xbf16, #tpu.memory_space<vmem>>, vector<7x32xbf16>,
    %34 = vector.extract_strided_slice %13 {offsets = [6, 0, 0], sizes = [1, 7, 32], strides = [1, 1, 1]} : vector<8x8x32xbf16> to vector<1x7x32xbf16>
    %35 = vector.shape_cast %34 : vector<1x7x32xbf16> to vector<7x32xbf16>
    %c57 = arith.constant 57 : index
    %c0_16 = arith.constant 0 : index
    %36 = vector.load %arg7[%c57, %c0_16] : memref<64x288xbf16, #tpu.memory_space<vmem>>, vector<7x32xbf16>
    tpu.vector_store %arg7[%c57, %c0_16], %35 {strides = array<i32>} : memref<64x288xbf16, #tpu.memory_space<vmem>>, vector<7x32xbf16>,
    %37 = vector.extract_strided_slice %13 {offsets = [0, 0, 0], sizes = [1, 8, 32], strides = [1, 1, 1]} : vector<8x8x32xbf16> to vector<1x8x32xbf16>
    %38 = vector.shape_cast %37 : vector<1x8x32xbf16> to vector<8x32xbf16>
    %c8 = arith.constant 8 : index
    %c32 = arith.constant 32 : index
    %39 = vector.load %arg7[%c8, %c32] : memref<64x288xbf16, #tpu.memory_space<vmem>>, vector<8x32xbf16>
    tpu.vector_store %arg7[%c8, %c32], %38 {strides = array<i32>} : memref<64x288xbf16, #tpu.memory_space<vmem>>, vector<8x32xbf16>,
    %40 = vector.extract_strided_slice %13 {offsets = [1, 0, 0], sizes = [1, 8, 32], strides = [1, 1, 1]} : vector<8x8x32xbf16> to vector<1x8x32xbf16>
    %41 = vector.shape_cast %40 : vector<1x8x32xbf16> to vector<8x32xbf16>
    %c16 = arith.constant 16 : index
    %c32_17 = arith.constant 32 : index
    %42 = vector.load %arg7[%c16, %c32_17] : memref<64x288xbf16, #tpu.memory_space<vmem>>, vector<8x32xbf16>
    tpu.vector_store %arg7[%c16, %c32_17], %41 {strides = array<i32>} : memref<64x288xbf16, #tpu.memory_space<vmem>>, vector<8x32xbf16>,
    %43 = vector.extract_strided_slice %13 {offsets = [2, 0, 0], sizes = [1, 8, 32], strides = [1, 1, 1]} : vector<8x8x32xbf16> to vector<1x8x32xbf16>
    %44 = vector.shape_cast %43 : vector<1x8x32xbf16> to vector<8x32xbf16>
    %c24 = arith.constant 24 : index
    %c32_18 = arith.constant 32 : index
    %45 = vector.load %arg7[%c24, %c32_18] : memref<64x288xbf16, #tpu.memory_space<vmem>>, vector<8x32xbf16>
    tpu.vector_store %arg7[%c24, %c32_18], %44 {strides = array<i32>} : memref<64x288xbf16, #tpu.memory_space<vmem>>, vector<8x32xbf16>,
    %46 = vector.extract_strided_slice %13 {offsets = [3, 0, 0], sizes = [1, 8, 32], strides = [1, 1, 1]} : vector<8x8x32xbf16> to vector<1x8x32xbf16>
    %47 = vector.shape_cast %46 : vector<1x8x32xbf16> to vector<8x32xbf16>
    %c32_19 = arith.constant 32 : index
    %c32_20 = arith.constant 32 : index
    %48 = vector.load %arg7[%c32_19, %c32_20] : memref<64x288xbf16, #tpu.memory_space<vmem>>, vector<8x32xbf16>
    tpu.vector_store %arg7[%c32_19, %c32_20], %47 {strides = array<i32>} : memref<64x288xbf16, #tpu.memory_space<vmem>>, vector<8x32xbf16>,
    %49 = vector.extract_strided_slice %13 {offsets = [4, 0, 0], sizes = [1, 8, 32], strides = [1, 1, 1]} : vector<8x8x32xbf16> to vector<1x8x32xbf16>
    %50 = vector.shape_cast %49 : vector<1x8x32xbf16> to vector<8x32xbf16>
    %c40 = arith.constant 40 : index
    %c32_21 = arith.constant 32 : index
    %51 = vector.load %arg7[%c40, %c32_21] : memref<64x288xbf16, #tpu.memory_space<vmem>>, vector<8x32xbf16>
    tpu.vector_store %arg7[%c40, %c32_21], %50 {strides = array<i32>} : memref<64x288xbf16, #tpu.memory_space<vmem>>, vector<8x32xbf16>,
    %52 = vector.extract_strided_slice %13 {offsets = [5, 0, 0], sizes = [1, 8, 32], strides = [1, 1, 1]} : vector<8x8x32xbf16> to vector<1x8x32xbf16>
    %53 = vector.shape_cast %52 : vector<1x8x32xbf16> to vector<8x32xbf16>
    %c48 = arith.constant 48 : index
    %c32_22 = arith.constant 32 : index
    %54 = vector.load %arg7[%c48, %c32_22] : memref<64x288xbf16, #tpu.memory_space<vmem>>, vector<8x32xbf16>
    tpu.vector_store %arg7[%c48, %c32_22], %53 {strides = array<i32>} : memref<64x288xbf16, #tpu.memory_space<vmem>>, vector<8x32xbf16>,
    %55 = vector.extract_strided_slice %13 {offsets = [6, 0, 0], sizes = [1, 8, 32], strides = [1, 1, 1]} : vector<8x8x32xbf16> to vector<1x8x32xbf16>
    %56 = vector.shape_cast %55 : vector<1x8x32xbf16> to vector<8x32xbf16>
    %c56 = arith.constant 56 : index
    %c32_23 = arith.constant 32 : index
    %57 = vector.load %arg7[%c56, %c32_23] : memref<64x288xbf16, #tpu.memory_space<vmem>>, vector<8x32xbf16>
    tpu.vector_store %arg7[%c56, %c32_23], %56 {strides = array<i32>} : memref<64x288xbf16, #tpu.memory_space<vmem>>, vector<8x32xbf16>,
    %58 = vector.extract_strided_slice %13 {offsets = [0, 1, 0], sizes = [1, 7, 32], strides = [1, 1, 1]} : vector<8x8x32xbf16> to vector<1x7x32xbf16>
    %59 = vector.shape_cast %58 : vector<1x7x32xbf16> to vector<7x32xbf16>
    %c8_24 = arith.constant 8 : index
    %c64 = arith.constant 64 : index
    %60 = vector.load %arg7[%c8_24, %c64] : memref<64x288xbf16, #tpu.memory_space<vmem>>, vector<7x32xbf16>
    tpu.vector_store %arg7[%c8_24, %c64], %59 {strides = array<i32>} : memref<64x288xbf16, #tpu.memory_space<vmem>>, vector<7x32xbf16>,
    %61 = vector.extract_strided_slice %13 {offsets = [1, 1, 0], sizes = [1, 7, 32], strides = [1, 1, 1]} : vector<8x8x32xbf16> to vector<1x7x32xbf16>
    %62 = vector.shape_cast %61 : vector<1x7x32xbf16> to vector<7x32xbf16>
    %c16_25 = arith.constant 16 : index
    %c64_26 = arith.constant 64 : index
    %63 = vector.load %arg7[%c16_25, %c64_26] : memref<64x288xbf16, #tpu.memory_space<vmem>>, vector<7x32xbf16>
    tpu.vector_store %arg7[%c16_25, %c64_26], %62 {strides = array<i32>} : memref<64x288xbf16, #tpu.memory_space<vmem>>, vector<7x32xbf16>,
    %64 = vector.extract_strided_slice %13 {offsets = [2, 1, 0], sizes = [1, 7, 32], strides = [1, 1, 1]} : vector<8x8x32xbf16> to vector<1x7x32xbf16>
    %65 = vector.shape_cast %64 : vector<1x7x32xbf16> to vector<7x32xbf16>
    %c24_27 = arith.constant 24 : index
    %c64_28 = arith.constant 64 : index
    %66 = vector.load %arg7[%c24_27, %c64_28] : memref<64x288xbf16, #tpu.memory_space<vmem>>, vector<7x32xbf16>
    tpu.vector_store %arg7[%c24_27, %c64_28], %65 {strides = array<i32>} : memref<64x288xbf16, #tpu.memory_space<vmem>>, vector<7x32xbf16>,
    %67 = vector.extract_strided_slice %13 {offsets = [3, 1, 0], sizes = [1, 7, 32], strides = [1, 1, 1]} : vector<8x8x32xbf16> to vector<1x7x32xbf16>
    %68 = vector.shape_cast %67 : vector<1x7x32xbf16> to vector<7x32xbf16>
    %c32_29 = arith.constant 32 : index
    %c64_30 = arith.constant 64 : index
    %69 = vector.load %arg7[%c32_29, %c64_30] : memref<64x288xbf16, #tpu.memory_space<vmem>>, vector<7x32xbf16>
    tpu.vector_store %arg7[%c32_29, %c64_30], %68 {strides = array<i32>} : memref<64x288xbf16, #tpu.memory_space<vmem>>, vector<7x32xbf16>,
    %70 = vector.extract_strided_slice %13 {offsets = [4, 1, 0], sizes = [1, 7, 32], strides = [1, 1, 1]} : vector<8x8x32xbf16> to vector<1x7x32xbf16>
    %71 = vector.shape_cast %70 : vector<1x7x32xbf16> to vector<7x32xbf16>
    %c40_31 = arith.constant 40 : index
    %c64_32 = arith.constant 64 : index
    %72 = vector.load %arg7[%c40_31, %c64_32] : memref<64x288xbf16, #tpu.memory_space<vmem>>, vector<7x32xbf16>
    tpu.vector_store %arg7[%c40_31, %c64_32], %71 {strides = array<i32>} : memref<64x288xbf16, #tpu.memory_space<vmem>>, vector<7x32xbf16>,
    %73 = vector.extract_strided_slice %13 {offsets = [5, 1, 0], sizes = [1, 7, 32], strides = [1, 1, 1]} : vector<8x8x32xbf16> to vector<1x7x32xbf16>
    %74 = vector.shape_cast %73 : vector<1x7x32xbf16> to vector<7x32xbf16>
    %c48_33 = arith.constant 48 : index
    %c64_34 = arith.constant 64 : index
    %75 = vector.load %arg7[%c48_33, %c64_34] : memref<64x288xbf16, #tpu.memory_space<vmem>>, vector<7x32xbf16>
    tpu.vector_store %arg7[%c48_33, %c64_34], %74 {strides = array<i32>} : memref<64x288xbf16, #tpu.memory_space<vmem>>, vector<7x32xbf16>,
    %76 = vector.extract_strided_slice %13 {offsets = [6, 1, 0], sizes = [1, 7, 32], strides = [1, 1, 1]} : vector<8x8x32xbf16> to vector<1x7x32xbf16>
    %77 = vector.shape_cast %76 : vector<1x7x32xbf16> to vector<7x32xbf16>
    %c56_35 = arith.constant 56 : index
    %c64_36 = arith.constant 64 : index
    %78 = vector.load %arg7[%c56_35, %c64_36] : memref<64x288xbf16, #tpu.memory_space<vmem>>, vector<7x32xbf16>
    tpu.vector_store %arg7[%c56_35, %c64_36], %77 {strides = array<i32>} : memref<64x288xbf16, #tpu.memory_space<vmem>>, vector<7x32xbf16>,
    %79 = vector.extract_strided_slice %13 {offsets = [0, 0, 0], sizes = [1, 7, 32], strides = [1, 1, 1]} : vector<8x8x32xbf16> to vector<1x7x32xbf16>
    %80 = vector.shape_cast %79 : vector<1x7x32xbf16> to vector<7x32xbf16>
    %c1 = arith.constant 1 : index
    %c96 = arith.constant 96 : index
    %81 = vector.load %arg7[%c1, %c96] : memref<64x288xbf16, #tpu.memory_space<vmem>>, vector<7x32xbf16>
    tpu.vector_store %arg7[%c1, %c96], %80 {strides = array<i32>} : memref<64x288xbf16, #tpu.memory_space<vmem>>, vector<7x32xbf16>,
    %82 = vector.extract_strided_slice %13 {offsets = [1, 0, 0], sizes = [1, 7, 32], strides = [1, 1, 1]} : vector<8x8x32xbf16> to vector<1x7x32xbf16>
    %83 = vector.shape_cast %82 : vector<1x7x32xbf16> to vector<7x32xbf16>
    %c9_37 = arith.constant 9 : index
    %c96_38 = arith.constant 96 : index
    %84 = vector.load %arg7[%c9_37, %c96_38] : memref<64x288xbf16, #tpu.memory_space<vmem>>, vector<7x32xbf16>
    tpu.vector_store %arg7[%c9_37, %c96_38], %83 {strides = array<i32>} : memref<64x288xbf16, #tpu.memory_space<vmem>>, vector<7x32xbf16>,
    %85 = vector.extract_strided_slice %13 {offsets = [2, 0, 0], sizes = [1, 7, 32], strides = [1, 1, 1]} : vector<8x8x32xbf16> to vector<1x7x32xbf16>
    %86 = vector.shape_cast %85 : vector<1x7x32xbf16> to vector<7x32xbf16>
    %c17_39 = arith.constant 17 : index
    %c96_40 = arith.constant 96 : index
    %87 = vector.load %arg7[%c17_39, %c96_40] : memref<64x288xbf16, #tpu.memory_space<vmem>>, vector<7x32xbf16>
    tpu.vector_store %arg7[%c17_39, %c96_40], %86 {strides = array<i32>} : memref<64x288xbf16, #tpu.memory_space<vmem>>, vector<7x32xbf16>,
    %88 = vector.extract_strided_slice %13 {offsets = [3, 0, 0], sizes = [1, 7, 32], strides = [1, 1, 1]} : vector<8x8x32xbf16> to vector<1x7x32xbf16>
    %89 = vector.shape_cast %88 : vector<1x7x32xbf16> to vector<7x32xbf16>
    %c25_41 = arith.constant 25 : index
    %c96_42 = arith.constant 96 : index
    %90 = vector.load %arg7[%c25_41, %c96_42] : memref<64x288xbf16, #tpu.memory_space<vmem>>, vector<7x32xbf16>
    tpu.vector_store %arg7[%c25_41, %c96_42], %89 {strides = array<i32>} : memref<64x288xbf16, #tpu.memory_space<vmem>>, vector<7x32xbf16>,
    %91 = vector.extract_strided_slice %13 {offsets = [4, 0, 0], sizes = [1, 7, 32], strides = [1, 1, 1]} : vector<8x8x32xbf16> to vector<1x7x32xbf16>
    %92 = vector.shape_cast %91 : vector<1x7x32xbf16> to vector<7x32xbf16>
    %c33_43 = arith.constant 33 : index
    %c96_44 = arith.constant 96 : index
    %93 = vector.load %arg7[%c33_43, %c96_44] : memref<64x288xbf16, #tpu.memory_space<vmem>>, vector<7x32xbf16>
    tpu.vector_store %arg7[%c33_43, %c96_44], %92 {strides = array<i32>} : memref<64x288xbf16, #tpu.memory_space<vmem>>, vector<7x32xbf16>,
    %94 = vector.extract_strided_slice %13 {offsets = [5, 0, 0], sizes = [1, 7, 32], strides = [1, 1, 1]} : vector<8x8x32xbf16> to vector<1x7x32xbf16>
    %95 = vector.shape_cast %94 : vector<1x7x32xbf16> to vector<7x32xbf16>
    %c41_45 = arith.constant 41 : index
    %c96_46 = arith.constant 96 : index
    %96 = vector.load %arg7[%c41_45, %c96_46] : memref<64x288xbf16, #tpu.memory_space<vmem>>, vector<7x32xbf16>
    tpu.vector_store %arg7[%c41_45, %c96_46], %95 {strides = array<i32>} : memref<64x288xbf16, #tpu.memory_space<vmem>>, vector<7x32xbf16>,
    %97 = vector.extract_strided_slice %13 {offsets = [6, 0, 0], sizes = [1, 7, 32], strides = [1, 1, 1]} : vector<8x8x32xbf16> to vector<1x7x32xbf16>
    %98 = vector.shape_cast %97 : vector<1x7x32xbf16> to vector<7x32xbf16>
    %c49_47 = arith.constant 49 : index
    %c96_48 = arith.constant 96 : index
    %99 = vector.load %arg7[%c49_47, %c96_48] : memref<64x288xbf16, #tpu.memory_space<vmem>>, vector<7x32xbf16>
    tpu.vector_store %arg7[%c49_47, %c96_48], %98 {strides = array<i32>} : memref<64x288xbf16, #tpu.memory_space<vmem>>, vector<7x32xbf16>,
    %100 = vector.extract_strided_slice %13 {offsets = [7, 0, 0], sizes = [1, 7, 32], strides = [1, 1, 1]} : vector<8x8x32xbf16> to vector<1x7x32xbf16>
    %101 = vector.shape_cast %100 : vector<1x7x32xbf16> to vector<7x32xbf16>
    %c57_49 = arith.constant 57 : index
    %c96_50 = arith.constant 96 : index
    %102 = vector.load %arg7[%c57_49, %c96_50] : memref<64x288xbf16, #tpu.memory_space<vmem>>, vector<7x32xbf16>
    tpu.vector_store %arg7[%c57_49, %c96_50], %101 {strides = array<i32>} : memref<64x288xbf16, #tpu.memory_space<vmem>>, vector<7x32xbf16>,
    %103 = vector.extract_strided_slice %13 {offsets = [0, 0, 0], sizes = [1, 8, 32], strides = [1, 1, 1]} : vector<8x8x32xbf16> to vector<1x8x32xbf16>
    %104 = vector.shape_cast %103 : vector<1x8x32xbf16> to vector<8x32xbf16>
    %c0_51 = arith.constant 0 : index
    %c128 = arith.constant 128 : index
    %105 = vector.load %arg7[%c0_51, %c128] : memref<64x288xbf16, #tpu.memory_space<vmem>>, vector<8x32xbf16>
    tpu.vector_store %arg7[%c0_51, %c128], %104 {strides = array<i32>} : memref<64x288xbf16, #tpu.memory_space<vmem>>, vector<8x32xbf16>,
    %106 = vector.extract_strided_slice %13 {offsets = [1, 0, 0], sizes = [1, 8, 32], strides = [1, 1, 1]} : vector<8x8x32xbf16> to vector<1x8x32xbf16>
    %107 = vector.shape_cast %106 : vector<1x8x32xbf16> to vector<8x32xbf16>
    %c8_52 = arith.constant 8 : index
    %c128_53 = arith.constant 128 : index
    %108 = vector.load %arg7[%c8_52, %c128_53] : memref<64x288xbf16, #tpu.memory_space<vmem>>, vector<8x32xbf16>
    tpu.vector_store %arg7[%c8_52, %c128_53], %107 {strides = array<i32>} : memref<64x288xbf16, #tpu.memory_space<vmem>>, vector<8x32xbf16>,
    %109 = vector.extract_strided_slice %13 {offsets = [2, 0, 0], sizes = [1, 8, 32], strides = [1, 1, 1]} : vector<8x8x32xbf16> to vector<1x8x32xbf16>
    %110 = vector.shape_cast %109 : vector<1x8x32xbf16> to vector<8x32xbf16>
    %c16_54 = arith.constant 16 : index
    %c128_55 = arith.constant 128 : index
    %111 = vector.load %arg7[%c16_54, %c128_55] : memref<64x288xbf16, #tpu.memory_space<vmem>>, vector<8x32xbf16>
    tpu.vector_store %arg7[%c16_54, %c128_55], %110 {strides = array<i32>} : memref<64x288xbf16, #tpu.memory_space<vmem>>, vector<8x32xbf16>,
    %112 = vector.extract_strided_slice %13 {offsets = [3, 0, 0], sizes = [1, 8, 32], strides = [1, 1, 1]} : vector<8x8x32xbf16> to vector<1x8x32xbf16>
    %113 = vector.shape_cast %112 : vector<1x8x32xbf16> to vector<8x32xbf16>
    %c24_56 = arith.constant 24 : index
    %c128_57 = arith.constant 128 : index
    %114 = vector.load %arg7[%c24_56, %c128_57] : memref<64x288xbf16, #tpu.memory_space<vmem>>, vector<8x32xbf16>
    tpu.vector_store %arg7[%c24_56, %c128_57], %113 {strides = array<i32>} : memref<64x288xbf16, #tpu.memory_space<vmem>>, vector<8x32xbf16>,
    %115 = vector.extract_strided_slice %13 {offsets = [4, 0, 0], sizes = [1, 8, 32], strides = [1, 1, 1]} : vector<8x8x32xbf16> to vector<1x8x32xbf16>
    %116 = vector.shape_cast %115 : vector<1x8x32xbf16> to vector<8x32xbf16>
    %c32_58 = arith.constant 32 : index
    %c128_59 = arith.constant 128 : index
    %117 = vector.load %arg7[%c32_58, %c128_59] : memref<64x288xbf16, #tpu.memory_space<vmem>>, vector<8x32xbf16>
    tpu.vector_store %arg7[%c32_58, %c128_59], %116 {strides = array<i32>} : memref<64x288xbf16, #tpu.memory_space<vmem>>, vector<8x32xbf16>,
    %118 = vector.extract_strided_slice %13 {offsets = [5, 0, 0], sizes = [1, 8, 32], strides = [1, 1, 1]} : vector<8x8x32xbf16> to vector<1x8x32xbf16>
    %119 = vector.shape_cast %118 : vector<1x8x32xbf16> to vector<8x32xbf16>
    %c40_60 = arith.constant 40 : index
    %c128_61 = arith.constant 128 : index
    %120 = vector.load %arg7[%c40_60, %c128_61] : memref<64x288xbf16, #tpu.memory_space<vmem>>, vector<8x32xbf16>
    tpu.vector_store %arg7[%c40_60, %c128_61], %119 {strides = array<i32>} : memref<64x288xbf16, #tpu.memory_space<vmem>>, vector<8x32xbf16>,
    %121 = vector.extract_strided_slice %13 {offsets = [6, 0, 0], sizes = [1, 8, 32], strides = [1, 1, 1]} : vector<8x8x32xbf16> to vector<1x8x32xbf16>
    %122 = vector.shape_cast %121 : vector<1x8x32xbf16> to vector<8x32xbf16>
    %c48_62 = arith.constant 48 : index
    %c128_63 = arith.constant 128 : index
    %123 = vector.load %arg7[%c48_62, %c128_63] : memref<64x288xbf16, #tpu.memory_space<vmem>>, vector<8x32xbf16>
    tpu.vector_store %arg7[%c48_62, %c128_63], %122 {strides = array<i32>} : memref<64x288xbf16, #tpu.memory_space<vmem>>, vector<8x32xbf16>,
    %124 = vector.extract_strided_slice %13 {offsets = [7, 0, 0], sizes = [1, 8, 32], strides = [1, 1, 1]} : vector<8x8x32xbf16> to vector<1x8x32xbf16>
    %125 = vector.shape_cast %124 : vector<1x8x32xbf16> to vector<8x32xbf16>
    %c56_64 = arith.constant 56 : index
    %c128_65 = arith.constant 128 : index
    %126 = vector.load %arg7[%c56_64, %c128_65] : memref<64x288xbf16, #tpu.memory_space<vmem>>, vector<8x32xbf16>
    tpu.vector_store %arg7[%c56_64, %c128_65], %125 {strides = array<i32>} : memref<64x288xbf16, #tpu.memory_space<vmem>>, vector<8x32xbf16>,
    %127 = vector.extract_strided_slice %13 {offsets = [0, 1, 0], sizes = [1, 7, 32], strides = [1, 1, 1]} : vector<8x8x32xbf16> to vector<1x7x32xbf16>
    %128 = vector.shape_cast %127 : vector<1x7x32xbf16> to vector<7x32xbf16>
    %c0_66 = arith.constant 0 : index
    %c160 = arith.constant 160 : index
    %129 = vector.load %arg7[%c0_66, %c160] : memref<64x288xbf16, #tpu.memory_space<vmem>>, vector<7x32xbf16>
    tpu.vector_store %arg7[%c0_66, %c160], %128 {strides = array<i32>} : memref<64x288xbf16, #tpu.memory_space<vmem>>, vector<7x32xbf16>,
    %130 = vector.extract_strided_slice %13 {offsets = [1, 1, 0], sizes = [1, 7, 32], strides = [1, 1, 1]} : vector<8x8x32xbf16> to vector<1x7x32xbf16>
    %131 = vector.shape_cast %130 : vector<1x7x32xbf16> to vector<7x32xbf16>
    %c8_67 = arith.constant 8 : index
    %c160_68 = arith.constant 160 : index
    %132 = vector.load %arg7[%c8_67, %c160_68] : memref<64x288xbf16, #tpu.memory_space<vmem>>, vector<7x32xbf16>
    tpu.vector_store %arg7[%c8_67, %c160_68], %131 {strides = array<i32>} : memref<64x288xbf16, #tpu.memory_space<vmem>>, vector<7x32xbf16>,
    %133 = vector.extract_strided_slice %13 {offsets = [2, 1, 0], sizes = [1, 7, 32], strides = [1, 1, 1]} : vector<8x8x32xbf16> to vector<1x7x32xbf16>
    %134 = vector.shape_cast %133 : vector<1x7x32xbf16> to vector<7x32xbf16>
    %c16_69 = arith.constant 16 : index
    %c160_70 = arith.constant 160 : index
    %135 = vector.load %arg7[%c16_69, %c160_70] : memref<64x288xbf16, #tpu.memory_space<vmem>>, vector<7x32xbf16>
    tpu.vector_store %arg7[%c16_69, %c160_70], %134 {strides = array<i32>} : memref<64x288xbf16, #tpu.memory_space<vmem>>, vector<7x32xbf16>,
    %136 = vector.extract_strided_slice %13 {offsets = [3, 1, 0], sizes = [1, 7, 32], strides = [1, 1, 1]} : vector<8x8x32xbf16> to vector<1x7x32xbf16>
    %137 = vector.shape_cast %136 : vector<1x7x32xbf16> to vector<7x32xbf16>
    %c24_71 = arith.constant 24 : index
    %c160_72 = arith.constant 160 : index
    %138 = vector.load %arg7[%c24_71, %c160_72] : memref<64x288xbf16, #tpu.memory_space<vmem>>, vector<7x32xbf16>
    tpu.vector_store %arg7[%c24_71, %c160_72], %137 {strides = array<i32>} : memref<64x288xbf16, #tpu.memory_space<vmem>>, vector<7x32xbf16>,
    %139 = vector.extract_strided_slice %13 {offsets = [4, 1, 0], sizes = [1, 7, 32], strides = [1, 1, 1]} : vector<8x8x32xbf16> to vector<1x7x32xbf16>
    %140 = vector.shape_cast %139 : vector<1x7x32xbf16> to vector<7x32xbf16>
    %c32_73 = arith.constant 32 : index
    %c160_74 = arith.constant 160 : index
    %141 = vector.load %arg7[%c32_73, %c160_74] : memref<64x288xbf16, #tpu.memory_space<vmem>>, vector<7x32xbf16>
    tpu.vector_store %arg7[%c32_73, %c160_74], %140 {strides = array<i32>} : memref<64x288xbf16, #tpu.memory_space<vmem>>, vector<7x32xbf16>,
    %142 = vector.extract_strided_slice %13 {offsets = [5, 1, 0], sizes = [1, 7, 32], strides = [1, 1, 1]} : vector<8x8x32xbf16> to vector<1x7x32xbf16>
    %143 = vector.shape_cast %142 : vector<1x7x32xbf16> to vector<7x32xbf16>
    %c40_75 = arith.constant 40 : index
    %c160_76 = arith.constant 160 : index
    %144 = vector.load %arg7[%c40_75, %c160_76] : memref<64x288xbf16, #tpu.memory_space<vmem>>, vector<7x32xbf16>
    tpu.vector_store %arg7[%c40_75, %c160_76], %143 {strides = array<i32>} : memref<64x288xbf16, #tpu.memory_space<vmem>>, vector<7x32xbf16>,
    %145 = vector.extract_strided_slice %13 {offsets = [6, 1, 0], sizes = [1, 7, 32], strides = [1, 1, 1]} : vector<8x8x32xbf16> to vector<1x7x32xbf16>
    %146 = vector.shape_cast %145 : vector<1x7x32xbf16> to vector<7x32xbf16>
    %c48_77 = arith.constant 48 : index
    %c160_78 = arith.constant 160 : index
    %147 = vector.load %arg7[%c48_77, %c160_78] : memref<64x288xbf16, #tpu.memory_space<vmem>>, vector<7x32xbf16>
    tpu.vector_store %arg7[%c48_77, %c160_78], %146 {strides = array<i32>} : memref<64x288xbf16, #tpu.memory_space<vmem>>, vector<7x32xbf16>,
    %148 = vector.extract_strided_slice %13 {offsets = [7, 1, 0], sizes = [1, 7, 32], strides = [1, 1, 1]} : vector<8x8x32xbf16> to vector<1x7x32xbf16>
    %149 = vector.shape_cast %148 : vector<1x7x32xbf16> to vector<7x32xbf16>
    %c56_79 = arith.constant 56 : index
    %c160_80 = arith.constant 160 : index
    %150 = vector.load %arg7[%c56_79, %c160_80] : memref<64x288xbf16, #tpu.memory_space<vmem>>, vector<7x32xbf16>
    tpu.vector_store %arg7[%c56_79, %c160_80], %149 {strides = array<i32>} : memref<64x288xbf16, #tpu.memory_space<vmem>>, vector<7x32xbf16>,
    %151 = vector.extract_strided_slice %13 {offsets = [1, 0, 0], sizes = [1, 7, 32], strides = [1, 1, 1]} : vector<8x8x32xbf16> to vector<1x7x32xbf16>
    %152 = vector.shape_cast %151 : vector<1x7x32xbf16> to vector<7x32xbf16>
    %c1_81 = arith.constant 1 : index
    %c192 = arith.constant 192 : index
    %153 = vector.load %arg7[%c1_81, %c192] : memref<64x288xbf16, #tpu.memory_space<vmem>>, vector<7x32xbf16>
    tpu.vector_store %arg7[%c1_81, %c192], %152 {strides = array<i32>} : memref<64x288xbf16, #tpu.memory_space<vmem>>, vector<7x32xbf16>,
    %154 = vector.extract_strided_slice %13 {offsets = [2, 0, 0], sizes = [1, 7, 32], strides = [1, 1, 1]} : vector<8x8x32xbf16> to vector<1x7x32xbf16>
    %155 = vector.shape_cast %154 : vector<1x7x32xbf16> to vector<7x32xbf16>
    %c9_82 = arith.constant 9 : index
    %c192_83 = arith.constant 192 : index
    %156 = vector.load %arg7[%c9_82, %c192_83] : memref<64x288xbf16, #tpu.memory_space<vmem>>, vector<7x32xbf16>
    tpu.vector_store %arg7[%c9_82, %c192_83], %155 {strides = array<i32>} : memref<64x288xbf16, #tpu.memory_space<vmem>>, vector<7x32xbf16>,
    %157 = vector.extract_strided_slice %13 {offsets = [3, 0, 0], sizes = [1, 7, 32], strides = [1, 1, 1]} : vector<8x8x32xbf16> to vector<1x7x32xbf16>
    %158 = vector.shape_cast %157 : vector<1x7x32xbf16> to vector<7x32xbf16>
    %c17_84 = arith.constant 17 : index
    %c192_85 = arith.constant 192 : index
    %159 = vector.load %arg7[%c17_84, %c192_85] : memref<64x288xbf16, #tpu.memory_space<vmem>>, vector<7x32xbf16>
    tpu.vector_store %arg7[%c17_84, %c192_85], %158 {strides = array<i32>} : memref<64x288xbf16, #tpu.memory_space<vmem>>, vector<7x32xbf16>,
    %160 = vector.extract_strided_slice %13 {offsets = [4, 0, 0], sizes = [1, 7, 32], strides = [1, 1, 1]} : vector<8x8x32xbf16> to vector<1x7x32xbf16>
    %161 = vector.shape_cast %160 : vector<1x7x32xbf16> to vector<7x32xbf16>
    %c25_86 = arith.constant 25 : index
    %c192_87 = arith.constant 192 : index
    %162 = vector.load %arg7[%c25_86, %c192_87] : memref<64x288xbf16, #tpu.memory_space<vmem>>, vector<7x32xbf16>
    tpu.vector_store %arg7[%c25_86, %c192_87], %161 {strides = array<i32>} : memref<64x288xbf16, #tpu.memory_space<vmem>>, vector<7x32xbf16>,
    %163 = vector.extract_strided_slice %13 {offsets = [5, 0, 0], sizes = [1, 7, 32], strides = [1, 1, 1]} : vector<8x8x32xbf16> to vector<1x7x32xbf16>
    %164 = vector.shape_cast %163 : vector<1x7x32xbf16> to vector<7x32xbf16>
    %c33_88 = arith.constant 33 : index
    %c192_89 = arith.constant 192 : index
    %165 = vector.load %arg7[%c33_88, %c192_89] : memref<64x288xbf16, #tpu.memory_space<vmem>>, vector<7x32xbf16>
    tpu.vector_store %arg7[%c33_88, %c192_89], %164 {strides = array<i32>} : memref<64x288xbf16, #tpu.memory_space<vmem>>, vector<7x32xbf16>,
    %166 = vector.extract_strided_slice %13 {offsets = [6, 0, 0], sizes = [1, 7, 32], strides = [1, 1, 1]} : vector<8x8x32xbf16> to vector<1x7x32xbf16>
    %167 = vector.shape_cast %166 : vector<1x7x32xbf16> to vector<7x32xbf16>
    %c41_90 = arith.constant 41 : index
    %c192_91 = arith.constant 192 : index
    %168 = vector.load %arg7[%c41_90, %c192_91] : memref<64x288xbf16, #tpu.memory_space<vmem>>, vector<7x32xbf16>
    tpu.vector_store %arg7[%c41_90, %c192_91], %167 {strides = array<i32>} : memref<64x288xbf16, #tpu.memory_space<vmem>>, vector<7x32xbf16>,
    %169 = vector.extract_strided_slice %13 {offsets = [7, 0, 0], sizes = [1, 7, 32], strides = [1, 1, 1]} : vector<8x8x32xbf16> to vector<1x7x32xbf16>
    %170 = vector.shape_cast %169 : vector<1x7x32xbf16> to vector<7x32xbf16>
    %c49_92 = arith.constant 49 : index
    %c192_93 = arith.constant 192 : index
    %171 = vector.load %arg7[%c49_92, %c192_93] : memref<64x288xbf16, #tpu.memory_space<vmem>>, vector<7x32xbf16>
    tpu.vector_store %arg7[%c49_92, %c192_93], %170 {strides = array<i32>} : memref<64x288xbf16, #tpu.memory_space<vmem>>, vector<7x32xbf16>,
    %172 = vector.extract_strided_slice %13 {offsets = [1, 0, 0], sizes = [1, 8, 32], strides = [1, 1, 1]} : vector<8x8x32xbf16> to vector<1x8x32xbf16>
    %173 = vector.shape_cast %172 : vector<1x8x32xbf16> to vector<8x32xbf16>
    %c0_94 = arith.constant 0 : index
    %c224 = arith.constant 224 : index
    %174 = vector.load %arg7[%c0_94, %c224] : memref<64x288xbf16, #tpu.memory_space<vmem>>, vector<8x32xbf16>
    tpu.vector_store %arg7[%c0_94, %c224], %173 {strides = array<i32>} : memref<64x288xbf16, #tpu.memory_space<vmem>>, vector<8x32xbf16>,
    %175 = vector.extract_strided_slice %13 {offsets = [2, 0, 0], sizes = [1, 8, 32], strides = [1, 1, 1]} : vector<8x8x32xbf16> to vector<1x8x32xbf16>
    %176 = vector.shape_cast %175 : vector<1x8x32xbf16> to vector<8x32xbf16>
    %c8_95 = arith.constant 8 : index
    %c224_96 = arith.constant 224 : index
    %177 = vector.load %arg7[%c8_95, %c224_96] : memref<64x288xbf16, #tpu.memory_space<vmem>>, vector<8x32xbf16>
    tpu.vector_store %arg7[%c8_95, %c224_96], %176 {strides = array<i32>} : memref<64x288xbf16, #tpu.memory_space<vmem>>, vector<8x32xbf16>,
    %178 = vector.extract_strided_slice %13 {offsets = [3, 0, 0], sizes = [1, 8, 32], strides = [1, 1, 1]} : vector<8x8x32xbf16> to vector<1x8x32xbf16>
    %179 = vector.shape_cast %178 : vector<1x8x32xbf16> to vector<8x32xbf16>
    %c16_97 = arith.constant 16 : index
    %c224_98 = arith.constant 224 : index
    %180 = vector.load %arg7[%c16_97, %c224_98] : memref<64x288xbf16, #tpu.memory_space<vmem>>, vector<8x32xbf16>
    tpu.vector_store %arg7[%c16_97, %c224_98], %179 {strides = array<i32>} : memref<64x288xbf16, #tpu.memory_space<vmem>>, vector<8x32xbf16>,
    %181 = vector.extract_strided_slice %13 {offsets = [4, 0, 0], sizes = [1, 8, 32], strides = [1, 1, 1]} : vector<8x8x32xbf16> to vector<1x8x32xbf16>
    %182 = vector.shape_cast %181 : vector<1x8x32xbf16> to vector<8x32xbf16>
    %c24_99 = arith.constant 24 : index
    %c224_100 = arith.constant 224 : index
    %183 = vector.load %arg7[%c24_99, %c224_100] : memref<64x288xbf16, #tpu.memory_space<vmem>>, vector<8x32xbf16>
    tpu.vector_store %arg7[%c24_99, %c224_100], %182 {strides = array<i32>} : memref<64x288xbf16, #tpu.memory_space<vmem>>, vector<8x32xbf16>,
    %184 = vector.extract_strided_slice %13 {offsets = [5, 0, 0], sizes = [1, 8, 32], strides = [1, 1, 1]} : vector<8x8x32xbf16> to vector<1x8x32xbf16>
    %185 = vector.shape_cast %184 : vector<1x8x32xbf16> to vector<8x32xbf16>
    %c32_101 = arith.constant 32 : index
    %c224_102 = arith.constant 224 : index
    %186 = vector.load %arg7[%c32_101, %c224_102] : memref<64x288xbf16, #tpu.memory_space<vmem>>, vector<8x32xbf16>
    tpu.vector_store %arg7[%c32_101, %c224_102], %185 {strides = array<i32>} : memref<64x288xbf16, #tpu.memory_space<vmem>>, vector<8x32xbf16>,
    %187 = vector.extract_strided_slice %13 {offsets = [6, 0, 0], sizes = [1, 8, 32], strides = [1, 1, 1]} : vector<8x8x32xbf16> to vector<1x8x32xbf16>
    %188 = vector.shape_cast %187 : vector<1x8x32xbf16> to vector<8x32xbf16>
    %c40_103 = arith.constant 40 : index
    %c224_104 = arith.constant 224 : index
    %189 = vector.load %arg7[%c40_103, %c224_104] : memref<64x288xbf16, #tpu.memory_space<vmem>>, vector<8x32xbf16>
    tpu.vector_store %arg7[%c40_103, %c224_104], %188 {strides = array<i32>} : memref<64x288xbf16, #tpu.memory_space<vmem>>, vector<8x32xbf16>,
    %190 = vector.extract_strided_slice %13 {offsets = [7, 0, 0], sizes = [1, 8, 32], strides = [1, 1, 1]} : vector<8x8x32xbf16> to vector<1x8x32xbf16>
    %191 = vector.shape_cast %190 : vector<1x8x32xbf16> to vector<8x32xbf16>
    %c48_105 = arith.constant 48 : index
    %c224_106 = arith.constant 224 : index
    %192 = vector.load %arg7[%c48_105, %c224_106] : memref<64x288xbf16, #tpu.memory_space<vmem>>, vector<8x32xbf16>
    tpu.vector_store %arg7[%c48_105, %c224_106], %191 {strides = array<i32>} : memref<64x288xbf16, #tpu.memory_space<vmem>>, vector<8x32xbf16>,
    %193 = vector.extract_strided_slice %13 {offsets = [1, 1, 0], sizes = [1, 7, 32], strides = [1, 1, 1]} : vector<8x8x32xbf16> to vector<1x7x32xbf16>
    %194 = vector.shape_cast %193 : vector<1x7x32xbf16> to vector<7x32xbf16>
    %c0_107 = arith.constant 0 : index
    %c256 = arith.constant 256 : index
    %195 = vector.load %arg7[%c0_107, %c256] : memref<64x288xbf16, #tpu.memory_space<vmem>>, vector<7x32xbf16>
    tpu.vector_store %arg7[%c0_107, %c256], %194 {strides = array<i32>} : memref<64x288xbf16, #tpu.memory_space<vmem>>, vector<7x32xbf16>,
    %196 = vector.extract_strided_slice %13 {offsets = [2, 1, 0], sizes = [1, 7, 32], strides = [1, 1, 1]} : vector<8x8x32xbf16> to vector<1x7x32xbf16>
    %197 = vector.shape_cast %196 : vector<1x7x32xbf16> to vector<7x32xbf16>
    %c8_108 = arith.constant 8 : index
    %c256_109 = arith.constant 256 : index
    %198 = vector.load %arg7[%c8_108, %c256_109] : memref<64x288xbf16, #tpu.memory_space<vmem>>, vector<7x32xbf16>
    tpu.vector_store %arg7[%c8_108, %c256_109], %197 {strides = array<i32>} : memref<64x288xbf16, #tpu.memory_space<vmem>>, vector<7x32xbf16>,
    %199 = vector.extract_strided_slice %13 {offsets = [3, 1, 0], sizes = [1, 7, 32], strides = [1, 1, 1]} : vector<8x8x32xbf16> to vector<1x7x32xbf16>
    %200 = vector.shape_cast %199 : vector<1x7x32xbf16> to vector<7x32xbf16>
    %c16_110 = arith.constant 16 : index
    %c256_111 = arith.constant 256 : index
    %201 = vector.load %arg7[%c16_110, %c256_111] : memref<64x288xbf16, #tpu.memory_space<vmem>>, vector<7x32xbf16>
    tpu.vector_store %arg7[%c16_110, %c256_111], %200 {strides = array<i32>} : memref<64x288xbf16, #tpu.memory_space<vmem>>, vector<7x32xbf16>,
    %202 = vector.extract_strided_slice %13 {offsets = [4, 1, 0], sizes = [1, 7, 32], strides = [1, 1, 1]} : vector<8x8x32xbf16> to vector<1x7x32xbf16>
    %203 = vector.shape_cast %202 : vector<1x7x32xbf16> to vector<7x32xbf16>
    %c24_112 = arith.constant 24 : index
    %c256_113 = arith.constant 256 : index
    %204 = vector.load %arg7[%c24_112, %c256_113] : memref<64x288xbf16, #tpu.memory_space<vmem>>, vector<7x32xbf16>
    tpu.vector_store %arg7[%c24_112, %c256_113], %203 {strides = array<i32>} : memref<64x288xbf16, #tpu.memory_space<vmem>>, vector<7x32xbf16>,
    %205 = vector.extract_strided_slice %13 {offsets = [5, 1, 0], sizes = [1, 7, 32], strides = [1, 1, 1]} : vector<8x8x32xbf16> to vector<1x7x32xbf16>
    %206 = vector.shape_cast %205 : vector<1x7x32xbf16> to vector<7x32xbf16>
    %c32_114 = arith.constant 32 : index
    %c256_115 = arith.constant 256 : index
    %207 = vector.load %arg7[%c32_114, %c256_115] : memref<64x288xbf16, #tpu.memory_space<vmem>>, vector<7x32xbf16>
    tpu.vector_store %arg7[%c32_114, %c256_115], %206 {strides = array<i32>} : memref<64x288xbf16, #tpu.memory_space<vmem>>, vector<7x32xbf16>,
    %208 = vector.extract_strided_slice %13 {offsets = [6, 1, 0], sizes = [1, 7, 32], strides = [1, 1, 1]} : vector<8x8x32xbf16> to vector<1x7x32xbf16>
    %209 = vector.shape_cast %208 : vector<1x7x32xbf16> to vector<7x32xbf16>
    %c40_116 = arith.constant 40 : index
    %c256_117 = arith.constant 256 : index
    %210 = vector.load %arg7[%c40_116, %c256_117] : memref<64x288xbf16, #tpu.memory_space<vmem>>, vector<7x32xbf16>
    tpu.vector_store %arg7[%c40_116, %c256_117], %209 {strides = array<i32>} : memref<64x288xbf16, #tpu.memory_space<vmem>>, vector<7x32xbf16>,
    %211 = vector.extract_strided_slice %13 {offsets = [7, 1, 0], sizes = [1, 7, 32], strides = [1, 1, 1]} : vector<8x8x32xbf16> to vector<1x7x32xbf16>
    %212 = vector.shape_cast %211 : vector<1x7x32xbf16> to vector<7x32xbf16>
    %c48_118 = arith.constant 48 : index
    %c256_119 = arith.constant 256 : index
    %213 = vector.load %arg7[%c48_118, %c256_119] : memref<64x288xbf16, #tpu.memory_space<vmem>>, vector<7x32xbf16>
    tpu.vector_store %arg7[%c48_118, %c256_119], %212 {strides = array<i32>} : memref<64x288xbf16, #tpu.memory_space<vmem>>, vector<7x32xbf16>,
    %c0_120 = arith.constant 0 : index
    %c0_121 = arith.constant 0 : index
    %214 = vector.load %arg7[%c0_120, %c0_121] : memref<64x288xbf16, #tpu.memory_space<vmem>>, vector<64x288xbf16>
    %c0_122 = arith.constant 0 : index
    %c0_123 = arith.constant 0 : index
    %215 = vector.load %arg4[%c0_122, %c0_123] : memref<288x128xbf16, #tpu.memory_space<vmem>>, vector<288x128xbf16>
    %cst_124 = arith.constant dense<0.000000e+00> : vector<64x128xf32>
    %216 = tpu.matmul %214, %215, %cst_124 {dimension_numbers = #tpu.dot_dimension_numbers<[1], [0], [0], [1], [0, 0, 1, 1], [], []>} : vector<64x288xbf16>, vector<288x128xbf16>, vector<64x128xf32> -> vector<64x128xf32>
    %217 = arith.truncf %216 : vector<64x128xf32> to vector<64x128xbf16>
    %c0_125 = arith.constant 0 : index
    %c0_126 = arith.constant 0 : index
    %c0_127 = arith.constant 0 : index
    %218 = vector.load %arg5[%c0_125, %c0_126, %c0_127] : memref<1x64x128xbf16, #tpu.memory_space<vmem>>, vector<1x64x128xbf16>
    %219 = vector.shape_cast %218 : vector<1x64x128xbf16> to vector<64x128xbf16>
    %220 = vector.shape_cast %217 : vector<64x128xbf16> to vector<1x64x128xbf16>
    tpu.vector_store %arg5[%c0_125, %c0_126, %c0_127], %220 {strides = array<i32>} : memref<1x64x128xbf16, #tpu.memory_space<vmem>>, vector<1x64x128xbf16>,
    %cst_128 = arith.constant dense<0.000000e+00> : vector<128xf32>
    %221 = vector.multi_reduction <add>, %216, %cst_128 [0] : vector<64x128xf32> to vector<128xf32>
    %222 = vector.shape_cast %221 : vector<128xf32> to vector<1x128xf32>
    %c0_129 = arith.constant 0 : index
    %c0_130 = arith.constant 0 : index
    %c0_131 = arith.constant 0 : index
    %223 = vector.load %arg6[%c0_129, %c0_130, %c0_131] : memref<1x2x128xf32, #tpu.memory_space<vmem>>, vector<1x1x128xf32>
    %224 = vector.shape_cast %223 : vector<1x1x128xf32> to vector<1x128xf32>
    %225 = vector.shape_cast %222 : vector<1x128xf32> to vector<1x1x128xf32>
    tpu.vector_store %arg6[%c0_129, %c0_130, %c0_131], %225 {strides = array<i32>} : memref<1x2x128xf32, #tpu.memory_space<vmem>>, vector<1x1x128xf32>,
    %226 = arith.mulf %216, %216 : vector<64x128xf32>
    %cst_132 = arith.constant dense<0.000000e+00> : vector<128xf32>
    %227 = vector.multi_reduction <add>, %226, %cst_132 [0] : vector<64x128xf32> to vector<128xf32>
    %228 = vector.shape_cast %227 : vector<128xf32> to vector<1x128xf32>
    %c0_133 = arith.constant 0 : index
    %c1_134 = arith.constant 1 : index
    %c0_135 = arith.constant 0 : index
    %229 = vector.load %arg6[%c0_133, %c1_134, %c0_135] : memref<1x2x128xf32, #tpu.memory_space<vmem>>, vector<1x1x128xf32>
    %230 = vector.shape_cast %229 : vector<1x1x128xf32> to vector<1x128xf32>
    %231 = vector.shape_cast %228 : vector<1x128xf32> to vector<1x1x128xf32>
    tpu.vector_store %arg6[%c0_133, %c1_134, %c0_135], %231 {strides = array<i32>} : memref<1x2x128xf32, #tpu.memory_space<vmem>>, vector<1x1x128xf32>,
    return
  }
  func.func @transform_0(%arg0: i32) -> (i32, i32, i32, i32) {
    %c0_i32 = arith.constant 0 : i32
    %c0_i32_0 = arith.constant 0 : i32
    %c0_i32_1 = arith.constant 0 : i32
    %c0_i32_2 = arith.constant 0 : i32
    return %arg0, %c0_i32, %c0_i32_0, %c0_i32_1 : i32, i32, i32, i32
  }
  func.func @transform_1(%arg0: i32) -> (i32, i32) {
    %c0_i32 = arith.constant 0 : i32
    %c0_i32_0 = arith.constant 0 : i32
    %c0_i32_1 = arith.constant 0 : i32
    return %c0_i32, %c0_i32_0 : i32, i32
  }
  func.func @transform_2(%arg0: i32) -> (i32, i32) {
    %c0_i32 = arith.constant 0 : i32
    %c0_i32_0 = arith.constant 0 : i32
    %c0_i32_1 = arith.constant 0 : i32
    return %c0_i32, %c0_i32_0 : i32, i32
  }
  func.func @transform_3(%arg0: i32) -> (i32, i32) {
    %c0_i32 = arith.constant 0 : i32
    %c0_i32_0 = arith.constant 0 : i32
    %c0_i32_1 = arith.constant 0 : i32
    return %c0_i32, %c0_i32_0 : i32, i32
  }
  func.func @transform_4(%arg0: i32) -> (i32, i32, i32) {
    %c0_i32 = arith.constant 0 : i32
    %c0_i32_0 = arith.constant 0 : i32
    %c0_i32_1 = arith.constant 0 : i32
    return %arg0, %c0_i32, %c0_i32_0 : i32, i32, i32
  }
  func.func @transform_5(%arg0: i32) -> (i32, i32, i32) {
    %c0_i32 = arith.constant 0 : i32
    %c0_i32_0 = arith.constant 0 : i32
    %c0_i32_1 = arith.constant 0 : i32
    return %arg0, %c0_i32, %c0_i32_0 : i32, i32, i32
  }
}

module attributes {stable_mosaic.version = 11 : i64} {
  func.func @_deconv_kernel(%arg0: i32, %arg1: memref<1x16x16x16xbf16, #tpu.memory_space<vmem>>, %arg2: memref<1x16xf32, #tpu.memory_space<vmem>>, %arg3: memref<1x16xf32, #tpu.memory_space<vmem>>, %arg4: memref<144x128xbf16, #tpu.memory_space<vmem>>, %arg5: memref<1x128xf32, #tpu.memory_space<vmem>>, %arg6: memref<1x256x128xf32, #tpu.memory_space<vmem>>, %arg7: memref<1x2x128xf32, #tpu.memory_space<vmem>>, %arg8: memref<256x144xbf16, #tpu.memory_space<vmem>>) attributes {dimension_semantics = [#tpu.dimension_semantics<parallel>], iteration_bounds = array<i64: 2>, scalar_prefetch = 0 : i64, scratch_operands = 1 : i64, tpu.core_type = #tpu.core_type<tc>, window_params = [{transform_indices = @transform_0, window_bounds = array<i64: 1, 16, 16, 16>}, {pipeline_mode = #tpu.pipeline_mode<synchronous>, transform_indices = @transform_1, window_bounds = array<i64: 1, 16>}, {pipeline_mode = #tpu.pipeline_mode<synchronous>, transform_indices = @transform_2, window_bounds = array<i64: 1, 16>}, {pipeline_mode = #tpu.pipeline_mode<synchronous>, transform_indices = @transform_3, window_bounds = array<i64: 144, 128>}, {pipeline_mode = #tpu.pipeline_mode<synchronous>, transform_indices = @transform_4, window_bounds = array<i64: 1, 128>}, {transform_indices = @transform_5, window_bounds = array<i64: 1, 256, 128>}, {transform_indices = @transform_6, window_bounds = array<i64: 1, 2, 128>}]} {
    %c0 = arith.constant 0 : index
    %c0_0 = arith.constant 0 : index
    %c0_1 = arith.constant 0 : index
    %c0_2 = arith.constant 0 : index
    %0 = vector.load %arg1[%c0, %c0_0, %c0_1, %c0_2] : memref<1x16x16x16xbf16, #tpu.memory_space<vmem>>, vector<1x16x16x16xbf16>
    %1 = vector.shape_cast %0 : vector<1x16x16x16xbf16> to vector<16x16x16xbf16>
    %2 = arith.extf %1 : vector<16x16x16xbf16> to vector<16x16x16xf32>
    %c0_3 = arith.constant 0 : index
    %c0_4 = arith.constant 0 : index
    %3 = vector.load %arg2[%c0_3, %c0_4] : memref<1x16xf32, #tpu.memory_space<vmem>>, vector<1x16xf32>
    %4 = vector.shape_cast %3 : vector<1x16xf32> to vector<1x1x16xf32>
    %5 = vector.broadcast %4 : vector<1x1x16xf32> to vector<16x16x16xf32>
    %6 = arith.mulf %2, %5 : vector<16x16x16xf32>
    %c0_5 = arith.constant 0 : index
    %c0_6 = arith.constant 0 : index
    %7 = vector.load %arg3[%c0_5, %c0_6] : memref<1x16xf32, #tpu.memory_space<vmem>>, vector<1x16xf32>
    %8 = vector.shape_cast %7 : vector<1x16xf32> to vector<1x1x16xf32>
    %9 = vector.broadcast %8 : vector<1x1x16xf32> to vector<16x16x16xf32>
    %10 = arith.addf %6, %9 : vector<16x16x16xf32>
    %cst = arith.constant 0.000000e+00 : f32
    %11 = vector.broadcast %cst : f32 to vector<16x16x16xf32>
    %12 = arith.maximumf %10, %11 : vector<16x16x16xf32>
    %13 = arith.truncf %12 : vector<16x16x16xf32> to vector<16x16x16xbf16>
    %cst_7 = arith.constant 0.000000e+00 : bf16
    %14 = vector.broadcast %cst_7 : bf16 to vector<256x144xbf16>
    %c0_8 = arith.constant 0 : index
    %c0_9 = arith.constant 0 : index
    %15 = vector.load %arg8[%c0_8, %c0_9] : memref<256x144xbf16, #tpu.memory_space<vmem>>, vector<256x144xbf16>
    tpu.vector_store %arg8[%c0_8, %c0_9], %14 {strides = array<i32>} : memref<256x144xbf16, #tpu.memory_space<vmem>>, vector<256x144xbf16>,
    %16 = vector.extract_strided_slice %13 {offsets = [0, 0, 0], sizes = [1, 15, 16], strides = [1, 1, 1]} : vector<16x16x16xbf16> to vector<1x15x16xbf16>
    %17 = vector.shape_cast %16 : vector<1x15x16xbf16> to vector<15x16xbf16>
    %c17 = arith.constant 17 : index
    %c0_10 = arith.constant 0 : index
    %18 = vector.load %arg8[%c17, %c0_10] : memref<256x144xbf16, #tpu.memory_space<vmem>>, vector<15x16xbf16>
    tpu.vector_store %arg8[%c17, %c0_10], %17 {strides = array<i32>} : memref<256x144xbf16, #tpu.memory_space<vmem>>, vector<15x16xbf16>,
    %19 = vector.extract_strided_slice %13 {offsets = [1, 0, 0], sizes = [1, 15, 16], strides = [1, 1, 1]} : vector<16x16x16xbf16> to vector<1x15x16xbf16>
    %20 = vector.shape_cast %19 : vector<1x15x16xbf16> to vector<15x16xbf16>
    %c33 = arith.constant 33 : index
    %c0_11 = arith.constant 0 : index
    %21 = vector.load %arg8[%c33, %c0_11] : memref<256x144xbf16, #tpu.memory_space<vmem>>, vector<15x16xbf16>
    tpu.vector_store %arg8[%c33, %c0_11], %20 {strides = array<i32>} : memref<256x144xbf16, #tpu.memory_space<vmem>>, vector<15x16xbf16>,
    %22 = vector.extract_strided_slice %13 {offsets = [2, 0, 0], sizes = [1, 15, 16], strides = [1, 1, 1]} : vector<16x16x16xbf16> to vector<1x15x16xbf16>
    %23 = vector.shape_cast %22 : vector<1x15x16xbf16> to vector<15x16xbf16>
    %c49 = arith.constant 49 : index
    %c0_12 = arith.constant 0 : index
    %24 = vector.load %arg8[%c49, %c0_12] : memref<256x144xbf16, #tpu.memory_space<vmem>>, vector<15x16xbf16>
    tpu.vector_store %arg8[%c49, %c0_12], %23 {strides = array<i32>} : memref<256x144xbf16, #tpu.memory_space<vmem>>, vector<15x16xbf16>,
    %25 = vector.extract_strided_slice %13 {offsets = [3, 0, 0], sizes = [1, 15, 16], strides = [1, 1, 1]} : vector<16x16x16xbf16> to vector<1x15x16xbf16>
    %26 = vector.shape_cast %25 : vector<1x15x16xbf16> to vector<15x16xbf16>
    %c65 = arith.constant 65 : index
    %c0_13 = arith.constant 0 : index
    %27 = vector.load %arg8[%c65, %c0_13] : memref<256x144xbf16, #tpu.memory_space<vmem>>, vector<15x16xbf16>
    tpu.vector_store %arg8[%c65, %c0_13], %26 {strides = array<i32>} : memref<256x144xbf16, #tpu.memory_space<vmem>>, vector<15x16xbf16>,
    %28 = vector.extract_strided_slice %13 {offsets = [4, 0, 0], sizes = [1, 15, 16], strides = [1, 1, 1]} : vector<16x16x16xbf16> to vector<1x15x16xbf16>
    %29 = vector.shape_cast %28 : vector<1x15x16xbf16> to vector<15x16xbf16>
    %c81 = arith.constant 81 : index
    %c0_14 = arith.constant 0 : index
    %30 = vector.load %arg8[%c81, %c0_14] : memref<256x144xbf16, #tpu.memory_space<vmem>>, vector<15x16xbf16>
    tpu.vector_store %arg8[%c81, %c0_14], %29 {strides = array<i32>} : memref<256x144xbf16, #tpu.memory_space<vmem>>, vector<15x16xbf16>,
    %31 = vector.extract_strided_slice %13 {offsets = [5, 0, 0], sizes = [1, 15, 16], strides = [1, 1, 1]} : vector<16x16x16xbf16> to vector<1x15x16xbf16>
    %32 = vector.shape_cast %31 : vector<1x15x16xbf16> to vector<15x16xbf16>
    %c97 = arith.constant 97 : index
    %c0_15 = arith.constant 0 : index
    %33 = vector.load %arg8[%c97, %c0_15] : memref<256x144xbf16, #tpu.memory_space<vmem>>, vector<15x16xbf16>
    tpu.vector_store %arg8[%c97, %c0_15], %32 {strides = array<i32>} : memref<256x144xbf16, #tpu.memory_space<vmem>>, vector<15x16xbf16>,
    %34 = vector.extract_strided_slice %13 {offsets = [6, 0, 0], sizes = [1, 15, 16], strides = [1, 1, 1]} : vector<16x16x16xbf16> to vector<1x15x16xbf16>
    %35 = vector.shape_cast %34 : vector<1x15x16xbf16> to vector<15x16xbf16>
    %c113 = arith.constant 113 : index
    %c0_16 = arith.constant 0 : index
    %36 = vector.load %arg8[%c113, %c0_16] : memref<256x144xbf16, #tpu.memory_space<vmem>>, vector<15x16xbf16>
    tpu.vector_store %arg8[%c113, %c0_16], %35 {strides = array<i32>} : memref<256x144xbf16, #tpu.memory_space<vmem>>, vector<15x16xbf16>,
    %37 = vector.extract_strided_slice %13 {offsets = [7, 0, 0], sizes = [1, 15, 16], strides = [1, 1, 1]} : vector<16x16x16xbf16> to vector<1x15x16xbf16>
    %38 = vector.shape_cast %37 : vector<1x15x16xbf16> to vector<15x16xbf16>
    %c129 = arith.constant 129 : index
    %c0_17 = arith.constant 0 : index
    %39 = vector.load %arg8[%c129, %c0_17] : memref<256x144xbf16, #tpu.memory_space<vmem>>, vector<15x16xbf16>
    tpu.vector_store %arg8[%c129, %c0_17], %38 {strides = array<i32>} : memref<256x144xbf16, #tpu.memory_space<vmem>>, vector<15x16xbf16>,
    %40 = vector.extract_strided_slice %13 {offsets = [8, 0, 0], sizes = [1, 15, 16], strides = [1, 1, 1]} : vector<16x16x16xbf16> to vector<1x15x16xbf16>
    %41 = vector.shape_cast %40 : vector<1x15x16xbf16> to vector<15x16xbf16>
    %c145 = arith.constant 145 : index
    %c0_18 = arith.constant 0 : index
    %42 = vector.load %arg8[%c145, %c0_18] : memref<256x144xbf16, #tpu.memory_space<vmem>>, vector<15x16xbf16>
    tpu.vector_store %arg8[%c145, %c0_18], %41 {strides = array<i32>} : memref<256x144xbf16, #tpu.memory_space<vmem>>, vector<15x16xbf16>,
    %43 = vector.extract_strided_slice %13 {offsets = [9, 0, 0], sizes = [1, 15, 16], strides = [1, 1, 1]} : vector<16x16x16xbf16> to vector<1x15x16xbf16>
    %44 = vector.shape_cast %43 : vector<1x15x16xbf16> to vector<15x16xbf16>
    %c161 = arith.constant 161 : index
    %c0_19 = arith.constant 0 : index
    %45 = vector.load %arg8[%c161, %c0_19] : memref<256x144xbf16, #tpu.memory_space<vmem>>, vector<15x16xbf16>
    tpu.vector_store %arg8[%c161, %c0_19], %44 {strides = array<i32>} : memref<256x144xbf16, #tpu.memory_space<vmem>>, vector<15x16xbf16>,
    %46 = vector.extract_strided_slice %13 {offsets = [10, 0, 0], sizes = [1, 15, 16], strides = [1, 1, 1]} : vector<16x16x16xbf16> to vector<1x15x16xbf16>
    %47 = vector.shape_cast %46 : vector<1x15x16xbf16> to vector<15x16xbf16>
    %c177 = arith.constant 177 : index
    %c0_20 = arith.constant 0 : index
    %48 = vector.load %arg8[%c177, %c0_20] : memref<256x144xbf16, #tpu.memory_space<vmem>>, vector<15x16xbf16>
    tpu.vector_store %arg8[%c177, %c0_20], %47 {strides = array<i32>} : memref<256x144xbf16, #tpu.memory_space<vmem>>, vector<15x16xbf16>,
    %49 = vector.extract_strided_slice %13 {offsets = [11, 0, 0], sizes = [1, 15, 16], strides = [1, 1, 1]} : vector<16x16x16xbf16> to vector<1x15x16xbf16>
    %50 = vector.shape_cast %49 : vector<1x15x16xbf16> to vector<15x16xbf16>
    %c193 = arith.constant 193 : index
    %c0_21 = arith.constant 0 : index
    %51 = vector.load %arg8[%c193, %c0_21] : memref<256x144xbf16, #tpu.memory_space<vmem>>, vector<15x16xbf16>
    tpu.vector_store %arg8[%c193, %c0_21], %50 {strides = array<i32>} : memref<256x144xbf16, #tpu.memory_space<vmem>>, vector<15x16xbf16>,
    %52 = vector.extract_strided_slice %13 {offsets = [12, 0, 0], sizes = [1, 15, 16], strides = [1, 1, 1]} : vector<16x16x16xbf16> to vector<1x15x16xbf16>
    %53 = vector.shape_cast %52 : vector<1x15x16xbf16> to vector<15x16xbf16>
    %c209 = arith.constant 209 : index
    %c0_22 = arith.constant 0 : index
    %54 = vector.load %arg8[%c209, %c0_22] : memref<256x144xbf16, #tpu.memory_space<vmem>>, vector<15x16xbf16>
    tpu.vector_store %arg8[%c209, %c0_22], %53 {strides = array<i32>} : memref<256x144xbf16, #tpu.memory_space<vmem>>, vector<15x16xbf16>,
    %55 = vector.extract_strided_slice %13 {offsets = [13, 0, 0], sizes = [1, 15, 16], strides = [1, 1, 1]} : vector<16x16x16xbf16> to vector<1x15x16xbf16>
    %56 = vector.shape_cast %55 : vector<1x15x16xbf16> to vector<15x16xbf16>
    %c225 = arith.constant 225 : index
    %c0_23 = arith.constant 0 : index
    %57 = vector.load %arg8[%c225, %c0_23] : memref<256x144xbf16, #tpu.memory_space<vmem>>, vector<15x16xbf16>
    tpu.vector_store %arg8[%c225, %c0_23], %56 {strides = array<i32>} : memref<256x144xbf16, #tpu.memory_space<vmem>>, vector<15x16xbf16>,
    %58 = vector.extract_strided_slice %13 {offsets = [14, 0, 0], sizes = [1, 15, 16], strides = [1, 1, 1]} : vector<16x16x16xbf16> to vector<1x15x16xbf16>
    %59 = vector.shape_cast %58 : vector<1x15x16xbf16> to vector<15x16xbf16>
    %c241 = arith.constant 241 : index
    %c0_24 = arith.constant 0 : index
    %60 = vector.load %arg8[%c241, %c0_24] : memref<256x144xbf16, #tpu.memory_space<vmem>>, vector<15x16xbf16>
    tpu.vector_store %arg8[%c241, %c0_24], %59 {strides = array<i32>} : memref<256x144xbf16, #tpu.memory_space<vmem>>, vector<15x16xbf16>,
    %61 = vector.extract_strided_slice %13 {offsets = [0, 0, 0], sizes = [1, 16, 16], strides = [1, 1, 1]} : vector<16x16x16xbf16> to vector<1x16x16xbf16>
    %62 = vector.shape_cast %61 : vector<1x16x16xbf16> to vector<16x16xbf16>
    %c16 = arith.constant 16 : index
    %c16_25 = arith.constant 16 : index
    %63 = vector.load %arg8[%c16, %c16_25] : memref<256x144xbf16, #tpu.memory_space<vmem>>, vector<16x16xbf16>
    tpu.vector_store %arg8[%c16, %c16_25], %62 {strides = array<i32>} : memref<256x144xbf16, #tpu.memory_space<vmem>>, vector<16x16xbf16>,
    %64 = vector.extract_strided_slice %13 {offsets = [1, 0, 0], sizes = [1, 16, 16], strides = [1, 1, 1]} : vector<16x16x16xbf16> to vector<1x16x16xbf16>
    %65 = vector.shape_cast %64 : vector<1x16x16xbf16> to vector<16x16xbf16>
    %c32 = arith.constant 32 : index
    %c16_26 = arith.constant 16 : index
    %66 = vector.load %arg8[%c32, %c16_26] : memref<256x144xbf16, #tpu.memory_space<vmem>>, vector<16x16xbf16>
    tpu.vector_store %arg8[%c32, %c16_26], %65 {strides = array<i32>} : memref<256x144xbf16, #tpu.memory_space<vmem>>, vector<16x16xbf16>,
    %67 = vector.extract_strided_slice %13 {offsets = [2, 0, 0], sizes = [1, 16, 16], strides = [1, 1, 1]} : vector<16x16x16xbf16> to vector<1x16x16xbf16>
    %68 = vector.shape_cast %67 : vector<1x16x16xbf16> to vector<16x16xbf16>
    %c48 = arith.constant 48 : index
    %c16_27 = arith.constant 16 : index
    %69 = vector.load %arg8[%c48, %c16_27] : memref<256x144xbf16, #tpu.memory_space<vmem>>, vector<16x16xbf16>
    tpu.vector_store %arg8[%c48, %c16_27], %68 {strides = array<i32>} : memref<256x144xbf16, #tpu.memory_space<vmem>>, vector<16x16xbf16>,
    %70 = vector.extract_strided_slice %13 {offsets = [3, 0, 0], sizes = [1, 16, 16], strides = [1, 1, 1]} : vector<16x16x16xbf16> to vector<1x16x16xbf16>
    %71 = vector.shape_cast %70 : vector<1x16x16xbf16> to vector<16x16xbf16>
    %c64 = arith.constant 64 : index
    %c16_28 = arith.constant 16 : index
    %72 = vector.load %arg8[%c64, %c16_28] : memref<256x144xbf16, #tpu.memory_space<vmem>>, vector<16x16xbf16>
    tpu.vector_store %arg8[%c64, %c16_28], %71 {strides = array<i32>} : memref<256x144xbf16, #tpu.memory_space<vmem>>, vector<16x16xbf16>,
    %73 = vector.extract_strided_slice %13 {offsets = [4, 0, 0], sizes = [1, 16, 16], strides = [1, 1, 1]} : vector<16x16x16xbf16> to vector<1x16x16xbf16>
    %74 = vector.shape_cast %73 : vector<1x16x16xbf16> to vector<16x16xbf16>
    %c80 = arith.constant 80 : index
    %c16_29 = arith.constant 16 : index
    %75 = vector.load %arg8[%c80, %c16_29] : memref<256x144xbf16, #tpu.memory_space<vmem>>, vector<16x16xbf16>
    tpu.vector_store %arg8[%c80, %c16_29], %74 {strides = array<i32>} : memref<256x144xbf16, #tpu.memory_space<vmem>>, vector<16x16xbf16>,
    %76 = vector.extract_strided_slice %13 {offsets = [5, 0, 0], sizes = [1, 16, 16], strides = [1, 1, 1]} : vector<16x16x16xbf16> to vector<1x16x16xbf16>
    %77 = vector.shape_cast %76 : vector<1x16x16xbf16> to vector<16x16xbf16>
    %c96 = arith.constant 96 : index
    %c16_30 = arith.constant 16 : index
    %78 = vector.load %arg8[%c96, %c16_30] : memref<256x144xbf16, #tpu.memory_space<vmem>>, vector<16x16xbf16>
    tpu.vector_store %arg8[%c96, %c16_30], %77 {strides = array<i32>} : memref<256x144xbf16, #tpu.memory_space<vmem>>, vector<16x16xbf16>,
    %79 = vector.extract_strided_slice %13 {offsets = [6, 0, 0], sizes = [1, 16, 16], strides = [1, 1, 1]} : vector<16x16x16xbf16> to vector<1x16x16xbf16>
    %80 = vector.shape_cast %79 : vector<1x16x16xbf16> to vector<16x16xbf16>
    %c112 = arith.constant 112 : index
    %c16_31 = arith.constant 16 : index
    %81 = vector.load %arg8[%c112, %c16_31] : memref<256x144xbf16, #tpu.memory_space<vmem>>, vector<16x16xbf16>
    tpu.vector_store %arg8[%c112, %c16_31], %80 {strides = array<i32>} : memref<256x144xbf16, #tpu.memory_space<vmem>>, vector<16x16xbf16>,
    %82 = vector.extract_strided_slice %13 {offsets = [7, 0, 0], sizes = [1, 16, 16], strides = [1, 1, 1]} : vector<16x16x16xbf16> to vector<1x16x16xbf16>
    %83 = vector.shape_cast %82 : vector<1x16x16xbf16> to vector<16x16xbf16>
    %c128 = arith.constant 128 : index
    %c16_32 = arith.constant 16 : index
    %84 = vector.load %arg8[%c128, %c16_32] : memref<256x144xbf16, #tpu.memory_space<vmem>>, vector<16x16xbf16>
    tpu.vector_store %arg8[%c128, %c16_32], %83 {strides = array<i32>} : memref<256x144xbf16, #tpu.memory_space<vmem>>, vector<16x16xbf16>,
    %85 = vector.extract_strided_slice %13 {offsets = [8, 0, 0], sizes = [1, 16, 16], strides = [1, 1, 1]} : vector<16x16x16xbf16> to vector<1x16x16xbf16>
    %86 = vector.shape_cast %85 : vector<1x16x16xbf16> to vector<16x16xbf16>
    %c144 = arith.constant 144 : index
    %c16_33 = arith.constant 16 : index
    %87 = vector.load %arg8[%c144, %c16_33] : memref<256x144xbf16, #tpu.memory_space<vmem>>, vector<16x16xbf16>
    tpu.vector_store %arg8[%c144, %c16_33], %86 {strides = array<i32>} : memref<256x144xbf16, #tpu.memory_space<vmem>>, vector<16x16xbf16>,
    %88 = vector.extract_strided_slice %13 {offsets = [9, 0, 0], sizes = [1, 16, 16], strides = [1, 1, 1]} : vector<16x16x16xbf16> to vector<1x16x16xbf16>
    %89 = vector.shape_cast %88 : vector<1x16x16xbf16> to vector<16x16xbf16>
    %c160 = arith.constant 160 : index
    %c16_34 = arith.constant 16 : index
    %90 = vector.load %arg8[%c160, %c16_34] : memref<256x144xbf16, #tpu.memory_space<vmem>>, vector<16x16xbf16>
    tpu.vector_store %arg8[%c160, %c16_34], %89 {strides = array<i32>} : memref<256x144xbf16, #tpu.memory_space<vmem>>, vector<16x16xbf16>,
    %91 = vector.extract_strided_slice %13 {offsets = [10, 0, 0], sizes = [1, 16, 16], strides = [1, 1, 1]} : vector<16x16x16xbf16> to vector<1x16x16xbf16>
    %92 = vector.shape_cast %91 : vector<1x16x16xbf16> to vector<16x16xbf16>
    %c176 = arith.constant 176 : index
    %c16_35 = arith.constant 16 : index
    %93 = vector.load %arg8[%c176, %c16_35] : memref<256x144xbf16, #tpu.memory_space<vmem>>, vector<16x16xbf16>
    tpu.vector_store %arg8[%c176, %c16_35], %92 {strides = array<i32>} : memref<256x144xbf16, #tpu.memory_space<vmem>>, vector<16x16xbf16>,
    %94 = vector.extract_strided_slice %13 {offsets = [11, 0, 0], sizes = [1, 16, 16], strides = [1, 1, 1]} : vector<16x16x16xbf16> to vector<1x16x16xbf16>
    %95 = vector.shape_cast %94 : vector<1x16x16xbf16> to vector<16x16xbf16>
    %c192 = arith.constant 192 : index
    %c16_36 = arith.constant 16 : index
    %96 = vector.load %arg8[%c192, %c16_36] : memref<256x144xbf16, #tpu.memory_space<vmem>>, vector<16x16xbf16>
    tpu.vector_store %arg8[%c192, %c16_36], %95 {strides = array<i32>} : memref<256x144xbf16, #tpu.memory_space<vmem>>, vector<16x16xbf16>,
    %97 = vector.extract_strided_slice %13 {offsets = [12, 0, 0], sizes = [1, 16, 16], strides = [1, 1, 1]} : vector<16x16x16xbf16> to vector<1x16x16xbf16>
    %98 = vector.shape_cast %97 : vector<1x16x16xbf16> to vector<16x16xbf16>
    %c208 = arith.constant 208 : index
    %c16_37 = arith.constant 16 : index
    %99 = vector.load %arg8[%c208, %c16_37] : memref<256x144xbf16, #tpu.memory_space<vmem>>, vector<16x16xbf16>
    tpu.vector_store %arg8[%c208, %c16_37], %98 {strides = array<i32>} : memref<256x144xbf16, #tpu.memory_space<vmem>>, vector<16x16xbf16>,
    %100 = vector.extract_strided_slice %13 {offsets = [13, 0, 0], sizes = [1, 16, 16], strides = [1, 1, 1]} : vector<16x16x16xbf16> to vector<1x16x16xbf16>
    %101 = vector.shape_cast %100 : vector<1x16x16xbf16> to vector<16x16xbf16>
    %c224 = arith.constant 224 : index
    %c16_38 = arith.constant 16 : index
    %102 = vector.load %arg8[%c224, %c16_38] : memref<256x144xbf16, #tpu.memory_space<vmem>>, vector<16x16xbf16>
    tpu.vector_store %arg8[%c224, %c16_38], %101 {strides = array<i32>} : memref<256x144xbf16, #tpu.memory_space<vmem>>, vector<16x16xbf16>,
    %103 = vector.extract_strided_slice %13 {offsets = [14, 0, 0], sizes = [1, 16, 16], strides = [1, 1, 1]} : vector<16x16x16xbf16> to vector<1x16x16xbf16>
    %104 = vector.shape_cast %103 : vector<1x16x16xbf16> to vector<16x16xbf16>
    %c240 = arith.constant 240 : index
    %c16_39 = arith.constant 16 : index
    %105 = vector.load %arg8[%c240, %c16_39] : memref<256x144xbf16, #tpu.memory_space<vmem>>, vector<16x16xbf16>
    tpu.vector_store %arg8[%c240, %c16_39], %104 {strides = array<i32>} : memref<256x144xbf16, #tpu.memory_space<vmem>>, vector<16x16xbf16>,
    %106 = vector.extract_strided_slice %13 {offsets = [0, 1, 0], sizes = [1, 15, 16], strides = [1, 1, 1]} : vector<16x16x16xbf16> to vector<1x15x16xbf16>
    %107 = vector.shape_cast %106 : vector<1x15x16xbf16> to vector<15x16xbf16>
    %c16_40 = arith.constant 16 : index
    %c32_41 = arith.constant 32 : index
    %108 = vector.load %arg8[%c16_40, %c32_41] : memref<256x144xbf16, #tpu.memory_space<vmem>>, vector<15x16xbf16>
    tpu.vector_store %arg8[%c16_40, %c32_41], %107 {strides = array<i32>} : memref<256x144xbf16, #tpu.memory_space<vmem>>, vector<15x16xbf16>,
    %109 = vector.extract_strided_slice %13 {offsets = [1, 1, 0], sizes = [1, 15, 16], strides = [1, 1, 1]} : vector<16x16x16xbf16> to vector<1x15x16xbf16>
    %110 = vector.shape_cast %109 : vector<1x15x16xbf16> to vector<15x16xbf16>
    %c32_42 = arith.constant 32 : index
    %c32_43 = arith.constant 32 : index
    %111 = vector.load %arg8[%c32_42, %c32_43] : memref<256x144xbf16, #tpu.memory_space<vmem>>, vector<15x16xbf16>
    tpu.vector_store %arg8[%c32_42, %c32_43], %110 {strides = array<i32>} : memref<256x144xbf16, #tpu.memory_space<vmem>>, vector<15x16xbf16>,
    %112 = vector.extract_strided_slice %13 {offsets = [2, 1, 0], sizes = [1, 15, 16], strides = [1, 1, 1]} : vector<16x16x16xbf16> to vector<1x15x16xbf16>
    %113 = vector.shape_cast %112 : vector<1x15x16xbf16> to vector<15x16xbf16>
    %c48_44 = arith.constant 48 : index
    %c32_45 = arith.constant 32 : index
    %114 = vector.load %arg8[%c48_44, %c32_45] : memref<256x144xbf16, #tpu.memory_space<vmem>>, vector<15x16xbf16>
    tpu.vector_store %arg8[%c48_44, %c32_45], %113 {strides = array<i32>} : memref<256x144xbf16, #tpu.memory_space<vmem>>, vector<15x16xbf16>,
    %115 = vector.extract_strided_slice %13 {offsets = [3, 1, 0], sizes = [1, 15, 16], strides = [1, 1, 1]} : vector<16x16x16xbf16> to vector<1x15x16xbf16>
    %116 = vector.shape_cast %115 : vector<1x15x16xbf16> to vector<15x16xbf16>
    %c64_46 = arith.constant 64 : index
    %c32_47 = arith.constant 32 : index
    %117 = vector.load %arg8[%c64_46, %c32_47] : memref<256x144xbf16, #tpu.memory_space<vmem>>, vector<15x16xbf16>
    tpu.vector_store %arg8[%c64_46, %c32_47], %116 {strides = array<i32>} : memref<256x144xbf16, #tpu.memory_space<vmem>>, vector<15x16xbf16>,
    %118 = vector.extract_strided_slice %13 {offsets = [4, 1, 0], sizes = [1, 15, 16], strides = [1, 1, 1]} : vector<16x16x16xbf16> to vector<1x15x16xbf16>
    %119 = vector.shape_cast %118 : vector<1x15x16xbf16> to vector<15x16xbf16>
    %c80_48 = arith.constant 80 : index
    %c32_49 = arith.constant 32 : index
    %120 = vector.load %arg8[%c80_48, %c32_49] : memref<256x144xbf16, #tpu.memory_space<vmem>>, vector<15x16xbf16>
    tpu.vector_store %arg8[%c80_48, %c32_49], %119 {strides = array<i32>} : memref<256x144xbf16, #tpu.memory_space<vmem>>, vector<15x16xbf16>,
    %121 = vector.extract_strided_slice %13 {offsets = [5, 1, 0], sizes = [1, 15, 16], strides = [1, 1, 1]} : vector<16x16x16xbf16> to vector<1x15x16xbf16>
    %122 = vector.shape_cast %121 : vector<1x15x16xbf16> to vector<15x16xbf16>
    %c96_50 = arith.constant 96 : index
    %c32_51 = arith.constant 32 : index
    %123 = vector.load %arg8[%c96_50, %c32_51] : memref<256x144xbf16, #tpu.memory_space<vmem>>, vector<15x16xbf16>
    tpu.vector_store %arg8[%c96_50, %c32_51], %122 {strides = array<i32>} : memref<256x144xbf16, #tpu.memory_space<vmem>>, vector<15x16xbf16>,
    %124 = vector.extract_strided_slice %13 {offsets = [6, 1, 0], sizes = [1, 15, 16], strides = [1, 1, 1]} : vector<16x16x16xbf16> to vector<1x15x16xbf16>
    %125 = vector.shape_cast %124 : vector<1x15x16xbf16> to vector<15x16xbf16>
    %c112_52 = arith.constant 112 : index
    %c32_53 = arith.constant 32 : index
    %126 = vector.load %arg8[%c112_52, %c32_53] : memref<256x144xbf16, #tpu.memory_space<vmem>>, vector<15x16xbf16>
    tpu.vector_store %arg8[%c112_52, %c32_53], %125 {strides = array<i32>} : memref<256x144xbf16, #tpu.memory_space<vmem>>, vector<15x16xbf16>,
    %127 = vector.extract_strided_slice %13 {offsets = [7, 1, 0], sizes = [1, 15, 16], strides = [1, 1, 1]} : vector<16x16x16xbf16> to vector<1x15x16xbf16>
    %128 = vector.shape_cast %127 : vector<1x15x16xbf16> to vector<15x16xbf16>
    %c128_54 = arith.constant 128 : index
    %c32_55 = arith.constant 32 : index
    %129 = vector.load %arg8[%c128_54, %c32_55] : memref<256x144xbf16, #tpu.memory_space<vmem>>, vector<15x16xbf16>
    tpu.vector_store %arg8[%c128_54, %c32_55], %128 {strides = array<i32>} : memref<256x144xbf16, #tpu.memory_space<vmem>>, vector<15x16xbf16>,
    %130 = vector.extract_strided_slice %13 {offsets = [8, 1, 0], sizes = [1, 15, 16], strides = [1, 1, 1]} : vector<16x16x16xbf16> to vector<1x15x16xbf16>
    %131 = vector.shape_cast %130 : vector<1x15x16xbf16> to vector<15x16xbf16>
    %c144_56 = arith.constant 144 : index
    %c32_57 = arith.constant 32 : index
    %132 = vector.load %arg8[%c144_56, %c32_57] : memref<256x144xbf16, #tpu.memory_space<vmem>>, vector<15x16xbf16>
    tpu.vector_store %arg8[%c144_56, %c32_57], %131 {strides = array<i32>} : memref<256x144xbf16, #tpu.memory_space<vmem>>, vector<15x16xbf16>,
    %133 = vector.extract_strided_slice %13 {offsets = [9, 1, 0], sizes = [1, 15, 16], strides = [1, 1, 1]} : vector<16x16x16xbf16> to vector<1x15x16xbf16>
    %134 = vector.shape_cast %133 : vector<1x15x16xbf16> to vector<15x16xbf16>
    %c160_58 = arith.constant 160 : index
    %c32_59 = arith.constant 32 : index
    %135 = vector.load %arg8[%c160_58, %c32_59] : memref<256x144xbf16, #tpu.memory_space<vmem>>, vector<15x16xbf16>
    tpu.vector_store %arg8[%c160_58, %c32_59], %134 {strides = array<i32>} : memref<256x144xbf16, #tpu.memory_space<vmem>>, vector<15x16xbf16>,
    %136 = vector.extract_strided_slice %13 {offsets = [10, 1, 0], sizes = [1, 15, 16], strides = [1, 1, 1]} : vector<16x16x16xbf16> to vector<1x15x16xbf16>
    %137 = vector.shape_cast %136 : vector<1x15x16xbf16> to vector<15x16xbf16>
    %c176_60 = arith.constant 176 : index
    %c32_61 = arith.constant 32 : index
    %138 = vector.load %arg8[%c176_60, %c32_61] : memref<256x144xbf16, #tpu.memory_space<vmem>>, vector<15x16xbf16>
    tpu.vector_store %arg8[%c176_60, %c32_61], %137 {strides = array<i32>} : memref<256x144xbf16, #tpu.memory_space<vmem>>, vector<15x16xbf16>,
    %139 = vector.extract_strided_slice %13 {offsets = [11, 1, 0], sizes = [1, 15, 16], strides = [1, 1, 1]} : vector<16x16x16xbf16> to vector<1x15x16xbf16>
    %140 = vector.shape_cast %139 : vector<1x15x16xbf16> to vector<15x16xbf16>
    %c192_62 = arith.constant 192 : index
    %c32_63 = arith.constant 32 : index
    %141 = vector.load %arg8[%c192_62, %c32_63] : memref<256x144xbf16, #tpu.memory_space<vmem>>, vector<15x16xbf16>
    tpu.vector_store %arg8[%c192_62, %c32_63], %140 {strides = array<i32>} : memref<256x144xbf16, #tpu.memory_space<vmem>>, vector<15x16xbf16>,
    %142 = vector.extract_strided_slice %13 {offsets = [12, 1, 0], sizes = [1, 15, 16], strides = [1, 1, 1]} : vector<16x16x16xbf16> to vector<1x15x16xbf16>
    %143 = vector.shape_cast %142 : vector<1x15x16xbf16> to vector<15x16xbf16>
    %c208_64 = arith.constant 208 : index
    %c32_65 = arith.constant 32 : index
    %144 = vector.load %arg8[%c208_64, %c32_65] : memref<256x144xbf16, #tpu.memory_space<vmem>>, vector<15x16xbf16>
    tpu.vector_store %arg8[%c208_64, %c32_65], %143 {strides = array<i32>} : memref<256x144xbf16, #tpu.memory_space<vmem>>, vector<15x16xbf16>,
    %145 = vector.extract_strided_slice %13 {offsets = [13, 1, 0], sizes = [1, 15, 16], strides = [1, 1, 1]} : vector<16x16x16xbf16> to vector<1x15x16xbf16>
    %146 = vector.shape_cast %145 : vector<1x15x16xbf16> to vector<15x16xbf16>
    %c224_66 = arith.constant 224 : index
    %c32_67 = arith.constant 32 : index
    %147 = vector.load %arg8[%c224_66, %c32_67] : memref<256x144xbf16, #tpu.memory_space<vmem>>, vector<15x16xbf16>
    tpu.vector_store %arg8[%c224_66, %c32_67], %146 {strides = array<i32>} : memref<256x144xbf16, #tpu.memory_space<vmem>>, vector<15x16xbf16>,
    %148 = vector.extract_strided_slice %13 {offsets = [14, 1, 0], sizes = [1, 15, 16], strides = [1, 1, 1]} : vector<16x16x16xbf16> to vector<1x15x16xbf16>
    %149 = vector.shape_cast %148 : vector<1x15x16xbf16> to vector<15x16xbf16>
    %c240_68 = arith.constant 240 : index
    %c32_69 = arith.constant 32 : index
    %150 = vector.load %arg8[%c240_68, %c32_69] : memref<256x144xbf16, #tpu.memory_space<vmem>>, vector<15x16xbf16>
    tpu.vector_store %arg8[%c240_68, %c32_69], %149 {strides = array<i32>} : memref<256x144xbf16, #tpu.memory_space<vmem>>, vector<15x16xbf16>,
    %151 = vector.extract_strided_slice %13 {offsets = [0, 0, 0], sizes = [1, 15, 16], strides = [1, 1, 1]} : vector<16x16x16xbf16> to vector<1x15x16xbf16>
    %152 = vector.shape_cast %151 : vector<1x15x16xbf16> to vector<15x16xbf16>
    %c1 = arith.constant 1 : index
    %c48_70 = arith.constant 48 : index
    %153 = vector.load %arg8[%c1, %c48_70] : memref<256x144xbf16, #tpu.memory_space<vmem>>, vector<15x16xbf16>
    tpu.vector_store %arg8[%c1, %c48_70], %152 {strides = array<i32>} : memref<256x144xbf16, #tpu.memory_space<vmem>>, vector<15x16xbf16>,
    %154 = vector.extract_strided_slice %13 {offsets = [1, 0, 0], sizes = [1, 15, 16], strides = [1, 1, 1]} : vector<16x16x16xbf16> to vector<1x15x16xbf16>
    %155 = vector.shape_cast %154 : vector<1x15x16xbf16> to vector<15x16xbf16>
    %c17_71 = arith.constant 17 : index
    %c48_72 = arith.constant 48 : index
    %156 = vector.load %arg8[%c17_71, %c48_72] : memref<256x144xbf16, #tpu.memory_space<vmem>>, vector<15x16xbf16>
    tpu.vector_store %arg8[%c17_71, %c48_72], %155 {strides = array<i32>} : memref<256x144xbf16, #tpu.memory_space<vmem>>, vector<15x16xbf16>,
    %157 = vector.extract_strided_slice %13 {offsets = [2, 0, 0], sizes = [1, 15, 16], strides = [1, 1, 1]} : vector<16x16x16xbf16> to vector<1x15x16xbf16>
    %158 = vector.shape_cast %157 : vector<1x15x16xbf16> to vector<15x16xbf16>
    %c33_73 = arith.constant 33 : index
    %c48_74 = arith.constant 48 : index
    %159 = vector.load %arg8[%c33_73, %c48_74] : memref<256x144xbf16, #tpu.memory_space<vmem>>, vector<15x16xbf16>
    tpu.vector_store %arg8[%c33_73, %c48_74], %158 {strides = array<i32>} : memref<256x144xbf16, #tpu.memory_space<vmem>>, vector<15x16xbf16>,
    %160 = vector.extract_strided_slice %13 {offsets = [3, 0, 0], sizes = [1, 15, 16], strides = [1, 1, 1]} : vector<16x16x16xbf16> to vector<1x15x16xbf16>
    %161 = vector.shape_cast %160 : vector<1x15x16xbf16> to vector<15x16xbf16>
    %c49_75 = arith.constant 49 : index
    %c48_76 = arith.constant 48 : index
    %162 = vector.load %arg8[%c49_75, %c48_76] : memref<256x144xbf16, #tpu.memory_space<vmem>>, vector<15x16xbf16>
    tpu.vector_store %arg8[%c49_75, %c48_76], %161 {strides = array<i32>} : memref<256x144xbf16, #tpu.memory_space<vmem>>, vector<15x16xbf16>,
    %163 = vector.extract_strided_slice %13 {offsets = [4, 0, 0], sizes = [1, 15, 16], strides = [1, 1, 1]} : vector<16x16x16xbf16> to vector<1x15x16xbf16>
    %164 = vector.shape_cast %163 : vector<1x15x16xbf16> to vector<15x16xbf16>
    %c65_77 = arith.constant 65 : index
    %c48_78 = arith.constant 48 : index
    %165 = vector.load %arg8[%c65_77, %c48_78] : memref<256x144xbf16, #tpu.memory_space<vmem>>, vector<15x16xbf16>
    tpu.vector_store %arg8[%c65_77, %c48_78], %164 {strides = array<i32>} : memref<256x144xbf16, #tpu.memory_space<vmem>>, vector<15x16xbf16>,
    %166 = vector.extract_strided_slice %13 {offsets = [5, 0, 0], sizes = [1, 15, 16], strides = [1, 1, 1]} : vector<16x16x16xbf16> to vector<1x15x16xbf16>
    %167 = vector.shape_cast %166 : vector<1x15x16xbf16> to vector<15x16xbf16>
    %c81_79 = arith.constant 81 : index
    %c48_80 = arith.constant 48 : index
    %168 = vector.load %arg8[%c81_79, %c48_80] : memref<256x144xbf16, #tpu.memory_space<vmem>>, vector<15x16xbf16>
    tpu.vector_store %arg8[%c81_79, %c48_80], %167 {strides = array<i32>} : memref<256x144xbf16, #tpu.memory_space<vmem>>, vector<15x16xbf16>,
    %169 = vector.extract_strided_slice %13 {offsets = [6, 0, 0], sizes = [1, 15, 16], strides = [1, 1, 1]} : vector<16x16x16xbf16> to vector<1x15x16xbf16>
    %170 = vector.shape_cast %169 : vector<1x15x16xbf16> to vector<15x16xbf16>
    %c97_81 = arith.constant 97 : index
    %c48_82 = arith.constant 48 : index
    %171 = vector.load %arg8[%c97_81, %c48_82] : memref<256x144xbf16, #tpu.memory_space<vmem>>, vector<15x16xbf16>
    tpu.vector_store %arg8[%c97_81, %c48_82], %170 {strides = array<i32>} : memref<256x144xbf16, #tpu.memory_space<vmem>>, vector<15x16xbf16>,
    %172 = vector.extract_strided_slice %13 {offsets = [7, 0, 0], sizes = [1, 15, 16], strides = [1, 1, 1]} : vector<16x16x16xbf16> to vector<1x15x16xbf16>
    %173 = vector.shape_cast %172 : vector<1x15x16xbf16> to vector<15x16xbf16>
    %c113_83 = arith.constant 113 : index
    %c48_84 = arith.constant 48 : index
    %174 = vector.load %arg8[%c113_83, %c48_84] : memref<256x144xbf16, #tpu.memory_space<vmem>>, vector<15x16xbf16>
    tpu.vector_store %arg8[%c113_83, %c48_84], %173 {strides = array<i32>} : memref<256x144xbf16, #tpu.memory_space<vmem>>, vector<15x16xbf16>,
    %175 = vector.extract_strided_slice %13 {offsets = [8, 0, 0], sizes = [1, 15, 16], strides = [1, 1, 1]} : vector<16x16x16xbf16> to vector<1x15x16xbf16>
    %176 = vector.shape_cast %175 : vector<1x15x16xbf16> to vector<15x16xbf16>
    %c129_85 = arith.constant 129 : index
    %c48_86 = arith.constant 48 : index
    %177 = vector.load %arg8[%c129_85, %c48_86] : memref<256x144xbf16, #tpu.memory_space<vmem>>, vector<15x16xbf16>
    tpu.vector_store %arg8[%c129_85, %c48_86], %176 {strides = array<i32>} : memref<256x144xbf16, #tpu.memory_space<vmem>>, vector<15x16xbf16>,
    %178 = vector.extract_strided_slice %13 {offsets = [9, 0, 0], sizes = [1, 15, 16], strides = [1, 1, 1]} : vector<16x16x16xbf16> to vector<1x15x16xbf16>
    %179 = vector.shape_cast %178 : vector<1x15x16xbf16> to vector<15x16xbf16>
    %c145_87 = arith.constant 145 : index
    %c48_88 = arith.constant 48 : index
    %180 = vector.load %arg8[%c145_87, %c48_88] : memref<256x144xbf16, #tpu.memory_space<vmem>>, vector<15x16xbf16>
    tpu.vector_store %arg8[%c145_87, %c48_88], %179 {strides = array<i32>} : memref<256x144xbf16, #tpu.memory_space<vmem>>, vector<15x16xbf16>,
    %181 = vector.extract_strided_slice %13 {offsets = [10, 0, 0], sizes = [1, 15, 16], strides = [1, 1, 1]} : vector<16x16x16xbf16> to vector<1x15x16xbf16>
    %182 = vector.shape_cast %181 : vector<1x15x16xbf16> to vector<15x16xbf16>
    %c161_89 = arith.constant 161 : index
    %c48_90 = arith.constant 48 : index
    %183 = vector.load %arg8[%c161_89, %c48_90] : memref<256x144xbf16, #tpu.memory_space<vmem>>, vector<15x16xbf16>
    tpu.vector_store %arg8[%c161_89, %c48_90], %182 {strides = array<i32>} : memref<256x144xbf16, #tpu.memory_space<vmem>>, vector<15x16xbf16>,
    %184 = vector.extract_strided_slice %13 {offsets = [11, 0, 0], sizes = [1, 15, 16], strides = [1, 1, 1]} : vector<16x16x16xbf16> to vector<1x15x16xbf16>
    %185 = vector.shape_cast %184 : vector<1x15x16xbf16> to vector<15x16xbf16>
    %c177_91 = arith.constant 177 : index
    %c48_92 = arith.constant 48 : index
    %186 = vector.load %arg8[%c177_91, %c48_92] : memref<256x144xbf16, #tpu.memory_space<vmem>>, vector<15x16xbf16>
    tpu.vector_store %arg8[%c177_91, %c48_92], %185 {strides = array<i32>} : memref<256x144xbf16, #tpu.memory_space<vmem>>, vector<15x16xbf16>,
    %187 = vector.extract_strided_slice %13 {offsets = [12, 0, 0], sizes = [1, 15, 16], strides = [1, 1, 1]} : vector<16x16x16xbf16> to vector<1x15x16xbf16>
    %188 = vector.shape_cast %187 : vector<1x15x16xbf16> to vector<15x16xbf16>
    %c193_93 = arith.constant 193 : index
    %c48_94 = arith.constant 48 : index
    %189 = vector.load %arg8[%c193_93, %c48_94] : memref<256x144xbf16, #tpu.memory_space<vmem>>, vector<15x16xbf16>
    tpu.vector_store %arg8[%c193_93, %c48_94], %188 {strides = array<i32>} : memref<256x144xbf16, #tpu.memory_space<vmem>>, vector<15x16xbf16>,
    %190 = vector.extract_strided_slice %13 {offsets = [13, 0, 0], sizes = [1, 15, 16], strides = [1, 1, 1]} : vector<16x16x16xbf16> to vector<1x15x16xbf16>
    %191 = vector.shape_cast %190 : vector<1x15x16xbf16> to vector<15x16xbf16>
    %c209_95 = arith.constant 209 : index
    %c48_96 = arith.constant 48 : index
    %192 = vector.load %arg8[%c209_95, %c48_96] : memref<256x144xbf16, #tpu.memory_space<vmem>>, vector<15x16xbf16>
    tpu.vector_store %arg8[%c209_95, %c48_96], %191 {strides = array<i32>} : memref<256x144xbf16, #tpu.memory_space<vmem>>, vector<15x16xbf16>,
    %193 = vector.extract_strided_slice %13 {offsets = [14, 0, 0], sizes = [1, 15, 16], strides = [1, 1, 1]} : vector<16x16x16xbf16> to vector<1x15x16xbf16>
    %194 = vector.shape_cast %193 : vector<1x15x16xbf16> to vector<15x16xbf16>
    %c225_97 = arith.constant 225 : index
    %c48_98 = arith.constant 48 : index
    %195 = vector.load %arg8[%c225_97, %c48_98] : memref<256x144xbf16, #tpu.memory_space<vmem>>, vector<15x16xbf16>
    tpu.vector_store %arg8[%c225_97, %c48_98], %194 {strides = array<i32>} : memref<256x144xbf16, #tpu.memory_space<vmem>>, vector<15x16xbf16>,
    %196 = vector.extract_strided_slice %13 {offsets = [15, 0, 0], sizes = [1, 15, 16], strides = [1, 1, 1]} : vector<16x16x16xbf16> to vector<1x15x16xbf16>
    %197 = vector.shape_cast %196 : vector<1x15x16xbf16> to vector<15x16xbf16>
    %c241_99 = arith.constant 241 : index
    %c48_100 = arith.constant 48 : index
    %198 = vector.load %arg8[%c241_99, %c48_100] : memref<256x144xbf16, #tpu.memory_space<vmem>>, vector<15x16xbf16>
    tpu.vector_store %arg8[%c241_99, %c48_100], %197 {strides = array<i32>} : memref<256x144xbf16, #tpu.memory_space<vmem>>, vector<15x16xbf16>,
    %199 = vector.extract_strided_slice %13 {offsets = [0, 0, 0], sizes = [1, 16, 16], strides = [1, 1, 1]} : vector<16x16x16xbf16> to vector<1x16x16xbf16>
    %200 = vector.shape_cast %199 : vector<1x16x16xbf16> to vector<16x16xbf16>
    %c0_101 = arith.constant 0 : index
    %c64_102 = arith.constant 64 : index
    %201 = vector.load %arg8[%c0_101, %c64_102] : memref<256x144xbf16, #tpu.memory_space<vmem>>, vector<16x16xbf16>
    tpu.vector_store %arg8[%c0_101, %c64_102], %200 {strides = array<i32>} : memref<256x144xbf16, #tpu.memory_space<vmem>>, vector<16x16xbf16>,
    %202 = vector.extract_strided_slice %13 {offsets = [1, 0, 0], sizes = [1, 16, 16], strides = [1, 1, 1]} : vector<16x16x16xbf16> to vector<1x16x16xbf16>
    %203 = vector.shape_cast %202 : vector<1x16x16xbf16> to vector<16x16xbf16>
    %c16_103 = arith.constant 16 : index
    %c64_104 = arith.constant 64 : index
    %204 = vector.load %arg8[%c16_103, %c64_104] : memref<256x144xbf16, #tpu.memory_space<vmem>>, vector<16x16xbf16>
    tpu.vector_store %arg8[%c16_103, %c64_104], %203 {strides = array<i32>} : memref<256x144xbf16, #tpu.memory_space<vmem>>, vector<16x16xbf16>,
    %205 = vector.extract_strided_slice %13 {offsets = [2, 0, 0], sizes = [1, 16, 16], strides = [1, 1, 1]} : vector<16x16x16xbf16> to vector<1x16x16xbf16>
    %206 = vector.shape_cast %205 : vector<1x16x16xbf16> to vector<16x16xbf16>
    %c32_105 = arith.constant 32 : index
    %c64_106 = arith.constant 64 : index
    %207 = vector.load %arg8[%c32_105, %c64_106] : memref<256x144xbf16, #tpu.memory_space<vmem>>, vector<16x16xbf16>
    tpu.vector_store %arg8[%c32_105, %c64_106], %206 {strides = array<i32>} : memref<256x144xbf16, #tpu.memory_space<vmem>>, vector<16x16xbf16>,
    %208 = vector.extract_strided_slice %13 {offsets = [3, 0, 0], sizes = [1, 16, 16], strides = [1, 1, 1]} : vector<16x16x16xbf16> to vector<1x16x16xbf16>
    %209 = vector.shape_cast %208 : vector<1x16x16xbf16> to vector<16x16xbf16>
    %c48_107 = arith.constant 48 : index
    %c64_108 = arith.constant 64 : index
    %210 = vector.load %arg8[%c48_107, %c64_108] : memref<256x144xbf16, #tpu.memory_space<vmem>>, vector<16x16xbf16>
    tpu.vector_store %arg8[%c48_107, %c64_108], %209 {strides = array<i32>} : memref<256x144xbf16, #tpu.memory_space<vmem>>, vector<16x16xbf16>,
    %211 = vector.extract_strided_slice %13 {offsets = [4, 0, 0], sizes = [1, 16, 16], strides = [1, 1, 1]} : vector<16x16x16xbf16> to vector<1x16x16xbf16>
    %212 = vector.shape_cast %211 : vector<1x16x16xbf16> to vector<16x16xbf16>
    %c64_109 = arith.constant 64 : index
    %c64_110 = arith.constant 64 : index
    %213 = vector.load %arg8[%c64_109, %c64_110] : memref<256x144xbf16, #tpu.memory_space<vmem>>, vector<16x16xbf16>
    tpu.vector_store %arg8[%c64_109, %c64_110], %212 {strides = array<i32>} : memref<256x144xbf16, #tpu.memory_space<vmem>>, vector<16x16xbf16>,
    %214 = vector.extract_strided_slice %13 {offsets = [5, 0, 0], sizes = [1, 16, 16], strides = [1, 1, 1]} : vector<16x16x16xbf16> to vector<1x16x16xbf16>
    %215 = vector.shape_cast %214 : vector<1x16x16xbf16> to vector<16x16xbf16>
    %c80_111 = arith.constant 80 : index
    %c64_112 = arith.constant 64 : index
    %216 = vector.load %arg8[%c80_111, %c64_112] : memref<256x144xbf16, #tpu.memory_space<vmem>>, vector<16x16xbf16>
    tpu.vector_store %arg8[%c80_111, %c64_112], %215 {strides = array<i32>} : memref<256x144xbf16, #tpu.memory_space<vmem>>, vector<16x16xbf16>,
    %217 = vector.extract_strided_slice %13 {offsets = [6, 0, 0], sizes = [1, 16, 16], strides = [1, 1, 1]} : vector<16x16x16xbf16> to vector<1x16x16xbf16>
    %218 = vector.shape_cast %217 : vector<1x16x16xbf16> to vector<16x16xbf16>
    %c96_113 = arith.constant 96 : index
    %c64_114 = arith.constant 64 : index
    %219 = vector.load %arg8[%c96_113, %c64_114] : memref<256x144xbf16, #tpu.memory_space<vmem>>, vector<16x16xbf16>
    tpu.vector_store %arg8[%c96_113, %c64_114], %218 {strides = array<i32>} : memref<256x144xbf16, #tpu.memory_space<vmem>>, vector<16x16xbf16>,
    %220 = vector.extract_strided_slice %13 {offsets = [7, 0, 0], sizes = [1, 16, 16], strides = [1, 1, 1]} : vector<16x16x16xbf16> to vector<1x16x16xbf16>
    %221 = vector.shape_cast %220 : vector<1x16x16xbf16> to vector<16x16xbf16>
    %c112_115 = arith.constant 112 : index
    %c64_116 = arith.constant 64 : index
    %222 = vector.load %arg8[%c112_115, %c64_116] : memref<256x144xbf16, #tpu.memory_space<vmem>>, vector<16x16xbf16>
    tpu.vector_store %arg8[%c112_115, %c64_116], %221 {strides = array<i32>} : memref<256x144xbf16, #tpu.memory_space<vmem>>, vector<16x16xbf16>,
    %223 = vector.extract_strided_slice %13 {offsets = [8, 0, 0], sizes = [1, 16, 16], strides = [1, 1, 1]} : vector<16x16x16xbf16> to vector<1x16x16xbf16>
    %224 = vector.shape_cast %223 : vector<1x16x16xbf16> to vector<16x16xbf16>
    %c128_117 = arith.constant 128 : index
    %c64_118 = arith.constant 64 : index
    %225 = vector.load %arg8[%c128_117, %c64_118] : memref<256x144xbf16, #tpu.memory_space<vmem>>, vector<16x16xbf16>
    tpu.vector_store %arg8[%c128_117, %c64_118], %224 {strides = array<i32>} : memref<256x144xbf16, #tpu.memory_space<vmem>>, vector<16x16xbf16>,
    %226 = vector.extract_strided_slice %13 {offsets = [9, 0, 0], sizes = [1, 16, 16], strides = [1, 1, 1]} : vector<16x16x16xbf16> to vector<1x16x16xbf16>
    %227 = vector.shape_cast %226 : vector<1x16x16xbf16> to vector<16x16xbf16>
    %c144_119 = arith.constant 144 : index
    %c64_120 = arith.constant 64 : index
    %228 = vector.load %arg8[%c144_119, %c64_120] : memref<256x144xbf16, #tpu.memory_space<vmem>>, vector<16x16xbf16>
    tpu.vector_store %arg8[%c144_119, %c64_120], %227 {strides = array<i32>} : memref<256x144xbf16, #tpu.memory_space<vmem>>, vector<16x16xbf16>,
    %229 = vector.extract_strided_slice %13 {offsets = [10, 0, 0], sizes = [1, 16, 16], strides = [1, 1, 1]} : vector<16x16x16xbf16> to vector<1x16x16xbf16>
    %230 = vector.shape_cast %229 : vector<1x16x16xbf16> to vector<16x16xbf16>
    %c160_121 = arith.constant 160 : index
    %c64_122 = arith.constant 64 : index
    %231 = vector.load %arg8[%c160_121, %c64_122] : memref<256x144xbf16, #tpu.memory_space<vmem>>, vector<16x16xbf16>
    tpu.vector_store %arg8[%c160_121, %c64_122], %230 {strides = array<i32>} : memref<256x144xbf16, #tpu.memory_space<vmem>>, vector<16x16xbf16>,
    %232 = vector.extract_strided_slice %13 {offsets = [11, 0, 0], sizes = [1, 16, 16], strides = [1, 1, 1]} : vector<16x16x16xbf16> to vector<1x16x16xbf16>
    %233 = vector.shape_cast %232 : vector<1x16x16xbf16> to vector<16x16xbf16>
    %c176_123 = arith.constant 176 : index
    %c64_124 = arith.constant 64 : index
    %234 = vector.load %arg8[%c176_123, %c64_124] : memref<256x144xbf16, #tpu.memory_space<vmem>>, vector<16x16xbf16>
    tpu.vector_store %arg8[%c176_123, %c64_124], %233 {strides = array<i32>} : memref<256x144xbf16, #tpu.memory_space<vmem>>, vector<16x16xbf16>,
    %235 = vector.extract_strided_slice %13 {offsets = [12, 0, 0], sizes = [1, 16, 16], strides = [1, 1, 1]} : vector<16x16x16xbf16> to vector<1x16x16xbf16>
    %236 = vector.shape_cast %235 : vector<1x16x16xbf16> to vector<16x16xbf16>
    %c192_125 = arith.constant 192 : index
    %c64_126 = arith.constant 64 : index
    %237 = vector.load %arg8[%c192_125, %c64_126] : memref<256x144xbf16, #tpu.memory_space<vmem>>, vector<16x16xbf16>
    tpu.vector_store %arg8[%c192_125, %c64_126], %236 {strides = array<i32>} : memref<256x144xbf16, #tpu.memory_space<vmem>>, vector<16x16xbf16>,
    %238 = vector.extract_strided_slice %13 {offsets = [13, 0, 0], sizes = [1, 16, 16], strides = [1, 1, 1]} : vector<16x16x16xbf16> to vector<1x16x16xbf16>
    %239 = vector.shape_cast %238 : vector<1x16x16xbf16> to vector<16x16xbf16>
    %c208_127 = arith.constant 208 : index
    %c64_128 = arith.constant 64 : index
    %240 = vector.load %arg8[%c208_127, %c64_128] : memref<256x144xbf16, #tpu.memory_space<vmem>>, vector<16x16xbf16>
    tpu.vector_store %arg8[%c208_127, %c64_128], %239 {strides = array<i32>} : memref<256x144xbf16, #tpu.memory_space<vmem>>, vector<16x16xbf16>,
    %241 = vector.extract_strided_slice %13 {offsets = [14, 0, 0], sizes = [1, 16, 16], strides = [1, 1, 1]} : vector<16x16x16xbf16> to vector<1x16x16xbf16>
    %242 = vector.shape_cast %241 : vector<1x16x16xbf16> to vector<16x16xbf16>
    %c224_129 = arith.constant 224 : index
    %c64_130 = arith.constant 64 : index
    %243 = vector.load %arg8[%c224_129, %c64_130] : memref<256x144xbf16, #tpu.memory_space<vmem>>, vector<16x16xbf16>
    tpu.vector_store %arg8[%c224_129, %c64_130], %242 {strides = array<i32>} : memref<256x144xbf16, #tpu.memory_space<vmem>>, vector<16x16xbf16>,
    %244 = vector.extract_strided_slice %13 {offsets = [15, 0, 0], sizes = [1, 16, 16], strides = [1, 1, 1]} : vector<16x16x16xbf16> to vector<1x16x16xbf16>
    %245 = vector.shape_cast %244 : vector<1x16x16xbf16> to vector<16x16xbf16>
    %c240_131 = arith.constant 240 : index
    %c64_132 = arith.constant 64 : index
    %246 = vector.load %arg8[%c240_131, %c64_132] : memref<256x144xbf16, #tpu.memory_space<vmem>>, vector<16x16xbf16>
    tpu.vector_store %arg8[%c240_131, %c64_132], %245 {strides = array<i32>} : memref<256x144xbf16, #tpu.memory_space<vmem>>, vector<16x16xbf16>,
    %247 = vector.extract_strided_slice %13 {offsets = [0, 1, 0], sizes = [1, 15, 16], strides = [1, 1, 1]} : vector<16x16x16xbf16> to vector<1x15x16xbf16>
    %248 = vector.shape_cast %247 : vector<1x15x16xbf16> to vector<15x16xbf16>
    %c0_133 = arith.constant 0 : index
    %c80_134 = arith.constant 80 : index
    %249 = vector.load %arg8[%c0_133, %c80_134] : memref<256x144xbf16, #tpu.memory_space<vmem>>, vector<15x16xbf16>
    tpu.vector_store %arg8[%c0_133, %c80_134], %248 {strides = array<i32>} : memref<256x144xbf16, #tpu.memory_space<vmem>>, vector<15x16xbf16>,
    %250 = vector.extract_strided_slice %13 {offsets = [1, 1, 0], sizes = [1, 15, 16], strides = [1, 1, 1]} : vector<16x16x16xbf16> to vector<1x15x16xbf16>
    %251 = vector.shape_cast %250 : vector<1x15x16xbf16> to vector<15x16xbf16>
    %c16_135 = arith.constant 16 : index
    %c80_136 = arith.constant 80 : index
    %252 = vector.load %arg8[%c16_135, %c80_136] : memref<256x144xbf16, #tpu.memory_space<vmem>>, vector<15x16xbf16>
    tpu.vector_store %arg8[%c16_135, %c80_136], %251 {strides = array<i32>} : memref<256x144xbf16, #tpu.memory_space<vmem>>, vector<15x16xbf16>,
    %253 = vector.extract_strided_slice %13 {offsets = [2, 1, 0], sizes = [1, 15, 16], strides = [1, 1, 1]} : vector<16x16x16xbf16> to vector<1x15x16xbf16>
    %254 = vector.shape_cast %253 : vector<1x15x16xbf16> to vector<15x16xbf16>
    %c32_137 = arith.constant 32 : index
    %c80_138 = arith.constant 80 : index
    %255 = vector.load %arg8[%c32_137, %c80_138] : memref<256x144xbf16, #tpu.memory_space<vmem>>, vector<15x16xbf16>
    tpu.vector_store %arg8[%c32_137, %c80_138], %254 {strides = array<i32>} : memref<256x144xbf16, #tpu.memory_space<vmem>>, vector<15x16xbf16>,
    %256 = vector.extract_strided_slice %13 {offsets = [3, 1, 0], sizes = [1, 15, 16], strides = [1, 1, 1]} : vector<16x16x16xbf16> to vector<1x15x16xbf16>
    %257 = vector.shape_cast %256 : vector<1x15x16xbf16> to vector<15x16xbf16>
    %c48_139 = arith.constant 48 : index
    %c80_140 = arith.constant 80 : index
    %258 = vector.load %arg8[%c48_139, %c80_140] : memref<256x144xbf16, #tpu.memory_space<vmem>>, vector<15x16xbf16>
    tpu.vector_store %arg8[%c48_139, %c80_140], %257 {strides = array<i32>} : memref<256x144xbf16, #tpu.memory_space<vmem>>, vector<15x16xbf16>,
    %259 = vector.extract_strided_slice %13 {offsets = [4, 1, 0], sizes = [1, 15, 16], strides = [1, 1, 1]} : vector<16x16x16xbf16> to vector<1x15x16xbf16>
    %260 = vector.shape_cast %259 : vector<1x15x16xbf16> to vector<15x16xbf16>
    %c64_141 = arith.constant 64 : index
    %c80_142 = arith.constant 80 : index
    %261 = vector.load %arg8[%c64_141, %c80_142] : memref<256x144xbf16, #tpu.memory_space<vmem>>, vector<15x16xbf16>
    tpu.vector_store %arg8[%c64_141, %c80_142], %260 {strides = array<i32>} : memref<256x144xbf16, #tpu.memory_space<vmem>>, vector<15x16xbf16>,
    %262 = vector.extract_strided_slice %13 {offsets = [5, 1, 0], sizes = [1, 15, 16], strides = [1, 1, 1]} : vector<16x16x16xbf16> to vector<1x15x16xbf16>
    %263 = vector.shape_cast %262 : vector<1x15x16xbf16> to vector<15x16xbf16>
    %c80_143 = arith.constant 80 : index
    %c80_144 = arith.constant 80 : index
    %264 = vector.load %arg8[%c80_143, %c80_144] : memref<256x144xbf16, #tpu.memory_space<vmem>>, vector<15x16xbf16>
    tpu.vector_store %arg8[%c80_143, %c80_144], %263 {strides = array<i32>} : memref<256x144xbf16, #tpu.memory_space<vmem>>, vector<15x16xbf16>,
    %265 = vector.extract_strided_slice %13 {offsets = [6, 1, 0], sizes = [1, 15, 16], strides = [1, 1, 1]} : vector<16x16x16xbf16> to vector<1x15x16xbf16>
    %266 = vector.shape_cast %265 : vector<1x15x16xbf16> to vector<15x16xbf16>
    %c96_145 = arith.constant 96 : index
    %c80_146 = arith.constant 80 : index
    %267 = vector.load %arg8[%c96_145, %c80_146] : memref<256x144xbf16, #tpu.memory_space<vmem>>, vector<15x16xbf16>
    tpu.vector_store %arg8[%c96_145, %c80_146], %266 {strides = array<i32>} : memref<256x144xbf16, #tpu.memory_space<vmem>>, vector<15x16xbf16>,
    %268 = vector.extract_strided_slice %13 {offsets = [7, 1, 0], sizes = [1, 15, 16], strides = [1, 1, 1]} : vector<16x16x16xbf16> to vector<1x15x16xbf16>
    %269 = vector.shape_cast %268 : vector<1x15x16xbf16> to vector<15x16xbf16>
    %c112_147 = arith.constant 112 : index
    %c80_148 = arith.constant 80 : index
    %270 = vector.load %arg8[%c112_147, %c80_148] : memref<256x144xbf16, #tpu.memory_space<vmem>>, vector<15x16xbf16>
    tpu.vector_store %arg8[%c112_147, %c80_148], %269 {strides = array<i32>} : memref<256x144xbf16, #tpu.memory_space<vmem>>, vector<15x16xbf16>,
    %271 = vector.extract_strided_slice %13 {offsets = [8, 1, 0], sizes = [1, 15, 16], strides = [1, 1, 1]} : vector<16x16x16xbf16> to vector<1x15x16xbf16>
    %272 = vector.shape_cast %271 : vector<1x15x16xbf16> to vector<15x16xbf16>
    %c128_149 = arith.constant 128 : index
    %c80_150 = arith.constant 80 : index
    %273 = vector.load %arg8[%c128_149, %c80_150] : memref<256x144xbf16, #tpu.memory_space<vmem>>, vector<15x16xbf16>
    tpu.vector_store %arg8[%c128_149, %c80_150], %272 {strides = array<i32>} : memref<256x144xbf16, #tpu.memory_space<vmem>>, vector<15x16xbf16>,
    %274 = vector.extract_strided_slice %13 {offsets = [9, 1, 0], sizes = [1, 15, 16], strides = [1, 1, 1]} : vector<16x16x16xbf16> to vector<1x15x16xbf16>
    %275 = vector.shape_cast %274 : vector<1x15x16xbf16> to vector<15x16xbf16>
    %c144_151 = arith.constant 144 : index
    %c80_152 = arith.constant 80 : index
    %276 = vector.load %arg8[%c144_151, %c80_152] : memref<256x144xbf16, #tpu.memory_space<vmem>>, vector<15x16xbf16>
    tpu.vector_store %arg8[%c144_151, %c80_152], %275 {strides = array<i32>} : memref<256x144xbf16, #tpu.memory_space<vmem>>, vector<15x16xbf16>,
    %277 = vector.extract_strided_slice %13 {offsets = [10, 1, 0], sizes = [1, 15, 16], strides = [1, 1, 1]} : vector<16x16x16xbf16> to vector<1x15x16xbf16>
    %278 = vector.shape_cast %277 : vector<1x15x16xbf16> to vector<15x16xbf16>
    %c160_153 = arith.constant 160 : index
    %c80_154 = arith.constant 80 : index
    %279 = vector.load %arg8[%c160_153, %c80_154] : memref<256x144xbf16, #tpu.memory_space<vmem>>, vector<15x16xbf16>
    tpu.vector_store %arg8[%c160_153, %c80_154], %278 {strides = array<i32>} : memref<256x144xbf16, #tpu.memory_space<vmem>>, vector<15x16xbf16>,
    %280 = vector.extract_strided_slice %13 {offsets = [11, 1, 0], sizes = [1, 15, 16], strides = [1, 1, 1]} : vector<16x16x16xbf16> to vector<1x15x16xbf16>
    %281 = vector.shape_cast %280 : vector<1x15x16xbf16> to vector<15x16xbf16>
    %c176_155 = arith.constant 176 : index
    %c80_156 = arith.constant 80 : index
    %282 = vector.load %arg8[%c176_155, %c80_156] : memref<256x144xbf16, #tpu.memory_space<vmem>>, vector<15x16xbf16>
    tpu.vector_store %arg8[%c176_155, %c80_156], %281 {strides = array<i32>} : memref<256x144xbf16, #tpu.memory_space<vmem>>, vector<15x16xbf16>,
    %283 = vector.extract_strided_slice %13 {offsets = [12, 1, 0], sizes = [1, 15, 16], strides = [1, 1, 1]} : vector<16x16x16xbf16> to vector<1x15x16xbf16>
    %284 = vector.shape_cast %283 : vector<1x15x16xbf16> to vector<15x16xbf16>
    %c192_157 = arith.constant 192 : index
    %c80_158 = arith.constant 80 : index
    %285 = vector.load %arg8[%c192_157, %c80_158] : memref<256x144xbf16, #tpu.memory_space<vmem>>, vector<15x16xbf16>
    tpu.vector_store %arg8[%c192_157, %c80_158], %284 {strides = array<i32>} : memref<256x144xbf16, #tpu.memory_space<vmem>>, vector<15x16xbf16>,
    %286 = vector.extract_strided_slice %13 {offsets = [13, 1, 0], sizes = [1, 15, 16], strides = [1, 1, 1]} : vector<16x16x16xbf16> to vector<1x15x16xbf16>
    %287 = vector.shape_cast %286 : vector<1x15x16xbf16> to vector<15x16xbf16>
    %c208_159 = arith.constant 208 : index
    %c80_160 = arith.constant 80 : index
    %288 = vector.load %arg8[%c208_159, %c80_160] : memref<256x144xbf16, #tpu.memory_space<vmem>>, vector<15x16xbf16>
    tpu.vector_store %arg8[%c208_159, %c80_160], %287 {strides = array<i32>} : memref<256x144xbf16, #tpu.memory_space<vmem>>, vector<15x16xbf16>,
    %289 = vector.extract_strided_slice %13 {offsets = [14, 1, 0], sizes = [1, 15, 16], strides = [1, 1, 1]} : vector<16x16x16xbf16> to vector<1x15x16xbf16>
    %290 = vector.shape_cast %289 : vector<1x15x16xbf16> to vector<15x16xbf16>
    %c224_161 = arith.constant 224 : index
    %c80_162 = arith.constant 80 : index
    %291 = vector.load %arg8[%c224_161, %c80_162] : memref<256x144xbf16, #tpu.memory_space<vmem>>, vector<15x16xbf16>
    tpu.vector_store %arg8[%c224_161, %c80_162], %290 {strides = array<i32>} : memref<256x144xbf16, #tpu.memory_space<vmem>>, vector<15x16xbf16>,
    %292 = vector.extract_strided_slice %13 {offsets = [15, 1, 0], sizes = [1, 15, 16], strides = [1, 1, 1]} : vector<16x16x16xbf16> to vector<1x15x16xbf16>
    %293 = vector.shape_cast %292 : vector<1x15x16xbf16> to vector<15x16xbf16>
    %c240_163 = arith.constant 240 : index
    %c80_164 = arith.constant 80 : index
    %294 = vector.load %arg8[%c240_163, %c80_164] : memref<256x144xbf16, #tpu.memory_space<vmem>>, vector<15x16xbf16>
    tpu.vector_store %arg8[%c240_163, %c80_164], %293 {strides = array<i32>} : memref<256x144xbf16, #tpu.memory_space<vmem>>, vector<15x16xbf16>,
    %295 = vector.extract_strided_slice %13 {offsets = [1, 0, 0], sizes = [1, 15, 16], strides = [1, 1, 1]} : vector<16x16x16xbf16> to vector<1x15x16xbf16>
    %296 = vector.shape_cast %295 : vector<1x15x16xbf16> to vector<15x16xbf16>
    %c1_165 = arith.constant 1 : index
    %c96_166 = arith.constant 96 : index
    %297 = vector.load %arg8[%c1_165, %c96_166] : memref<256x144xbf16, #tpu.memory_space<vmem>>, vector<15x16xbf16>
    tpu.vector_store %arg8[%c1_165, %c96_166], %296 {strides = array<i32>} : memref<256x144xbf16, #tpu.memory_space<vmem>>, vector<15x16xbf16>,
    %298 = vector.extract_strided_slice %13 {offsets = [2, 0, 0], sizes = [1, 15, 16], strides = [1, 1, 1]} : vector<16x16x16xbf16> to vector<1x15x16xbf16>
    %299 = vector.shape_cast %298 : vector<1x15x16xbf16> to vector<15x16xbf16>
    %c17_167 = arith.constant 17 : index
    %c96_168 = arith.constant 96 : index
    %300 = vector.load %arg8[%c17_167, %c96_168] : memref<256x144xbf16, #tpu.memory_space<vmem>>, vector<15x16xbf16>
    tpu.vector_store %arg8[%c17_167, %c96_168], %299 {strides = array<i32>} : memref<256x144xbf16, #tpu.memory_space<vmem>>, vector<15x16xbf16>,
    %301 = vector.extract_strided_slice %13 {offsets = [3, 0, 0], sizes = [1, 15, 16], strides = [1, 1, 1]} : vector<16x16x16xbf16> to vector<1x15x16xbf16>
    %302 = vector.shape_cast %301 : vector<1x15x16xbf16> to vector<15x16xbf16>
    %c33_169 = arith.constant 33 : index
    %c96_170 = arith.constant 96 : index
    %303 = vector.load %arg8[%c33_169, %c96_170] : memref<256x144xbf16, #tpu.memory_space<vmem>>, vector<15x16xbf16>
    tpu.vector_store %arg8[%c33_169, %c96_170], %302 {strides = array<i32>} : memref<256x144xbf16, #tpu.memory_space<vmem>>, vector<15x16xbf16>,
    %304 = vector.extract_strided_slice %13 {offsets = [4, 0, 0], sizes = [1, 15, 16], strides = [1, 1, 1]} : vector<16x16x16xbf16> to vector<1x15x16xbf16>
    %305 = vector.shape_cast %304 : vector<1x15x16xbf16> to vector<15x16xbf16>
    %c49_171 = arith.constant 49 : index
    %c96_172 = arith.constant 96 : index
    %306 = vector.load %arg8[%c49_171, %c96_172] : memref<256x144xbf16, #tpu.memory_space<vmem>>, vector<15x16xbf16>
    tpu.vector_store %arg8[%c49_171, %c96_172], %305 {strides = array<i32>} : memref<256x144xbf16, #tpu.memory_space<vmem>>, vector<15x16xbf16>,
    %307 = vector.extract_strided_slice %13 {offsets = [5, 0, 0], sizes = [1, 15, 16], strides = [1, 1, 1]} : vector<16x16x16xbf16> to vector<1x15x16xbf16>
    %308 = vector.shape_cast %307 : vector<1x15x16xbf16> to vector<15x16xbf16>
    %c65_173 = arith.constant 65 : index
    %c96_174 = arith.constant 96 : index
    %309 = vector.load %arg8[%c65_173, %c96_174] : memref<256x144xbf16, #tpu.memory_space<vmem>>, vector<15x16xbf16>
    tpu.vector_store %arg8[%c65_173, %c96_174], %308 {strides = array<i32>} : memref<256x144xbf16, #tpu.memory_space<vmem>>, vector<15x16xbf16>,
    %310 = vector.extract_strided_slice %13 {offsets = [6, 0, 0], sizes = [1, 15, 16], strides = [1, 1, 1]} : vector<16x16x16xbf16> to vector<1x15x16xbf16>
    %311 = vector.shape_cast %310 : vector<1x15x16xbf16> to vector<15x16xbf16>
    %c81_175 = arith.constant 81 : index
    %c96_176 = arith.constant 96 : index
    %312 = vector.load %arg8[%c81_175, %c96_176] : memref<256x144xbf16, #tpu.memory_space<vmem>>, vector<15x16xbf16>
    tpu.vector_store %arg8[%c81_175, %c96_176], %311 {strides = array<i32>} : memref<256x144xbf16, #tpu.memory_space<vmem>>, vector<15x16xbf16>,
    %313 = vector.extract_strided_slice %13 {offsets = [7, 0, 0], sizes = [1, 15, 16], strides = [1, 1, 1]} : vector<16x16x16xbf16> to vector<1x15x16xbf16>
    %314 = vector.shape_cast %313 : vector<1x15x16xbf16> to vector<15x16xbf16>
    %c97_177 = arith.constant 97 : index
    %c96_178 = arith.constant 96 : index
    %315 = vector.load %arg8[%c97_177, %c96_178] : memref<256x144xbf16, #tpu.memory_space<vmem>>, vector<15x16xbf16>
    tpu.vector_store %arg8[%c97_177, %c96_178], %314 {strides = array<i32>} : memref<256x144xbf16, #tpu.memory_space<vmem>>, vector<15x16xbf16>,
    %316 = vector.extract_strided_slice %13 {offsets = [8, 0, 0], sizes = [1, 15, 16], strides = [1, 1, 1]} : vector<16x16x16xbf16> to vector<1x15x16xbf16>
    %317 = vector.shape_cast %316 : vector<1x15x16xbf16> to vector<15x16xbf16>
    %c113_179 = arith.constant 113 : index
    %c96_180 = arith.constant 96 : index
    %318 = vector.load %arg8[%c113_179, %c96_180] : memref<256x144xbf16, #tpu.memory_space<vmem>>, vector<15x16xbf16>
    tpu.vector_store %arg8[%c113_179, %c96_180], %317 {strides = array<i32>} : memref<256x144xbf16, #tpu.memory_space<vmem>>, vector<15x16xbf16>,
    %319 = vector.extract_strided_slice %13 {offsets = [9, 0, 0], sizes = [1, 15, 16], strides = [1, 1, 1]} : vector<16x16x16xbf16> to vector<1x15x16xbf16>
    %320 = vector.shape_cast %319 : vector<1x15x16xbf16> to vector<15x16xbf16>
    %c129_181 = arith.constant 129 : index
    %c96_182 = arith.constant 96 : index
    %321 = vector.load %arg8[%c129_181, %c96_182] : memref<256x144xbf16, #tpu.memory_space<vmem>>, vector<15x16xbf16>
    tpu.vector_store %arg8[%c129_181, %c96_182], %320 {strides = array<i32>} : memref<256x144xbf16, #tpu.memory_space<vmem>>, vector<15x16xbf16>,
    %322 = vector.extract_strided_slice %13 {offsets = [10, 0, 0], sizes = [1, 15, 16], strides = [1, 1, 1]} : vector<16x16x16xbf16> to vector<1x15x16xbf16>
    %323 = vector.shape_cast %322 : vector<1x15x16xbf16> to vector<15x16xbf16>
    %c145_183 = arith.constant 145 : index
    %c96_184 = arith.constant 96 : index
    %324 = vector.load %arg8[%c145_183, %c96_184] : memref<256x144xbf16, #tpu.memory_space<vmem>>, vector<15x16xbf16>
    tpu.vector_store %arg8[%c145_183, %c96_184], %323 {strides = array<i32>} : memref<256x144xbf16, #tpu.memory_space<vmem>>, vector<15x16xbf16>,
    %325 = vector.extract_strided_slice %13 {offsets = [11, 0, 0], sizes = [1, 15, 16], strides = [1, 1, 1]} : vector<16x16x16xbf16> to vector<1x15x16xbf16>
    %326 = vector.shape_cast %325 : vector<1x15x16xbf16> to vector<15x16xbf16>
    %c161_185 = arith.constant 161 : index
    %c96_186 = arith.constant 96 : index
    %327 = vector.load %arg8[%c161_185, %c96_186] : memref<256x144xbf16, #tpu.memory_space<vmem>>, vector<15x16xbf16>
    tpu.vector_store %arg8[%c161_185, %c96_186], %326 {strides = array<i32>} : memref<256x144xbf16, #tpu.memory_space<vmem>>, vector<15x16xbf16>,
    %328 = vector.extract_strided_slice %13 {offsets = [12, 0, 0], sizes = [1, 15, 16], strides = [1, 1, 1]} : vector<16x16x16xbf16> to vector<1x15x16xbf16>
    %329 = vector.shape_cast %328 : vector<1x15x16xbf16> to vector<15x16xbf16>
    %c177_187 = arith.constant 177 : index
    %c96_188 = arith.constant 96 : index
    %330 = vector.load %arg8[%c177_187, %c96_188] : memref<256x144xbf16, #tpu.memory_space<vmem>>, vector<15x16xbf16>
    tpu.vector_store %arg8[%c177_187, %c96_188], %329 {strides = array<i32>} : memref<256x144xbf16, #tpu.memory_space<vmem>>, vector<15x16xbf16>,
    %331 = vector.extract_strided_slice %13 {offsets = [13, 0, 0], sizes = [1, 15, 16], strides = [1, 1, 1]} : vector<16x16x16xbf16> to vector<1x15x16xbf16>
    %332 = vector.shape_cast %331 : vector<1x15x16xbf16> to vector<15x16xbf16>
    %c193_189 = arith.constant 193 : index
    %c96_190 = arith.constant 96 : index
    %333 = vector.load %arg8[%c193_189, %c96_190] : memref<256x144xbf16, #tpu.memory_space<vmem>>, vector<15x16xbf16>
    tpu.vector_store %arg8[%c193_189, %c96_190], %332 {strides = array<i32>} : memref<256x144xbf16, #tpu.memory_space<vmem>>, vector<15x16xbf16>,
    %334 = vector.extract_strided_slice %13 {offsets = [14, 0, 0], sizes = [1, 15, 16], strides = [1, 1, 1]} : vector<16x16x16xbf16> to vector<1x15x16xbf16>
    %335 = vector.shape_cast %334 : vector<1x15x16xbf16> to vector<15x16xbf16>
    %c209_191 = arith.constant 209 : index
    %c96_192 = arith.constant 96 : index
    %336 = vector.load %arg8[%c209_191, %c96_192] : memref<256x144xbf16, #tpu.memory_space<vmem>>, vector<15x16xbf16>
    tpu.vector_store %arg8[%c209_191, %c96_192], %335 {strides = array<i32>} : memref<256x144xbf16, #tpu.memory_space<vmem>>, vector<15x16xbf16>,
    %337 = vector.extract_strided_slice %13 {offsets = [15, 0, 0], sizes = [1, 15, 16], strides = [1, 1, 1]} : vector<16x16x16xbf16> to vector<1x15x16xbf16>
    %338 = vector.shape_cast %337 : vector<1x15x16xbf16> to vector<15x16xbf16>
    %c225_193 = arith.constant 225 : index
    %c96_194 = arith.constant 96 : index
    %339 = vector.load %arg8[%c225_193, %c96_194] : memref<256x144xbf16, #tpu.memory_space<vmem>>, vector<15x16xbf16>
    tpu.vector_store %arg8[%c225_193, %c96_194], %338 {strides = array<i32>} : memref<256x144xbf16, #tpu.memory_space<vmem>>, vector<15x16xbf16>,
    %340 = vector.extract_strided_slice %13 {offsets = [1, 0, 0], sizes = [1, 16, 16], strides = [1, 1, 1]} : vector<16x16x16xbf16> to vector<1x16x16xbf16>
    %341 = vector.shape_cast %340 : vector<1x16x16xbf16> to vector<16x16xbf16>
    %c0_195 = arith.constant 0 : index
    %c112_196 = arith.constant 112 : index
    %342 = vector.load %arg8[%c0_195, %c112_196] : memref<256x144xbf16, #tpu.memory_space<vmem>>, vector<16x16xbf16>
    tpu.vector_store %arg8[%c0_195, %c112_196], %341 {strides = array<i32>} : memref<256x144xbf16, #tpu.memory_space<vmem>>, vector<16x16xbf16>,
    %343 = vector.extract_strided_slice %13 {offsets = [2, 0, 0], sizes = [1, 16, 16], strides = [1, 1, 1]} : vector<16x16x16xbf16> to vector<1x16x16xbf16>
    %344 = vector.shape_cast %343 : vector<1x16x16xbf16> to vector<16x16xbf16>
    %c16_197 = arith.constant 16 : index
    %c112_198 = arith.constant 112 : index
    %345 = vector.load %arg8[%c16_197, %c112_198] : memref<256x144xbf16, #tpu.memory_space<vmem>>, vector<16x16xbf16>
    tpu.vector_store %arg8[%c16_197, %c112_198], %344 {strides = array<i32>} : memref<256x144xbf16, #tpu.memory_space<vmem>>, vector<16x16xbf16>,
    %346 = vector.extract_strided_slice %13 {offsets = [3, 0, 0], sizes = [1, 16, 16], strides = [1, 1, 1]} : vector<16x16x16xbf16> to vector<1x16x16xbf16>
    %347 = vector.shape_cast %346 : vector<1x16x16xbf16> to vector<16x16xbf16>
    %c32_199 = arith.constant 32 : index
    %c112_200 = arith.constant 112 : index
    %348 = vector.load %arg8[%c32_199, %c112_200] : memref<256x144xbf16, #tpu.memory_space<vmem>>, vector<16x16xbf16>
    tpu.vector_store %arg8[%c32_199, %c112_200], %347 {strides = array<i32>} : memref<256x144xbf16, #tpu.memory_space<vmem>>, vector<16x16xbf16>,
    %349 = vector.extract_strided_slice %13 {offsets = [4, 0, 0], sizes = [1, 16, 16], strides = [1, 1, 1]} : vector<16x16x16xbf16> to vector<1x16x16xbf16>
    %350 = vector.shape_cast %349 : vector<1x16x16xbf16> to vector<16x16xbf16>
    %c48_201 = arith.constant 48 : index
    %c112_202 = arith.constant 112 : index
    %351 = vector.load %arg8[%c48_201, %c112_202] : memref<256x144xbf16, #tpu.memory_space<vmem>>, vector<16x16xbf16>
    tpu.vector_store %arg8[%c48_201, %c112_202], %350 {strides = array<i32>} : memref<256x144xbf16, #tpu.memory_space<vmem>>, vector<16x16xbf16>,
    %352 = vector.extract_strided_slice %13 {offsets = [5, 0, 0], sizes = [1, 16, 16], strides = [1, 1, 1]} : vector<16x16x16xbf16> to vector<1x16x16xbf16>
    %353 = vector.shape_cast %352 : vector<1x16x16xbf16> to vector<16x16xbf16>
    %c64_203 = arith.constant 64 : index
    %c112_204 = arith.constant 112 : index
    %354 = vector.load %arg8[%c64_203, %c112_204] : memref<256x144xbf16, #tpu.memory_space<vmem>>, vector<16x16xbf16>
    tpu.vector_store %arg8[%c64_203, %c112_204], %353 {strides = array<i32>} : memref<256x144xbf16, #tpu.memory_space<vmem>>, vector<16x16xbf16>,
    %355 = vector.extract_strided_slice %13 {offsets = [6, 0, 0], sizes = [1, 16, 16], strides = [1, 1, 1]} : vector<16x16x16xbf16> to vector<1x16x16xbf16>
    %356 = vector.shape_cast %355 : vector<1x16x16xbf16> to vector<16x16xbf16>
    %c80_205 = arith.constant 80 : index
    %c112_206 = arith.constant 112 : index
    %357 = vector.load %arg8[%c80_205, %c112_206] : memref<256x144xbf16, #tpu.memory_space<vmem>>, vector<16x16xbf16>
    tpu.vector_store %arg8[%c80_205, %c112_206], %356 {strides = array<i32>} : memref<256x144xbf16, #tpu.memory_space<vmem>>, vector<16x16xbf16>,
    %358 = vector.extract_strided_slice %13 {offsets = [7, 0, 0], sizes = [1, 16, 16], strides = [1, 1, 1]} : vector<16x16x16xbf16> to vector<1x16x16xbf16>
    %359 = vector.shape_cast %358 : vector<1x16x16xbf16> to vector<16x16xbf16>
    %c96_207 = arith.constant 96 : index
    %c112_208 = arith.constant 112 : index
    %360 = vector.load %arg8[%c96_207, %c112_208] : memref<256x144xbf16, #tpu.memory_space<vmem>>, vector<16x16xbf16>
    tpu.vector_store %arg8[%c96_207, %c112_208], %359 {strides = array<i32>} : memref<256x144xbf16, #tpu.memory_space<vmem>>, vector<16x16xbf16>,
    %361 = vector.extract_strided_slice %13 {offsets = [8, 0, 0], sizes = [1, 16, 16], strides = [1, 1, 1]} : vector<16x16x16xbf16> to vector<1x16x16xbf16>
    %362 = vector.shape_cast %361 : vector<1x16x16xbf16> to vector<16x16xbf16>
    %c112_209 = arith.constant 112 : index
    %c112_210 = arith.constant 112 : index
    %363 = vector.load %arg8[%c112_209, %c112_210] : memref<256x144xbf16, #tpu.memory_space<vmem>>, vector<16x16xbf16>
    tpu.vector_store %arg8[%c112_209, %c112_210], %362 {strides = array<i32>} : memref<256x144xbf16, #tpu.memory_space<vmem>>, vector<16x16xbf16>,
    %364 = vector.extract_strided_slice %13 {offsets = [9, 0, 0], sizes = [1, 16, 16], strides = [1, 1, 1]} : vector<16x16x16xbf16> to vector<1x16x16xbf16>
    %365 = vector.shape_cast %364 : vector<1x16x16xbf16> to vector<16x16xbf16>
    %c128_211 = arith.constant 128 : index
    %c112_212 = arith.constant 112 : index
    %366 = vector.load %arg8[%c128_211, %c112_212] : memref<256x144xbf16, #tpu.memory_space<vmem>>, vector<16x16xbf16>
    tpu.vector_store %arg8[%c128_211, %c112_212], %365 {strides = array<i32>} : memref<256x144xbf16, #tpu.memory_space<vmem>>, vector<16x16xbf16>,
    %367 = vector.extract_strided_slice %13 {offsets = [10, 0, 0], sizes = [1, 16, 16], strides = [1, 1, 1]} : vector<16x16x16xbf16> to vector<1x16x16xbf16>
    %368 = vector.shape_cast %367 : vector<1x16x16xbf16> to vector<16x16xbf16>
    %c144_213 = arith.constant 144 : index
    %c112_214 = arith.constant 112 : index
    %369 = vector.load %arg8[%c144_213, %c112_214] : memref<256x144xbf16, #tpu.memory_space<vmem>>, vector<16x16xbf16>
    tpu.vector_store %arg8[%c144_213, %c112_214], %368 {strides = array<i32>} : memref<256x144xbf16, #tpu.memory_space<vmem>>, vector<16x16xbf16>,
    %370 = vector.extract_strided_slice %13 {offsets = [11, 0, 0], sizes = [1, 16, 16], strides = [1, 1, 1]} : vector<16x16x16xbf16> to vector<1x16x16xbf16>
    %371 = vector.shape_cast %370 : vector<1x16x16xbf16> to vector<16x16xbf16>
    %c160_215 = arith.constant 160 : index
    %c112_216 = arith.constant 112 : index
    %372 = vector.load %arg8[%c160_215, %c112_216] : memref<256x144xbf16, #tpu.memory_space<vmem>>, vector<16x16xbf16>
    tpu.vector_store %arg8[%c160_215, %c112_216], %371 {strides = array<i32>} : memref<256x144xbf16, #tpu.memory_space<vmem>>, vector<16x16xbf16>,
    %373 = vector.extract_strided_slice %13 {offsets = [12, 0, 0], sizes = [1, 16, 16], strides = [1, 1, 1]} : vector<16x16x16xbf16> to vector<1x16x16xbf16>
    %374 = vector.shape_cast %373 : vector<1x16x16xbf16> to vector<16x16xbf16>
    %c176_217 = arith.constant 176 : index
    %c112_218 = arith.constant 112 : index
    %375 = vector.load %arg8[%c176_217, %c112_218] : memref<256x144xbf16, #tpu.memory_space<vmem>>, vector<16x16xbf16>
    tpu.vector_store %arg8[%c176_217, %c112_218], %374 {strides = array<i32>} : memref<256x144xbf16, #tpu.memory_space<vmem>>, vector<16x16xbf16>,
    %376 = vector.extract_strided_slice %13 {offsets = [13, 0, 0], sizes = [1, 16, 16], strides = [1, 1, 1]} : vector<16x16x16xbf16> to vector<1x16x16xbf16>
    %377 = vector.shape_cast %376 : vector<1x16x16xbf16> to vector<16x16xbf16>
    %c192_219 = arith.constant 192 : index
    %c112_220 = arith.constant 112 : index
    %378 = vector.load %arg8[%c192_219, %c112_220] : memref<256x144xbf16, #tpu.memory_space<vmem>>, vector<16x16xbf16>
    tpu.vector_store %arg8[%c192_219, %c112_220], %377 {strides = array<i32>} : memref<256x144xbf16, #tpu.memory_space<vmem>>, vector<16x16xbf16>,
    %379 = vector.extract_strided_slice %13 {offsets = [14, 0, 0], sizes = [1, 16, 16], strides = [1, 1, 1]} : vector<16x16x16xbf16> to vector<1x16x16xbf16>
    %380 = vector.shape_cast %379 : vector<1x16x16xbf16> to vector<16x16xbf16>
    %c208_221 = arith.constant 208 : index
    %c112_222 = arith.constant 112 : index
    %381 = vector.load %arg8[%c208_221, %c112_222] : memref<256x144xbf16, #tpu.memory_space<vmem>>, vector<16x16xbf16>
    tpu.vector_store %arg8[%c208_221, %c112_222], %380 {strides = array<i32>} : memref<256x144xbf16, #tpu.memory_space<vmem>>, vector<16x16xbf16>,
    %382 = vector.extract_strided_slice %13 {offsets = [15, 0, 0], sizes = [1, 16, 16], strides = [1, 1, 1]} : vector<16x16x16xbf16> to vector<1x16x16xbf16>
    %383 = vector.shape_cast %382 : vector<1x16x16xbf16> to vector<16x16xbf16>
    %c224_223 = arith.constant 224 : index
    %c112_224 = arith.constant 112 : index
    %384 = vector.load %arg8[%c224_223, %c112_224] : memref<256x144xbf16, #tpu.memory_space<vmem>>, vector<16x16xbf16>
    tpu.vector_store %arg8[%c224_223, %c112_224], %383 {strides = array<i32>} : memref<256x144xbf16, #tpu.memory_space<vmem>>, vector<16x16xbf16>,
    %385 = vector.extract_strided_slice %13 {offsets = [1, 1, 0], sizes = [1, 15, 16], strides = [1, 1, 1]} : vector<16x16x16xbf16> to vector<1x15x16xbf16>
    %386 = vector.shape_cast %385 : vector<1x15x16xbf16> to vector<15x16xbf16>
    %c0_225 = arith.constant 0 : index
    %c128_226 = arith.constant 128 : index
    %387 = vector.load %arg8[%c0_225, %c128_226] : memref<256x144xbf16, #tpu.memory_space<vmem>>, vector<15x16xbf16>
    tpu.vector_store %arg8[%c0_225, %c128_226], %386 {strides = array<i32>} : memref<256x144xbf16, #tpu.memory_space<vmem>>, vector<15x16xbf16>,
    %388 = vector.extract_strided_slice %13 {offsets = [2, 1, 0], sizes = [1, 15, 16], strides = [1, 1, 1]} : vector<16x16x16xbf16> to vector<1x15x16xbf16>
    %389 = vector.shape_cast %388 : vector<1x15x16xbf16> to vector<15x16xbf16>
    %c16_227 = arith.constant 16 : index
    %c128_228 = arith.constant 128 : index
    %390 = vector.load %arg8[%c16_227, %c128_228] : memref<256x144xbf16, #tpu.memory_space<vmem>>, vector<15x16xbf16>
    tpu.vector_store %arg8[%c16_227, %c128_228], %389 {strides = array<i32>} : memref<256x144xbf16, #tpu.memory_space<vmem>>, vector<15x16xbf16>,
    %391 = vector.extract_strided_slice %13 {offsets = [3, 1, 0], sizes = [1, 15, 16], strides = [1, 1, 1]} : vector<16x16x16xbf16> to vector<1x15x16xbf16>
    %392 = vector.shape_cast %391 : vector<1x15x16xbf16> to vector<15x16xbf16>
    %c32_229 = arith.constant 32 : index
    %c128_230 = arith.constant 128 : index
    %393 = vector.load %arg8[%c32_229, %c128_230] : memref<256x144xbf16, #tpu.memory_space<vmem>>, vector<15x16xbf16>
    tpu.vector_store %arg8[%c32_229, %c128_230], %392 {strides = array<i32>} : memref<256x144xbf16, #tpu.memory_space<vmem>>, vector<15x16xbf16>,
    %394 = vector.extract_strided_slice %13 {offsets = [4, 1, 0], sizes = [1, 15, 16], strides = [1, 1, 1]} : vector<16x16x16xbf16> to vector<1x15x16xbf16>
    %395 = vector.shape_cast %394 : vector<1x15x16xbf16> to vector<15x16xbf16>
    %c48_231 = arith.constant 48 : index
    %c128_232 = arith.constant 128 : index
    %396 = vector.load %arg8[%c48_231, %c128_232] : memref<256x144xbf16, #tpu.memory_space<vmem>>, vector<15x16xbf16>
    tpu.vector_store %arg8[%c48_231, %c128_232], %395 {strides = array<i32>} : memref<256x144xbf16, #tpu.memory_space<vmem>>, vector<15x16xbf16>,
    %397 = vector.extract_strided_slice %13 {offsets = [5, 1, 0], sizes = [1, 15, 16], strides = [1, 1, 1]} : vector<16x16x16xbf16> to vector<1x15x16xbf16>
    %398 = vector.shape_cast %397 : vector<1x15x16xbf16> to vector<15x16xbf16>
    %c64_233 = arith.constant 64 : index
    %c128_234 = arith.constant 128 : index
    %399 = vector.load %arg8[%c64_233, %c128_234] : memref<256x144xbf16, #tpu.memory_space<vmem>>, vector<15x16xbf16>
    tpu.vector_store %arg8[%c64_233, %c128_234], %398 {strides = array<i32>} : memref<256x144xbf16, #tpu.memory_space<vmem>>, vector<15x16xbf16>,
    %400 = vector.extract_strided_slice %13 {offsets = [6, 1, 0], sizes = [1, 15, 16], strides = [1, 1, 1]} : vector<16x16x16xbf16> to vector<1x15x16xbf16>
    %401 = vector.shape_cast %400 : vector<1x15x16xbf16> to vector<15x16xbf16>
    %c80_235 = arith.constant 80 : index
    %c128_236 = arith.constant 128 : index
    %402 = vector.load %arg8[%c80_235, %c128_236] : memref<256x144xbf16, #tpu.memory_space<vmem>>, vector<15x16xbf16>
    tpu.vector_store %arg8[%c80_235, %c128_236], %401 {strides = array<i32>} : memref<256x144xbf16, #tpu.memory_space<vmem>>, vector<15x16xbf16>,
    %403 = vector.extract_strided_slice %13 {offsets = [7, 1, 0], sizes = [1, 15, 16], strides = [1, 1, 1]} : vector<16x16x16xbf16> to vector<1x15x16xbf16>
    %404 = vector.shape_cast %403 : vector<1x15x16xbf16> to vector<15x16xbf16>
    %c96_237 = arith.constant 96 : index
    %c128_238 = arith.constant 128 : index
    %405 = vector.load %arg8[%c96_237, %c128_238] : memref<256x144xbf16, #tpu.memory_space<vmem>>, vector<15x16xbf16>
    tpu.vector_store %arg8[%c96_237, %c128_238], %404 {strides = array<i32>} : memref<256x144xbf16, #tpu.memory_space<vmem>>, vector<15x16xbf16>,
    %406 = vector.extract_strided_slice %13 {offsets = [8, 1, 0], sizes = [1, 15, 16], strides = [1, 1, 1]} : vector<16x16x16xbf16> to vector<1x15x16xbf16>
    %407 = vector.shape_cast %406 : vector<1x15x16xbf16> to vector<15x16xbf16>
    %c112_239 = arith.constant 112 : index
    %c128_240 = arith.constant 128 : index
    %408 = vector.load %arg8[%c112_239, %c128_240] : memref<256x144xbf16, #tpu.memory_space<vmem>>, vector<15x16xbf16>
    tpu.vector_store %arg8[%c112_239, %c128_240], %407 {strides = array<i32>} : memref<256x144xbf16, #tpu.memory_space<vmem>>, vector<15x16xbf16>,
    %409 = vector.extract_strided_slice %13 {offsets = [9, 1, 0], sizes = [1, 15, 16], strides = [1, 1, 1]} : vector<16x16x16xbf16> to vector<1x15x16xbf16>
    %410 = vector.shape_cast %409 : vector<1x15x16xbf16> to vector<15x16xbf16>
    %c128_241 = arith.constant 128 : index
    %c128_242 = arith.constant 128 : index
    %411 = vector.load %arg8[%c128_241, %c128_242] : memref<256x144xbf16, #tpu.memory_space<vmem>>, vector<15x16xbf16>
    tpu.vector_store %arg8[%c128_241, %c128_242], %410 {strides = array<i32>} : memref<256x144xbf16, #tpu.memory_space<vmem>>, vector<15x16xbf16>,
    %412 = vector.extract_strided_slice %13 {offsets = [10, 1, 0], sizes = [1, 15, 16], strides = [1, 1, 1]} : vector<16x16x16xbf16> to vector<1x15x16xbf16>
    %413 = vector.shape_cast %412 : vector<1x15x16xbf16> to vector<15x16xbf16>
    %c144_243 = arith.constant 144 : index
    %c128_244 = arith.constant 128 : index
    %414 = vector.load %arg8[%c144_243, %c128_244] : memref<256x144xbf16, #tpu.memory_space<vmem>>, vector<15x16xbf16>
    tpu.vector_store %arg8[%c144_243, %c128_244], %413 {strides = array<i32>} : memref<256x144xbf16, #tpu.memory_space<vmem>>, vector<15x16xbf16>,
    %415 = vector.extract_strided_slice %13 {offsets = [11, 1, 0], sizes = [1, 15, 16], strides = [1, 1, 1]} : vector<16x16x16xbf16> to vector<1x15x16xbf16>
    %416 = vector.shape_cast %415 : vector<1x15x16xbf16> to vector<15x16xbf16>
    %c160_245 = arith.constant 160 : index
    %c128_246 = arith.constant 128 : index
    %417 = vector.load %arg8[%c160_245, %c128_246] : memref<256x144xbf16, #tpu.memory_space<vmem>>, vector<15x16xbf16>
    tpu.vector_store %arg8[%c160_245, %c128_246], %416 {strides = array<i32>} : memref<256x144xbf16, #tpu.memory_space<vmem>>, vector<15x16xbf16>,
    %418 = vector.extract_strided_slice %13 {offsets = [12, 1, 0], sizes = [1, 15, 16], strides = [1, 1, 1]} : vector<16x16x16xbf16> to vector<1x15x16xbf16>
    %419 = vector.shape_cast %418 : vector<1x15x16xbf16> to vector<15x16xbf16>
    %c176_247 = arith.constant 176 : index
    %c128_248 = arith.constant 128 : index
    %420 = vector.load %arg8[%c176_247, %c128_248] : memref<256x144xbf16, #tpu.memory_space<vmem>>, vector<15x16xbf16>
    tpu.vector_store %arg8[%c176_247, %c128_248], %419 {strides = array<i32>} : memref<256x144xbf16, #tpu.memory_space<vmem>>, vector<15x16xbf16>,
    %421 = vector.extract_strided_slice %13 {offsets = [13, 1, 0], sizes = [1, 15, 16], strides = [1, 1, 1]} : vector<16x16x16xbf16> to vector<1x15x16xbf16>
    %422 = vector.shape_cast %421 : vector<1x15x16xbf16> to vector<15x16xbf16>
    %c192_249 = arith.constant 192 : index
    %c128_250 = arith.constant 128 : index
    %423 = vector.load %arg8[%c192_249, %c128_250] : memref<256x144xbf16, #tpu.memory_space<vmem>>, vector<15x16xbf16>
    tpu.vector_store %arg8[%c192_249, %c128_250], %422 {strides = array<i32>} : memref<256x144xbf16, #tpu.memory_space<vmem>>, vector<15x16xbf16>,
    %424 = vector.extract_strided_slice %13 {offsets = [14, 1, 0], sizes = [1, 15, 16], strides = [1, 1, 1]} : vector<16x16x16xbf16> to vector<1x15x16xbf16>
    %425 = vector.shape_cast %424 : vector<1x15x16xbf16> to vector<15x16xbf16>
    %c208_251 = arith.constant 208 : index
    %c128_252 = arith.constant 128 : index
    %426 = vector.load %arg8[%c208_251, %c128_252] : memref<256x144xbf16, #tpu.memory_space<vmem>>, vector<15x16xbf16>
    tpu.vector_store %arg8[%c208_251, %c128_252], %425 {strides = array<i32>} : memref<256x144xbf16, #tpu.memory_space<vmem>>, vector<15x16xbf16>,
    %427 = vector.extract_strided_slice %13 {offsets = [15, 1, 0], sizes = [1, 15, 16], strides = [1, 1, 1]} : vector<16x16x16xbf16> to vector<1x15x16xbf16>
    %428 = vector.shape_cast %427 : vector<1x15x16xbf16> to vector<15x16xbf16>
    %c224_253 = arith.constant 224 : index
    %c128_254 = arith.constant 128 : index
    %429 = vector.load %arg8[%c224_253, %c128_254] : memref<256x144xbf16, #tpu.memory_space<vmem>>, vector<15x16xbf16>
    tpu.vector_store %arg8[%c224_253, %c128_254], %428 {strides = array<i32>} : memref<256x144xbf16, #tpu.memory_space<vmem>>, vector<15x16xbf16>,
    %c0_255 = arith.constant 0 : index
    %c0_256 = arith.constant 0 : index
    %430 = vector.load %arg8[%c0_255, %c0_256] : memref<256x144xbf16, #tpu.memory_space<vmem>>, vector<256x144xbf16>
    %c0_257 = arith.constant 0 : index
    %c0_258 = arith.constant 0 : index
    %431 = vector.load %arg4[%c0_257, %c0_258] : memref<144x128xbf16, #tpu.memory_space<vmem>>, vector<144x128xbf16>
    %cst_259 = arith.constant dense<0.000000e+00> : vector<256x128xf32>
    %432 = tpu.matmul %430, %431, %cst_259 {dimension_numbers = #tpu.dot_dimension_numbers<[1], [0], [0], [1], [0, 0, 1, 1], [], []>} : vector<256x144xbf16>, vector<144x128xbf16>, vector<256x128xf32> -> vector<256x128xf32>
    %c0_260 = arith.constant 0 : index
    %c0_261 = arith.constant 0 : index
    %433 = vector.load %arg5[%c0_260, %c0_261] : memref<1x128xf32, #tpu.memory_space<vmem>>, vector<1x128xf32>
    %434 = vector.broadcast %433 : vector<1x128xf32> to vector<256x128xf32>
    %435 = arith.addf %432, %434 : vector<256x128xf32>
    %436 = math.tanh %435 : vector<256x128xf32>
    %c0_262 = arith.constant 0 : index
    %c0_263 = arith.constant 0 : index
    %c0_264 = arith.constant 0 : index
    %437 = vector.load %arg6[%c0_262, %c0_263, %c0_264] : memref<1x256x128xf32, #tpu.memory_space<vmem>>, vector<1x256x128xf32>
    %438 = vector.shape_cast %437 : vector<1x256x128xf32> to vector<256x128xf32>
    %439 = vector.shape_cast %436 : vector<256x128xf32> to vector<1x256x128xf32>
    tpu.vector_store %arg6[%c0_262, %c0_263, %c0_264], %439 {strides = array<i32>} : memref<1x256x128xf32, #tpu.memory_space<vmem>>, vector<1x256x128xf32>,
    %cst_265 = arith.constant dense<0.000000e+00> : vector<128xf32>
    %440 = vector.multi_reduction <add>, %436, %cst_265 [0] : vector<256x128xf32> to vector<128xf32>
    %441 = vector.shape_cast %440 : vector<128xf32> to vector<1x128xf32>
    %c0_266 = arith.constant 0 : index
    %c0_267 = arith.constant 0 : index
    %c0_268 = arith.constant 0 : index
    %442 = vector.load %arg7[%c0_266, %c0_267, %c0_268] : memref<1x2x128xf32, #tpu.memory_space<vmem>>, vector<1x1x128xf32>
    %443 = vector.shape_cast %442 : vector<1x1x128xf32> to vector<1x128xf32>
    %444 = vector.shape_cast %441 : vector<1x128xf32> to vector<1x1x128xf32>
    tpu.vector_store %arg7[%c0_266, %c0_267, %c0_268], %444 {strides = array<i32>} : memref<1x2x128xf32, #tpu.memory_space<vmem>>, vector<1x1x128xf32>,
    %445 = arith.mulf %436, %436 : vector<256x128xf32>
    %cst_269 = arith.constant dense<0.000000e+00> : vector<128xf32>
    %446 = vector.multi_reduction <add>, %445, %cst_269 [0] : vector<256x128xf32> to vector<128xf32>
    %447 = vector.shape_cast %446 : vector<128xf32> to vector<1x128xf32>
    %c0_270 = arith.constant 0 : index
    %c1_271 = arith.constant 1 : index
    %c0_272 = arith.constant 0 : index
    %448 = vector.load %arg7[%c0_270, %c1_271, %c0_272] : memref<1x2x128xf32, #tpu.memory_space<vmem>>, vector<1x1x128xf32>
    %449 = vector.shape_cast %448 : vector<1x1x128xf32> to vector<1x128xf32>
    %450 = vector.shape_cast %447 : vector<1x128xf32> to vector<1x1x128xf32>
    tpu.vector_store %arg7[%c0_270, %c1_271, %c0_272], %450 {strides = array<i32>} : memref<1x2x128xf32, #tpu.memory_space<vmem>>, vector<1x1x128xf32>,
    return
  }
  func.func @transform_0(%arg0: i32) -> (i32, i32, i32, i32) {
    %c0_i32 = arith.constant 0 : i32
    %c0_i32_0 = arith.constant 0 : i32
    %c0_i32_1 = arith.constant 0 : i32
    %c0_i32_2 = arith.constant 0 : i32
    return %arg0, %c0_i32, %c0_i32_0, %c0_i32_1 : i32, i32, i32, i32
  }
  func.func @transform_1(%arg0: i32) -> (i32, i32) {
    %c0_i32 = arith.constant 0 : i32
    %c0_i32_0 = arith.constant 0 : i32
    %c0_i32_1 = arith.constant 0 : i32
    return %c0_i32, %c0_i32_0 : i32, i32
  }
  func.func @transform_2(%arg0: i32) -> (i32, i32) {
    %c0_i32 = arith.constant 0 : i32
    %c0_i32_0 = arith.constant 0 : i32
    %c0_i32_1 = arith.constant 0 : i32
    return %c0_i32, %c0_i32_0 : i32, i32
  }
  func.func @transform_3(%arg0: i32) -> (i32, i32) {
    %c0_i32 = arith.constant 0 : i32
    %c0_i32_0 = arith.constant 0 : i32
    %c0_i32_1 = arith.constant 0 : i32
    return %c0_i32, %c0_i32_0 : i32, i32
  }
  func.func @transform_4(%arg0: i32) -> (i32, i32) {
    %c0_i32 = arith.constant 0 : i32
    %c0_i32_0 = arith.constant 0 : i32
    %c0_i32_1 = arith.constant 0 : i32
    return %c0_i32, %c0_i32_0 : i32, i32
  }
  func.func @transform_5(%arg0: i32) -> (i32, i32, i32) {
    %c0_i32 = arith.constant 0 : i32
    %c0_i32_0 = arith.constant 0 : i32
    %c0_i32_1 = arith.constant 0 : i32
    return %arg0, %c0_i32, %c0_i32_0 : i32, i32, i32
  }
  func.func @transform_6(%arg0: i32) -> (i32, i32, i32) {
    %c0_i32 = arith.constant 0 : i32
    %c0_i32_0 = arith.constant 0 : i32
    %c0_i32_1 = arith.constant 0 : i32
    return %arg0, %c0_i32, %c0_i32_0 : i32, i32, i32
  }
}

</mosaic_0001>

<llo_original>
// kernel: generator_forward.4
$region0: #{generator_forward.4}
  #allocation0 [shape = 'u32[]', space=smem, size = 0x4, offset = 0x4, fixed_abs, tag = 'smem constant byte address 0x4 - core index']
  #allocation1 [shape = 'u32[72,128]{1,0:T(1,128)}', space=vmem, size = 0x9000, scoped, tag = 'internal scratch']
  %s0 = inlined_call_operand.vmem [shape: bf16[2,32], index: 0, kind: input, shape index: {}]
  %s1 = inlined_call_operand.vmem [shape: bf16[32,1024], index: 1, kind: input, shape index: {}]
  %s2 = inlined_call_operand.vmem [shape: bf16[2,1024], index: 2, kind: output, shape index: {0}]
  %s3 = inlined_call_operand.vmem [shape: f32[2,64], index: 3, kind: output, shape index: {1}]
  %4 = xla_tuple %s2, %s3
  %s5 = sld [smem:[#allocation0]]
  $region26: #{generator_forward.4} parent=0
    _
  %s7 = ssub.s32 1, %s5
  %s8 = scalar_select 0, %s7, %s5
  // Predicated region
  $region2: #{generator_forward.4} parent=0 // pred_check
    _
  $region3: #{generator_forward.4} parent=0 // pred_check_branch
    %10 = sbr.rel (0) target = $region5
  $region4: #{generator_forward.4} parent=0 // pred_region
    _
  $region5: #{generator_forward.4} parent=0 // pred_fallthru
    _
  // Predicated region
  $region6: #{generator_forward.4} parent=0 // pred_check
    _
  $region7: #{generator_forward.4} parent=0 // pred_check_branch
    %12 = sbr.rel (0) target = $region9
  $region8: #{generator_forward.4} parent=0 // pred_region
    _
  $region9: #{generator_forward.4} parent=0 // pred_fallthru
    _
  %v14 = vld [vmem:[%s0] sm:$0x1]
  %v15 = vld [vmem:[%s1] sm:$0xff]
  %v16 = vld [vmem:[%s1 + $0x8] sm:$0xff]
  %v17 = vld [vmem:[%s1 + $0x10] sm:$0xff]
  %v18 = vld [vmem:[%s1 + $0x18] sm:$0xff]
  %v19 = vld [vmem:[%s1 + $0x20] sm:$0xff]
  %v20 = vld [vmem:[%s1 + $0x28] sm:$0xff]
  %v21 = vld [vmem:[%s1 + $0x30] sm:$0xff]
  %v22 = vld [vmem:[%s1 + $0x38] sm:$0xff]
  %v23 = vld [vmem:[%s1 + $0x40] sm:$0xff]
  %v24 = vld [vmem:[%s1 + $0x48] sm:$0xff]
  %v25 = vld [vmem:[%s1 + $0x50] sm:$0xff]
  %v26 = vld [vmem:[%s1 + $0x58] sm:$0xff]
  %v27 = vld [vmem:[%s1 + $0x60] sm:$0xff]
  %v28 = vld [vmem:[%s1 + $0x68] sm:$0xff]
  %v29 = vld [vmem:[%s1 + $0x70] sm:$0xff]
  %v30 = vld [vmem:[%s1 + $0x78] sm:$0xff]
  %v47 = vunpack.c.l.b16 %v15
  %v48 = vunpack.c.h.b16 %v15
  %v49 = vunpack.c.l.b16 %v16
  %v50 = vunpack.c.h.b16 %v16
  %v51 = vunpack.c.l.b16 %v17
  %v52 = vunpack.c.h.b16 %v17
  %v53 = vunpack.c.l.b16 %v18
  %v54 = vunpack.c.h.b16 %v18
  %v55 = vunpack.c.l.b16 %v19
  %v56 = vunpack.c.h.b16 %v19
  %v57 = vunpack.c.l.b16 %v20
  %v58 = vunpack.c.h.b16 %v20
  %v59 = vunpack.c.l.b16 %v21
  %v60 = vunpack.c.h.b16 %v21
  %v61 = vunpack.c.l.b16 %v22
  %v62 = vunpack.c.h.b16 %v22
  %v63 = vunpack.c.l.b16 %v23
  %v64 = vunpack.c.h.b16 %v23
  %v65 = vunpack.c.l.b16 %v24
  %v66 = vunpack.c.h.b16 %v24
  %v67 = vunpack.c.l.b16 %v25
  %v68 = vunpack.c.h.b16 %v25
  %v69 = vunpack.c.l.b16 %v26
  %v70 = vunpack.c.h.b16 %v26
  %v71 = vunpack.c.l.b16 %v27
  %v72 = vunpack.c.h.b16 %v27
  %v73 = vunpack.c.l.b16 %v28
  %v74 = vunpack.c.h.b16 %v28
  %v75 = vunpack.c.l.b16 %v29
  %v76 = vunpack.c.h.b16 %v29
  %v77 = vunpack.c.l.b16 %v30
  %v78 = vunpack.c.h.b16 %v30
  %v79 = vpack.c.b16 %v55, %v47
  %v80 = vpack.c.b16 %v56, %v48
  %v81 = vpack.c.b16 %v57, %v49
  %v82 = vpack.c.b16 %v58, %v50
  %v83 = vpack.c.b16 %v59, %v51
  %v84 = vpack.c.b16 %v60, %v52
  %v85 = vpack.c.b16 %v61, %v53
  %v86 = vpack.c.b16 %v62, %v54
  %v87 = vpack.c.b16 %v71, %v63
  %v88 = vpack.c.b16 %v72, %v64
  %v89 = vpack.c.b16 %v73, %v65
  %v90 = vpack.c.b16 %v74, %v66
  %v91 = vpack.c.b16 %v75, %v67
  %v92 = vpack.c.b16 %v76, %v68
  %v93 = vpack.c.b16 %v77, %v69
  %v94 = vpack.c.b16 %v78, %v70
  %vm111 = vcmask 261120
  %v113 = vsel %vm111, %v14, 0
  %115 = vmatpush.bf16.msra.mxu0 0
  %116 = vmatpush.bf16.msra.mxu0 0
  %117 = vmatpush.bf16.msra.mxu0 0
  %118 = vmatpush.bf16.msra.mxu0 0
  %119 = vmatpush.bf16.msra.mxu0 0
  %120 = vmatpush.bf16.msra.mxu0 0
  %121 = vmatpush.bf16.msra.mxu0 %v87
  %122 = vmatpush.bf16.msra.mxu0 %v79
  %123 = vmatmul.bf16.gmra.mxu0 %v113
  %v124 = vpop.f32.mrf.mxu0
  %v125 = vadd.f32 0.0, %v124
  %v126 = vpop.f32.mrf.mxu0
  %127 = vdwg.mxu0
  %128 = vmatpush.bf16.msra.mxu0 0
  %129 = vmatpush.bf16.msra.mxu0 0
  %130 = vmatpush.bf16.msra.mxu0 0
  %131 = vmatpush.bf16.msra.mxu0 0
  %132 = vmatpush.bf16.msra.mxu0 0
  %133 = vmatpush.bf16.msra.mxu0 0
  %134 = vmatpush.bf16.msra.mxu0 %v88
  %135 = vmatpush.bf16.msra.mxu0 %v80
  %136 = vmatmul.bf16.gmra.mxu0 %v113
  %v137 = vpop.f32.mrf.mxu0
  %v138 = vadd.f32 0.0, %v137
  %v139 = vpop.f32.mrf.mxu0
  %140 = vdwg.mxu0
  %141 = vmatpush.bf16.msra.mxu0 0
  %142 = vmatpush.bf16.msra.mxu0 0
  %143 = vmatpush.bf16.msra.mxu0 0
  %144 = vmatpush.bf16.msra.mxu0 0
  %145 = vmatpush.bf16.msra.mxu0 0
  %146 = vmatpush.bf16.msra.mxu0 0
  %147 = vmatpush.bf16.msra.mxu0 %v89
  %148 = vmatpush.bf16.msra.mxu0 %v81
  %149 = vmatmul.bf16.gmra.mxu0 %v113
  %v150 = vpop.f32.mrf.mxu0
  %v151 = vadd.f32 0.0, %v150
  %v152 = vpop.f32.mrf.mxu0
  %153 = vdwg.mxu0
  %154 = vmatpush.bf16.msra.mxu0 0
  %155 = vmatpush.bf16.msra.mxu0 0
  %156 = vmatpush.bf16.msra.mxu0 0
  %157 = vmatpush.bf16.msra.mxu0 0
  %158 = vmatpush.bf16.msra.mxu0 0
  %159 = vmatpush.bf16.msra.mxu0 0
  %160 = vmatpush.bf16.msra.mxu0 %v90
  %161 = vmatpush.bf16.msra.mxu0 %v82
  %162 = vmatmul.bf16.gmra.mxu0 %v113
  %v163 = vpop.f32.mrf.mxu0
  %v164 = vadd.f32 0.0, %v163
  %v165 = vpop.f32.mrf.mxu0
  %166 = vdwg.mxu0
  %167 = vmatpush.bf16.msra.mxu0 0
  %168 = vmatpush.bf16.msra.mxu0 0
  %169 = vmatpush.bf16.msra.mxu0 0
  %170 = vmatpush.bf16.msra.mxu0 0
  %171 = vmatpush.bf16.msra.mxu0 0
  %172 = vmatpush.bf16.msra.mxu0 0
  %173 = vmatpush.bf16.msra.mxu0 %v91
  %174 = vmatpush.bf16.msra.mxu0 %v83
  %175 = vmatmul.bf16.gmra.mxu0 %v113
  %v176 = vpop.f32.mrf.mxu0
  %v177 = vadd.f32 0.0, %v176
  %v178 = vpop.f32.mrf.mxu0
  %179 = vdwg.mxu0
  %180 = vmatpush.bf16.msra.mxu0 0
  %181 = vmatpush.bf16.msra.mxu0 0
  %182 = vmatpush.bf16.msra.mxu0 0
  %183 = vmatpush.bf16.msra.mxu0 0
  %184 = vmatpush.bf16.msra.mxu0 0
  %185 = vmatpush.bf16.msra.mxu0 0
  %186 = vmatpush.bf16.msra.mxu0 %v92
  %187 = vmatpush.bf16.msra.mxu0 %v84
  %188 = vmatmul.bf16.gmra.mxu0 %v113
  %v189 = vpop.f32.mrf.mxu0
  %v190 = vadd.f32 0.0, %v189
  %v191 = vpop.f32.mrf.mxu0
  %192 = vdwg.mxu0
  %193 = vmatpush.bf16.msra.mxu0 0
  %194 = vmatpush.bf16.msra.mxu0 0
  %195 = vmatpush.bf16.msra.mxu0 0
  %196 = vmatpush.bf16.msra.mxu0 0
  %197 = vmatpush.bf16.msra.mxu0 0
  %198 = vmatpush.bf16.msra.mxu0 0
  %199 = vmatpush.bf16.msra.mxu0 %v93
  %200 = vmatpush.bf16.msra.mxu0 %v85
  %201 = vmatmul.bf16.gmra.mxu0 %v113
  %v202 = vpop.f32.mrf.mxu0
  %v203 = vadd.f32 0.0, %v202
  %v204 = vpop.f32.mrf.mxu0
  %205 = vdwg.mxu0
  %206 = vmatpush.bf16.msra.mxu0 0
  %207 = vmatpush.bf16.msra.mxu0 0
  %208 = vmatpush.bf16.msra.mxu0 0
  %209 = vmatpush.bf16.msra.mxu0 0
  %210 = vmatpush.bf16.msra.mxu0 0
  %211 = vmatpush.bf16.msra.mxu0 0
  %212 = vmatpush.bf16.msra.mxu0 %v94
  %213 = vmatpush.bf16.msra.mxu0 %v86
  %214 = vmatmul.bf16.gmra.mxu0 %v113
  %v215 = vpop.f32.mrf.mxu0
  %v216 = vadd.f32 0.0, %v215
  %v217 = vpop.f32.mrf.mxu0
  %218 = vdwg.mxu0
  %v219 = vpack.c.bf16 %v138, %v125
  %v220 = vpack.c.bf16 %v164, %v151
  %v221 = vpack.c.bf16 %v190, %v177
  %v222 = vpack.c.bf16 %v216, %v203
  %v227 = vrot.slane %v219, 3
  %v228 = vrot.slane %v220, 6
  %v229 = vrot.slane %v220, 1
  %v230 = vrot.slane %v221, 4
  %v231 = vrot.slane %v221, 7
  %v232 = vrot.slane %v222, 2
  %v233 = vrot.slane %v222, 5
  %vm234 = vcmask 1040384
  %v237 = vsel %vm234, %v219, %v227
  %vm238 = vcmask 1042434
  %v241 = vsel %vm238, %v228, %v229
  %vm242 = vcmask 1041408
  %v243 = vsel %vm242, %v237, %v241
  %vm244 = vcmask 1044484
  %v247 = vsel %vm244, %v230, %v231
  %vm248 = vcmask 1046534
  %v251 = vsel %vm248, %v232, %v233
  %vm252 = vcmask 1045508
  %v253 = vsel %vm252, %v247, %v251
  %vm254 = vcmask 1043456
  %v255 = vsel %vm254, %v243, %v253
  %257 = vst [vmem:[%s2] sm:$0xff] %v255
  %v258 = vsel %vm242, %v125, 0.0
  %v259 = vrot.slane %v258, 4
  %v260 = vadd.f32 %v258, %v259
  %v261 = vrot.slane %v260, 2
  %v262 = vadd.f32 %v260, %v261
  %v263 = vrot.slane %v262, 1
  %v264 = vadd.f32 %v262, %v263
  %v265 = vsel %vm242, %v138, 0.0
  %v266 = vrot.slane %v265, 4
  %v267 = vadd.f32 %v265, %v266
  %v268 = vrot.slane %v267, 2
  %v269 = vadd.f32 %v267, %v268
  %v270 = vrot.slane %v269, 1
  %v271 = vadd.f32 %v269, %v270
  %v272 = vsel %vm242, %v151, 0.0
  %v273 = vrot.slane %v272, 4
  %v274 = vadd.f32 %v272, %v273
  %v275 = vrot.slane %v274, 2
  %v276 = vadd.f32 %v274, %v275
  %v277 = vrot.slane %v276, 1
  %v278 = vadd.f32 %v276, %v277
  %v279 = vsel %vm242, %v164, 0.0
  %v280 = vrot.slane %v279, 4
  %v281 = vadd.f32 %v279, %v280
  %v282 = vrot.slane %v281, 2
  %v283 = vadd.f32 %v281, %v282
  %v284 = vrot.slane %v283, 1
  %v285 = vadd.f32 %v283, %v284
  %v286 = vsel %vm242, %v177, 0.0
  %v287 = vrot.slane %v286, 4
  %v288 = vadd.f32 %v286, %v287
  %v289 = vrot.slane %v288, 2
  %v290 = vadd.f32 %v288, %v289
  %v291 = vrot.slane %v290, 1
  %v292 = vadd.f32 %v290, %v291
  %v293 = vsel %vm242, %v190, 0.0
  %v294 = vrot.slane %v293, 4
  %v295 = vadd.f32 %v293, %v294
  %v296 = vrot.slane %v295, 2
  %v297 = vadd.f32 %v295, %v296
  %v298 = vrot.slane %v297, 1
  %v299 = vadd.f32 %v297, %v298
  %v300 = vsel %vm242, %v203, 0.0
  %v301 = vrot.slane %v300, 4
  %v302 = vadd.f32 %v300, %v301
  %v303 = vrot.slane %v302, 2
  %v304 = vadd.f32 %v302, %v303
  %v305 = vrot.slane %v304, 1
  %v306 = vadd.f32 %v304, %v305
  %v307 = vsel %vm242, %v216, 0.0
  %v308 = vrot.slane %v307, 4
  %v309 = vadd.f32 %v307, %v308
  %v310 = vrot.slane %v309, 2
  %v311 = vadd.f32 %v309, %v310
  %v312 = vrot.slane %v311, 1
  %v313 = vadd.f32 %v311, %v312
  %v314 = vmul.f32 %v125, %v125
  %v315 = vmul.f32 %v138, %v138
  %v316 = vmul.f32 %v151, %v151
  %v317 = vmul.f32 %v164, %v164
  %v318 = vmul.f32 %v177, %v177
  %v319 = vmul.f32 %v190, %v190
  %v320 = vmul.f32 %v203, %v203
  %v321 = vmul.f32 %v216, %v216
  %v322 = vsel %vm242, %v314, 0.0
  %v323 = vrot.slane %v322, 4
  %v324 = vadd.f32 %v322, %v323
  %v325 = vrot.slane %v324, 2
  %v326 = vadd.f32 %v324, %v325
  %v327 = vrot.slane %v326, 1
  %v328 = vadd.f32 %v326, %v327
  %v329 = vsel %vm242, %v315, 0.0
  %v330 = vrot.slane %v329, 4
  %v331 = vadd.f32 %v329, %v330
  %v332 = vrot.slane %v331, 2
  %v333 = vadd.f32 %v331, %v332
  %v334 = vrot.slane %v333, 1
  %v335 = vadd.f32 %v333, %v334
  %v336 = vsel %vm242, %v316, 0.0
  %v337 = vrot.slane %v336, 4
  %v338 = vadd.f32 %v336, %v337
  %v339 = vrot.slane %v338, 2
  %v340 = vadd.f32 %v338, %v339
  %v341 = vrot.slane %v340, 1
  %v342 = vadd.f32 %v340, %v341
  %v343 = vsel %vm242, %v317, 0.0
  %v344 = vrot.slane %v343, 4
  %v345 = vadd.f32 %v343, %v344
  %v346 = vrot.slane %v345, 2
  %v347 = vadd.f32 %v345, %v346
  %v348 = vrot.slane %v347, 1
  %v349 = vadd.f32 %v347, %v348
  %v350 = vsel %vm242, %v318, 0.0
  %v351 = vrot.slane %v350, 4
  %v352 = vadd.f32 %v350, %v351
  %v353 = vrot.slane %v352, 2
  %v354 = vadd.f32 %v352, %v353
  %v355 = vrot.slane %v354, 1
  %v356 = vadd.f32 %v354, %v355
  %v357 = vsel %vm242, %v319, 0.0
  %v358 = vrot.slane %v357, 4
  %v359 = vadd.f32 %v357, %v358
  %v360 = vrot.slane %v359, 2
  %v361 = vadd.f32 %v359, %v360
  %v362 = vrot.slane %v361, 1
  %v363 = vadd.f32 %v361, %v362
  %v364 = vsel %vm242, %v320, 0.0
  %v365 = vrot.slane %v364, 4
  %v366 = vadd.f32 %v364, %v365
  %v367 = vrot.slane %v366, 2
  %v368 = vadd.f32 %v366, %v367
  %v369 = vrot.slane %v368, 1
  %v370 = vadd.f32 %v368, %v369
  %v371 = vsel %vm242, %v321, 0.0
  %v372 = vrot.slane %v371, 4
  %v373 = vadd.f32 %v371, %v372
  %v374 = vrot.slane %v373, 2
  %v375 = vadd.f32 %v373, %v374
  %v376 = vrot.slane %v375, 1
  %v377 = vadd.f32 %v375, %v376
  %v378 = vadd.f32 %v264, 0.0
  %v379 = vadd.f32 %v328, 0.0
  %381 = vrot.lane.b32.xlu0 %v264, 64
  %v382 = vpop.permute.xlu0 %381
  %v384 = vadd.f32 %v378, %v382
  %386 = vrot.lane.b32.xlu0 %v328, 64
  %v387 = vpop.permute.xlu0 %386
  %v389 = vadd.f32 %v379, %v387
  %v390 = vadd.f32 %v384, %v271
  %v391 = vadd.f32 %v389, %v335
  %393 = vrot.lane.b32.xlu0 %v271, 64
  %v394 = vpop.permute.xlu0 %393
  %v396 = vadd.f32 %v390, %v394
  %398 = vrot.lane.b32.xlu0 %v335, 64
  %v399 = vpop.permute.xlu0 %398
  %v401 = vadd.f32 %v391, %v399
  %v402 = vadd.f32 %v396, %v278
  %v403 = vadd.f32 %v401, %v342
  %405 = vrot.lane.b32.xlu0 %v278, 64
  %v406 = vpop.permute.xlu0 %405
  %v408 = vadd.f32 %v402, %v406
  %410 = vrot.lane.b32.xlu0 %v342, 64
  %v411 = vpop.permute.xlu0 %410
  %v413 = vadd.f32 %v403, %v411
  %v414 = vadd.f32 %v408, %v285
  %v415 = vadd.f32 %v413, %v349
  %417 = vrot.lane.b32.xlu0 %v285, 64
  %v418 = vpop.permute.xlu0 %417
  %v420 = vadd.f32 %v414, %v418
  %422 = vrot.lane.b32.xlu0 %v349, 64
  %v423 = vpop.permute.xlu0 %422
  %v425 = vadd.f32 %v415, %v423
  %v426 = vadd.f32 %v420, %v292
  %v427 = vadd.f32 %v425, %v356
  %429 = vrot.lane.b32.xlu0 %v292, 64
  %v430 = vpop.permute.xlu0 %429
  %v432 = vadd.f32 %v426, %v430
  %434 = vrot.lane.b32.xlu0 %v356, 64
  %v435 = vpop.permute.xlu0 %434
  %v437 = vadd.f32 %v427, %v435
  %v438 = vadd.f32 %v432, %v299
  %v439 = vadd.f32 %v437, %v363
  %441 = vrot.lane.b32.xlu0 %v299, 64
  %v442 = vpop.permute.xlu0 %441
  %v444 = vadd.f32 %v438, %v442
  %446 = vrot.lane.b32.xlu0 %v363, 64
  %v447 = vpop.permute.xlu0 %446
  %v449 = vadd.f32 %v439, %v447
  %v450 = vadd.f32 %v444, %v306
  %v451 = vadd.f32 %v449, %v370
  %453 = vrot.lane.b32.xlu0 %v306, 64
  %v454 = vpop.permute.xlu0 %453
  %v456 = vadd.f32 %v450, %v454
  %458 = vrot.lane.b32.xlu0 %v370, 64
  %v459 = vpop.permute.xlu0 %458
  %v461 = vadd.f32 %v451, %v459
  %v462 = vadd.f32 %v456, %v313
  %v463 = vadd.f32 %v461, %v377
  %465 = vrot.lane.b32.xlu0 %v313, 64
  %v466 = vpop.permute.xlu0 %465
  %v468 = vadd.f32 %v462, %v466
  %470 = vrot.lane.b32.xlu0 %v377, 64
  %v471 = vpop.permute.xlu0 %470
  %v473 = vadd.f32 %v463, %v471
  %vm474 = vcmask 516096
  %475 = vst.msk [vmem:[%s3] sm:$0x1] %vm474, %v468
  %476 = vst.msk [vmem:[%s3 + $0x1] sm:$0x1] %vm474, %v473
  // Predicated region
  $region10: #{generator_forward.4} parent=0 // pred_check
    _
  $region11: #{generator_forward.4} parent=0 // pred_check_branch
    %478 = sbr.rel (0) target = $region13
  $region12: #{generator_forward.4} parent=0 // pred_region
    _
  $region13: #{generator_forward.4} parent=0 // pred_fallthru
    _
  // Predicated region
  $region14: #{generator_forward.4} parent=0 // pred_check
    _
  $region15: #{generator_forward.4} parent=0 // pred_check_branch
    %480 = sbr.rel (0) target = $region17
  $region16: #{generator_forward.4} parent=0 // pred_region
    _
  $region17: #{generator_forward.4} parent=0 // pred_fallthru
    _
  // Predicated region
  $region18: #{generator_forward.4} parent=0 // pred_check
    _
  $region19: #{generator_forward.4} parent=0 // pred_check_branch
    %482 = sbr.rel (0) target = $region21
  $region20: #{generator_forward.4} parent=0 // pred_region
    _
  $region21: #{generator_forward.4} parent=0 // pred_fallthru
    _
  // Predicated region
  $region22: #{generator_forward.4} parent=0 // pred_check
    _
  $region23: #{generator_forward.4} parent=0 // pred_check_branch
    %484 = sbr.rel (0) target = $region25
  $region24: #{generator_forward.4} parent=0 // pred_region
    _
  $region25: #{generator_forward.4} parent=0 // pred_fallthru
    _

// kernel: generator_forward.5
$region0: #{generator_forward.5}
  #allocation0 [shape = 'u32[]', space=smem, size = 0x4, offset = 0x4, fixed_abs, tag = 'smem constant byte address 0x4 - core index']
  #allocation1 [shape = 'u32[72,128]{1,0:T(1,128)}', space=vmem, size = 0x9000, scoped, tag = 'internal scratch']
  #allocation2 [shape = 'bf16[16,576]{1,0:T(8,128)(2,1)}', space=vmem, size = 0x5000, scoped, tag = 'scratch operand']
  %s0 = inlined_call_operand.vmem [shape: bf16[2,4,4,64], index: 0, kind: input, shape index: {}]
  %s1 = inlined_call_operand.vmem [shape: f32[1,64], index: 1, kind: input, shape index: {}]
  %s2 = inlined_call_operand.vmem [shape: f32[1,64], index: 2, kind: input, shape index: {}]
  %s3 = inlined_call_operand.vmem [shape: bf16[576,128], index: 3, kind: input, shape index: {}]
  %s4 = inlined_call_operand.vmem [shape: bf16[2,16,128], index: 4, kind: output, shape index: {0}]
  %s5 = inlined_call_operand.vmem [shape: f32[2,2,128], index: 5, kind: output, shape index: {1}]
  %6 = xla_tuple %s4, %s5
  %s7 = sld [smem:[#allocation0]]
  $region57: #{generator_forward.5} parent=0
    _
  %s9 = ssub.s32 1, %s7
  %s10 = scalar_select 0, %s9, %s7
  loop: start=0, step=1, limit=4
  $region2: #{generator_forward.5} parent=0 // loop_pre_header
    _
  $region3: #{generator_forward.5} parent=0 // loop_header
    %s12 = sphi 0, %s16
    %p13 = scmp.ge.s32.totalorder %s12, 4
    %s22 = sphi 0, %s24
    %s25 = sphi 0, %s22
    %s26 = sphi 0, %s25
    %s42 = sphi 0, %s26
    %s46 = sphi 0, %s46
    %s48 = sphi 0, %s46
    %s49 = sphi 0, %s48
    %s63 = sphi 0, %s49
    %s67 = sphi 0, %s67
    %s69 = sphi 0, %s67
    %s70 = sphi 0, %s69
    %s84 = sphi 0, %s70
    %s88 = sphi 0, %s88
    %s90 = sphi 0, %s88
    %s91 = sphi 0, %s90
    %s105 = sphi 0, %s91
    %s111 = sphi 0, %s113
    %s114 = sphi 0, %s111
    %s115 = sphi 0, %s114
    %s131 = sphi 0, %s115
    %s137 = sphi 0, %s139
    %s140 = sphi 0, %s137
    %s141 = sphi 0, %s140
    %s157 = sphi 0, %s141
  $region4: #{generator_forward.5} parent=0 // loop_header_branch
    %15 = sbr.rel (%p13) target = $region8
  $region5: #{generator_forward.5} parent=0 // loop_body
    %s17 = ssub.s32 %s12, 1
    %s18 = ssub.s32 %s12, 2
    %s19 = sadd.s32 %s12, 1
    %s20 = ssub.s32 %s12, %s19
    %p21 = scmp.eq.s32.totalorder %s20, 0
    %s23 = sadd.s32 %s22, 1
    %s24 = scalar_select %p21, %s22, %s23
    %p27 = pneg %p21
    %p28 = scmp.eq.s32.totalorder %s12, 1
    %p29 = por %p27, %p28
    %p30 = scmp.ne.s32.totalorder %s22, %s25
    %p31 = scmp.eq.s32.totalorder %s12, 0
    %p32 = por %p30, %p31
    %p33 = scmp.ne.s32.totalorder %s22, %s25
    %p34 = scmp.eq.s32.totalorder %s17, 1
    %p35 = por %p33, %p34
    %p36 = scmp.ne.s32.totalorder %s25, %s26
    %p37 = scmp.eq.s32.totalorder %s17, 0
    %p38 = por %p36, %p37
    %p39 = scmp.ne.s32.totalorder %s25, %s26
    %p40 = scmp.eq.s32.totalorder %s18, 1
    %p41 = por %p39, %p40
    %p43 = scmp.ne.s32.totalorder %s26, %s42
    %p44 = scmp.eq.s32.totalorder %s18, 0
    %p45 = por %p43, %p44
    %s47 = sadd.s32 %s46, 1
    %p50 = scmp.eq.s32.totalorder %s12, 1
    %p51 = scmp.ne.s32.totalorder %s46, %s48
    %p52 = scmp.eq.s32.totalorder %s12, 0
    %p53 = por %p51, %p52
    %p54 = scmp.ne.s32.totalorder %s46, %s48
    %p55 = scmp.eq.s32.totalorder %s17, 1
    %p56 = por %p54, %p55
    %p57 = scmp.ne.s32.totalorder %s48, %s49
    %p58 = scmp.eq.s32.totalorder %s17, 0
    %p59 = por %p57, %p58
    %p60 = scmp.ne.s32.totalorder %s48, %s49
    %p61 = scmp.eq.s32.totalorder %s18, 1
    %p62 = por %p60, %p61
    %p64 = scmp.ne.s32.totalorder %s49, %s63
    %p65 = scmp.eq.s32.totalorder %s18, 0
    %p66 = por %p64, %p65
    %s68 = sadd.s32 %s67, 1
    %p71 = scmp.eq.s32.totalorder %s12, 1
    %p72 = scmp.ne.s32.totalorder %s67, %s69
    %p73 = scmp.eq.s32.totalorder %s12, 0
    %p74 = por %p72, %p73
    %p75 = scmp.ne.s32.totalorder %s67, %s69
    %p76 = scmp.eq.s32.totalorder %s17, 1
    %p77 = por %p75, %p76
    %p78 = scmp.ne.s32.totalorder %s69, %s70
    %p79 = scmp.eq.s32.totalorder %s17, 0
    %p80 = por %p78, %p79
    %p81 = scmp.ne.s32.totalorder %s69, %s70
    %p82 = scmp.eq.s32.totalorder %s18, 1
    %p83 = por %p81, %p82
    %p85 = scmp.ne.s32.totalorder %s70, %s84
    %p86 = scmp.eq.s32.totalorder %s18, 0
    %p87 = por %p85, %p86
    %s89 = sadd.s32 %s88, 1
    %p92 = scmp.eq.s32.totalorder %s12, 1
    %p93 = scmp.ne.s32.totalorder %s88, %s90
    %p94 = scmp.eq.s32.totalorder %s12, 0
    %p95 = por %p93, %p94
    %p96 = scmp.ne.s32.totalorder %s88, %s90
    %p97 = scmp.eq.s32.totalorder %s17, 1
    %p98 = por %p96, %p97
    %p99 = scmp.ne.s32.totalorder %s90, %s91
    %p100 = scmp.eq.s32.totalorder %s17, 0
    %p101 = por %p99, %p100
    %p102 = scmp.ne.s32.totalorder %s90, %s91
    %p103 = scmp.eq.s32.totalorder %s18, 1
    %p104 = por %p102, %p103
    %p106 = scmp.ne.s32.totalorder %s91, %s105
    %p107 = scmp.eq.s32.totalorder %s18, 0
    %p108 = por %p106, %p107
    %s109 = ssub.s32 %s12, %s19
    %p110 = scmp.eq.s32.totalorder %s109, 0
    %s112 = sadd.s32 %s111, 1
    %s113 = scalar_select %p110, %s111, %s112
    %p116 = pneg %p110
    %p117 = scmp.eq.s32.totalorder %s12, 1
    %p118 = por %p116, %p117
    %p119 = scmp.ne.s32.totalorder %s111, %s114
    %p120 = scmp.eq.s32.totalorder %s12, 0
    %p121 = por %p119, %p120
    %p122 = scmp.ne.s32.totalorder %s111, %s114
    %p123 = scmp.eq.s32.totalorder %s17, 1
    %p124 = por %p122, %p123
    %p125 = scmp.ne.s32.totalorder %s114, %s115
    %p126 = scmp.eq.s32.totalorder %s17, 0
    %p127 = por %p125, %p126
    %p128 = scmp.ne.s32.totalorder %s114, %s115
    %p129 = scmp.eq.s32.totalorder %s18, 1
    %p130 = por %p128, %p129
    %p132 = scmp.ne.s32.totalorder %s115, %s131
    %p133 = scmp.eq.s32.totalorder %s18, 0
    %p134 = por %p132, %p133
    %s135 = ssub.s32 %s12, %s19
    %p136 = scmp.eq.s32.totalorder %s135, 0
    %s138 = sadd.s32 %s137, 1
    %s139 = scalar_select %p136, %s137, %s138
    %p142 = pneg %p136
    %p143 = scmp.eq.s32.totalorder %s12, 1
    %p144 = por %p142, %p143
    %p145 = scmp.ne.s32.totalorder %s137, %s140
    %p146 = scmp.eq.s32.totalorder %s12, 0
    %p147 = por %p145, %p146
    %p148 = scmp.ne.s32.totalorder %s137, %s140
    %p149 = scmp.eq.s32.totalorder %s17, 1
    %p150 = por %p148, %p149
    %p151 = scmp.ne.s32.totalorder %s140, %s141
    %p152 = scmp.eq.s32.totalorder %s17, 0
    %p153 = por %p151, %p152
    %p154 = scmp.ne.s32.totalorder %s140, %s141
    %p155 = scmp.eq.s32.totalorder %s18, 1
    %p156 = por %p154, %p155
    %p158 = scmp.ne.s32.totalorder %s141, %s157
    %p159 = scmp.eq.s32.totalorder %s18, 0
    %p160 = por %p158, %p159
    %p161 = scmp.le.s32.totalorder 1, %s12
    %p162 = scmp.lt.s32.totalorder %s12, 3
    %p163 = pnand %p161, %p162
    %p164 = pneg %p163
    // Predicated region
    $region9: #{generator_forward.5} parent=5 // pred_check
      _
    $region10: #{generator_forward.5} parent=5 // pred_check_branch
      %166 = sbr.rel (%p163) target = $region12
    $region11: #{generator_forward.5} parent=5 // pred_region
      %s167 = ssub.s32 %s12, 1
      // Predicated region
      $region13: #{generator_forward.5} parent=11 // pred_check
        %p168 = pneg %p59
      $region14: #{generator_forward.5} parent=11 // pred_check_branch
        %170 = sbr.rel (%p168) target = $region16
      $region15: #{generator_forward.5} parent=11 // pred_region
        _
      $region16: #{generator_forward.5} parent=11 // pred_fallthru
        _
      // Predicated region
      $region17: #{generator_forward.5} parent=11 // pred_check
        %p171 = pneg %p80
      $region18: #{generator_forward.5} parent=11 // pred_check_branch
        %173 = sbr.rel (%p171) target = $region20
      $region19: #{generator_forward.5} parent=11 // pred_region
        _
      $region20: #{generator_forward.5} parent=11 // pred_fallthru
        _
      // Predicated region
      $region21: #{generator_forward.5} parent=11 // pred_check
        %p174 = pneg %p101
      $region22: #{generator_forward.5} parent=11 // pred_check_branch
        %176 = sbr.rel (%p174) target = $region24
      $region23: #{generator_forward.5} parent=11 // pred_region
        _
      $region24: #{generator_forward.5} parent=11 // pred_fallthru
        _
    $region12: #{generator_forward.5} parent=5 // pred_fallthru
      _
    %p177 = scmp.lt.s32.totalorder %s12, 2
    // Predicated region
    $region25: #{generator_forward.5} parent=5 // pred_check
      %p178 = pneg %p177
    $region26: #{generator_forward.5} parent=5 // pred_check_branch
      %180 = sbr.rel (%p178) target = $region28
    $region27: #{generator_forward.5} parent=5 // pred_region
      // Predicated region
      $region29: #{generator_forward.5} parent=27 // pred_check
        %p181 = pneg %p32
      $region30: #{generator_forward.5} parent=27 // pred_check_branch
        %183 = sbr.rel (%p181) target = $region32
      $region31: #{generator_forward.5} parent=27 // pred_region
        %p184 = scmp.lt.s32.totalorder %s12, 1
        %s185 = scalar_select %p184, %s12, 1
        %s186 = smul.addr %s185, 4
        %s187 = smul.addr %s186, 2
        %s188 = scalar_lea.vmem %s0, %s187
      $region32: #{generator_forward.5} parent=27 // pred_fallthru
        _
    $region28: #{generator_forward.5} parent=5 // pred_fallthru
      _
    %p189 = scmp.le.s32.totalorder 1, %s12
    %p190 = scmp.lt.s32.totalorder %s12, 3
    %p191 = pnand %p189, %p190
    %p192 = pneg %p191
    // Predicated region
    $region33: #{generator_forward.5} parent=5 // pred_check
      _
    $region34: #{generator_forward.5} parent=5 // pred_check_branch
      %194 = sbr.rel (%p191) target = $region36
    $region35: #{generator_forward.5} parent=5 // pred_region
      %s195 = ssub.s32 %s12, 1
      %p196 = scmp.lt.s32.totalorder %s17, 1
      %s197 = scalar_select %p196, %s17, 1
      %s198 = smul.addr %s197, 4
      %s199 = smul.addr %s198, 2
      %s200 = scalar_lea.vmem %s0, %s199
      %p201 = pneg %p38
      %p202 = pneg %p35
      %p203 = pneg %p59
      %p204 = pneg %p56
      %p205 = pneg %p80
      %p206 = pneg %p77
      %p207 = pneg %p101
      %p208 = pneg %p98
      %p209 = pneg %p127
      %p210 = pneg %p124
      %p211 = scmp.lt.s32.totalorder %s17, 1
      %s212 = scalar_select %p211, %s17, 1
      %s213 = smul.addr %s212, 2
      %s214 = smul.addr %s213, 4
      %s215 = scalar_lea.vmem %s4, %s214
      %p216 = pneg %p153
      %p217 = pneg %p150
      %p218 = scmp.lt.s32.totalorder %s17, 1
      %s219 = scalar_select %p218, %s17, 1
      %s220 = smul.addr %s219, 2
      %s221 = scalar_lea.vmem %s5, %s220
      %p222 = scmp.lt.s32.totalorder %s17, 1
      %s223 = scalar_select %p222, %s17, 1
      %s224 = smul.addr %s223, 4
      %s225 = smul.addr %s224, 2
      %s226 = scalar_lea.vmem %s0, %s225
      %p227 = scmp.lt.s32.totalorder %s17, 1
      %s228 = scalar_select %p227, %s17, 1
      %s229 = smul.addr %s228, 2
      %s230 = smul.addr %s229, 4
      %s231 = scalar_lea.vmem %s4, %s230
      %p232 = scmp.lt.s32.totalorder %s17, 1
      %s233 = scalar_select %p232, %s17, 1
      %s234 = smul.addr %s233, 2
      %s235 = scalar_lea.vmem %s5, %s234
      %v237 = vld [vmem:[%s226] sm:$0x3]
      %v238 = vld [vmem:[%s226 + $0x2] sm:$0x3]
      %v239 = vld [vmem:[%s226 + $0x4] sm:$0x3]
      %v240 = vld [vmem:[%s226 + $0x6] sm:$0x3]
      %v241 = vunpack.c.l.bf16 %v237
      %v242 = vunpack.c.l.bf16 %v238
      %v243 = vunpack.c.l.bf16 %v239
      %v244 = vunpack.c.l.bf16 %v240
      %v245 = vld [vmem:[%s1] sm:$0x1]
      %v247 = vperm.slane %v245, 0
      %v249 = vmul.f32 %v241, %v247
      %v250 = vmul.f32 %v242, %v247
      %v251 = vmul.f32 %v243, %v247
      %v252 = vmul.f32 %v244, %v247
      %v253 = vld [vmem:[%s2] sm:$0x1]
      %v255 = vperm.slane %v253, 0
      %v257 = vadd.f32 %v249, %v255
      %v258 = vadd.f32 %v250, %v255
      %v259 = vadd.f32 %v251, %v255
      %v260 = vadd.f32 %v252, %v255
      %v261 = vmax.f32 %v257, 0.0
      %v262 = vmax.f32 %v258, 0.0
      %v263 = vmax.f32 %v259, 0.0
      %v264 = vmax.f32 %v260, 0.0
      %v265 = vpack.c.bf16 %v261, %v261
      %v266 = vpack.c.bf16 %v262, %v262
      %v267 = vpack.c.bf16 %v263, %v263
      %v268 = vpack.c.bf16 %v264, %v264
      %269 = vst [vmem:[#allocation2] sm:$0xff] 0
      %270 = vst [vmem:[#allocation2 + $0x8] sm:$0xff] 0
      %vm271 = vcmask 519168
      %272 = vst.msk [vmem:[#allocation2 + $0x10] sm:$0xf] %vm271, 0
      %273 = vst [vmem:[#allocation2 + $0x14] sm:$0xff] 0
      %274 = vst [vmem:[#allocation2 + $0x1c] sm:$0xff] 0
      %275 = vst.msk [vmem:[#allocation2 + $0x24] sm:$0xf] %vm271, 0
      %v277 = vshrl.u32 %v265, 16
      %v279 = vrot.slane %v277, 5
      %v280 = vshll.u32 %v265, 16
      %v282 = vrot.slane %v280, 6
      %v283 = vor.u32 %v279, %v282
      %vm285 = vcmask 519170
      %vm286 = vsmask.f32 7946
      %vm287 = vmand %vm285, %vm286
      %v288 = vld [vmem:[#allocation2] sm:$0xc]
      %v289 = vsel %vm287, %v283, %v288
      %290 = vst [vmem:[#allocation2] sm:$0xc] %v289
      %v292 = vshrl.u32 %v266, 16
      %v294 = vrot.slane %v292, 7
      %v295 = vshll.u32 %v266, 16
      %v297 = vor.u32 %v294, %v295
      %vm299 = vcmask 517120
      %vm300 = vsmask.f32 7938
      %vm301 = vmand %vm299, %vm300
      %v302 = vld [vmem:[#allocation2 + $0x14] sm:$0x3]
      %v303 = vsel %vm301, %v297, %v302
      %304 = vst [vmem:[#allocation2 + $0x14] sm:$0x3] %v303
      %v306 = vshrl.u32 %v267, 16
      %v308 = vrot.slane %v306, 5
      %v309 = vshll.u32 %v267, 16
      %v311 = vrot.slane %v309, 6
      %v312 = vor.u32 %v308, %v311
      %v314 = vld [vmem:[#allocation2 + $0x14] sm:$0xc]
      %v315 = vsel %vm287, %v312, %v314
      %316 = vst [vmem:[#allocation2 + $0x14] sm:$0xc] %v315
      %v318 = vrot.slane %v265, 6
      %319 = vrot.lane.b32.xlu0 %v318, 64
      %v320 = vpop.permute.xlu0 %319
      %vm322 = vcmask 1043970
      %323 = vst.msk [vmem:[#allocation2] sm:$0xc] %vm322, %v320
      %325 = vrot.lane.b32.xlu0 %v266, 64
      %v326 = vpop.permute.xlu0 %325
      %vm328 = vcmask 1041920
      %329 = vst.msk [vmem:[#allocation2 + $0x14] sm:$0x3] %vm328, %v326
      %v331 = vrot.slane %v267, 6
      %332 = vrot.lane.b32.xlu0 %v331, 64
      %v333 = vpop.permute.xlu0 %332
      %335 = vst.msk [vmem:[#allocation2 + $0x14] sm:$0xc] %vm322, %v333
      %v336 = vrot.slane %v277, 6
      %v337 = vrot.slane %v280, 7
      %v338 = vor.u32 %v336, %v337
      %vm340 = vsmask.f32 3328
      %vm341 = vmand %vm285, %vm340
      %v342 = vld [vmem:[#allocation2 + $0x4] sm:$0xc]
      %v343 = vsel %vm341, %v338, %v342
      %344 = vst [vmem:[#allocation2 + $0x4] sm:$0xc] %v343
      %v345 = vrot.slane %v292, 4
      %v346 = vrot.slane %v295, 5
      %v347 = vor.u32 %v345, %v346
      %v348 = vrot.slane %v347, 4
      %vm350 = vsmask.f32 1280
      %vm351 = vmand %vm299, %vm350
      %v352 = vld [vmem:[#allocation2 + $0x18] sm:$0x3]
      %v353 = vsel %vm351, %v348, %v352
      %354 = vst [vmem:[#allocation2 + $0x18] sm:$0x3] %v353
      %v355 = vrot.slane %v306, 6
      %v356 = vrot.slane %v309, 7
      %v357 = vor.u32 %v355, %v356
      %v359 = vld [vmem:[#allocation2 + $0x18] sm:$0xc]
      %v360 = vsel %vm341, %v357, %v359
      %361 = vst [vmem:[#allocation2 + $0x18] sm:$0xc] %v360
      %v362 = vrot.slane %v277, 7
      %v363 = vor.u32 %v362, %v280
      %364 = vrot.lane.b32.xlu0 %v363, 64
      %v365 = vpop.permute.xlu0 %364
      %vm367 = vcmask 1041920
      %vm368 = vmand %vm367, %vm300
      %v369 = vld [vmem:[#allocation2 + $0x4] sm:$0x3]
      %v370 = vsel %vm368, %v365, %v369
      %371 = vst [vmem:[#allocation2 + $0x4] sm:$0x3] %v370
      %v372 = vrot.slane %v292, 5
      %v373 = vrot.slane %v295, 6
      %v374 = vor.u32 %v372, %v373
      %375 = vrot.lane.b32.xlu0 %v374, 64
      %v376 = vpop.permute.xlu0 %375
      %vm378 = vcmask 1043970
      %vm379 = vmand %vm378, %vm286
      %v380 = vld [vmem:[#allocation2 + $0x4] sm:$0xc]
      %v381 = vsel %vm379, %v376, %v380
      %382 = vst [vmem:[#allocation2 + $0x4] sm:$0xc] %v381
      %v383 = vrot.slane %v306, 7
      %v384 = vor.u32 %v383, %v309
      %385 = vrot.lane.b32.xlu0 %v384, 64
      %v386 = vpop.permute.xlu0 %385
      %v388 = vld [vmem:[#allocation2 + $0x18] sm:$0x3]
      %v389 = vsel %vm368, %v386, %v388
      %390 = vst [vmem:[#allocation2 + $0x18] sm:$0x3] %v389
      %v392 = vshrl.u32 %v268, 16
      %v394 = vrot.slane %v392, 5
      %v395 = vshll.u32 %v268, 16
      %v397 = vrot.slane %v395, 6
      %v398 = vor.u32 %v394, %v397
      %399 = vrot.lane.b32.xlu0 %v398, 64
      %v400 = vpop.permute.xlu0 %399
      %v402 = vld [vmem:[#allocation2 + $0x18] sm:$0xc]
      %v403 = vsel %vm379, %v400, %v402
      %404 = vst [vmem:[#allocation2 + $0x18] sm:$0xc] %v403
      %vm405 = vcmask 517120
      %406 = vst.msk [vmem:[#allocation2 + $0x8] sm:$0x3] %vm405, %v265
      %v407 = vrot.slane %v266, 6
      %vm409 = vcmask 519170
      %410 = vst.msk [vmem:[#allocation2 + $0x8] sm:$0xc] %vm409, %v407
      %411 = vst.msk [vmem:[#allocation2 + $0x1c] sm:$0x3] %vm405, %v267
      %v413 = vrot.slane %v268, 6
      %415 = vst.msk [vmem:[#allocation2 + $0x1c] sm:$0xc] %vm409, %v413
      %v416 = vrot.slane %v277, 4
      %v417 = vrot.slane %v280, 5
      %v418 = vor.u32 %v416, %v417
      %v419 = vrot.slane %v418, 4
      %420 = vrot.lane.b32.xlu0 %v419, 64
      %v421 = vpop.permute.xlu0 %420
      %vm423 = vmand %vm367, %vm350
      %v424 = vld [vmem:[#allocation2 + $0x8] sm:$0x3]
      %v425 = vsel %vm423, %v421, %v424
      %426 = vst [vmem:[#allocation2 + $0x8] sm:$0x3] %v425
      %v427 = vrot.slane %v292, 6
      %v428 = vrot.slane %v295, 7
      %v429 = vor.u32 %v427, %v428
      %430 = vrot.lane.b32.xlu0 %v429, 64
      %v431 = vpop.permute.xlu0 %430
      %vm433 = vmand %vm378, %vm340
      %v434 = vld [vmem:[#allocation2 + $0x8] sm:$0xc]
      %v435 = vsel %vm433, %v431, %v434
      %436 = vst [vmem:[#allocation2 + $0x8] sm:$0xc] %v435
      %v437 = vrot.slane %v306, 4
      %v438 = vrot.slane %v309, 5
      %v439 = vor.u32 %v437, %v438
      %v440 = vrot.slane %v439, 4
      %441 = vrot.lane.b32.xlu0 %v440, 64
      %v442 = vpop.permute.xlu0 %441
      %v444 = vld [vmem:[#allocation2 + $0x1c] sm:$0x3]
      %v445 = vsel %vm423, %v442, %v444
      %446 = vst [vmem:[#allocation2 + $0x1c] sm:$0x3] %v445
      %v447 = vrot.slane %v392, 6
      %v448 = vrot.slane %v395, 7
      %v449 = vor.u32 %v447, %v448
      %450 = vrot.lane.b32.xlu0 %v449, 64
      %v451 = vpop.permute.xlu0 %450
      %v453 = vld [vmem:[#allocation2 + $0x1c] sm:$0xc]
      %v454 = vsel %vm433, %v451, %v453
      %455 = vst [vmem:[#allocation2 + $0x1c] sm:$0xc] %v454
      %v456 = vld [vmem:[#allocation2 + $0xc] sm:$0x3]
      %v457 = vsel %vm301, %v297, %v456
      %458 = vst [vmem:[#allocation2 + $0xc] sm:$0x3] %v457
      %v459 = vld [vmem:[#allocation2 + $0xc] sm:$0xc]
      %v460 = vsel %vm287, %v312, %v459
      %461 = vst [vmem:[#allocation2 + $0xc] sm:$0xc] %v460
      %v462 = vrot.slane %v392, 7
      %v463 = vor.u32 %v462, %v395
      %v465 = vld [vmem:[#allocation2 + $0x20] sm:$0x3]
      %v466 = vsel %vm301, %v463, %v465
      %467 = vst [vmem:[#allocation2 + $0x20] sm:$0x3] %v466
      %468 = vst.msk [vmem:[#allocation2 + $0xc] sm:$0x3] %vm328, %v326
      %469 = vst.msk [vmem:[#allocation2 + $0xc] sm:$0xc] %vm322, %v333
      %470 = vrot.lane.b32.xlu0 %v268, 64
      %v471 = vpop.permute.xlu0 %470
      %473 = vst.msk [vmem:[#allocation2 + $0x20] sm:$0x3] %vm328, %v471
      %v474 = vld [vmem:[#allocation2 + $0x10] sm:$0x3]
      %v475 = vsel %vm351, %v348, %v474
      %476 = vst [vmem:[#allocation2 + $0x10] sm:$0x3] %v475
      %v477 = vld [vmem:[#allocation2 + $0x10] sm:$0xc]
      %v478 = vsel %vm341, %v357, %v477
      %479 = vst [vmem:[#allocation2 + $0x10] sm:$0xc] %v478
      %v480 = vrot.slane %v392, 4
      %v481 = vrot.slane %v395, 5
      %v482 = vor.u32 %v480, %v481
      %v483 = vrot.slane %v482, 4
      %v485 = vld [vmem:[#allocation2 + $0x24] sm:$0x3]
      %v486 = vsel %vm351, %v483, %v485
      %487 = vst [vmem:[#allocation2 + $0x24] sm:$0x3] %v486
      %v488 = vld [vmem:[#allocation2] sm:$0xff]
      %v489 = vld [vmem:[#allocation2 + $0x8] sm:$0xff]
      %v490 = vld [vmem:[#allocation2 + $0x10] sm:$0xf]
      %v491 = vld [vmem:[#allocation2 + $0x14] sm:$0xff]
      %v492 = vld [vmem:[#allocation2 + $0x1c] sm:$0xff]
      %v493 = vld [vmem:[#allocation2 + $0x24] sm:$0xf]
      %v494 = vld [vmem:[%s3] sm:$0xf]
      %v495 = vld [vmem:[%s3 + $0x4] sm:$0xf]
      %v496 = vld [vmem:[%s3 + $0x8] sm:$0xf]
      %v497 = vld [vmem:[%s3 + $0xc] sm:$0xf]
      %v498 = vld [vmem:[%s3 + $0x10] sm:$0xf]
      %v499 = vld [vmem:[%s3 + $0x14] sm:$0xf]
      %v500 = vld [vmem:[%s3 + $0x18] sm:$0xf]
      %v501 = vld [vmem:[%s3 + $0x1c] sm:$0xf]
      %v502 = vld [vmem:[%s3 + $0x20] sm:$0xf]
      %v503 = vld [vmem:[%s3 + $0x24] sm:$0xf]
      %v504 = vld [vmem:[%s3 + $0x28] sm:$0xf]
      %v505 = vld [vmem:[%s3 + $0x2c] sm:$0xf]
      %v506 = vld [vmem:[%s3 + $0x30] sm:$0xf]
      %v507 = vld [vmem:[%s3 + $0x34] sm:$0xf]
      %v508 = vld [vmem:[%s3 + $0x38] sm:$0xf]
      %v509 = vld [vmem:[%s3 + $0x3c] sm:$0xf]
      %v510 = vld [vmem:[%s3 + $0x40] sm:$0xf]
      %v511 = vld [vmem:[%s3 + $0x44] sm:$0xf]
      %v512 = vld [vmem:[%s3 + $0x48] sm:$0xf]
      %v513 = vld [vmem:[%s3 + $0x4c] sm:$0xf]
      %v514 = vld [vmem:[%s3 + $0x50] sm:$0xf]
      %v515 = vld [vmem:[%s3 + $0x54] sm:$0xf]
      %v516 = vld [vmem:[%s3 + $0x58] sm:$0xf]
      %v517 = vld [vmem:[%s3 + $0x5c] sm:$0xf]
      %v518 = vld [vmem:[%s3 + $0x60] sm:$0xf]
      %v519 = vld [vmem:[%s3 + $0x64] sm:$0xf]
      %v520 = vld [vmem:[%s3 + $0x68] sm:$0xf]
      %v521 = vld [vmem:[%s3 + $0x6c] sm:$0xf]
      %v522 = vld [vmem:[%s3 + $0x70] sm:$0xf]
      %v523 = vld [vmem:[%s3 + $0x74] sm:$0xf]
      %v524 = vld [vmem:[%s3 + $0x78] sm:$0xf]
      %v525 = vld [vmem:[%s3 + $0x7c] sm:$0xf]
      %v526 = vld [vmem:[%s3 + $0x80] sm:$0xf]
      %v527 = vld [vmem:[%s3 + $0x84] sm:$0xf]
      %v528 = vld [vmem:[%s3 + $0x88] sm:$0xf]
      %v529 = vld [vmem:[%s3 + $0x8c] sm:$0xf]
      %v530 = vld [vmem:[%s3 + $0x90] sm:$0xf]
      %v531 = vld [vmem:[%s3 + $0x94] sm:$0xf]
      %v532 = vld [vmem:[%s3 + $0x98] sm:$0xf]
      %v533 = vld [vmem:[%s3 + $0x9c] sm:$0xf]
      %v534 = vld [vmem:[%s3 + $0xa0] sm:$0xf]
      %v535 = vld [vmem:[%s3 + $0xa4] sm:$0xf]
      %v536 = vld [vmem:[%s3 + $0xa8] sm:$0xf]
      %v537 = vld [vmem:[%s3 + $0xac] sm:$0xf]
      %v538 = vld [vmem:[%s3 + $0xb0] sm:$0xf]
      %v539 = vld [vmem:[%s3 + $0xb4] sm:$0xf]
      %v540 = vld [vmem:[%s3 + $0xb8] sm:$0xf]
      %v541 = vld [vmem:[%s3 + $0xbc] sm:$0xf]
      %v542 = vld [vmem:[%s3 + $0xc0] sm:$0xf]
      %v543 = vld [vmem:[%s3 + $0xc4] sm:$0xf]
      %v544 = vld [vmem:[%s3 + $0xc8] sm:$0xf]
      %v545 = vld [vmem:[%s3 + $0xcc] sm:$0xf]
      %v546 = vld [vmem:[%s3 + $0xd0] sm:$0xf]
      %v547 = vld [vmem:[%s3 + $0xd4] sm:$0xf]
      %v548 = vld [vmem:[%s3 + $0xd8] sm:$0xf]
      %v549 = vld [vmem:[%s3 + $0xdc] sm:$0xf]
      %v550 = vld [vmem:[%s3 + $0xe0] sm:$0xf]
      %v551 = vld [vmem:[%s3 + $0xe4] sm:$0xf]
      %v552 = vld [vmem:[%s3 + $0xe8] sm:$0xf]
      %v553 = vld [vmem:[%s3 + $0xec] sm:$0xf]
      %v554 = vld [vmem:[%s3 + $0xf0] sm:$0xf]
      %v555 = vld [vmem:[%s3 + $0xf4] sm:$0xf]
      %v556 = vld [vmem:[%s3 + $0xf8] sm:$0xf]
      %v557 = vld [vmem:[%s3 + $0xfc] sm:$0xf]
      %v558 = vld [vmem:[%s3 + $0x100] sm:$0xf]
      %v559 = vld [vmem:[%s3 + $0x104] sm:$0xf]
      %v560 = vld [vmem:[%s3 + $0x108] sm:$0xf]
      %v561 = vld [vmem:[%s3 + $0x10c] sm:$0xf]
      %v562 = vld [vmem:[%s3 + $0x110] sm:$0xf]
      %v563 = vld [vmem:[%s3 + $0x114] sm:$0xf]
      %v564 = vld [vmem:[%s3 + $0x118] sm:$0xf]
      %v565 = vld [vmem:[%s3 + $0x11c] sm:$0xf]
      %v572 = vunpack.c.l.b16 %v488
      %v573 = vunpack.c.h.b16 %v488
      %v574 = vunpack.c.l.b16 %v489
      %v575 = vunpack.c.h.b16 %v489
      %v576 = vunpack.c.l.b16 %v490
      %v577 = vunpack.c.l.b16 %v491
      %v578 = vunpack.c.h.b16 %v491
      %v579 = vunpack.c.l.b16 %v492
      %v580 = vunpack.c.h.b16 %v492
      %v581 = vunpack.c.l.b16 %v493
      %v582 = vpack.c.b16 %v577, %v572
      %v583 = vpack.c.b16 %v578, %v573
      %v584 = vpack.c.b16 %v579, %v574
      %v585 = vpack.c.b16 %v580, %v575
      %v586 = vpack.c.b16 %v581, %v576
      %v663 = vunpack.c.l.b16 %v494
      %v664 = vunpack.c.l.b16 %v495
      %v665 = vunpack.c.l.b16 %v496
      %v666 = vunpack.c.l.b16 %v497
      %v667 = vunpack.c.l.b16 %v498
      %v668 = vunpack.c.l.b16 %v499
      %v669 = vunpack.c.l.b16 %v500
      %v670 = vunpack.c.l.b16 %v501
      %v671 = vunpack.c.l.b16 %v502
      %v672 = vunpack.c.l.b16 %v503
      %v673 = vunpack.c.l.b16 %v504
      %v674 = vunpack.c.l.b16 %v505
      %v675 = vunpack.c.l.b16 %v506
      %v676 = vunpack.c.l.b16 %v507
      %v677 = vunpack.c.l.b16 %v508
      %v678 = vunpack.c.l.b16 %v509
      %v679 = vunpack.c.l.b16 %v510
      %v680 = vunpack.c.l.b16 %v511
      %v681 = vunpack.c.l.b16 %v512
      %v682 = vunpack.c.l.b16 %v513
      %v683 = vunpack.c.l.b16 %v514
      %v684 = vunpack.c.l.b16 %v515
      %v685 = vunpack.c.l.b16 %v516
      %v686 = vunpack.c.l.b16 %v517
      %v687 = vunpack.c.l.b16 %v518
      %v688 = vunpack.c.l.b16 %v519
      %v689 = vunpack.c.l.b16 %v520
      %v690 = vunpack.c.l.b16 %v521
      %v691 = vunpack.c.l.b16 %v522
      %v692 = vunpack.c.l.b16 %v523
      %v693 = vunpack.c.l.b16 %v524
      %v694 = vunpack.c.l.b16 %v525
      %v695 = vunpack.c.l.b16 %v526
      %v696 = vunpack.c.l.b16 %v527
      %v697 = vunpack.c.l.b16 %v528
      %v698 = vunpack.c.l.b16 %v529
      %v699 = vunpack.c.l.b16 %v530
      %v700 = vunpack.c.l.b16 %v531
      %v701 = vunpack.c.l.b16 %v532
      %v702 = vunpack.c.l.b16 %v533
      %v703 = vunpack.c.l.b16 %v534
      %v704 = vunpack.c.l.b16 %v535
      %v705 = vunpack.c.l.b16 %v536
      %v706 = vunpack.c.l.b16 %v537
      %v707 = vunpack.c.l.b16 %v538
      %v708 = vunpack.c.l.b16 %v539
      %v709 = vunpack.c.l.b16 %v540
      %v710 = vunpack.c.l.b16 %v541
      %v711 = vunpack.c.l.b16 %v542
      %v712 = vunpack.c.l.b16 %v543
      %v713 = vunpack.c.l.b16 %v544
      %v714 = vunpack.c.l.b16 %v545
      %v715 = vunpack.c.l.b16 %v546
      %v716 = vunpack.c.l.b16 %v547
      %v717 = vunpack.c.l.b16 %v548
      %v718 = vunpack.c.l.b16 %v549
      %v719 = vunpack.c.l.b16 %v550
      %v720 = vunpack.c.l.b16 %v551
      %v721 = vunpack.c.l.b16 %v552
      %v722 = vunpack.c.l.b16 %v553
      %v723 = vunpack.c.l.b16 %v554
      %v724 = vunpack.c.l.b16 %v555
      %v725 = vunpack.c.l.b16 %v556
      %v726 = vunpack.c.l.b16 %v557
      %v727 = vunpack.c.l.b16 %v558
      %v728 = vunpack.c.l.b16 %v559
      %v729 = vunpack.c.l.b16 %v560
      %v730 = vunpack.c.l.b16 %v561
      %v731 = vunpack.c.l.b16 %v562
      %v732 = vunpack.c.l.b16 %v563
      %v733 = vunpack.c.l.b16 %v564
      %v734 = vunpack.c.l.b16 %v565
      %v735 = vpack.c.b16 %v664, %v663
      %v736 = vpack.c.b16 %v666, %v665
      %v737 = vpack.c.b16 %v668, %v667
      %v738 = vpack.c.b16 %v670, %v669
      %v739 = vpack.c.b16 %v672, %v671
      %v740 = vpack.c.b16 %v674, %v673
      %v741 = vpack.c.b16 %v676, %v675
      %v742 = vpack.c.b16 %v678, %v677
      %v743 = vpack.c.b16 %v680, %v679
      %v744 = vpack.c.b16 %v682, %v681
      %v745 = vpack.c.b16 %v684, %v683
      %v746 = vpack.c.b16 %v686, %v685
      %v747 = vpack.c.b16 %v688, %v687
      %v748 = vpack.c.b16 %v690, %v689
      %v749 = vpack.c.b16 %v692, %v691
      %v750 = vpack.c.b16 %v694, %v693
      %v751 = vpack.c.b16 %v696, %v695
      %v752 = vpack.c.b16 %v698, %v697
      %v753 = vpack.c.b16 %v700, %v699
      %v754 = vpack.c.b16 %v702, %v701
      %v755 = vpack.c.b16 %v704, %v703
      %v756 = vpack.c.b16 %v706, %v705
      %v757 = vpack.c.b16 %v708, %v707
      %v758 = vpack.c.b16 %v710, %v709
      %v759 = vpack.c.b16 %v712, %v711
      %v760 = vpack.c.b16 %v714, %v713
      %v761 = vpack.c.b16 %v716, %v715
      %v762 = vpack.c.b16 %v718, %v717
      %v763 = vpack.c.b16 %v720, %v719
      %v764 = vpack.c.b16 %v722, %v721
      %v765 = vpack.c.b16 %v724, %v723
      %v766 = vpack.c.b16 %v726, %v725
      %v767 = vpack.c.b16 %v728, %v727
      %v768 = vpack.c.b16 %v730, %v729
      %v769 = vpack.c.b16 %v732, %v731
      %v770 = vpack.c.b16 %v734, %v733
      %vm807 = vcmask 523264
      %v809 = vsel %vm807, %v586, 0
      %811 = vmatpush.bf16.msra.mxu0 %v742
      %812 = vmatpush.bf16.msra.mxu0 %v741
      %813 = vmatpush.bf16.msra.mxu0 %v740
      %814 = vmatpush.bf16.msra.mxu0 %v739
      %815 = vmatpush.bf16.msra.mxu0 %v738
      %816 = vmatpush.bf16.msra.mxu0 %v737
      %817 = vmatpush.bf16.msra.mxu0 %v736
      %818 = vmatpush.bf16.msra.mxu0 %v735
      %819 = vmatmul.bf16.gmra.mxu0 %v582
      %v820 = vpop.f32.mrf.mxu0
      %v821 = vadd.f32 0.0, %v820
      %v822 = vpop.f32.mrf.mxu0
      %v823 = vadd.f32 0.0, %v822
      %824 = vdwg.mxu0
      %825 = vmatpush.bf16.msra.mxu0 %v750
      %826 = vmatpush.bf16.msra.mxu0 %v749
      %827 = vmatpush.bf16.msra.mxu0 %v748
      %828 = vmatpush.bf16.msra.mxu0 %v747
      %829 = vmatpush.bf16.msra.mxu0 %v746
      %830 = vmatpush.bf16.msra.mxu0 %v745
      %831 = vmatpush.bf16.msra.mxu0 %v744
      %832 = vmatpush.bf16.msra.mxu0 %v743
      %833 = vmatmul.bf16.gmra.mxu0 %v583
      %v834 = vpop.f32.mrf.mxu0
      %v835 = vadd.f32 %v821, %v834
      %v836 = vpop.f32.mrf.mxu0
      %v837 = vadd.f32 %v823, %v836
      %838 = vdwg.mxu0
      %839 = vmatpush.bf16.msra.mxu0 %v758
      %840 = vmatpush.bf16.msra.mxu0 %v757
      %841 = vmatpush.bf16.msra.mxu0 %v756
      %842 = vmatpush.bf16.msra.mxu0 %v755
      %843 = vmatpush.bf16.msra.mxu0 %v754
      %844 = vmatpush.bf16.msra.mxu0 %v753
      %845 = vmatpush.bf16.msra.mxu0 %v752
      %846 = vmatpush.bf16.msra.mxu0 %v751
      %847 = vmatmul.bf16.gmra.mxu0 %v584
      %v848 = vpop.f32.mrf.mxu0
      %v849 = vadd.f32 %v835, %v848
      %v850 = vpop.f32.mrf.mxu0
      %v851 = vadd.f32 %v837, %v850
      %852 = vdwg.mxu0
      %853 = vmatpush.bf16.msra.mxu0 %v766
      %854 = vmatpush.bf16.msra.mxu0 %v765
      %855 = vmatpush.bf16.msra.mxu0 %v764
      %856 = vmatpush.bf16.msra.mxu0 %v763
      %857 = vmatpush.bf16.msra.mxu0 %v762
      %858 = vmatpush.bf16.msra.mxu0 %v761
      %859 = vmatpush.bf16.msra.mxu0 %v760
      %860 = vmatpush.bf16.msra.mxu0 %v759
      %861 = vmatmul.bf16.gmra.mxu0 %v585
      %v862 = vpop.f32.mrf.mxu0
      %v863 = vadd.f32 %v849, %v862
      %v864 = vpop.f32.mrf.mxu0
      %v865 = vadd.f32 %v851, %v864
      %866 = vdwg.mxu0
      %867 = vmatpush.bf16.msra.mxu0 0
      %868 = vmatpush.bf16.msra.mxu0 0
      %869 = vmatpush.bf16.msra.mxu0 0
      %870 = vmatpush.bf16.msra.mxu0 0
      %871 = vmatpush.bf16.msra.mxu0 %v770
      %872 = vmatpush.bf16.msra.mxu0 %v769
      %873 = vmatpush.bf16.msra.mxu0 %v768
      %874 = vmatpush.bf16.msra.mxu0 %v767
      %875 = vmatmul.bf16.gmra.mxu0 %v809
      %v876 = vpop.f32.mrf.mxu0
      %v877 = vadd.f32 %v863, %v876
      %v878 = vpop.f32.mrf.mxu0
      %v879 = vadd.f32 %v865, %v878
      %880 = vdwg.mxu0
      %v881 = vpack.c.bf16 %v877, %v877
      %v882 = vpack.c.bf16 %v879, %v879
      %883 = vst [vmem:[%s231] sm:$0xf] %v881
      %884 = vst [vmem:[%s231 + $0x4] sm:$0xf] %v882
      %v885 = vadd.f32 %v877, %v879
      %v886 = vrot.slane %v885, 4
      %v887 = vadd.f32 %v885, %v886
      %v888 = vrot.slane %v887, 2
      %v889 = vadd.f32 %v887, %v888
      %v890 = vrot.slane %v889, 1
      %v891 = vadd.f32 %v889, %v890
      %892 = vst [vmem:[%s235] sm:$0x1] %v891
      %v893 = vmul.f32 %v877, %v877
      %v894 = vmul.f32 %v879, %v879
      %v895 = vadd.f32 %v893, %v894
      %v896 = vrot.slane %v895, 4
      %v897 = vadd.f32 %v895, %v896
      %v898 = vrot.slane %v897, 2
      %v899 = vadd.f32 %v897, %v898
      %v900 = vrot.slane %v899, 1
      %v901 = vadd.f32 %v899, %v900
      %902 = vst [vmem:[%s235 + $0x1] sm:$0x1] %v901
      %p903 = scmp.lt.s32.totalorder %s17, 1
      %s904 = scalar_select %p903, %s17, 1
      %s905 = smul.addr %s904, 2
      %s906 = smul.addr %s905, 4
      %s907 = scalar_lea.vmem %s4, %s906
      %p908 = scmp.lt.s32.totalorder %s17, 1
      %s909 = scalar_select %p908, %s17, 1
      %s910 = smul.addr %s909, 2
      %s911 = scalar_lea.vmem %s5, %s910
      // Predicated region
      $region37: #{generator_forward.5} parent=35 // pred_check
        %p912 = pneg %p124
      $region38: #{generator_forward.5} parent=35 // pred_check_branch
        %914 = sbr.rel (%p912) target = $region40
      $region39: #{generator_forward.5} parent=35 // pred_region
        _
      $region40: #{generator_forward.5} parent=35 // pred_fallthru
        _
      // Predicated region
      $region41: #{generator_forward.5} parent=35 // pred_check
        %p915 = pneg %p150
      $region42: #{generator_forward.5} parent=35 // pred_check_branch
        %917 = sbr.rel (%p915) target = $region44
      $region43: #{generator_forward.5} parent=35 // pred_region
        _
      $region44: #{generator_forward.5} parent=35 // pred_fallthru
        _
    $region36: #{generator_forward.5} parent=5 // pred_fallthru
      _
    %p918 = scmp.le.s32.totalorder 2, %s12
    // Predicated region
    $region45: #{generator_forward.5} parent=5 // pred_check
      %p919 = pneg %p918
    $region46: #{generator_forward.5} parent=5 // pred_check_branch
      %921 = sbr.rel (%p919) target = $region48
    $region47: #{generator_forward.5} parent=5 // pred_region
      %s922 = ssub.s32 %s12, 2
      // Predicated region
      $region49: #{generator_forward.5} parent=47 // pred_check
        %p923 = pneg %p130
      $region50: #{generator_forward.5} parent=47 // pred_check_branch
        %925 = sbr.rel (%p923) target = $region52
      $region51: #{generator_forward.5} parent=47 // pred_region
        %p926 = scmp.lt.s32.totalorder %s18, 1
        %s927 = scalar_select %p926, %s18, 1
        %s928 = smul.addr %s927, 2
        %s929 = smul.addr %s928, 4
        %s930 = scalar_lea.vmem %s4, %s929
      $region52: #{generator_forward.5} parent=47 // pred_fallthru
        _
      // Predicated region
      $region53: #{generator_forward.5} parent=47 // pred_check
        %p931 = pneg %p156
      $region54: #{generator_forward.5} parent=47 // pred_check_branch
        %933 = sbr.rel (%p931) target = $region56
      $region55: #{generator_forward.5} parent=47 // pred_region
        %p934 = scmp.lt.s32.totalorder %s18, 1
        %s935 = scalar_select %p934, %s18, 1
        %s936 = smul.addr %s935, 2
        %s937 = scalar_lea.vmem %s5, %s936
      $region56: #{generator_forward.5} parent=47 // pred_fallthru
        _
    $region48: #{generator_forward.5} parent=5 // pred_fallthru
      _
  $region6: #{generator_forward.5} parent=0 // loop_footer
    %s16 = sadd.s32 1, %s12
  $region7: #{generator_forward.5} parent=0 // loop_footer_branch
    %11 = sbr.rel target = $region3
  $region8: #{generator_forward.5} parent=0 // loop_exit
    _

// kernel: generator_forward.6
$region0: #{generator_forward.6}
  #allocation0 [shape = 'u32[]', space=smem, size = 0x4, offset = 0x4, fixed_abs, tag = 'smem constant byte address 0x4 - core index']
  #allocation1 [shape = 'u32[72,128]{1,0:T(1,128)}', space=vmem, size = 0x9000, scoped, tag = 'internal scratch']
  #allocation2 [shape = 'bf16[64,288]{1,0:T(8,128)(2,1)}', space=vmem, size = 0xc000, scoped, tag = 'scratch operand']
  %s0 = inlined_call_operand.vmem [shape: bf16[2,8,8,32], index: 0, kind: input, shape index: {}]
  %s1 = inlined_call_operand.vmem [shape: f32[1,32], index: 1, kind: input, shape index: {}]
  %s2 = inlined_call_operand.vmem [shape: f32[1,32], index: 2, kind: input, shape index: {}]
  %s3 = inlined_call_operand.vmem [shape: bf16[288,128], index: 3, kind: input, shape index: {}]
  %s4 = inlined_call_operand.vmem [shape: bf16[2,64,128], index: 4, kind: output, shape index: {0}]
  %s5 = inlined_call_operand.vmem [shape: f32[2,2,128], index: 5, kind: output, shape index: {1}]
  %6 = xla_tuple %s4, %s5
  %s7 = sld [smem:[#allocation0]]
  $region57: #{generator_forward.6} parent=0
    _
  %s9 = ssub.s32 1, %s7
  %s10 = scalar_select 0, %s9, %s7
  loop: start=0, step=1, limit=4
  $region2: #{generator_forward.6} parent=0 // loop_pre_header
    _
  $region3: #{generator_forward.6} parent=0 // loop_header
    %s12 = sphi 0, %s16
    %p13 = scmp.ge.s32.totalorder %s12, 4
    %s22 = sphi 0, %s24
    %s25 = sphi 0, %s22
    %s26 = sphi 0, %s25
    %s42 = sphi 0, %s26
    %s46 = sphi 0, %s46
    %s48 = sphi 0, %s46
    %s49 = sphi 0, %s48
    %s63 = sphi 0, %s49
    %s67 = sphi 0, %s67
    %s69 = sphi 0, %s67
    %s70 = sphi 0, %s69
    %s84 = sphi 0, %s70
    %s88 = sphi 0, %s88
    %s90 = sphi 0, %s88
    %s91 = sphi 0, %s90
    %s105 = sphi 0, %s91
    %s111 = sphi 0, %s113
    %s114 = sphi 0, %s111
    %s115 = sphi 0, %s114
    %s131 = sphi 0, %s115
    %s137 = sphi 0, %s139
    %s140 = sphi 0, %s137
    %s141 = sphi 0, %s140
    %s157 = sphi 0, %s141
  $region4: #{generator_forward.6} parent=0 // loop_header_branch
    %15 = sbr.rel (%p13) target = $region8
  $region5: #{generator_forward.6} parent=0 // loop_body
    %s17 = ssub.s32 %s12, 1
    %s18 = ssub.s32 %s12, 2
    %s19 = sadd.s32 %s12, 1
    %s20 = ssub.s32 %s12, %s19
    %p21 = scmp.eq.s32.totalorder %s20, 0
    %s23 = sadd.s32 %s22, 1
    %s24 = scalar_select %p21, %s22, %s23
    %p27 = pneg %p21
    %p28 = scmp.eq.s32.totalorder %s12, 1
    %p29 = por %p27, %p28
    %p30 = scmp.ne.s32.totalorder %s22, %s25
    %p31 = scmp.eq.s32.totalorder %s12, 0
    %p32 = por %p30, %p31
    %p33 = scmp.ne.s32.totalorder %s22, %s25
    %p34 = scmp.eq.s32.totalorder %s17, 1
    %p35 = por %p33, %p34
    %p36 = scmp.ne.s32.totalorder %s25, %s26
    %p37 = scmp.eq.s32.totalorder %s17, 0
    %p38 = por %p36, %p37
    %p39 = scmp.ne.s32.totalorder %s25, %s26
    %p40 = scmp.eq.s32.totalorder %s18, 1
    %p41 = por %p39, %p40
    %p43 = scmp.ne.s32.totalorder %s26, %s42
    %p44 = scmp.eq.s32.totalorder %s18, 0
    %p45 = por %p43, %p44
    %s47 = sadd.s32 %s46, 1
    %p50 = scmp.eq.s32.totalorder %s12, 1
    %p51 = scmp.ne.s32.totalorder %s46, %s48
    %p52 = scmp.eq.s32.totalorder %s12, 0
    %p53 = por %p51, %p52
    %p54 = scmp.ne.s32.totalorder %s46, %s48
    %p55 = scmp.eq.s32.totalorder %s17, 1
    %p56 = por %p54, %p55
    %p57 = scmp.ne.s32.totalorder %s48, %s49
    %p58 = scmp.eq.s32.totalorder %s17, 0
    %p59 = por %p57, %p58
    %p60 = scmp.ne.s32.totalorder %s48, %s49
    %p61 = scmp.eq.s32.totalorder %s18, 1
    %p62 = por %p60, %p61
    %p64 = scmp.ne.s32.totalorder %s49, %s63
    %p65 = scmp.eq.s32.totalorder %s18, 0
    %p66 = por %p64, %p65
    %s68 = sadd.s32 %s67, 1
    %p71 = scmp.eq.s32.totalorder %s12, 1
    %p72 = scmp.ne.s32.totalorder %s67, %s69
    %p73 = scmp.eq.s32.totalorder %s12, 0
    %p74 = por %p72, %p73
    %p75 = scmp.ne.s32.totalorder %s67, %s69
    %p76 = scmp.eq.s32.totalorder %s17, 1
    %p77 = por %p75, %p76
    %p78 = scmp.ne.s32.totalorder %s69, %s70
    %p79 = scmp.eq.s32.totalorder %s17, 0
    %p80 = por %p78, %p79
    %p81 = scmp.ne.s32.totalorder %s69, %s70
    %p82 = scmp.eq.s32.totalorder %s18, 1
    %p83 = por %p81, %p82
    %p85 = scmp.ne.s32.totalorder %s70, %s84
    %p86 = scmp.eq.s32.totalorder %s18, 0
    %p87 = por %p85, %p86
    %s89 = sadd.s32 %s88, 1
    %p92 = scmp.eq.s32.totalorder %s12, 1
    %p93 = scmp.ne.s32.totalorder %s88, %s90
    %p94 = scmp.eq.s32.totalorder %s12, 0
    %p95 = por %p93, %p94
    %p96 = scmp.ne.s32.totalorder %s88, %s90
    %p97 = scmp.eq.s32.totalorder %s17, 1
    %p98 = por %p96, %p97
    %p99 = scmp.ne.s32.totalorder %s90, %s91
    %p100 = scmp.eq.s32.totalorder %s17, 0
    %p101 = por %p99, %p100
    %p102 = scmp.ne.s32.totalorder %s90, %s91
    %p103 = scmp.eq.s32.totalorder %s18, 1
    %p104 = por %p102, %p103
    %p106 = scmp.ne.s32.totalorder %s91, %s105
    %p107 = scmp.eq.s32.totalorder %s18, 0
    %p108 = por %p106, %p107
    %s109 = ssub.s32 %s12, %s19
    %p110 = scmp.eq.s32.totalorder %s109, 0
    %s112 = sadd.s32 %s111, 1
    %s113 = scalar_select %p110, %s111, %s112
    %p116 = pneg %p110
    %p117 = scmp.eq.s32.totalorder %s12, 1
    %p118 = por %p116, %p117
    %p119 = scmp.ne.s32.totalorder %s111, %s114
    %p120 = scmp.eq.s32.totalorder %s12, 0
    %p121 = por %p119, %p120
    %p122 = scmp.ne.s32.totalorder %s111, %s114
    %p123 = scmp.eq.s32.totalorder %s17, 1
    %p124 = por %p122, %p123
    %p125 = scmp.ne.s32.totalorder %s114, %s115
    %p126 = scmp.eq.s32.totalorder %s17, 0
    %p127 = por %p125, %p126
    %p128 = scmp.ne.s32.totalorder %s114, %s115
    %p129 = scmp.eq.s32.totalorder %s18, 1
    %p130 = por %p128, %p129
    %p132 = scmp.ne.s32.totalorder %s115, %s131
    %p133 = scmp.eq.s32.totalorder %s18, 0
    %p134 = por %p132, %p133
    %s135 = ssub.s32 %s12, %s19
    %p136 = scmp.eq.s32.totalorder %s135, 0
    %s138 = sadd.s32 %s137, 1
    %s139 = scalar_select %p136, %s137, %s138
    %p142 = pneg %p136
    %p143 = scmp.eq.s32.totalorder %s12, 1
    %p144 = por %p142, %p143
    %p145 = scmp.ne.s32.totalorder %s137, %s140
    %p146 = scmp.eq.s32.totalorder %s12, 0
    %p147 = por %p145, %p146
    %p148 = scmp.ne.s32.totalorder %s137, %s140
    %p149 = scmp.eq.s32.totalorder %s17, 1
    %p150 = por %p148, %p149
    %p151 = scmp.ne.s32.totalorder %s140, %s141
    %p152 = scmp.eq.s32.totalorder %s17, 0
    %p153 = por %p151, %p152
    %p154 = scmp.ne.s32.totalorder %s140, %s141
    %p155 = scmp.eq.s32.totalorder %s18, 1
    %p156 = por %p154, %p155
    %p158 = scmp.ne.s32.totalorder %s141, %s157
    %p159 = scmp.eq.s32.totalorder %s18, 0
    %p160 = por %p158, %p159
    %p161 = scmp.le.s32.totalorder 1, %s12
    %p162 = scmp.lt.s32.totalorder %s12, 3
    %p163 = pnand %p161, %p162
    %p164 = pneg %p163
    // Predicated region
    $region9: #{generator_forward.6} parent=5 // pred_check
      _
    $region10: #{generator_forward.6} parent=5 // pred_check_branch
      %166 = sbr.rel (%p163) target = $region12
    $region11: #{generator_forward.6} parent=5 // pred_region
      %s167 = ssub.s32 %s12, 1
      // Predicated region
      $region13: #{generator_forward.6} parent=11 // pred_check
        %p168 = pneg %p59
      $region14: #{generator_forward.6} parent=11 // pred_check_branch
        %170 = sbr.rel (%p168) target = $region16
      $region15: #{generator_forward.6} parent=11 // pred_region
        _
      $region16: #{generator_forward.6} parent=11 // pred_fallthru
        _
      // Predicated region
      $region17: #{generator_forward.6} parent=11 // pred_check
        %p171 = pneg %p80
      $region18: #{generator_forward.6} parent=11 // pred_check_branch
        %173 = sbr.rel (%p171) target = $region20
      $region19: #{generator_forward.6} parent=11 // pred_region
        _
      $region20: #{generator_forward.6} parent=11 // pred_fallthru
        _
      // Predicated region
      $region21: #{generator_forward.6} parent=11 // pred_check
        %p174 = pneg %p101
      $region22: #{generator_forward.6} parent=11 // pred_check_branch
        %176 = sbr.rel (%p174) target = $region24
      $region23: #{generator_forward.6} parent=11 // pred_region
        _
      $region24: #{generator_forward.6} parent=11 // pred_fallthru
        _
    $region12: #{generator_forward.6} parent=5 // pred_fallthru
      _
    %p177 = scmp.lt.s32.totalorder %s12, 2
    // Predicated region
    $region25: #{generator_forward.6} parent=5 // pred_check
      %p178 = pneg %p177
    $region26: #{generator_forward.6} parent=5 // pred_check_branch
      %180 = sbr.rel (%p178) target = $region28
    $region27: #{generator_forward.6} parent=5 // pred_region
      // Predicated region
      $region29: #{generator_forward.6} parent=27 // pred_check
        %p181 = pneg %p32
      $region30: #{generator_forward.6} parent=27 // pred_check_branch
        %183 = sbr.rel (%p181) target = $region32
      $region31: #{generator_forward.6} parent=27 // pred_region
        %p184 = scmp.lt.s32.totalorder %s12, 1
        %s185 = scalar_select %p184, %s12, 1
        %s186 = smul.addr %s185, 8
        %s187 = smul.addr %s186, 4
        %s188 = scalar_lea.vmem %s0, %s187
      $region32: #{generator_forward.6} parent=27 // pred_fallthru
        _
    $region28: #{generator_forward.6} parent=5 // pred_fallthru
      _
    %p189 = scmp.le.s32.totalorder 1, %s12
    %p190 = scmp.lt.s32.totalorder %s12, 3
    %p191 = pnand %p189, %p190
    %p192 = pneg %p191
    // Predicated region
    $region33: #{generator_forward.6} parent=5 // pred_check
      _
    $region34: #{generator_forward.6} parent=5 // pred_check_branch
      %194 = sbr.rel (%p191) target = $region36
    $region35: #{generator_forward.6} parent=5 // pred_region
      %s195 = ssub.s32 %s12, 1
      %p196 = scmp.lt.s32.totalorder %s17, 1
      %s197 = scalar_select %p196, %s17, 1
      %s198 = smul.addr %s197, 8
      %s199 = smul.addr %s198, 4
      %s200 = scalar_lea.vmem %s0, %s199
      %p201 = pneg %p38
      %p202 = pneg %p35
      %p203 = pneg %p59
      %p204 = pneg %p56
      %p205 = pneg %p80
      %p206 = pneg %p77
      %p207 = pneg %p101
      %p208 = pneg %p98
      %p209 = pneg %p127
      %p210 = pneg %p124
      %p211 = scmp.lt.s32.totalorder %s17, 1
      %s212 = scalar_select %p211, %s17, 1
      %s213 = smul.addr %s212, 8
      %s214 = smul.addr %s213, 4
      %s215 = scalar_lea.vmem %s4, %s214
      %p216 = pneg %p153
      %p217 = pneg %p150
      %p218 = scmp.lt.s32.totalorder %s17, 1
      %s219 = scalar_select %p218, %s17, 1
      %s220 = smul.addr %s219, 2
      %s221 = scalar_lea.vmem %s5, %s220
      %p222 = scmp.lt.s32.totalorder %s17, 1
      %s223 = scalar_select %p222, %s17, 1
      %s224 = smul.addr %s223, 8
      %s225 = smul.addr %s224, 4
      %s226 = scalar_lea.vmem %s0, %s225
      %p227 = scmp.lt.s32.totalorder %s17, 1
      %s228 = scalar_select %p227, %s17, 1
      %s229 = smul.addr %s228, 8
      %s230 = smul.addr %s229, 4
      %s231 = scalar_lea.vmem %s4, %s230
      %p232 = scmp.lt.s32.totalorder %s17, 1
      %s233 = scalar_select %p232, %s17, 1
      %s234 = smul.addr %s233, 2
      %s235 = scalar_lea.vmem %s5, %s234
      %v237 = vld [vmem:[%s226] sm:$0xf]
      %v238 = vld [vmem:[%s226 + $0x4] sm:$0xf]
      %v239 = vld [vmem:[%s226 + $0x8] sm:$0xf]
      %v240 = vld [vmem:[%s226 + $0xc] sm:$0xf]
      %v241 = vld [vmem:[%s226 + $0x10] sm:$0xf]
      %v242 = vld [vmem:[%s226 + $0x14] sm:$0xf]
      %v243 = vld [vmem:[%s226 + $0x18] sm:$0xf]
      %v244 = vld [vmem:[%s226 + $0x1c] sm:$0xf]
      %v245 = vunpack.c.l.bf16 %v237
      %v246 = vunpack.c.l.bf16 %v238
      %v247 = vunpack.c.l.bf16 %v239
      %v248 = vunpack.c.l.bf16 %v240
      %v249 = vunpack.c.l.bf16 %v241
      %v250 = vunpack.c.l.bf16 %v242
      %v251 = vunpack.c.l.bf16 %v243
      %v252 = vunpack.c.l.bf16 %v244
      %v253 = vld [vmem:[%s1] sm:$0x1]
      %v255 = vperm.slane %v253, 0
      %v257 = vmul.f32 %v245, %v255
      %v258 = vmul.f32 %v246, %v255
      %v259 = vmul.f32 %v247, %v255
      %v260 = vmul.f32 %v248, %v255
      %v261 = vmul.f32 %v249, %v255
      %v262 = vmul.f32 %v250, %v255
      %v263 = vmul.f32 %v251, %v255
      %v264 = vmul.f32 %v252, %v255
      %v265 = vld [vmem:[%s2] sm:$0x1]
      %v267 = vperm.slane %v265, 0
      %v269 = vadd.f32 %v257, %v267
      %v270 = vadd.f32 %v258, %v267
      %v271 = vadd.f32 %v259, %v267
      %v272 = vadd.f32 %v260, %v267
      %v273 = vadd.f32 %v261, %v267
      %v274 = vadd.f32 %v262, %v267
      %v275 = vadd.f32 %v263, %v267
      %v276 = vadd.f32 %v264, %v267
      %v277 = vmax.f32 %v269, 0.0
      %v278 = vmax.f32 %v270, 0.0
      %v279 = vmax.f32 %v271, 0.0
      %v280 = vmax.f32 %v272, 0.0
      %v281 = vmax.f32 %v273, 0.0
      %v282 = vmax.f32 %v274, 0.0
      %v283 = vmax.f32 %v275, 0.0
      %v284 = vmax.f32 %v276, 0.0
      %v285 = vpack.c.bf16 %v277, %v277
      %v286 = vpack.c.bf16 %v278, %v278
      %v287 = vpack.c.bf16 %v279, %v279
      %v288 = vpack.c.bf16 %v280, %v280
      %v289 = vpack.c.bf16 %v281, %v281
      %v290 = vpack.c.bf16 %v282, %v282
      %v291 = vpack.c.bf16 %v283, %v283
      %v292 = vpack.c.bf16 %v284, %v284
      %293 = vst [vmem:[#allocation2] sm:$0xff] 0
      %vm294 = vcmask 257024
      %295 = vst.msk [vmem:[#allocation2 + $0x8] sm:$0xf] %vm294, 0
      %296 = vst [vmem:[#allocation2 + $0xc] sm:$0xff] 0
      %297 = vst.msk [vmem:[#allocation2 + $0x14] sm:$0xf] %vm294, 0
      %298 = vst [vmem:[#allocation2 + $0x18] sm:$0xff] 0
      %299 = vst.msk [vmem:[#allocation2 + $0x20] sm:$0xf] %vm294, 0
      %300 = vst [vmem:[#allocation2 + $0x24] sm:$0xff] 0
      %301 = vst.msk [vmem:[#allocation2 + $0x2c] sm:$0xf] %vm294, 0
      %302 = vst [vmem:[#allocation2 + $0x30] sm:$0xff] 0
      %303 = vst.msk [vmem:[#allocation2 + $0x38] sm:$0xf] %vm294, 0
      %304 = vst [vmem:[#allocation2 + $0x3c] sm:$0xff] 0
      %305 = vst.msk [vmem:[#allocation2 + $0x44] sm:$0xf] %vm294, 0
      %306 = vst [vmem:[#allocation2 + $0x48] sm:$0xff] 0
      %307 = vst.msk [vmem:[#allocation2 + $0x50] sm:$0xf] %vm294, 0
      %308 = vst [vmem:[#allocation2 + $0x54] sm:$0xff] 0
      %309 = vst.msk [vmem:[#allocation2 + $0x5c] sm:$0xf] %vm294, 0
      %v311 = vshrl.u32 %v285, 16
      %v313 = vrot.slane %v311, 7
      %v314 = vshll.u32 %v285, 16
      %v316 = vor.u32 %v313, %v314
      %vm318 = vcmask 257024
      %vm319 = vsmask.f32 7938
      %vm320 = vmand %vm318, %vm319
      %v321 = vld [vmem:[#allocation2 + $0xc] sm:$0xf]
      %v322 = vsel %vm320, %v316, %v321
      %323 = vst [vmem:[#allocation2 + $0xc] sm:$0xf] %v322
      %v325 = vshrl.u32 %v286, 16
      %v327 = vrot.slane %v325, 7
      %v328 = vshll.u32 %v286, 16
      %v330 = vor.u32 %v327, %v328
      %v332 = vld [vmem:[#allocation2 + $0x18] sm:$0xf]
      %v333 = vsel %vm320, %v330, %v332
      %334 = vst [vmem:[#allocation2 + $0x18] sm:$0xf] %v333
      %v336 = vshrl.u32 %v287, 16
      %v338 = vrot.slane %v336, 7
      %v339 = vshll.u32 %v287, 16
      %v341 = vor.u32 %v338, %v339
      %v343 = vld [vmem:[#allocation2 + $0x24] sm:$0xf]
      %v344 = vsel %vm320, %v341, %v343
      %345 = vst [vmem:[#allocation2 + $0x24] sm:$0xf] %v344
      %v347 = vshrl.u32 %v288, 16
      %v349 = vrot.slane %v347, 7
      %v350 = vshll.u32 %v288, 16
      %v352 = vor.u32 %v349, %v350
      %v354 = vld [vmem:[#allocation2 + $0x30] sm:$0xf]
      %v355 = vsel %vm320, %v352, %v354
      %356 = vst [vmem:[#allocation2 + $0x30] sm:$0xf] %v355
      %v358 = vshrl.u32 %v289, 16
      %v360 = vrot.slane %v358, 7
      %v361 = vshll.u32 %v289, 16
      %v363 = vor.u32 %v360, %v361
      %v365 = vld [vmem:[#allocation2 + $0x3c] sm:$0xf]
      %v366 = vsel %vm320, %v363, %v365
      %367 = vst [vmem:[#allocation2 + $0x3c] sm:$0xf] %v366
      %v369 = vshrl.u32 %v290, 16
      %v371 = vrot.slane %v369, 7
      %v372 = vshll.u32 %v290, 16
      %v374 = vor.u32 %v371, %v372
      %v376 = vld [vmem:[#allocation2 + $0x48] sm:$0xf]
      %v377 = vsel %vm320, %v374, %v376
      %378 = vst [vmem:[#allocation2 + $0x48] sm:$0xf] %v377
      %v380 = vshrl.u32 %v291, 16
      %v382 = vrot.slane %v380, 7
      %v383 = vshll.u32 %v291, 16
      %v385 = vor.u32 %v382, %v383
      %v387 = vld [vmem:[#allocation2 + $0x54] sm:$0xf]
      %v388 = vsel %vm320, %v385, %v387
      %389 = vst [vmem:[#allocation2 + $0x54] sm:$0xf] %v388
      %391 = vrot.lane.b32.xlu0 %v285, 32
      %v392 = vpop.permute.xlu0 %391
      %vm394 = vcmask 519424
      %395 = vst.msk [vmem:[#allocation2 + $0xc] sm:$0xf] %vm394, %v392
      %397 = vrot.lane.b32.xlu0 %v286, 32
      %v398 = vpop.permute.xlu0 %397
      %400 = vst.msk [vmem:[#allocation2 + $0x18] sm:$0xf] %vm394, %v398
      %402 = vrot.lane.b32.xlu0 %v287, 32
      %v403 = vpop.permute.xlu0 %402
      %405 = vst.msk [vmem:[#allocation2 + $0x24] sm:$0xf] %vm394, %v403
      %407 = vrot.lane.b32.xlu0 %v288, 32
      %v408 = vpop.permute.xlu0 %407
      %410 = vst.msk [vmem:[#allocation2 + $0x30] sm:$0xf] %vm394, %v408
      %412 = vrot.lane.b32.xlu0 %v289, 32
      %v413 = vpop.permute.xlu0 %412
      %415 = vst.msk [vmem:[#allocation2 + $0x3c] sm:$0xf] %vm394, %v413
      %417 = vrot.lane.b32.xlu0 %v290, 32
      %v418 = vpop.permute.xlu0 %417
      %420 = vst.msk [vmem:[#allocation2 + $0x48] sm:$0xf] %vm394, %v418
      %422 = vrot.lane.b32.xlu0 %v291, 32
      %v423 = vpop.permute.xlu0 %422
      %425 = vst.msk [vmem:[#allocation2 + $0x54] sm:$0xf] %vm394, %v423
      %v426 = vrot.slane %v311, 4
      %v427 = vrot.slane %v314, 5
      %v428 = vor.u32 %v426, %v427
      %v429 = vrot.slane %v428, 4
      %430 = vrot.lane.b32.xlu0 %v429, 64
      %v431 = vpop.permute.xlu0 %430
      %vm433 = vcmask 781824
      %vm434 = vsmask.f32 3328
      %vm435 = vmand %vm433, %vm434
      %v436 = vld [vmem:[#allocation2 + $0xc] sm:$0xf]
      %v437 = vsel %vm435, %v431, %v436
      %438 = vst [vmem:[#allocation2 + $0xc] sm:$0xf] %v437
      %v439 = vrot.slane %v325, 4
      %v440 = vrot.slane %v328, 5
      %v441 = vor.u32 %v439, %v440
      %v442 = vrot.slane %v441, 4
      %443 = vrot.lane.b32.xlu0 %v442, 64
      %v444 = vpop.permute.xlu0 %443
      %v446 = vld [vmem:[#allocation2 + $0x18] sm:$0xf]
      %v447 = vsel %vm435, %v444, %v446
      %448 = vst [vmem:[#allocation2 + $0x18] sm:$0xf] %v447
      %v449 = vrot.slane %v336, 4
      %v450 = vrot.slane %v339, 5
      %v451 = vor.u32 %v449, %v450
      %v452 = vrot.slane %v451, 4
      %453 = vrot.lane.b32.xlu0 %v452, 64
      %v454 = vpop.permute.xlu0 %453
      %v456 = vld [vmem:[#allocation2 + $0x24] sm:$0xf]
      %v457 = vsel %vm435, %v454, %v456
      %458 = vst [vmem:[#allocation2 + $0x24] sm:$0xf] %v457
      %v459 = vrot.slane %v347, 4
      %v460 = vrot.slane %v350, 5
      %v461 = vor.u32 %v459, %v460
      %v462 = vrot.slane %v461, 4
      %463 = vrot.lane.b32.xlu0 %v462, 64
      %v464 = vpop.permute.xlu0 %463
      %v466 = vld [vmem:[#allocation2 + $0x30] sm:$0xf]
      %v467 = vsel %vm435, %v464, %v466
      %468 = vst [vmem:[#allocation2 + $0x30] sm:$0xf] %v467
      %v469 = vrot.slane %v358, 4
      %v470 = vrot.slane %v361, 5
      %v471 = vor.u32 %v469, %v470
      %v472 = vrot.slane %v471, 4
      %473 = vrot.lane.b32.xlu0 %v472, 64
      %v474 = vpop.permute.xlu0 %473
      %v476 = vld [vmem:[#allocation2 + $0x3c] sm:$0xf]
      %v477 = vsel %vm435, %v474, %v476
      %478 = vst [vmem:[#allocation2 + $0x3c] sm:$0xf] %v477
      %v479 = vrot.slane %v369, 4
      %v480 = vrot.slane %v372, 5
      %v481 = vor.u32 %v479, %v480
      %v482 = vrot.slane %v481, 4
      %483 = vrot.lane.b32.xlu0 %v482, 64
      %v484 = vpop.permute.xlu0 %483
      %v486 = vld [vmem:[#allocation2 + $0x48] sm:$0xf]
      %v487 = vsel %vm435, %v484, %v486
      %488 = vst [vmem:[#allocation2 + $0x48] sm:$0xf] %v487
      %v489 = vrot.slane %v380, 4
      %v490 = vrot.slane %v383, 5
      %v491 = vor.u32 %v489, %v490
      %v492 = vrot.slane %v491, 4
      %493 = vrot.lane.b32.xlu0 %v492, 64
      %v494 = vpop.permute.xlu0 %493
      %v496 = vld [vmem:[#allocation2 + $0x54] sm:$0xf]
      %v497 = vsel %vm435, %v494, %v496
      %498 = vst [vmem:[#allocation2 + $0x54] sm:$0xf] %v497
      %499 = vrot.lane.b32.xlu0 %v316, 96
      %v500 = vpop.permute.xlu0 %499
      %vm502 = vcmask 1044224
      %vm503 = vmand %vm502, %vm319
      %v504 = vld [vmem:[#allocation2] sm:$0xf]
      %v505 = vsel %vm503, %v500, %v504
      %506 = vst [vmem:[#allocation2] sm:$0xf] %v505
      %507 = vrot.lane.b32.xlu0 %v330, 96
      %v508 = vpop.permute.xlu0 %507
      %v510 = vld [vmem:[#allocation2 + $0xc] sm:$0xf]
      %v511 = vsel %vm503, %v508, %v510
      %512 = vst [vmem:[#allocation2 + $0xc] sm:$0xf] %v511
      %513 = vrot.lane.b32.xlu0 %v341, 96
      %v514 = vpop.permute.xlu0 %513
      %v516 = vld [vmem:[#allocation2 + $0x18] sm:$0xf]
      %v517 = vsel %vm503, %v514, %v516
      %518 = vst [vmem:[#allocation2 + $0x18] sm:$0xf] %v517
      %519 = vrot.lane.b32.xlu0 %v352, 96
      %v520 = vpop.permute.xlu0 %519
      %v522 = vld [vmem:[#allocation2 + $0x24] sm:$0xf]
      %v523 = vsel %vm503, %v520, %v522
      %524 = vst [vmem:[#allocation2 + $0x24] sm:$0xf] %v523
      %525 = vrot.lane.b32.xlu0 %v363, 96
      %v526 = vpop.permute.xlu0 %525
      %v528 = vld [vmem:[#allocation2 + $0x30] sm:$0xf]
      %v529 = vsel %vm503, %v526, %v528
      %530 = vst [vmem:[#allocation2 + $0x30] sm:$0xf] %v529
      %531 = vrot.lane.b32.xlu0 %v374, 96
      %v532 = vpop.permute.xlu0 %531
      %v534 = vld [vmem:[#allocation2 + $0x3c] sm:$0xf]
      %v535 = vsel %vm503, %v532, %v534
      %536 = vst [vmem:[#allocation2 + $0x3c] sm:$0xf] %v535
      %537 = vrot.lane.b32.xlu0 %v385, 96
      %v538 = vpop.permute.xlu0 %537
      %v540 = vld [vmem:[#allocation2 + $0x48] sm:$0xf]
      %v541 = vsel %vm503, %v538, %v540
      %542 = vst [vmem:[#allocation2 + $0x48] sm:$0xf] %v541
      %v544 = vshrl.u32 %v292, 16
      %v546 = vrot.slane %v544, 7
      %v547 = vshll.u32 %v292, 16
      %v549 = vor.u32 %v546, %v547
      %550 = vrot.lane.b32.xlu0 %v549, 96
      %v551 = vpop.permute.xlu0 %550
      %v553 = vld [vmem:[#allocation2 + $0x54] sm:$0xf]
      %v554 = vsel %vm503, %v551, %v553
      %555 = vst [vmem:[#allocation2 + $0x54] sm:$0xf] %v554
      %556 = vst.msk [vmem:[#allocation2 + $0x4] sm:$0xf] %vm294, %v285
      %557 = vst.msk [vmem:[#allocation2 + $0x10] sm:$0xf] %vm294, %v286
      %558 = vst.msk [vmem:[#allocation2 + $0x1c] sm:$0xf] %vm294, %v287
      %559 = vst.msk [vmem:[#allocation2 + $0x28] sm:$0xf] %vm294, %v288
      %560 = vst.msk [vmem:[#allocation2 + $0x34] sm:$0xf] %vm294, %v289
      %561 = vst.msk [vmem:[#allocation2 + $0x40] sm:$0xf] %vm294, %v290
      %562 = vst.msk [vmem:[#allocation2 + $0x4c] sm:$0xf] %vm294, %v291
      %563 = vst.msk [vmem:[#allocation2 + $0x58] sm:$0xf] %vm294, %v292
      %564 = vrot.lane.b32.xlu0 %v429, 32
      %v565 = vpop.permute.xlu0 %564
      %vm567 = vcmask 519424
      %vm568 = vmand %vm567, %vm434
      %v569 = vld [vmem:[#allocation2 + $0x4] sm:$0xf]
      %v570 = vsel %vm568, %v565, %v569
      %571 = vst [vmem:[#allocation2 + $0x4] sm:$0xf] %v570
      %572 = vrot.lane.b32.xlu0 %v442, 32
      %v573 = vpop.permute.xlu0 %572
      %v575 = vld [vmem:[#allocation2 + $0x10] sm:$0xf]
      %v576 = vsel %vm568, %v573, %v575
      %577 = vst [vmem:[#allocation2 + $0x10] sm:$0xf] %v576
      %578 = vrot.lane.b32.xlu0 %v452, 32
      %v579 = vpop.permute.xlu0 %578
      %v581 = vld [vmem:[#allocation2 + $0x1c] sm:$0xf]
      %v582 = vsel %vm568, %v579, %v581
      %583 = vst [vmem:[#allocation2 + $0x1c] sm:$0xf] %v582
      %584 = vrot.lane.b32.xlu0 %v462, 32
      %v585 = vpop.permute.xlu0 %584
      %v587 = vld [vmem:[#allocation2 + $0x28] sm:$0xf]
      %v588 = vsel %vm568, %v585, %v587
      %589 = vst [vmem:[#allocation2 + $0x28] sm:$0xf] %v588
      %590 = vrot.lane.b32.xlu0 %v472, 32
      %v591 = vpop.permute.xlu0 %590
      %v593 = vld [vmem:[#allocation2 + $0x34] sm:$0xf]
      %v594 = vsel %vm568, %v591, %v593
      %595 = vst [vmem:[#allocation2 + $0x34] sm:$0xf] %v594
      %596 = vrot.lane.b32.xlu0 %v482, 32
      %v597 = vpop.permute.xlu0 %596
      %v599 = vld [vmem:[#allocation2 + $0x40] sm:$0xf]
      %v600 = vsel %vm568, %v597, %v599
      %601 = vst [vmem:[#allocation2 + $0x40] sm:$0xf] %v600
      %602 = vrot.lane.b32.xlu0 %v492, 32
      %v603 = vpop.permute.xlu0 %602
      %v605 = vld [vmem:[#allocation2 + $0x4c] sm:$0xf]
      %v606 = vsel %vm568, %v603, %v605
      %607 = vst [vmem:[#allocation2 + $0x4c] sm:$0xf] %v606
      %v608 = vrot.slane %v544, 4
      %v609 = vrot.slane %v547, 5
      %v610 = vor.u32 %v608, %v609
      %v611 = vrot.slane %v610, 4
      %612 = vrot.lane.b32.xlu0 %v611, 32
      %v613 = vpop.permute.xlu0 %612
      %v615 = vld [vmem:[#allocation2 + $0x58] sm:$0xf]
      %v616 = vsel %vm568, %v613, %v615
      %617 = vst [vmem:[#allocation2 + $0x58] sm:$0xf] %v616
      %618 = vrot.lane.b32.xlu0 %v330, 64
      %v619 = vpop.permute.xlu0 %618
      %vm621 = vmand %vm433, %vm319
      %v622 = vld [vmem:[#allocation2 + $0x4] sm:$0xf]
      %v623 = vsel %vm621, %v619, %v622
      %624 = vst [vmem:[#allocation2 + $0x4] sm:$0xf] %v623
      %625 = vrot.lane.b32.xlu0 %v341, 64
      %v626 = vpop.permute.xlu0 %625
      %v628 = vld [vmem:[#allocation2 + $0x10] sm:$0xf]
      %v629 = vsel %vm621, %v626, %v628
      %630 = vst [vmem:[#allocation2 + $0x10] sm:$0xf] %v629
      %631 = vrot.lane.b32.xlu0 %v352, 64
      %v632 = vpop.permute.xlu0 %631
      %v634 = vld [vmem:[#allocation2 + $0x1c] sm:$0xf]
      %v635 = vsel %vm621, %v632, %v634
      %636 = vst [vmem:[#allocation2 + $0x1c] sm:$0xf] %v635
      %637 = vrot.lane.b32.xlu0 %v363, 64
      %v638 = vpop.permute.xlu0 %637
      %v640 = vld [vmem:[#allocation2 + $0x28] sm:$0xf]
      %v641 = vsel %vm621, %v638, %v640
      %642 = vst [vmem:[#allocation2 + $0x28] sm:$0xf] %v641
      %643 = vrot.lane.b32.xlu0 %v374, 64
      %v644 = vpop.permute.xlu0 %643
      %v646 = vld [vmem:[#allocation2 + $0x34] sm:$0xf]
      %v647 = vsel %vm621, %v644, %v646
      %648 = vst [vmem:[#allocation2 + $0x34] sm:$0xf] %v647
      %649 = vrot.lane.b32.xlu0 %v385, 64
      %v650 = vpop.permute.xlu0 %649
      %v652 = vld [vmem:[#allocation2 + $0x40] sm:$0xf]
      %v653 = vsel %vm621, %v650, %v652
      %654 = vst [vmem:[#allocation2 + $0x40] sm:$0xf] %v653
      %655 = vrot.lane.b32.xlu0 %v549, 64
      %v656 = vpop.permute.xlu0 %655
      %v658 = vld [vmem:[#allocation2 + $0x4c] sm:$0xf]
      %v659 = vsel %vm621, %v656, %v658
      %660 = vst [vmem:[#allocation2 + $0x4c] sm:$0xf] %v659
      %661 = vrot.lane.b32.xlu0 %v286, 96
      %v662 = vpop.permute.xlu0 %661
      %vm664 = vcmask 1044224
      %665 = vst.msk [vmem:[#allocation2 + $0x4] sm:$0xf] %vm664, %v662
      %666 = vrot.lane.b32.xlu0 %v287, 96
      %v667 = vpop.permute.xlu0 %666
      %669 = vst.msk [vmem:[#allocation2 + $0x10] sm:$0xf] %vm664, %v667
      %670 = vrot.lane.b32.xlu0 %v288, 96
      %v671 = vpop.permute.xlu0 %670
      %673 = vst.msk [vmem:[#allocation2 + $0x1c] sm:$0xf] %vm664, %v671
      %674 = vrot.lane.b32.xlu0 %v289, 96
      %v675 = vpop.permute.xlu0 %674
      %677 = vst.msk [vmem:[#allocation2 + $0x28] sm:$0xf] %vm664, %v675
      %678 = vrot.lane.b32.xlu0 %v290, 96
      %v679 = vpop.permute.xlu0 %678
      %681 = vst.msk [vmem:[#allocation2 + $0x34] sm:$0xf] %vm664, %v679
      %682 = vrot.lane.b32.xlu0 %v291, 96
      %v683 = vpop.permute.xlu0 %682
      %685 = vst.msk [vmem:[#allocation2 + $0x40] sm:$0xf] %vm664, %v683
      %687 = vrot.lane.b32.xlu0 %v292, 96
      %v688 = vpop.permute.xlu0 %687
      %690 = vst.msk [vmem:[#allocation2 + $0x4c] sm:$0xf] %vm664, %v688
      %vm692 = vmand %vm318, %vm434
      %v693 = vld [vmem:[#allocation2 + $0x8] sm:$0xf]
      %v694 = vsel %vm692, %v442, %v693
      %695 = vst [vmem:[#allocation2 + $0x8] sm:$0xf] %v694
      %v697 = vld [vmem:[#allocation2 + $0x14] sm:$0xf]
      %v698 = vsel %vm692, %v452, %v697
      %699 = vst [vmem:[#allocation2 + $0x14] sm:$0xf] %v698
      %v701 = vld [vmem:[#allocation2 + $0x20] sm:$0xf]
      %v702 = vsel %vm692, %v462, %v701
      %703 = vst [vmem:[#allocation2 + $0x20] sm:$0xf] %v702
      %v705 = vld [vmem:[#allocation2 + $0x2c] sm:$0xf]
      %v706 = vsel %vm692, %v472, %v705
      %707 = vst [vmem:[#allocation2 + $0x2c] sm:$0xf] %v706
      %v709 = vld [vmem:[#allocation2 + $0x38] sm:$0xf]
      %v710 = vsel %vm692, %v482, %v709
      %711 = vst [vmem:[#allocation2 + $0x38] sm:$0xf] %v710
      %v713 = vld [vmem:[#allocation2 + $0x44] sm:$0xf]
      %v714 = vsel %vm692, %v492, %v713
      %715 = vst [vmem:[#allocation2 + $0x44] sm:$0xf] %v714
      %v717 = vld [vmem:[#allocation2 + $0x50] sm:$0xf]
      %v718 = vsel %vm692, %v611, %v717
      %719 = vst [vmem:[#allocation2 + $0x50] sm:$0xf] %v718
      %v720 = vld [vmem:[#allocation2] sm:$0xff]
      %v721 = vld [vmem:[#allocation2 + $0x8] sm:$0xf]
      %v722 = vld [vmem:[#allocation2 + $0xc] sm:$0xff]
      %v723 = vld [vmem:[#allocation2 + $0x14] sm:$0xf]
      %v724 = vld [vmem:[#allocation2 + $0x18] sm:$0xff]
      %v725 = vld [vmem:[#allocation2 + $0x20] sm:$0xf]
      %v726 = vld [vmem:[#allocation2 + $0x24] sm:$0xff]
      %v727 = vld [vmem:[#allocation2 + $0x2c] sm:$0xf]
      %v728 = vld [vmem:[#allocation2 + $0x30] sm:$0xff]
      %v729 = vld [vmem:[#allocation2 + $0x38] sm:$0xf]
      %v730 = vld [vmem:[#allocation2 + $0x3c] sm:$0xff]
      %v731 = vld [vmem:[#allocation2 + $0x44] sm:$0xf]
      %v732 = vld [vmem:[#allocation2 + $0x48] sm:$0xff]
      %v733 = vld [vmem:[#allocation2 + $0x50] sm:$0xf]
      %v734 = vld [vmem:[#allocation2 + $0x54] sm:$0xff]
      %v735 = vld [vmem:[#allocation2 + $0x5c] sm:$0xf]
      %v736 = vld [vmem:[%s3] sm:$0xf]
      %v737 = vld [vmem:[%s3 + $0x4] sm:$0xf]
      %v738 = vld [vmem:[%s3 + $0x8] sm:$0xf]
      %v739 = vld [vmem:[%s3 + $0xc] sm:$0xf]
      %v740 = vld [vmem:[%s3 + $0x10] sm:$0xf]
      %v741 = vld [vmem:[%s3 + $0x14] sm:$0xf]
      %v742 = vld [vmem:[%s3 + $0x18] sm:$0xf]
      %v743 = vld [vmem:[%s3 + $0x1c] sm:$0xf]
      %v744 = vld [vmem:[%s3 + $0x20] sm:$0xf]
      %v745 = vld [vmem:[%s3 + $0x24] sm:$0xf]
      %v746 = vld [vmem:[%s3 + $0x28] sm:$0xf]
      %v747 = vld [vmem:[%s3 + $0x2c] sm:$0xf]
      %v748 = vld [vmem:[%s3 + $0x30] sm:$0xf]
      %v749 = vld [vmem:[%s3 + $0x34] sm:$0xf]
      %v750 = vld [vmem:[%s3 + $0x38] sm:$0xf]
      %v751 = vld [vmem:[%s3 + $0x3c] sm:$0xf]
      %v752 = vld [vmem:[%s3 + $0x40] sm:$0xf]
      %v753 = vld [vmem:[%s3 + $0x44] sm:$0xf]
      %v754 = vld [vmem:[%s3 + $0x48] sm:$0xf]
      %v755 = vld [vmem:[%s3 + $0x4c] sm:$0xf]
      %v756 = vld [vmem:[%s3 + $0x50] sm:$0xf]
      %v757 = vld [vmem:[%s3 + $0x54] sm:$0xf]
      %v758 = vld [vmem:[%s3 + $0x58] sm:$0xf]
      %v759 = vld [vmem:[%s3 + $0x5c] sm:$0xf]
      %v760 = vld [vmem:[%s3 + $0x60] sm:$0xf]
      %v761 = vld [vmem:[%s3 + $0x64] sm:$0xf]
      %v762 = vld [vmem:[%s3 + $0x68] sm:$0xf]
      %v763 = vld [vmem:[%s3 + $0x6c] sm:$0xf]
      %v764 = vld [vmem:[%s3 + $0x70] sm:$0xf]
      %v765 = vld [vmem:[%s3 + $0x74] sm:$0xf]
      %v766 = vld [vmem:[%s3 + $0x78] sm:$0xf]
      %v767 = vld [vmem:[%s3 + $0x7c] sm:$0xf]
      %v768 = vld [vmem:[%s3 + $0x80] sm:$0xf]
      %v769 = vld [vmem:[%s3 + $0x84] sm:$0xf]
      %v770 = vld [vmem:[%s3 + $0x88] sm:$0xf]
      %v771 = vld [vmem:[%s3 + $0x8c] sm:$0xf]
      %v788 = vunpack.c.l.b16 %v720
      %v789 = vunpack.c.h.b16 %v720
      %v790 = vunpack.c.l.b16 %v721
      %v791 = vunpack.c.l.b16 %v722
      %v792 = vunpack.c.h.b16 %v722
      %v793 = vunpack.c.l.b16 %v723
      %v794 = vunpack.c.l.b16 %v724
      %v795 = vunpack.c.h.b16 %v724
      %v796 = vunpack.c.l.b16 %v725
      %v797 = vunpack.c.l.b16 %v726
      %v798 = vunpack.c.h.b16 %v726
      %v799 = vunpack.c.l.b16 %v727
      %v800 = vunpack.c.l.b16 %v728
      %v801 = vunpack.c.h.b16 %v728
      %v802 = vunpack.c.l.b16 %v729
      %v803 = vunpack.c.l.b16 %v730
      %v804 = vunpack.c.h.b16 %v730
      %v805 = vunpack.c.l.b16 %v731
      %v806 = vunpack.c.l.b16 %v732
      %v807 = vunpack.c.h.b16 %v732
      %v808 = vunpack.c.l.b16 %v733
      %v809 = vunpack.c.l.b16 %v734
      %v810 = vunpack.c.h.b16 %v734
      %v811 = vunpack.c.l.b16 %v735
      %v812 = vpack.c.b16 %v791, %v788
      %v813 = vpack.c.b16 %v792, %v789
      %v814 = vpack.c.b16 %v793, %v790
      %v815 = vpack.c.b16 %v797, %v794
      %v816 = vpack.c.b16 %v798, %v795
      %v817 = vpack.c.b16 %v799, %v796
      %v818 = vpack.c.b16 %v803, %v800
      %v819 = vpack.c.b16 %v804, %v801
      %v820 = vpack.c.b16 %v805, %v802
      %v821 = vpack.c.b16 %v809, %v806
      %v822 = vpack.c.b16 %v810, %v807
      %v823 = vpack.c.b16 %v811, %v808
      %v868 = vunpack.c.l.b16 %v736
      %v869 = vunpack.c.l.b16 %v737
      %v870 = vunpack.c.l.b16 %v738
      %v871 = vunpack.c.l.b16 %v739
      %v872 = vunpack.c.l.b16 %v740
      %v873 = vunpack.c.l.b16 %v741
      %v874 = vunpack.c.l.b16 %v742
      %v875 = vunpack.c.l.b16 %v743
      %v876 = vunpack.c.l.b16 %v744
      %v877 = vunpack.c.l.b16 %v745
      %v878 = vunpack.c.l.b16 %v746
      %v879 = vunpack.c.l.b16 %v747
      %v880 = vunpack.c.l.b16 %v748
      %v881 = vunpack.c.l.b16 %v749
      %v882 = vunpack.c.l.b16 %v750
      %v883 = vunpack.c.l.b16 %v751
      %v884 = vunpack.c.l.b16 %v752
      %v885 = vunpack.c.l.b16 %v753
      %v886 = vunpack.c.l.b16 %v754
      %v887 = vunpack.c.l.b16 %v755
      %v888 = vunpack.c.l.b16 %v756
      %v889 = vunpack.c.l.b16 %v757
      %v890 = vunpack.c.l.b16 %v758
      %v891 = vunpack.c.l.b16 %v759
      %v892 = vunpack.c.l.b16 %v760
      %v893 = vunpack.c.l.b16 %v761
      %v894 = vunpack.c.l.b16 %v762
      %v895 = vunpack.c.l.b16 %v763
      %v896 = vunpack.c.l.b16 %v764
      %v897 = vunpack.c.l.b16 %v765
      %v898 = vunpack.c.l.b16 %v766
      %v899 = vunpack.c.l.b16 %v767
      %v900 = vunpack.c.l.b16 %v768
      %v901 = vunpack.c.l.b16 %v769
      %v902 = vunpack.c.l.b16 %v770
      %v903 = vunpack.c.l.b16 %v771
      %v904 = vpack.c.b16 %v869, %v868
      %v905 = vpack.c.b16 %v871, %v870
      %v906 = vpack.c.b16 %v873, %v872
      %v907 = vpack.c.b16 %v875, %v874
      %v908 = vpack.c.b16 %v877, %v876
      %v909 = vpack.c.b16 %v879, %v878
      %v910 = vpack.c.b16 %v881, %v880
      %v911 = vpack.c.b16 %v883, %v882
      %v912 = vpack.c.b16 %v885, %v884
      %v913 = vpack.c.b16 %v887, %v886
      %v914 = vpack.c.b16 %v889, %v888
      %v915 = vpack.c.b16 %v891, %v890
      %v916 = vpack.c.b16 %v893, %v892
      %v917 = vpack.c.b16 %v895, %v894
      %v918 = vpack.c.b16 %v897, %v896
      %v919 = vpack.c.b16 %v899, %v898
      %v920 = vpack.c.b16 %v901, %v900
      %v921 = vpack.c.b16 %v903, %v902
      %vm940 = vcmask 261120
      %v942 = vsel %vm940, %v814, 0
      %v945 = vsel %vm940, %v817, 0
      %v948 = vsel %vm940, %v820, 0
      %v951 = vsel %vm940, %v823, 0
      %953 = vmatpush.bf16.msra.mxu0 %v911
      %954 = vmatpush.bf16.msra.mxu0 %v910
      %955 = vmatpush.bf16.msra.mxu0 %v909
      %956 = vmatpush.bf16.msra.mxu0 %v908
      %957 = vmatpush.bf16.msra.mxu0 %v907
      %958 = vmatpush.bf16.msra.mxu0 %v906
      %959 = vmatpush.bf16.msra.mxu0 %v905
      %960 = vmatpush.bf16.msra.mxu0 %v904
      %961 = vmatmul.bf16.gmra.mxu0 %v812
      %v962 = vpop.f32.mrf.mxu0
      %v963 = vadd.f32 0.0, %v962
      %v964 = vpop.f32.mrf.mxu0
      %v965 = vadd.f32 0.0, %v964
      %966 = vmatmul.bf16.gmra.mxu0 %v815
      %v967 = vpop.f32.mrf.mxu0
      %v968 = vadd.f32 0.0, %v967
      %v969 = vpop.f32.mrf.mxu0
      %v970 = vadd.f32 0.0, %v969
      %971 = vmatmul.bf16.gmra.mxu0 %v818
      %v972 = vpop.f32.mrf.mxu0
      %v973 = vadd.f32 0.0, %v972
      %v974 = vpop.f32.mrf.mxu0
      %v975 = vadd.f32 0.0, %v974
      %976 = vmatmul.bf16.gmra.mxu0 %v821
      %v977 = vpop.f32.mrf.mxu0
      %v978 = vadd.f32 0.0, %v977
      %v979 = vpop.f32.mrf.mxu0
      %v980 = vadd.f32 0.0, %v979
      %981 = vdwg.mxu0
      %982 = vmatpush.bf16.msra.mxu0 %v919
      %983 = vmatpush.bf16.msra.mxu0 %v918
      %984 = vmatpush.bf16.msra.mxu0 %v917
      %985 = vmatpush.bf16.msra.mxu0 %v916
      %986 = vmatpush.bf16.msra.mxu0 %v915
      %987 = vmatpush.bf16.msra.mxu0 %v914
      %988 = vmatpush.bf16.msra.mxu0 %v913
      %989 = vmatpush.bf16.msra.mxu0 %v912
      %990 = vmatmul.bf16.gmra.mxu0 %v813
      %v991 = vpop.f32.mrf.mxu0
      %v992 = vadd.f32 %v963, %v991
      %v993 = vpop.f32.mrf.mxu0
      %v994 = vadd.f32 %v965, %v993
      %995 = vmatmul.bf16.gmra.mxu0 %v816
      %v996 = vpop.f32.mrf.mxu0
      %v997 = vadd.f32 %v968, %v996
      %v998 = vpop.f32.mrf.mxu0
      %v999 = vadd.f32 %v970, %v998
      %1000 = vmatmul.bf16.gmra.mxu0 %v819
      %v1001 = vpop.f32.mrf.mxu0
      %v1002 = vadd.f32 %v973, %v1001
      %v1003 = vpop.f32.mrf.mxu0
      %v1004 = vadd.f32 %v975, %v1003
      %1005 = vmatmul.bf16.gmra.mxu0 %v822
      %v1006 = vpop.f32.mrf.mxu0
      %v1007 = vadd.f32 %v978, %v1006
      %v1008 = vpop.f32.mrf.mxu0
      %v1009 = vadd.f32 %v980, %v1008
      %1010 = vdwg.mxu0
      %1011 = vmatpush.bf16.msra.mxu0 0
      %1012 = vmatpush.bf16.msra.mxu0 0
      %1013 = vmatpush.bf16.msra.mxu0 0
      %1014 = vmatpush.bf16.msra.mxu0 0
      %1015 = vmatpush.bf16.msra.mxu0 0
      %1016 = vmatpush.bf16.msra.mxu0 0
      %1017 = vmatpush.bf16.msra.mxu0 %v921
      %1018 = vmatpush.bf16.msra.mxu0 %v920
      %1019 = vmatmul.bf16.gmra.mxu0 %v942
      %v1020 = vpop.f32.mrf.mxu0
      %v1021 = vadd.f32 %v992, %v1020
      %v1022 = vpop.f32.mrf.mxu0
      %v1023 = vadd.f32 %v994, %v1022
      %1024 = vmatmul.bf16.gmra.mxu0 %v945
      %v1025 = vpop.f32.mrf.mxu0
      %v1026 = vadd.f32 %v997, %v1025
      %v1027 = vpop.f32.mrf.mxu0
      %v1028 = vadd.f32 %v999, %v1027
      %1029 = vmatmul.bf16.gmra.mxu0 %v948
      %v1030 = vpop.f32.mrf.mxu0
      %v1031 = vadd.f32 %v1002, %v1030
      %v1032 = vpop.f32.mrf.mxu0
      %v1033 = vadd.f32 %v1004, %v1032
      %1034 = vmatmul.bf16.gmra.mxu0 %v951
      %v1035 = vpop.f32.mrf.mxu0
      %v1036 = vadd.f32 %v1007, %v1035
      %v1037 = vpop.f32.mrf.mxu0
      %v1038 = vadd.f32 %v1009, %v1037
      %1039 = vdwg.mxu0
      %v1040 = vpack.c.bf16 %v1021, %v1021
      %v1041 = vpack.c.bf16 %v1023, %v1023
      %v1042 = vpack.c.bf16 %v1026, %v1026
      %v1043 = vpack.c.bf16 %v1028, %v1028
      %v1044 = vpack.c.bf16 %v1031, %v1031
      %v1045 = vpack.c.bf16 %v1033, %v1033
      %v1046 = vpack.c.bf16 %v1036, %v1036
      %v1047 = vpack.c.bf16 %v1038, %v1038
      %1048 = vst [vmem:[%s231] sm:$0xf] %v1040
      %1049 = vst [vmem:[%s231 + $0x4] sm:$0xf] %v1041
      %1050 = vst [vmem:[%s231 + $0x8] sm:$0xf] %v1042
      %1051 = vst [vmem:[%s231 + $0xc] sm:$0xf] %v1043
      %1052 = vst [vmem:[%s231 + $0x10] sm:$0xf] %v1044
      %1053 = vst [vmem:[%s231 + $0x14] sm:$0xf] %v1045
      %1054 = vst [vmem:[%s231 + $0x18] sm:$0xf] %v1046
      %1055 = vst [vmem:[%s231 + $0x1c] sm:$0xf] %v1047
      %v1056 = vadd.f32 %v1021, %v1023
      %v1057 = vadd.f32 %v1056, %v1026
      %v1058 = vadd.f32 %v1057, %v1028
      %v1059 = vadd.f32 %v1058, %v1031
      %v1060 = vadd.f32 %v1059, %v1033
      %v1061 = vadd.f32 %v1060, %v1036
      %v1062 = vadd.f32 %v1061, %v1038
      %v1063 = vrot.slane %v1062, 4
      %v1064 = vadd.f32 %v1062, %v1063
      %v1065 = vrot.slane %v1064, 2
      %v1066 = vadd.f32 %v1064, %v1065
      %v1067 = vrot.slane %v1066, 1
      %v1068 = vadd.f32 %v1066, %v1067
      %1069 = vst [vmem:[%s235] sm:$0x1] %v1068
      %v1070 = vmul.f32 %v1021, %v1021
      %v1071 = vmul.f32 %v1023, %v1023
      %v1072 = vmul.f32 %v1026, %v1026
      %v1073 = vmul.f32 %v1028, %v1028
      %v1074 = vmul.f32 %v1031, %v1031
      %v1075 = vmul.f32 %v1033, %v1033
      %v1076 = vmul.f32 %v1036, %v1036
      %v1077 = vmul.f32 %v1038, %v1038
      %v1078 = vadd.f32 %v1070, %v1071
      %v1079 = vadd.f32 %v1078, %v1072
      %v1080 = vadd.f32 %v1079, %v1073
      %v1081 = vadd.f32 %v1080, %v1074
      %v1082 = vadd.f32 %v1081, %v1075
      %v1083 = vadd.f32 %v1082, %v1076
      %v1084 = vadd.f32 %v1083, %v1077
      %v1085 = vrot.slane %v1084, 4
      %v1086 = vadd.f32 %v1084, %v1085
      %v1087 = vrot.slane %v1086, 2
      %v1088 = vadd.f32 %v1086, %v1087
      %v1089 = vrot.slane %v1088, 1
      %v1090 = vadd.f32 %v1088, %v1089
      %1091 = vst [vmem:[%s235 + $0x1] sm:$0x1] %v1090
      %p1092 = scmp.lt.s32.totalorder %s17, 1
      %s1093 = scalar_select %p1092, %s17, 1
      %s1094 = smul.addr %s1093, 8
      %s1095 = smul.addr %s1094, 4
      %s1096 = scalar_lea.vmem %s4, %s1095
      %p1097 = scmp.lt.s32.totalorder %s17, 1
      %s1098 = scalar_select %p1097, %s17, 1
      %s1099 = smul.addr %s1098, 2
      %s1100 = scalar_lea.vmem %s5, %s1099
      // Predicated region
      $region37: #{generator_forward.6} parent=35 // pred_check
        %p1101 = pneg %p124
      $region38: #{generator_forward.6} parent=35 // pred_check_branch
        %1103 = sbr.rel (%p1101) target = $region40
      $region39: #{generator_forward.6} parent=35 // pred_region
        _
      $region40: #{generator_forward.6} parent=35 // pred_fallthru
        _
      // Predicated region
      $region41: #{generator_forward.6} parent=35 // pred_check
        %p1104 = pneg %p150
      $region42: #{generator_forward.6} parent=35 // pred_check_branch
        %1106 = sbr.rel (%p1104) target = $region44
      $region43: #{generator_forward.6} parent=35 // pred_region
        _
      $region44: #{generator_forward.6} parent=35 // pred_fallthru
        _
    $region36: #{generator_forward.6} parent=5 // pred_fallthru
      _
    %p1107 = scmp.le.s32.totalorder 2, %s12
    // Predicated region
    $region45: #{generator_forward.6} parent=5 // pred_check
      %p1108 = pneg %p1107
    $region46: #{generator_forward.6} parent=5 // pred_check_branch
      %1110 = sbr.rel (%p1108) target = $region48
    $region47: #{generator_forward.6} parent=5 // pred_region
      %s1111 = ssub.s32 %s12, 2
      // Predicated region
      $region49: #{generator_forward.6} parent=47 // pred_check
        %p1112 = pneg %p130
      $region50: #{generator_forward.6} parent=47 // pred_check_branch
        %1114 = sbr.rel (%p1112) target = $region52
      $region51: #{generator_forward.6} parent=47 // pred_region
        %p1115 = scmp.lt.s32.totalorder %s18, 1
        %s1116 = scalar_select %p1115, %s18, 1
        %s1117 = smul.addr %s1116, 8
        %s1118 = smul.addr %s1117, 4
        %s1119 = scalar_lea.vmem %s4, %s1118
      $region52: #{generator_forward.6} parent=47 // pred_fallthru
        _
      // Predicated region
      $region53: #{generator_forward.6} parent=47 // pred_check
        %p1120 = pneg %p156
      $region54: #{generator_forward.6} parent=47 // pred_check_branch
        %1122 = sbr.rel (%p1120) target = $region56
      $region55: #{generator_forward.6} parent=47 // pred_region
        %p1123 = scmp.lt.s32.totalorder %s18, 1
        %s1124 = scalar_select %p1123, %s18, 1
        %s1125 = smul.addr %s1124, 2
        %s1126 = scalar_lea.vmem %s5, %s1125
      $region56: #{generator_forward.6} parent=47 // pred_fallthru
        _
    $region48: #{generator_forward.6} parent=5 // pred_fallthru
      _
  $region6: #{generator_forward.6} parent=0 // loop_footer
    %s16 = sadd.s32 1, %s12
  $region7: #{generator_forward.6} parent=0 // loop_footer_branch
    %11 = sbr.rel target = $region3
  $region8: #{generator_forward.6} parent=0 // loop_exit
    _

// kernel: generator_forward.7
$region0: #{generator_forward.7}
  #allocation0 [shape = 'u32[]', space=smem, size = 0x4, offset = 0x4, fixed_abs, tag = 'smem constant byte address 0x4 - core index']
  #allocation1 [shape = 'u32[72,128]{1,0:T(1,128)}', space=vmem, size = 0x9000, scoped, tag = 'internal scratch']
  #allocation2 [shape = 'bf16[256,144]{1,0:T(8,128)(2,1)}', space=vmem, size = 0x20000, scoped, tag = 'scratch operand']
  %s0 = inlined_call_operand.vmem [shape: bf16[2,16,16,16], index: 0, kind: input, shape index: {}]
  %s1 = inlined_call_operand.vmem [shape: f32[1,16], index: 1, kind: input, shape index: {}]
  %s2 = inlined_call_operand.vmem [shape: f32[1,16], index: 2, kind: input, shape index: {}]
  %s3 = inlined_call_operand.vmem [shape: bf16[144,128], index: 3, kind: input, shape index: {}]
  %s4 = inlined_call_operand.vmem [shape: f32[1,128], index: 4, kind: input, shape index: {}]
  %s5 = inlined_call_operand.vmem [shape: f32[2,256,128], index: 5, kind: output, shape index: {0}]
  %s6 = inlined_call_operand.hbm [shape: f32[2,2,128], index: 6, kind: output, shape index: {1}]
  %7 = xla_tuple %s5, %s6
  %s8 = sld [smem:[#allocation0]]
  $region61: #{generator_forward.7} parent=0
    _
  %s10 = ssub.s32 1, %s8
  %s11 = scalar_select 0, %s10, %s8
  $region1: #{generator_forward.7} parent=0
    #allocation3 [shape = 'u8[2048]{0}', space=vmem, size = 0x800, scoped, tag = 'output window, operand 1']
    #allocation4 [shape = 's32[2]{0}', space=sflag, size = 0x8, scoped, tag = 'scoped memory for generator_forward.7']
    %12 = vsyncpa [#allocation4], 0
    %s13 = scalar_lea.sflag [#allocation4], 1
    %14 = vsyncpa %s13, 0
    loop: start=0, step=1, limit=4
    $region2: #{generator_forward.7} parent=1 // loop_pre_header
      _
    $region3: #{generator_forward.7} parent=1 // loop_header
      %s16 = sphi 0, %s20
      %p17 = scmp.ge.s32.totalorder %s16, 4
      %s26 = sphi 0, %s28
      %s29 = sphi 0, %s26
      %s30 = sphi 0, %s29
      %s46 = sphi 0, %s30
      %s50 = sphi 0, %s50
      %s52 = sphi 0, %s50
      %s53 = sphi 0, %s52
      %s67 = sphi 0, %s53
      %s71 = sphi 0, %s71
      %s73 = sphi 0, %s71
      %s74 = sphi 0, %s73
      %s88 = sphi 0, %s74
      %s92 = sphi 0, %s92
      %s94 = sphi 0, %s92
      %s95 = sphi 0, %s94
      %s109 = sphi 0, %s95
      %s113 = sphi 0, %s113
      %s115 = sphi 0, %s113
      %s116 = sphi 0, %s115
      %s130 = sphi 0, %s116
      %s136 = sphi 0, %s138
      %s139 = sphi 0, %s136
      %s140 = sphi 0, %s139
      %s156 = sphi 0, %s140
      %s162 = sphi 0, %s164
      %s165 = sphi 0, %s162
      %s166 = sphi 0, %s165
      %s182 = sphi 0, %s166
    $region4: #{generator_forward.7} parent=1 // loop_header_branch
      %19 = sbr.rel (%p17) target = $region8
    $region5: #{generator_forward.7} parent=1 // loop_body
      %s21 = ssub.s32 %s16, 1
      %s22 = ssub.s32 %s16, 2
      %s23 = sadd.s32 %s16, 1
      %s24 = ssub.s32 %s16, %s23
      %p25 = scmp.eq.s32.totalorder %s24, 0
      %s27 = sadd.s32 %s26, 1
      %s28 = scalar_select %p25, %s26, %s27
      %p31 = pneg %p25
      %p32 = scmp.eq.s32.totalorder %s16, 1
      %p33 = por %p31, %p32
      %p34 = scmp.ne.s32.totalorder %s26, %s29
      %p35 = scmp.eq.s32.totalorder %s16, 0
      %p36 = por %p34, %p35
      %p37 = scmp.ne.s32.totalorder %s26, %s29
      %p38 = scmp.eq.s32.totalorder %s21, 1
      %p39 = por %p37, %p38
      %p40 = scmp.ne.s32.totalorder %s29, %s30
      %p41 = scmp.eq.s32.totalorder %s21, 0
      %p42 = por %p40, %p41
      %p43 = scmp.ne.s32.totalorder %s29, %s30
      %p44 = scmp.eq.s32.totalorder %s22, 1
      %p45 = por %p43, %p44
      %p47 = scmp.ne.s32.totalorder %s30, %s46
      %p48 = scmp.eq.s32.totalorder %s22, 0
      %p49 = por %p47, %p48
      %s51 = sadd.s32 %s50, 1
      %p54 = scmp.eq.s32.totalorder %s16, 1
      %p55 = scmp.ne.s32.totalorder %s50, %s52
      %p56 = scmp.eq.s32.totalorder %s16, 0
      %p57 = por %p55, %p56
      %p58 = scmp.ne.s32.totalorder %s50, %s52
      %p59 = scmp.eq.s32.totalorder %s21, 1
      %p60 = por %p58, %p59
      %p61 = scmp.ne.s32.totalorder %s52, %s53
      %p62 = scmp.eq.s32.totalorder %s21, 0
      %p63 = por %p61, %p62
      %p64 = scmp.ne.s32.totalorder %s52, %s53
      %p65 = scmp.eq.s32.totalorder %s22, 1
      %p66 = por %p64, %p65
      %p68 = scmp.ne.s32.totalorder %s53, %s67
      %p69 = scmp.eq.s32.totalorder %s22, 0
      %p70 = por %p68, %p69
      %s72 = sadd.s32 %s71, 1
      %p75 = scmp.eq.s32.totalorder %s16, 1
      %p76 = scmp.ne.s32.totalorder %s71, %s73
      %p77 = scmp.eq.s32.totalorder %s16, 0
      %p78 = por %p76, %p77
      %p79 = scmp.ne.s32.totalorder %s71, %s73
      %p80 = scmp.eq.s32.totalorder %s21, 1
      %p81 = por %p79, %p80
      %p82 = scmp.ne.s32.totalorder %s73, %s74
      %p83 = scmp.eq.s32.totalorder %s21, 0
      %p84 = por %p82, %p83
      %p85 = scmp.ne.s32.totalorder %s73, %s74
      %p86 = scmp.eq.s32.totalorder %s22, 1
      %p87 = por %p85, %p86
      %p89 = scmp.ne.s32.totalorder %s74, %s88
      %p90 = scmp.eq.s32.totalorder %s22, 0
      %p91 = por %p89, %p90
      %s93 = sadd.s32 %s92, 1
      %p96 = scmp.eq.s32.totalorder %s16, 1
      %p97 = scmp.ne.s32.totalorder %s92, %s94
      %p98 = scmp.eq.s32.totalorder %s16, 0
      %p99 = por %p97, %p98
      %p100 = scmp.ne.s32.totalorder %s92, %s94
      %p101 = scmp.eq.s32.totalorder %s21, 1
      %p102 = por %p100, %p101
      %p103 = scmp.ne.s32.totalorder %s94, %s95
      %p104 = scmp.eq.s32.totalorder %s21, 0
      %p105 = por %p103, %p104
      %p106 = scmp.ne.s32.totalorder %s94, %s95
      %p107 = scmp.eq.s32.totalorder %s22, 1
      %p108 = por %p106, %p107
      %p110 = scmp.ne.s32.totalorder %s95, %s109
      %p111 = scmp.eq.s32.totalorder %s22, 0
      %p112 = por %p110, %p111
      %s114 = sadd.s32 %s113, 1
      %p117 = scmp.eq.s32.totalorder %s16, 1
      %p118 = scmp.ne.s32.totalorder %s113, %s115
      %p119 = scmp.eq.s32.totalorder %s16, 0
      %p120 = por %p118, %p119
      %p121 = scmp.ne.s32.totalorder %s113, %s115
      %p122 = scmp.eq.s32.totalorder %s21, 1
      %p123 = por %p121, %p122
      %p124 = scmp.ne.s32.totalorder %s115, %s116
      %p125 = scmp.eq.s32.totalorder %s21, 0
      %p126 = por %p124, %p125
      %p127 = scmp.ne.s32.totalorder %s115, %s116
      %p128 = scmp.eq.s32.totalorder %s22, 1
      %p129 = por %p127, %p128
      %p131 = scmp.ne.s32.totalorder %s116, %s130
      %p132 = scmp.eq.s32.totalorder %s22, 0
      %p133 = por %p131, %p132
      %s134 = ssub.s32 %s16, %s23
      %p135 = scmp.eq.s32.totalorder %s134, 0
      %s137 = sadd.s32 %s136, 1
      %s138 = scalar_select %p135, %s136, %s137
      %p141 = pneg %p135
      %p142 = scmp.eq.s32.totalorder %s16, 1
      %p143 = por %p141, %p142
      %p144 = scmp.ne.s32.totalorder %s136, %s139
      %p145 = scmp.eq.s32.totalorder %s16, 0
      %p146 = por %p144, %p145
      %p147 = scmp.ne.s32.totalorder %s136, %s139
      %p148 = scmp.eq.s32.totalorder %s21, 1
      %p149 = por %p147, %p148
      %p150 = scmp.ne.s32.totalorder %s139, %s140
      %p151 = scmp.eq.s32.totalorder %s21, 0
      %p152 = por %p150, %p151
      %p153 = scmp.ne.s32.totalorder %s139, %s140
      %p154 = scmp.eq.s32.totalorder %s22, 1
      %p155 = por %p153, %p154
      %p157 = scmp.ne.s32.totalorder %s140, %s156
      %p158 = scmp.eq.s32.totalorder %s22, 0
      %p159 = por %p157, %p158
      %s160 = ssub.s32 %s16, %s23
      %p161 = scmp.eq.s32.totalorder %s160, 0
      %s163 = sadd.s32 %s162, 1
      %s164 = scalar_select %p161, %s162, %s163
      %p167 = pneg %p161
      %p168 = scmp.eq.s32.totalorder %s16, 1
      %p169 = por %p167, %p168
      %p170 = scmp.ne.s32.totalorder %s162, %s165
      %p171 = scmp.eq.s32.totalorder %s16, 0
      %p172 = por %p170, %p171
      %p173 = scmp.ne.s32.totalorder %s162, %s165
      %p174 = scmp.eq.s32.totalorder %s21, 1
      %p175 = por %p173, %p174
      %p176 = scmp.ne.s32.totalorder %s165, %s166
      %p177 = scmp.eq.s32.totalorder %s21, 0
      %p178 = por %p176, %p177
      %p179 = scmp.ne.s32.totalorder %s165, %s166
      %p180 = scmp.eq.s32.totalorder %s22, 1
      %p181 = por %p179, %p180
      %p183 = scmp.ne.s32.totalorder %s166, %s182
      %p184 = scmp.eq.s32.totalorder %s22, 0
      %p185 = por %p183, %p184
      %p186 = scmp.le.s32.totalorder 1, %s16
      %p187 = scmp.lt.s32.totalorder %s16, 3
      %p188 = pnand %p186, %p187
      %p189 = pneg %p188
      // Predicated region
      $region9: #{generator_forward.7} parent=5 // pred_check
        _
      $region10: #{generator_forward.7} parent=5 // pred_check_branch
        %191 = sbr.rel (%p188) target = $region12
      $region11: #{generator_forward.7} parent=5 // pred_region
        %s192 = ssub.s32 %s16, 1
        // Predicated region
        $region13: #{generator_forward.7} parent=11 // pred_check
          %p193 = pneg %p63
        $region14: #{generator_forward.7} parent=11 // pred_check_branch
          %195 = sbr.rel (%p193) target = $region16
        $region15: #{generator_forward.7} parent=11 // pred_region
          _
        $region16: #{generator_forward.7} parent=11 // pred_fallthru
          _
        // Predicated region
        $region17: #{generator_forward.7} parent=11 // pred_check
          %p196 = pneg %p84
        $region18: #{generator_forward.7} parent=11 // pred_check_branch
          %198 = sbr.rel (%p196) target = $region20
        $region19: #{generator_forward.7} parent=11 // pred_region
          _
        $region20: #{generator_forward.7} parent=11 // pred_fallthru
          _
        // Predicated region
        $region21: #{generator_forward.7} parent=11 // pred_check
          %p199 = pneg %p105
        $region22: #{generator_forward.7} parent=11 // pred_check_branch
          %201 = sbr.rel (%p199) target = $region24
        $region23: #{generator_forward.7} parent=11 // pred_region
          _
        $region24: #{generator_forward.7} parent=11 // pred_fallthru
          _
        // Predicated region
        $region25: #{generator_forward.7} parent=11 // pred_check
          %p202 = pneg %p126
        $region26: #{generator_forward.7} parent=11 // pred_check_branch
          %204 = sbr.rel (%p202) target = $region28
        $region27: #{generator_forward.7} parent=11 // pred_region
          _
        $region28: #{generator_forward.7} parent=11 // pred_fallthru
          _
      $region12: #{generator_forward.7} parent=5 // pred_fallthru
        _
      %p205 = scmp.lt.s32.totalorder %s16, 2
      // Predicated region
      $region29: #{generator_forward.7} parent=5 // pred_check
        %p206 = pneg %p205
      $region30: #{generator_forward.7} parent=5 // pred_check_branch
        %208 = sbr.rel (%p206) target = $region32
      $region31: #{generator_forward.7} parent=5 // pred_region
        // Predicated region
        $region33: #{generator_forward.7} parent=31 // pred_check
          %p209 = pneg %p36
        $region34: #{generator_forward.7} parent=31 // pred_check_branch
          %211 = sbr.rel (%p209) target = $region36
        $region35: #{generator_forward.7} parent=31 // pred_region
          %p212 = scmp.lt.s32.totalorder %s16, 1
          %s213 = scalar_select %p212, %s16, 1
          %s214 = smul.addr %s213, 32
          %s215 = smul.addr %s214, 4
          %s216 = scalar_lea.vmem %s0, %s215
        $region36: #{generator_forward.7} parent=31 // pred_fallthru
          _
      $region32: #{generator_forward.7} parent=5 // pred_fallthru
        _
      %p217 = scmp.le.s32.totalorder 1, %s16
      %p218 = scmp.lt.s32.totalorder %s16, 3
      %p219 = pnand %p217, %p218
      %p220 = pneg %p219
      // Predicated region
      $region37: #{generator_forward.7} parent=5 // pred_check
        _
      $region38: #{generator_forward.7} parent=5 // pred_check_branch
        %222 = sbr.rel (%p219) target = $region40
      $region39: #{generator_forward.7} parent=5 // pred_region
        %s223 = ssub.s32 %s16, 1
        %p224 = scmp.lt.s32.totalorder %s21, 1
        %s225 = scalar_select %p224, %s21, 1
        %s226 = smul.addr %s225, 32
        %s227 = smul.addr %s226, 4
        %s228 = scalar_lea.vmem %s0, %s227
        %p229 = pneg %p42
        %p230 = pneg %p39
        %p231 = pneg %p63
        %p232 = pneg %p60
        %p233 = pneg %p84
        %p234 = pneg %p81
        %p235 = pneg %p105
        %p236 = pneg %p102
        %p237 = pneg %p126
        %p238 = pneg %p123
        %p239 = pneg %p152
        %p240 = pneg %p149
        %p241 = scmp.lt.s32.totalorder %s21, 1
        %s242 = scalar_select %p241, %s21, 1
        %s243 = smul.addr %s242, 32
        %s244 = smul.addr %s243, 8
        %s245 = scalar_lea.vmem %s5, %s244
        %p246 = pneg %p178
        %p247 = pneg %p175
        %s248 = sand.u32 %s165, 1
        %s249 = scalar_lea.sflag [#allocation4], %s248
        %s250 = sand.u32 %s165, 1
        %s251 = smul.addr %s250, 2
        %s252 = scalar_lea.vmem [#allocation3], %s251
        %p253 = scmp.lt.s32.totalorder %s21, 1
        %s254 = scalar_select %p253, %s21, 1
        %s255 = smul.addr %s254, 32
        %s256 = smul.addr %s255, 4
        %s257 = scalar_lea.vmem %s0, %s256
        %p258 = scmp.lt.s32.totalorder %s21, 1
        %s259 = scalar_select %p258, %s21, 1
        %s260 = smul.addr %s259, 32
        %s261 = smul.addr %s260, 8
        %s262 = scalar_lea.vmem %s5, %s261
        %v264 = vld [vmem:[%s257] sm:$0xf]
        %v265 = vld [vmem:[%s257 + $0x4] sm:$0xf]
        %v266 = vld [vmem:[%s257 + $0x8] sm:$0xf]
        %v267 = vld [vmem:[%s257 + $0xc] sm:$0xf]
        %v268 = vld [vmem:[%s257 + $0x10] sm:$0xf]
        %v269 = vld [vmem:[%s257 + $0x14] sm:$0xf]
        %v270 = vld [vmem:[%s257 + $0x18] sm:$0xf]
        %v271 = vld [vmem:[%s257 + $0x1c] sm:$0xf]
        %v272 = vld [vmem:[%s257 + $0x20] sm:$0xf]
        %v273 = vld [vmem:[%s257 + $0x24] sm:$0xf]
        %v274 = vld [vmem:[%s257 + $0x28] sm:$0xf]
        %v275 = vld [vmem:[%s257 + $0x2c] sm:$0xf]
        %v276 = vld [vmem:[%s257 + $0x30] sm:$0xf]
        %v277 = vld [vmem:[%s257 + $0x34] sm:$0xf]
        %v278 = vld [vmem:[%s257 + $0x38] sm:$0xf]
        %v279 = vld [vmem:[%s257 + $0x3c] sm:$0xf]
        %v280 = vld [vmem:[%s257 + $0x40] sm:$0xf]
        %v281 = vld [vmem:[%s257 + $0x44] sm:$0xf]
        %v282 = vld [vmem:[%s257 + $0x48] sm:$0xf]
        %v283 = vld [vmem:[%s257 + $0x4c] sm:$0xf]
        %v284 = vld [vmem:[%s257 + $0x50] sm:$0xf]
        %v285 = vld [vmem:[%s257 + $0x54] sm:$0xf]
        %v286 = vld [vmem:[%s257 + $0x58] sm:$0xf]
        %v287 = vld [vmem:[%s257 + $0x5c] sm:$0xf]
        %v288 = vld [vmem:[%s257 + $0x60] sm:$0xf]
        %v289 = vld [vmem:[%s257 + $0x64] sm:$0xf]
        %v290 = vld [vmem:[%s257 + $0x68] sm:$0xf]
        %v291 = vld [vmem:[%s257 + $0x6c] sm:$0xf]
        %v292 = vld [vmem:[%s257 + $0x70] sm:$0xf]
        %v293 = vld [vmem:[%s257 + $0x74] sm:$0xf]
        %v294 = vld [vmem:[%s257 + $0x78] sm:$0xf]
        %v295 = vld [vmem:[%s257 + $0x7c] sm:$0xf]
        %v296 = vunpack.c.l.bf16 %v264
        %v297 = vunpack.c.l.bf16 %v265
        %v298 = vunpack.c.l.bf16 %v266
        %v299 = vunpack.c.l.bf16 %v267
        %v300 = vunpack.c.l.bf16 %v268
        %v301 = vunpack.c.l.bf16 %v269
        %v302 = vunpack.c.l.bf16 %v270
        %v303 = vunpack.c.l.bf16 %v271
        %v304 = vunpack.c.l.bf16 %v272
        %v305 = vunpack.c.l.bf16 %v273
        %v306 = vunpack.c.l.bf16 %v274
        %v307 = vunpack.c.l.bf16 %v275
        %v308 = vunpack.c.l.bf16 %v276
        %v309 = vunpack.c.l.bf16 %v277
        %v310 = vunpack.c.l.bf16 %v278
        %v311 = vunpack.c.l.bf16 %v279
        %v312 = vunpack.c.l.bf16 %v280
        %v313 = vunpack.c.l.bf16 %v281
        %v314 = vunpack.c.l.bf16 %v282
        %v315 = vunpack.c.l.bf16 %v283
        %v316 = vunpack.c.l.bf16 %v284
        %v317 = vunpack.c.l.bf16 %v285
        %v318 = vunpack.c.l.bf16 %v286
        %v319 = vunpack.c.l.bf16 %v287
        %v320 = vunpack.c.l.bf16 %v288
        %v321 = vunpack.c.l.bf16 %v289
        %v322 = vunpack.c.l.bf16 %v290
        %v323 = vunpack.c.l.bf16 %v291
        %v324 = vunpack.c.l.bf16 %v292
        %v325 = vunpack.c.l.bf16 %v293
        %v326 = vunpack.c.l.bf16 %v294
        %v327 = vunpack.c.l.bf16 %v295
        %v328 = vld [vmem:[%s1] sm:$0x1]
        %v330 = vperm.slane %v328, 0
        %v332 = vmul.f32 %v296, %v330
        %v333 = vmul.f32 %v297, %v330
        %v334 = vmul.f32 %v298, %v330
        %v335 = vmul.f32 %v299, %v330
        %v336 = vmul.f32 %v300, %v330
        %v337 = vmul.f32 %v301, %v330
        %v338 = vmul.f32 %v302, %v330
        %v339 = vmul.f32 %v303, %v330
        %v340 = vmul.f32 %v304, %v330
        %v341 = vmul.f32 %v305, %v330
        %v342 = vmul.f32 %v306, %v330
        %v343 = vmul.f32 %v307, %v330
        %v344 = vmul.f32 %v308, %v330
        %v345 = vmul.f32 %v309, %v330
        %v346 = vmul.f32 %v310, %v330
        %v347 = vmul.f32 %v311, %v330
        %v348 = vmul.f32 %v312, %v330
        %v349 = vmul.f32 %v313, %v330
        %v350 = vmul.f32 %v314, %v330
        %v351 = vmul.f32 %v315, %v330
        %v352 = vmul.f32 %v316, %v330
        %v353 = vmul.f32 %v317, %v330
        %v354 = vmul.f32 %v318, %v330
        %v355 = vmul.f32 %v319, %v330
        %v356 = vmul.f32 %v320, %v330
        %v357 = vmul.f32 %v321, %v330
        %v358 = vmul.f32 %v322, %v330
        %v359 = vmul.f32 %v323, %v330
        %v360 = vmul.f32 %v324, %v330
        %v361 = vmul.f32 %v325, %v330
        %v362 = vmul.f32 %v326, %v330
        %v363 = vmul.f32 %v327, %v330
        %v364 = vld [vmem:[%s2] sm:$0x1]
        %v366 = vperm.slane %v364, 0
        %v368 = vadd.f32 %v332, %v366
        %v369 = vadd.f32 %v333, %v366
        %v370 = vadd.f32 %v334, %v366
        %v371 = vadd.f32 %v335, %v366
        %v372 = vadd.f32 %v336, %v366
        %v373 = vadd.f32 %v337, %v366
        %v374 = vadd.f32 %v338, %v366
        %v375 = vadd.f32 %v339, %v366
        %v376 = vadd.f32 %v340, %v366
        %v377 = vadd.f32 %v341, %v366
        %v378 = vadd.f32 %v342, %v366
        %v379 = vadd.f32 %v343, %v366
        %v380 = vadd.f32 %v344, %v366
        %v381 = vadd.f32 %v345, %v366
        %v382 = vadd.f32 %v346, %v366
        %v383 = vadd.f32 %v347, %v366
        %v384 = vadd.f32 %v348, %v366
        %v385 = vadd.f32 %v349, %v366
        %v386 = vadd.f32 %v350, %v366
        %v387 = vadd.f32 %v351, %v366
        %v388 = vadd.f32 %v352, %v366
        %v389 = vadd.f32 %v353, %v366
        %v390 = vadd.f32 %v354, %v366
        %v391 = vadd.f32 %v355, %v366
        %v392 = vadd.f32 %v356, %v366
        %v393 = vadd.f32 %v357, %v366
        %v394 = vadd.f32 %v358, %v366
        %v395 = vadd.f32 %v359, %v366
        %v396 = vadd.f32 %v360, %v366
        %v397 = vadd.f32 %v361, %v366
        %v398 = vadd.f32 %v362, %v366
        %v399 = vadd.f32 %v363, %v366
        %v400 = vmax.f32 %v368, 0.0
        %v401 = vmax.f32 %v369, 0.0
        %v402 = vmax.f32 %v370, 0.0
        %v403 = vmax.f32 %v371, 0.0
        %v404 = vmax.f32 %v372, 0.0
        %v405 = vmax.f32 %v373, 0.0
        %v406 = vmax.f32 %v374, 0.0
        %v407 = vmax.f32 %v375, 0.0
        %v408 = vmax.f32 %v376, 0.0
        %v409 = vmax.f32 %v377, 0.0
        %v410 = vmax.f32 %v378, 0.0
        %v411 = vmax.f32 %v379, 0.0
        %v412 = vmax.f32 %v380, 0.0
        %v413 = vmax.f32 %v381, 0.0
        %v414 = vmax.f32 %v382, 0.0
        %v415 = vmax.f32 %v383, 0.0
        %v416 = vmax.f32 %v384, 0.0
        %v417 = vmax.f32 %v385, 0.0
        %v418 = vmax.f32 %v386, 0.0
        %v419 = vmax.f32 %v387, 0.0
        %v420 = vmax.f32 %v388, 0.0
        %v421 = vmax.f32 %v389, 0.0
        %v422 = vmax.f32 %v390, 0.0
        %v423 = vmax.f32 %v391, 0.0
        %v424 = vmax.f32 %v392, 0.0
        %v425 = vmax.f32 %v393, 0.0
        %v426 = vmax.f32 %v394, 0.0
        %v427 = vmax.f32 %v395, 0.0
        %v428 = vmax.f32 %v396, 0.0
        %v429 = vmax.f32 %v397, 0.0
        %v430 = vmax.f32 %v398, 0.0
        %v431 = vmax.f32 %v399, 0.0
        %v432 = vpack.c.bf16 %v400, %v400
        %v433 = vpack.c.bf16 %v401, %v401
        %v434 = vpack.c.bf16 %v402, %v402
        %v435 = vpack.c.bf16 %v403, %v403
        %v436 = vpack.c.bf16 %v404, %v404
        %v437 = vpack.c.bf16 %v405, %v405
        %v438 = vpack.c.bf16 %v406, %v406
        %v439 = vpack.c.bf16 %v407, %v407
        %v440 = vpack.c.bf16 %v408, %v408
        %v441 = vpack.c.bf16 %v409, %v409
        %v442 = vpack.c.bf16 %v410, %v410
        %v443 = vpack.c.bf16 %v411, %v411
        %v444 = vpack.c.bf16 %v412, %v412
        %v445 = vpack.c.bf16 %v413, %v413
        %v446 = vpack.c.bf16 %v414, %v414
        %v447 = vpack.c.bf16 %v415, %v415
        %v448 = vpack.c.bf16 %v416, %v416
        %v449 = vpack.c.bf16 %v417, %v417
        %v450 = vpack.c.bf16 %v418, %v418
        %v451 = vpack.c.bf16 %v419, %v419
        %v452 = vpack.c.bf16 %v420, %v420
        %v453 = vpack.c.bf16 %v421, %v421
        %v454 = vpack.c.bf16 %v422, %v422
        %v455 = vpack.c.bf16 %v423, %v423
        %v456 = vpack.c.bf16 %v424, %v424
        %v457 = vpack.c.bf16 %v425, %v425
        %v458 = vpack.c.bf16 %v426, %v426
        %v459 = vpack.c.bf16 %v427, %v427
        %v460 = vpack.c.bf16 %v428, %v428
        %v461 = vpack.c.bf16 %v429, %v429
        %v462 = vpack.c.bf16 %v430, %v430
        %v463 = vpack.c.bf16 %v431, %v431
        %vm464 = vcmask 1043456
        %vm465 = vcmask 130052
        %vm466 = vmor %vm465, %vm464
        %467 = vst.msk [vmem:[#allocation2] sm:$0xff] %vm466, 0
        %468 = vst.msk [vmem:[#allocation2 + $0x8] sm:$0xff] %vm466, 0
        %469 = vst.msk [vmem:[#allocation2 + $0x10] sm:$0xff] %vm466, 0
        %470 = vst.msk [vmem:[#allocation2 + $0x18] sm:$0xff] %vm466, 0
        %471 = vst.msk [vmem:[#allocation2 + $0x20] sm:$0xff] %vm466, 0
        %472 = vst.msk [vmem:[#allocation2 + $0x28] sm:$0xff] %vm466, 0
        %473 = vst.msk [vmem:[#allocation2 + $0x30] sm:$0xff] %vm466, 0
        %474 = vst.msk [vmem:[#allocation2 + $0x38] sm:$0xff] %vm466, 0
        %475 = vst.msk [vmem:[#allocation2 + $0x40] sm:$0xff] %vm466, 0
        %476 = vst.msk [vmem:[#allocation2 + $0x48] sm:$0xff] %vm466, 0
        %477 = vst.msk [vmem:[#allocation2 + $0x50] sm:$0xff] %vm466, 0
        %478 = vst.msk [vmem:[#allocation2 + $0x58] sm:$0xff] %vm466, 0
        %479 = vst.msk [vmem:[#allocation2 + $0x60] sm:$0xff] %vm466, 0
        %480 = vst.msk [vmem:[#allocation2 + $0x68] sm:$0xff] %vm466, 0
        %481 = vst.msk [vmem:[#allocation2 + $0x70] sm:$0xff] %vm466, 0
        %482 = vst.msk [vmem:[#allocation2 + $0x78] sm:$0xff] %vm466, 0
        %483 = vst.msk [vmem:[#allocation2 + $0x80] sm:$0xff] %vm466, 0
        %484 = vst.msk [vmem:[#allocation2 + $0x88] sm:$0xff] %vm466, 0
        %485 = vst.msk [vmem:[#allocation2 + $0x90] sm:$0xff] %vm466, 0
        %486 = vst.msk [vmem:[#allocation2 + $0x98] sm:$0xff] %vm466, 0
        %487 = vst.msk [vmem:[#allocation2 + $0xa0] sm:$0xff] %vm466, 0
        %488 = vst.msk [vmem:[#allocation2 + $0xa8] sm:$0xff] %vm466, 0
        %489 = vst.msk [vmem:[#allocation2 + $0xb0] sm:$0xff] %vm466, 0
        %490 = vst.msk [vmem:[#allocation2 + $0xb8] sm:$0xff] %vm466, 0
        %491 = vst.msk [vmem:[#allocation2 + $0xc0] sm:$0xff] %vm466, 0
        %492 = vst.msk [vmem:[#allocation2 + $0xc8] sm:$0xff] %vm466, 0
        %493 = vst.msk [vmem:[#allocation2 + $0xd0] sm:$0xff] %vm466, 0
        %494 = vst.msk [vmem:[#allocation2 + $0xd8] sm:$0xff] %vm466, 0
        %495 = vst.msk [vmem:[#allocation2 + $0xe0] sm:$0xff] %vm466, 0
        %496 = vst.msk [vmem:[#allocation2 + $0xe8] sm:$0xff] %vm466, 0
        %497 = vst.msk [vmem:[#allocation2 + $0xf0] sm:$0xff] %vm466, 0
        %498 = vst.msk [vmem:[#allocation2 + $0xf8] sm:$0xff] %vm466, 0
        %vm499 = vsmask.f32 256
        %vm500 = vsmask.f32 4368
        %vm501 = vmor %vm499, %vm500
        %v503 = vshrl.u32 %v432, 16
        %v505 = vrot.slane %v503, 7
        %v506 = vshll.u32 %v432, 16
        %v508 = vor.u32 %v505, %v506
        %v509 = vrot.slane %v505, 4
        %v511 = vshrl.u32 %v433, 16
        %v513 = vrot.slane %v511, 7
        %v514 = vshll.u32 %v433, 16
        %v516 = vor.u32 %v513, %v514
        %v517 = vsel %vm501, %v509, %v516
        %vm520 = vcmask 125952
        %vm521 = vsmask.f32 7938
        %vm522 = vmand %vm520, %vm521
        %v523 = vld [vmem:[#allocation2 + $0x10] sm:$0xf]
        %v524 = vsel %vm522, %v508, %v523
        %525 = vst [vmem:[#allocation2 + $0x10] sm:$0xf] %v524
        %vm526 = vcmask 125952
        %527 = vst.msk [vmem:[#allocation2 + $0x18] sm:$0xf] %vm526, %v517
        %v529 = vshrl.u32 %v434, 16
        %v531 = vrot.slane %v529, 7
        %v532 = vshll.u32 %v434, 16
        %v534 = vor.u32 %v531, %v532
        %v535 = vrot.slane %v531, 4
        %v537 = vshrl.u32 %v435, 16
        %v539 = vrot.slane %v537, 7
        %v540 = vshll.u32 %v435, 16
        %v542 = vor.u32 %v539, %v540
        %v543 = vsel %vm501, %v535, %v542
        %v546 = vld [vmem:[#allocation2 + $0x20] sm:$0xf]
        %v547 = vsel %vm522, %v534, %v546
        %548 = vst [vmem:[#allocation2 + $0x20] sm:$0xf] %v547
        %549 = vst.msk [vmem:[#allocation2 + $0x28] sm:$0xf] %vm526, %v543
        %v551 = vshrl.u32 %v436, 16
        %v553 = vrot.slane %v551, 7
        %v554 = vshll.u32 %v436, 16
        %v556 = vor.u32 %v553, %v554
        %v557 = vrot.slane %v553, 4
        %v559 = vshrl.u32 %v437, 16
        %v561 = vrot.slane %v559, 7
        %v562 = vshll.u32 %v437, 16
        %v564 = vor.u32 %v561, %v562
        %v565 = vsel %vm501, %v557, %v564
        %v568 = vld [vmem:[#allocation2 + $0x30] sm:$0xf]
        %v569 = vsel %vm522, %v556, %v568
        %570 = vst [vmem:[#allocation2 + $0x30] sm:$0xf] %v569
        %571 = vst.msk [vmem:[#allocation2 + $0x38] sm:$0xf] %vm526, %v565
        %v573 = vshrl.u32 %v438, 16
        %v575 = vrot.slane %v573, 7
        %v576 = vshll.u32 %v438, 16
        %v578 = vor.u32 %v575, %v576
        %v579 = vrot.slane %v575, 4
        %v581 = vshrl.u32 %v439, 16
        %v583 = vrot.slane %v581, 7
        %v584 = vshll.u32 %v439, 16
        %v586 = vor.u32 %v583, %v584
        %v587 = vsel %vm501, %v579, %v586
        %v590 = vld [vmem:[#allocation2 + $0x40] sm:$0xf]
        %v591 = vsel %vm522, %v578, %v590
        %592 = vst [vmem:[#allocation2 + $0x40] sm:$0xf] %v591
        %593 = vst.msk [vmem:[#allocation2 + $0x48] sm:$0xf] %vm526, %v587
        %v595 = vshrl.u32 %v440, 16
        %v597 = vrot.slane %v595, 7
        %v598 = vshll.u32 %v440, 16
        %v600 = vor.u32 %v597, %v598
        %v601 = vrot.slane %v597, 4
        %v603 = vshrl.u32 %v441, 16
        %v605 = vrot.slane %v603, 7
        %v606 = vshll.u32 %v441, 16
        %v608 = vor.u32 %v605, %v606
        %v609 = vsel %vm501, %v601, %v608
        %v612 = vld [vmem:[#allocation2 + $0x50] sm:$0xf]
        %v613 = vsel %vm522, %v600, %v612
        %614 = vst [vmem:[#allocation2 + $0x50] sm:$0xf] %v613
        %615 = vst.msk [vmem:[#allocation2 + $0x58] sm:$0xf] %vm526, %v609
        %v617 = vshrl.u32 %v442, 16
        %v619 = vrot.slane %v617, 7
        %v620 = vshll.u32 %v442, 16
        %v622 = vor.u32 %v619, %v620
        %v623 = vrot.slane %v619, 4
        %v625 = vshrl.u32 %v443, 16
        %v627 = vrot.slane %v625, 7
        %v628 = vshll.u32 %v443, 16
        %v630 = vor.u32 %v627, %v628
        %v631 = vsel %vm501, %v623, %v630
        %v634 = vld [vmem:[#allocation2 + $0x60] sm:$0xf]
        %v635 = vsel %vm522, %v622, %v634
        %636 = vst [vmem:[#allocation2 + $0x60] sm:$0xf] %v635
        %637 = vst.msk [vmem:[#allocation2 + $0x68] sm:$0xf] %vm526, %v631
        %v639 = vshrl.u32 %v444, 16
        %v641 = vrot.slane %v639, 7
        %v642 = vshll.u32 %v444, 16
        %v644 = vor.u32 %v641, %v642
        %v645 = vrot.slane %v641, 4
        %v647 = vshrl.u32 %v445, 16
        %v649 = vrot.slane %v647, 7
        %v650 = vshll.u32 %v445, 16
        %v652 = vor.u32 %v649, %v650
        %v653 = vsel %vm501, %v645, %v652
        %v656 = vld [vmem:[#allocation2 + $0x70] sm:$0xf]
        %v657 = vsel %vm522, %v644, %v656
        %658 = vst [vmem:[#allocation2 + $0x70] sm:$0xf] %v657
        %659 = vst.msk [vmem:[#allocation2 + $0x78] sm:$0xf] %vm526, %v653
        %v661 = vshrl.u32 %v446, 16
        %v663 = vrot.slane %v661, 7
        %v664 = vshll.u32 %v446, 16
        %v666 = vor.u32 %v663, %v664
        %v667 = vrot.slane %v663, 4
        %v669 = vshrl.u32 %v447, 16
        %v671 = vrot.slane %v669, 7
        %v672 = vshll.u32 %v447, 16
        %v674 = vor.u32 %v671, %v672
        %v675 = vsel %vm501, %v667, %v674
        %v678 = vld [vmem:[#allocation2 + $0x80] sm:$0xf]
        %v679 = vsel %vm522, %v666, %v678
        %680 = vst [vmem:[#allocation2 + $0x80] sm:$0xf] %v679
        %681 = vst.msk [vmem:[#allocation2 + $0x88] sm:$0xf] %vm526, %v675
        %v683 = vshrl.u32 %v448, 16
        %v685 = vrot.slane %v683, 7
        %v686 = vshll.u32 %v448, 16
        %v688 = vor.u32 %v685, %v686
        %v689 = vrot.slane %v685, 4
        %v691 = vshrl.u32 %v449, 16
        %v693 = vrot.slane %v691, 7
        %v694 = vshll.u32 %v449, 16
        %v696 = vor.u32 %v693, %v694
        %v697 = vsel %vm501, %v689, %v696
        %v700 = vld [vmem:[#allocation2 + $0x90] sm:$0xf]
        %v701 = vsel %vm522, %v688, %v700
        %702 = vst [vmem:[#allocation2 + $0x90] sm:$0xf] %v701
        %703 = vst.msk [vmem:[#allocation2 + $0x98] sm:$0xf] %vm526, %v697
        %v705 = vshrl.u32 %v450, 16
        %v707 = vrot.slane %v705, 7
        %v708 = vshll.u32 %v450, 16
        %v710 = vor.u32 %v707, %v708
        %v711 = vrot.slane %v707, 4
        %v713 = vshrl.u32 %v451, 16
        %v715 = vrot.slane %v713, 7
        %v716 = vshll.u32 %v451, 16
        %v718 = vor.u32 %v715, %v716
        %v719 = vsel %vm501, %v711, %v718
        %v722 = vld [vmem:[#allocation2 + $0xa0] sm:$0xf]
        %v723 = vsel %vm522, %v710, %v722
        %724 = vst [vmem:[#allocation2 + $0xa0] sm:$0xf] %v723
        %725 = vst.msk [vmem:[#allocation2 + $0xa8] sm:$0xf] %vm526, %v719
        %v727 = vshrl.u32 %v452, 16
        %v729 = vrot.slane %v727, 7
        %v730 = vshll.u32 %v452, 16
        %v732 = vor.u32 %v729, %v730
        %v733 = vrot.slane %v729, 4
        %v735 = vshrl.u32 %v453, 16
        %v737 = vrot.slane %v735, 7
        %v738 = vshll.u32 %v453, 16
        %v740 = vor.u32 %v737, %v738
        %v741 = vsel %vm501, %v733, %v740
        %v744 = vld [vmem:[#allocation2 + $0xb0] sm:$0xf]
        %v745 = vsel %vm522, %v732, %v744
        %746 = vst [vmem:[#allocation2 + $0xb0] sm:$0xf] %v745
        %747 = vst.msk [vmem:[#allocation2 + $0xb8] sm:$0xf] %vm526, %v741
        %v749 = vshrl.u32 %v454, 16
        %v751 = vrot.slane %v749, 7
        %v752 = vshll.u32 %v454, 16
        %v754 = vor.u32 %v751, %v752
        %v755 = vrot.slane %v751, 4
        %v757 = vshrl.u32 %v455, 16
        %v759 = vrot.slane %v757, 7
        %v760 = vshll.u32 %v455, 16
        %v762 = vor.u32 %v759, %v760
        %v763 = vsel %vm501, %v755, %v762
        %v766 = vld [vmem:[#allocation2 + $0xc0] sm:$0xf]
        %v767 = vsel %vm522, %v754, %v766
        %768 = vst [vmem:[#allocation2 + $0xc0] sm:$0xf] %v767
        %769 = vst.msk [vmem:[#allocation2 + $0xc8] sm:$0xf] %vm526, %v763
        %v771 = vshrl.u32 %v456, 16
        %v773 = vrot.slane %v771, 7
        %v774 = vshll.u32 %v456, 16
        %v776 = vor.u32 %v773, %v774
        %v777 = vrot.slane %v773, 4
        %v779 = vshrl.u32 %v457, 16
        %v781 = vrot.slane %v779, 7
        %v782 = vshll.u32 %v457, 16
        %v784 = vor.u32 %v781, %v782
        %v785 = vsel %vm501, %v777, %v784
        %v788 = vld [vmem:[#allocation2 + $0xd0] sm:$0xf]
        %v789 = vsel %vm522, %v776, %v788
        %790 = vst [vmem:[#allocation2 + $0xd0] sm:$0xf] %v789
        %791 = vst.msk [vmem:[#allocation2 + $0xd8] sm:$0xf] %vm526, %v785
        %v793 = vshrl.u32 %v458, 16
        %v795 = vrot.slane %v793, 7
        %v796 = vshll.u32 %v458, 16
        %v798 = vor.u32 %v795, %v796
        %v799 = vrot.slane %v795, 4
        %v801 = vshrl.u32 %v459, 16
        %v803 = vrot.slane %v801, 7
        %v804 = vshll.u32 %v459, 16
        %v806 = vor.u32 %v803, %v804
        %v807 = vsel %vm501, %v799, %v806
        %v810 = vld [vmem:[#allocation2 + $0xe0] sm:$0xf]
        %v811 = vsel %vm522, %v798, %v810
        %812 = vst [vmem:[#allocation2 + $0xe0] sm:$0xf] %v811
        %813 = vst.msk [vmem:[#allocation2 + $0xe8] sm:$0xf] %vm526, %v807
        %v815 = vshrl.u32 %v460, 16
        %v817 = vrot.slane %v815, 7
        %v818 = vshll.u32 %v460, 16
        %v820 = vor.u32 %v817, %v818
        %v821 = vrot.slane %v817, 4
        %v823 = vshrl.u32 %v461, 16
        %v825 = vrot.slane %v823, 7
        %v826 = vshll.u32 %v461, 16
        %v828 = vor.u32 %v825, %v826
        %v829 = vsel %vm501, %v821, %v828
        %v832 = vld [vmem:[#allocation2 + $0xf0] sm:$0xf]
        %v833 = vsel %vm522, %v820, %v832
        %834 = vst [vmem:[#allocation2 + $0xf0] sm:$0xf] %v833
        %835 = vst.msk [vmem:[#allocation2 + $0xf8] sm:$0xf] %vm526, %v829
        %838 = vrot.lane.b32.xlu0 %v432, 16
        %v839 = vpop.permute.xlu0 %838
        %840 = vrot.lane.b32.xlu0 %v433, 16
        %v841 = vpop.permute.xlu0 %840
        %vm844 = vcmask 257152
        %845 = vst.msk [vmem:[#allocation2 + $0x10] sm:$0xf] %vm844, %v839
        %846 = vst.msk [vmem:[#allocation2 + $0x18] sm:$0xf] %vm844, %v841
        %849 = vrot.lane.b32.xlu0 %v434, 16
        %v850 = vpop.permute.xlu0 %849
        %851 = vrot.lane.b32.xlu0 %v435, 16
        %v852 = vpop.permute.xlu0 %851
        %855 = vst.msk [vmem:[#allocation2 + $0x20] sm:$0xf] %vm844, %v850
        %856 = vst.msk [vmem:[#allocation2 + $0x28] sm:$0xf] %vm844, %v852
        %859 = vrot.lane.b32.xlu0 %v436, 16
        %v860 = vpop.permute.xlu0 %859
        %861 = vrot.lane.b32.xlu0 %v437, 16
        %v862 = vpop.permute.xlu0 %861
        %865 = vst.msk [vmem:[#allocation2 + $0x30] sm:$0xf] %vm844, %v860
        %866 = vst.msk [vmem:[#allocation2 + $0x38] sm:$0xf] %vm844, %v862
        %869 = vrot.lane.b32.xlu0 %v438, 16
        %v870 = vpop.permute.xlu0 %869
        %871 = vrot.lane.b32.xlu0 %v439, 16
        %v872 = vpop.permute.xlu0 %871
        %875 = vst.msk [vmem:[#allocation2 + $0x40] sm:$0xf] %vm844, %v870
        %876 = vst.msk [vmem:[#allocation2 + $0x48] sm:$0xf] %vm844, %v872
        %879 = vrot.lane.b32.xlu0 %v440, 16
        %v880 = vpop.permute.xlu0 %879
        %881 = vrot.lane.b32.xlu0 %v441, 16
        %v882 = vpop.permute.xlu0 %881
        %885 = vst.msk [vmem:[#allocation2 + $0x50] sm:$0xf] %vm844, %v880
        %886 = vst.msk [vmem:[#allocation2 + $0x58] sm:$0xf] %vm844, %v882
        %889 = vrot.lane.b32.xlu0 %v442, 16
        %v890 = vpop.permute.xlu0 %889
        %891 = vrot.lane.b32.xlu0 %v443, 16
        %v892 = vpop.permute.xlu0 %891
        %895 = vst.msk [vmem:[#allocation2 + $0x60] sm:$0xf] %vm844, %v890
        %896 = vst.msk [vmem:[#allocation2 + $0x68] sm:$0xf] %vm844, %v892
        %899 = vrot.lane.b32.xlu0 %v444, 16
        %v900 = vpop.permute.xlu0 %899
        %901 = vrot.lane.b32.xlu0 %v445, 16
        %v902 = vpop.permute.xlu0 %901
        %905 = vst.msk [vmem:[#allocation2 + $0x70] sm:$0xf] %vm844, %v900
        %906 = vst.msk [vmem:[#allocation2 + $0x78] sm:$0xf] %vm844, %v902
        %909 = vrot.lane.b32.xlu0 %v446, 16
        %v910 = vpop.permute.xlu0 %909
        %911 = vrot.lane.b32.xlu0 %v447, 16
        %v912 = vpop.permute.xlu0 %911
        %915 = vst.msk [vmem:[#allocation2 + $0x80] sm:$0xf] %vm844, %v910
        %916 = vst.msk [vmem:[#allocation2 + $0x88] sm:$0xf] %vm844, %v912
        %919 = vrot.lane.b32.xlu0 %v448, 16
        %v920 = vpop.permute.xlu0 %919
        %921 = vrot.lane.b32.xlu0 %v449, 16
        %v922 = vpop.permute.xlu0 %921
        %925 = vst.msk [vmem:[#allocation2 + $0x90] sm:$0xf] %vm844, %v920
        %926 = vst.msk [vmem:[#allocation2 + $0x98] sm:$0xf] %vm844, %v922
        %929 = vrot.lane.b32.xlu0 %v450, 16
        %v930 = vpop.permute.xlu0 %929
        %931 = vrot.lane.b32.xlu0 %v451, 16
        %v932 = vpop.permute.xlu0 %931
        %935 = vst.msk [vmem:[#allocation2 + $0xa0] sm:$0xf] %vm844, %v930
        %936 = vst.msk [vmem:[#allocation2 + $0xa8] sm:$0xf] %vm844, %v932
        %939 = vrot.lane.b32.xlu0 %v452, 16
        %v940 = vpop.permute.xlu0 %939
        %941 = vrot.lane.b32.xlu0 %v453, 16
        %v942 = vpop.permute.xlu0 %941
        %945 = vst.msk [vmem:[#allocation2 + $0xb0] sm:$0xf] %vm844, %v940
        %946 = vst.msk [vmem:[#allocation2 + $0xb8] sm:$0xf] %vm844, %v942
        %949 = vrot.lane.b32.xlu0 %v454, 16
        %v950 = vpop.permute.xlu0 %949
        %951 = vrot.lane.b32.xlu0 %v455, 16
        %v952 = vpop.permute.xlu0 %951
        %955 = vst.msk [vmem:[#allocation2 + $0xc0] sm:$0xf] %vm844, %v950
        %956 = vst.msk [vmem:[#allocation2 + $0xc8] sm:$0xf] %vm844, %v952
        %959 = vrot.lane.b32.xlu0 %v456, 16
        %v960 = vpop.permute.xlu0 %959
        %961 = vrot.lane.b32.xlu0 %v457, 16
        %v962 = vpop.permute.xlu0 %961
        %965 = vst.msk [vmem:[#allocation2 + $0xd0] sm:$0xf] %vm844, %v960
        %966 = vst.msk [vmem:[#allocation2 + $0xd8] sm:$0xf] %vm844, %v962
        %969 = vrot.lane.b32.xlu0 %v458, 16
        %v970 = vpop.permute.xlu0 %969
        %971 = vrot.lane.b32.xlu0 %v459, 16
        %v972 = vpop.permute.xlu0 %971
        %975 = vst.msk [vmem:[#allocation2 + $0xe0] sm:$0xf] %vm844, %v970
        %976 = vst.msk [vmem:[#allocation2 + $0xe8] sm:$0xf] %vm844, %v972
        %979 = vrot.lane.b32.xlu0 %v460, 16
        %v980 = vpop.permute.xlu0 %979
        %981 = vrot.lane.b32.xlu0 %v461, 16
        %v982 = vpop.permute.xlu0 %981
        %985 = vst.msk [vmem:[#allocation2 + $0xf0] sm:$0xf] %vm844, %v980
        %986 = vst.msk [vmem:[#allocation2 + $0xf8] sm:$0xf] %vm844, %v982
        %vm987 = vsmask.f32 3328
        %vm988 = vsmask.f32 7440
        %vm989 = vmor %vm987, %vm988
        %v990 = vrot.slane %v503, 4
        %v991 = vrot.slane %v506, 5
        %v992 = vor.u32 %v990, %v991
        %v993 = vrot.slane %v992, 4
        %v994 = vrot.slane %v514, 5
        %v995 = vsel %vm989, %v993, %v994
        %v996 = vrot.slane %v511, 4
        %v997 = vor.u32 %v996, %v994
        %v998 = vrot.slane %v997, 4
        %999 = vrot.lane.b32.xlu0 %v995, 32
        %v1000 = vpop.permute.xlu0 %999
        %1001 = vrot.lane.b32.xlu0 %v998, 32
        %v1002 = vpop.permute.xlu0 %1001
        %vm1005 = vcmask 388352
        %1006 = vst.msk [vmem:[#allocation2 + $0x10] sm:$0xf] %vm1005, %v1000
        %vm1007 = vcmask 388352
        %vm1008 = vmand %vm1007, %vm987
        %v1009 = vld [vmem:[#allocation2 + $0x18] sm:$0xf]
        %v1010 = vsel %vm1008, %v1002, %v1009
        %1011 = vst [vmem:[#allocation2 + $0x18] sm:$0xf] %v1010
        %v1012 = vrot.slane %v529, 4
        %v1013 = vrot.slane %v532, 5
        %v1014 = vor.u32 %v1012, %v1013
        %v1015 = vrot.slane %v1014, 4
        %v1016 = vrot.slane %v540, 5
        %v1017 = vsel %vm989, %v1015, %v1016
        %v1018 = vrot.slane %v537, 4
        %v1019 = vor.u32 %v1018, %v1016
        %v1020 = vrot.slane %v1019, 4
        %1021 = vrot.lane.b32.xlu0 %v1017, 32
        %v1022 = vpop.permute.xlu0 %1021
        %1023 = vrot.lane.b32.xlu0 %v1020, 32
        %v1024 = vpop.permute.xlu0 %1023
        %1027 = vst.msk [vmem:[#allocation2 + $0x20] sm:$0xf] %vm1005, %v1022
        %v1028 = vld [vmem:[#allocation2 + $0x28] sm:$0xf]
        %v1029 = vsel %vm1008, %v1024, %v1028
        %1030 = vst [vmem:[#allocation2 + $0x28] sm:$0xf] %v1029
        %v1031 = vrot.slane %v551, 4
        %v1032 = vrot.slane %v554, 5
        %v1033 = vor.u32 %v1031, %v1032
        %v1034 = vrot.slane %v1033, 4
        %v1035 = vrot.slane %v562, 5
        %v1036 = vsel %vm989, %v1034, %v1035
        %v1037 = vrot.slane %v559, 4
        %v1038 = vor.u32 %v1037, %v1035
        %v1039 = vrot.slane %v1038, 4
        %1040 = vrot.lane.b32.xlu0 %v1036, 32
        %v1041 = vpop.permute.xlu0 %1040
        %1042 = vrot.lane.b32.xlu0 %v1039, 32
        %v1043 = vpop.permute.xlu0 %1042
        %1046 = vst.msk [vmem:[#allocation2 + $0x30] sm:$0xf] %vm1005, %v1041
        %v1047 = vld [vmem:[#allocation2 + $0x38] sm:$0xf]
        %v1048 = vsel %vm1008, %v1043, %v1047
        %1049 = vst [vmem:[#allocation2 + $0x38] sm:$0xf] %v1048
        %v1050 = vrot.slane %v573, 4
        %v1051 = vrot.slane %v576, 5
        %v1052 = vor.u32 %v1050, %v1051
        %v1053 = vrot.slane %v1052, 4
        %v1054 = vrot.slane %v584, 5
        %v1055 = vsel %vm989, %v1053, %v1054
        %v1056 = vrot.slane %v581, 4
        %v1057 = vor.u32 %v1056, %v1054
        %v1058 = vrot.slane %v1057, 4
        %1059 = vrot.lane.b32.xlu0 %v1055, 32
        %v1060 = vpop.permute.xlu0 %1059
        %1061 = vrot.lane.b32.xlu0 %v1058, 32
        %v1062 = vpop.permute.xlu0 %1061
        %1065 = vst.msk [vmem:[#allocation2 + $0x40] sm:$0xf] %vm1005, %v1060
        %v1066 = vld [vmem:[#allocation2 + $0x48] sm:$0xf]
        %v1067 = vsel %vm1008, %v1062, %v1066
        %1068 = vst [vmem:[#allocation2 + $0x48] sm:$0xf] %v1067
        %v1069 = vrot.slane %v595, 4
        %v1070 = vrot.slane %v598, 5
        %v1071 = vor.u32 %v1069, %v1070
        %v1072 = vrot.slane %v1071, 4
        %v1073 = vrot.slane %v606, 5
        %v1074 = vsel %vm989, %v1072, %v1073
        %v1075 = vrot.slane %v603, 4
        %v1076 = vor.u32 %v1075, %v1073
        %v1077 = vrot.slane %v1076, 4
        %1078 = vrot.lane.b32.xlu0 %v1074, 32
        %v1079 = vpop.permute.xlu0 %1078
        %1080 = vrot.lane.b32.xlu0 %v1077, 32
        %v1081 = vpop.permute.xlu0 %1080
        %1084 = vst.msk [vmem:[#allocation2 + $0x50] sm:$0xf] %vm1005, %v1079
        %v1085 = vld [vmem:[#allocation2 + $0x58] sm:$0xf]
        %v1086 = vsel %vm1008, %v1081, %v1085
        %1087 = vst [vmem:[#allocation2 + $0x58] sm:$0xf] %v1086
        %v1088 = vrot.slane %v617, 4
        %v1089 = vrot.slane %v620, 5
        %v1090 = vor.u32 %v1088, %v1089
        %v1091 = vrot.slane %v1090, 4
        %v1092 = vrot.slane %v628, 5
        %v1093 = vsel %vm989, %v1091, %v1092
        %v1094 = vrot.slane %v625, 4
        %v1095 = vor.u32 %v1094, %v1092
        %v1096 = vrot.slane %v1095, 4
        %1097 = vrot.lane.b32.xlu0 %v1093, 32
        %v1098 = vpop.permute.xlu0 %1097
        %1099 = vrot.lane.b32.xlu0 %v1096, 32
        %v1100 = vpop.permute.xlu0 %1099
        %1103 = vst.msk [vmem:[#allocation2 + $0x60] sm:$0xf] %vm1005, %v1098
        %v1104 = vld [vmem:[#allocation2 + $0x68] sm:$0xf]
        %v1105 = vsel %vm1008, %v1100, %v1104
        %1106 = vst [vmem:[#allocation2 + $0x68] sm:$0xf] %v1105
        %v1107 = vrot.slane %v639, 4
        %v1108 = vrot.slane %v642, 5
        %v1109 = vor.u32 %v1107, %v1108
        %v1110 = vrot.slane %v1109, 4
        %v1111 = vrot.slane %v650, 5
        %v1112 = vsel %vm989, %v1110, %v1111
        %v1113 = vrot.slane %v647, 4
        %v1114 = vor.u32 %v1113, %v1111
        %v1115 = vrot.slane %v1114, 4
        %1116 = vrot.lane.b32.xlu0 %v1112, 32
        %v1117 = vpop.permute.xlu0 %1116
        %1118 = vrot.lane.b32.xlu0 %v1115, 32
        %v1119 = vpop.permute.xlu0 %1118
        %1122 = vst.msk [vmem:[#allocation2 + $0x70] sm:$0xf] %vm1005, %v1117
        %v1123 = vld [vmem:[#allocation2 + $0x78] sm:$0xf]
        %v1124 = vsel %vm1008, %v1119, %v1123
        %1125 = vst [vmem:[#allocation2 + $0x78] sm:$0xf] %v1124
        %v1126 = vrot.slane %v661, 4
        %v1127 = vrot.slane %v664, 5
        %v1128 = vor.u32 %v1126, %v1127
        %v1129 = vrot.slane %v1128, 4
        %v1130 = vrot.slane %v672, 5
        %v1131 = vsel %vm989, %v1129, %v1130
        %v1132 = vrot.slane %v669, 4
        %v1133 = vor.u32 %v1132, %v1130
        %v1134 = vrot.slane %v1133, 4
        %1135 = vrot.lane.b32.xlu0 %v1131, 32
        %v1136 = vpop.permute.xlu0 %1135
        %1137 = vrot.lane.b32.xlu0 %v1134, 32
        %v1138 = vpop.permute.xlu0 %1137
        %1141 = vst.msk [vmem:[#allocation2 + $0x80] sm:$0xf] %vm1005, %v1136
        %v1142 = vld [vmem:[#allocation2 + $0x88] sm:$0xf]
        %v1143 = vsel %vm1008, %v1138, %v1142
        %1144 = vst [vmem:[#allocation2 + $0x88] sm:$0xf] %v1143
        %v1145 = vrot.slane %v683, 4
        %v1146 = vrot.slane %v686, 5
        %v1147 = vor.u32 %v1145, %v1146
        %v1148 = vrot.slane %v1147, 4
        %v1149 = vrot.slane %v694, 5
        %v1150 = vsel %vm989, %v1148, %v1149
        %v1151 = vrot.slane %v691, 4
        %v1152 = vor.u32 %v1151, %v1149
        %v1153 = vrot.slane %v1152, 4
        %1154 = vrot.lane.b32.xlu0 %v1150, 32
        %v1155 = vpop.permute.xlu0 %1154
        %1156 = vrot.lane.b32.xlu0 %v1153, 32
        %v1157 = vpop.permute.xlu0 %1156
        %1160 = vst.msk [vmem:[#allocation2 + $0x90] sm:$0xf] %vm1005, %v1155
        %v1161 = vld [vmem:[#allocation2 + $0x98] sm:$0xf]
        %v1162 = vsel %vm1008, %v1157, %v1161
        %1163 = vst [vmem:[#allocation2 + $0x98] sm:$0xf] %v1162
        %v1164 = vrot.slane %v705, 4
        %v1165 = vrot.slane %v708, 5
        %v1166 = vor.u32 %v1164, %v1165
        %v1167 = vrot.slane %v1166, 4
        %v1168 = vrot.slane %v716, 5
        %v1169 = vsel %vm989, %v1167, %v1168
        %v1170 = vrot.slane %v713, 4
        %v1171 = vor.u32 %v1170, %v1168
        %v1172 = vrot.slane %v1171, 4
        %1173 = vrot.lane.b32.xlu0 %v1169, 32
        %v1174 = vpop.permute.xlu0 %1173
        %1175 = vrot.lane.b32.xlu0 %v1172, 32
        %v1176 = vpop.permute.xlu0 %1175
        %1179 = vst.msk [vmem:[#allocation2 + $0xa0] sm:$0xf] %vm1005, %v1174
        %v1180 = vld [vmem:[#allocation2 + $0xa8] sm:$0xf]
        %v1181 = vsel %vm1008, %v1176, %v1180
        %1182 = vst [vmem:[#allocation2 + $0xa8] sm:$0xf] %v1181
        %v1183 = vrot.slane %v727, 4
        %v1184 = vrot.slane %v730, 5
        %v1185 = vor.u32 %v1183, %v1184
        %v1186 = vrot.slane %v1185, 4
        %v1187 = vrot.slane %v738, 5
        %v1188 = vsel %vm989, %v1186, %v1187
        %v1189 = vrot.slane %v735, 4
        %v1190 = vor.u32 %v1189, %v1187
        %v1191 = vrot.slane %v1190, 4
        %1192 = vrot.lane.b32.xlu0 %v1188, 32
        %v1193 = vpop.permute.xlu0 %1192
        %1194 = vrot.lane.b32.xlu0 %v1191, 32
        %v1195 = vpop.permute.xlu0 %1194
        %1198 = vst.msk [vmem:[#allocation2 + $0xb0] sm:$0xf] %vm1005, %v1193
        %v1199 = vld [vmem:[#allocation2 + $0xb8] sm:$0xf]
        %v1200 = vsel %vm1008, %v1195, %v1199
        %1201 = vst [vmem:[#allocation2 + $0xb8] sm:$0xf] %v1200
        %v1202 = vrot.slane %v749, 4
        %v1203 = vrot.slane %v752, 5
        %v1204 = vor.u32 %v1202, %v1203
        %v1205 = vrot.slane %v1204, 4
        %v1206 = vrot.slane %v760, 5
        %v1207 = vsel %vm989, %v1205, %v1206
        %v1208 = vrot.slane %v757, 4
        %v1209 = vor.u32 %v1208, %v1206
        %v1210 = vrot.slane %v1209, 4
        %1211 = vrot.lane.b32.xlu0 %v1207, 32
        %v1212 = vpop.permute.xlu0 %1211
        %1213 = vrot.lane.b32.xlu0 %v1210, 32
        %v1214 = vpop.permute.xlu0 %1213
        %1217 = vst.msk [vmem:[#allocation2 + $0xc0] sm:$0xf] %vm1005, %v1212
        %v1218 = vld [vmem:[#allocation2 + $0xc8] sm:$0xf]
        %v1219 = vsel %vm1008, %v1214, %v1218
        %1220 = vst [vmem:[#allocation2 + $0xc8] sm:$0xf] %v1219
        %v1221 = vrot.slane %v771, 4
        %v1222 = vrot.slane %v774, 5
        %v1223 = vor.u32 %v1221, %v1222
        %v1224 = vrot.slane %v1223, 4
        %v1225 = vrot.slane %v782, 5
        %v1226 = vsel %vm989, %v1224, %v1225
        %v1227 = vrot.slane %v779, 4
        %v1228 = vor.u32 %v1227, %v1225
        %v1229 = vrot.slane %v1228, 4
        %1230 = vrot.lane.b32.xlu0 %v1226, 32
        %v1231 = vpop.permute.xlu0 %1230
        %1232 = vrot.lane.b32.xlu0 %v1229, 32
        %v1233 = vpop.permute.xlu0 %1232
        %1236 = vst.msk [vmem:[#allocation2 + $0xd0] sm:$0xf] %vm1005, %v1231
        %v1237 = vld [vmem:[#allocation2 + $0xd8] sm:$0xf]
        %v1238 = vsel %vm1008, %v1233, %v1237
        %1239 = vst [vmem:[#allocation2 + $0xd8] sm:$0xf] %v1238
        %v1240 = vrot.slane %v793, 4
        %v1241 = vrot.slane %v796, 5
        %v1242 = vor.u32 %v1240, %v1241
        %v1243 = vrot.slane %v1242, 4
        %v1244 = vrot.slane %v804, 5
        %v1245 = vsel %vm989, %v1243, %v1244
        %v1246 = vrot.slane %v801, 4
        %v1247 = vor.u32 %v1246, %v1244
        %v1248 = vrot.slane %v1247, 4
        %1249 = vrot.lane.b32.xlu0 %v1245, 32
        %v1250 = vpop.permute.xlu0 %1249
        %1251 = vrot.lane.b32.xlu0 %v1248, 32
        %v1252 = vpop.permute.xlu0 %1251
        %1255 = vst.msk [vmem:[#allocation2 + $0xe0] sm:$0xf] %vm1005, %v1250
        %v1256 = vld [vmem:[#allocation2 + $0xe8] sm:$0xf]
        %v1257 = vsel %vm1008, %v1252, %v1256
        %1258 = vst [vmem:[#allocation2 + $0xe8] sm:$0xf] %v1257
        %v1259 = vrot.slane %v815, 4
        %v1260 = vrot.slane %v818, 5
        %v1261 = vor.u32 %v1259, %v1260
        %v1262 = vrot.slane %v1261, 4
        %v1263 = vrot.slane %v826, 5
        %v1264 = vsel %vm989, %v1262, %v1263
        %v1265 = vrot.slane %v823, 4
        %v1266 = vor.u32 %v1265, %v1263
        %v1267 = vrot.slane %v1266, 4
        %1268 = vrot.lane.b32.xlu0 %v1264, 32
        %v1269 = vpop.permute.xlu0 %1268
        %1270 = vrot.lane.b32.xlu0 %v1267, 32
        %v1271 = vpop.permute.xlu0 %1270
        %1274 = vst.msk [vmem:[#allocation2 + $0xf0] sm:$0xf] %vm1005, %v1269
        %v1275 = vld [vmem:[#allocation2 + $0xf8] sm:$0xf]
        %v1276 = vsel %vm1008, %v1271, %v1275
        %1277 = vst [vmem:[#allocation2 + $0xf8] sm:$0xf] %v1276
        %1278 = vrot.lane.b32.xlu0 %v508, 48
        %v1279 = vpop.permute.xlu0 %1278
        %1280 = vrot.lane.b32.xlu0 %v517, 48
        %v1281 = vpop.permute.xlu0 %1280
        %vm1284 = vcmask 519552
        %vm1285 = vmand %vm1284, %vm521
        %v1286 = vld [vmem:[#allocation2] sm:$0xf]
        %v1287 = vsel %vm1285, %v1279, %v1286
        %1288 = vst [vmem:[#allocation2] sm:$0xf] %v1287
        %vm1289 = vcmask 519552
        %1290 = vst.msk [vmem:[#allocation2 + $0x8] sm:$0xf] %vm1289, %v1281
        %1291 = vrot.lane.b32.xlu0 %v534, 48
        %v1292 = vpop.permute.xlu0 %1291
        %1293 = vrot.lane.b32.xlu0 %v543, 48
        %v1294 = vpop.permute.xlu0 %1293
        %v1297 = vld [vmem:[#allocation2 + $0x10] sm:$0xf]
        %v1298 = vsel %vm1285, %v1292, %v1297
        %1299 = vst [vmem:[#allocation2 + $0x10] sm:$0xf] %v1298
        %1300 = vst.msk [vmem:[#allocation2 + $0x18] sm:$0xf] %vm1289, %v1294
        %1301 = vrot.lane.b32.xlu0 %v556, 48
        %v1302 = vpop.permute.xlu0 %1301
        %1303 = vrot.lane.b32.xlu0 %v565, 48
        %v1304 = vpop.permute.xlu0 %1303
        %v1307 = vld [vmem:[#allocation2 + $0x20] sm:$0xf]
        %v1308 = vsel %vm1285, %v1302, %v1307
        %1309 = vst [vmem:[#allocation2 + $0x20] sm:$0xf] %v1308
        %1310 = vst.msk [vmem:[#allocation2 + $0x28] sm:$0xf] %vm1289, %v1304
        %1311 = vrot.lane.b32.xlu0 %v578, 48
        %v1312 = vpop.permute.xlu0 %1311
        %1313 = vrot.lane.b32.xlu0 %v587, 48
        %v1314 = vpop.permute.xlu0 %1313
        %v1317 = vld [vmem:[#allocation2 + $0x30] sm:$0xf]
        %v1318 = vsel %vm1285, %v1312, %v1317
        %1319 = vst [vmem:[#allocation2 + $0x30] sm:$0xf] %v1318
        %1320 = vst.msk [vmem:[#allocation2 + $0x38] sm:$0xf] %vm1289, %v1314
        %1321 = vrot.lane.b32.xlu0 %v600, 48
        %v1322 = vpop.permute.xlu0 %1321
        %1323 = vrot.lane.b32.xlu0 %v609, 48
        %v1324 = vpop.permute.xlu0 %1323
        %v1327 = vld [vmem:[#allocation2 + $0x40] sm:$0xf]
        %v1328 = vsel %vm1285, %v1322, %v1327
        %1329 = vst [vmem:[#allocation2 + $0x40] sm:$0xf] %v1328
        %1330 = vst.msk [vmem:[#allocation2 + $0x48] sm:$0xf] %vm1289, %v1324
        %1331 = vrot.lane.b32.xlu0 %v622, 48
        %v1332 = vpop.permute.xlu0 %1331
        %1333 = vrot.lane.b32.xlu0 %v631, 48
        %v1334 = vpop.permute.xlu0 %1333
        %v1337 = vld [vmem:[#allocation2 + $0x50] sm:$0xf]
        %v1338 = vsel %vm1285, %v1332, %v1337
        %1339 = vst [vmem:[#allocation2 + $0x50] sm:$0xf] %v1338
        %1340 = vst.msk [vmem:[#allocation2 + $0x58] sm:$0xf] %vm1289, %v1334
        %1341 = vrot.lane.b32.xlu0 %v644, 48
        %v1342 = vpop.permute.xlu0 %1341
        %1343 = vrot.lane.b32.xlu0 %v653, 48
        %v1344 = vpop.permute.xlu0 %1343
        %v1347 = vld [vmem:[#allocation2 + $0x60] sm:$0xf]
        %v1348 = vsel %vm1285, %v1342, %v1347
        %1349 = vst [vmem:[#allocation2 + $0x60] sm:$0xf] %v1348
        %1350 = vst.msk [vmem:[#allocation2 + $0x68] sm:$0xf] %vm1289, %v1344
        %1351 = vrot.lane.b32.xlu0 %v666, 48
        %v1352 = vpop.permute.xlu0 %1351
        %1353 = vrot.lane.b32.xlu0 %v675, 48
        %v1354 = vpop.permute.xlu0 %1353
        %v1357 = vld [vmem:[#allocation2 + $0x70] sm:$0xf]
        %v1358 = vsel %vm1285, %v1352, %v1357
        %1359 = vst [vmem:[#allocation2 + $0x70] sm:$0xf] %v1358
        %1360 = vst.msk [vmem:[#allocation2 + $0x78] sm:$0xf] %vm1289, %v1354
        %1361 = vrot.lane.b32.xlu0 %v688, 48
        %v1362 = vpop.permute.xlu0 %1361
        %1363 = vrot.lane.b32.xlu0 %v697, 48
        %v1364 = vpop.permute.xlu0 %1363
        %v1367 = vld [vmem:[#allocation2 + $0x80] sm:$0xf]
        %v1368 = vsel %vm1285, %v1362, %v1367
        %1369 = vst [vmem:[#allocation2 + $0x80] sm:$0xf] %v1368
        %1370 = vst.msk [vmem:[#allocation2 + $0x88] sm:$0xf] %vm1289, %v1364
        %1371 = vrot.lane.b32.xlu0 %v710, 48
        %v1372 = vpop.permute.xlu0 %1371
        %1373 = vrot.lane.b32.xlu0 %v719, 48
        %v1374 = vpop.permute.xlu0 %1373
        %v1377 = vld [vmem:[#allocation2 + $0x90] sm:$0xf]
        %v1378 = vsel %vm1285, %v1372, %v1377
        %1379 = vst [vmem:[#allocation2 + $0x90] sm:$0xf] %v1378
        %1380 = vst.msk [vmem:[#allocation2 + $0x98] sm:$0xf] %vm1289, %v1374
        %1381 = vrot.lane.b32.xlu0 %v732, 48
        %v1382 = vpop.permute.xlu0 %1381
        %1383 = vrot.lane.b32.xlu0 %v741, 48
        %v1384 = vpop.permute.xlu0 %1383
        %v1387 = vld [vmem:[#allocation2 + $0xa0] sm:$0xf]
        %v1388 = vsel %vm1285, %v1382, %v1387
        %1389 = vst [vmem:[#allocation2 + $0xa0] sm:$0xf] %v1388
        %1390 = vst.msk [vmem:[#allocation2 + $0xa8] sm:$0xf] %vm1289, %v1384
        %1391 = vrot.lane.b32.xlu0 %v754, 48
        %v1392 = vpop.permute.xlu0 %1391
        %1393 = vrot.lane.b32.xlu0 %v763, 48
        %v1394 = vpop.permute.xlu0 %1393
        %v1397 = vld [vmem:[#allocation2 + $0xb0] sm:$0xf]
        %v1398 = vsel %vm1285, %v1392, %v1397
        %1399 = vst [vmem:[#allocation2 + $0xb0] sm:$0xf] %v1398
        %1400 = vst.msk [vmem:[#allocation2 + $0xb8] sm:$0xf] %vm1289, %v1394
        %1401 = vrot.lane.b32.xlu0 %v776, 48
        %v1402 = vpop.permute.xlu0 %1401
        %1403 = vrot.lane.b32.xlu0 %v785, 48
        %v1404 = vpop.permute.xlu0 %1403
        %v1407 = vld [vmem:[#allocation2 + $0xc0] sm:$0xf]
        %v1408 = vsel %vm1285, %v1402, %v1407
        %1409 = vst [vmem:[#allocation2 + $0xc0] sm:$0xf] %v1408
        %1410 = vst.msk [vmem:[#allocation2 + $0xc8] sm:$0xf] %vm1289, %v1404
        %1411 = vrot.lane.b32.xlu0 %v798, 48
        %v1412 = vpop.permute.xlu0 %1411
        %1413 = vrot.lane.b32.xlu0 %v807, 48
        %v1414 = vpop.permute.xlu0 %1413
        %v1417 = vld [vmem:[#allocation2 + $0xd0] sm:$0xf]
        %v1418 = vsel %vm1285, %v1412, %v1417
        %1419 = vst [vmem:[#allocation2 + $0xd0] sm:$0xf] %v1418
        %1420 = vst.msk [vmem:[#allocation2 + $0xd8] sm:$0xf] %vm1289, %v1414
        %1421 = vrot.lane.b32.xlu0 %v820, 48
        %v1422 = vpop.permute.xlu0 %1421
        %1423 = vrot.lane.b32.xlu0 %v829, 48
        %v1424 = vpop.permute.xlu0 %1423
        %v1427 = vld [vmem:[#allocation2 + $0xe0] sm:$0xf]
        %v1428 = vsel %vm1285, %v1422, %v1427
        %1429 = vst [vmem:[#allocation2 + $0xe0] sm:$0xf] %v1428
        %1430 = vst.msk [vmem:[#allocation2 + $0xe8] sm:$0xf] %vm1289, %v1424
        %v1432 = vshrl.u32 %v462, 16
        %v1434 = vrot.slane %v1432, 7
        %v1435 = vshll.u32 %v462, 16
        %v1437 = vor.u32 %v1434, %v1435
        %v1438 = vrot.slane %v1434, 4
        %v1440 = vshrl.u32 %v463, 16
        %v1442 = vrot.slane %v1440, 7
        %v1443 = vshll.u32 %v463, 16
        %v1445 = vor.u32 %v1442, %v1443
        %v1446 = vsel %vm501, %v1438, %v1445
        %1447 = vrot.lane.b32.xlu0 %v1437, 48
        %v1448 = vpop.permute.xlu0 %1447
        %1449 = vrot.lane.b32.xlu0 %v1446, 48
        %v1450 = vpop.permute.xlu0 %1449
        %v1453 = vld [vmem:[#allocation2 + $0xf0] sm:$0xf]
        %v1454 = vsel %vm1285, %v1448, %v1453
        %1455 = vst [vmem:[#allocation2 + $0xf0] sm:$0xf] %v1454
        %1456 = vst.msk [vmem:[#allocation2 + $0xf8] sm:$0xf] %vm1289, %v1450
        %1457 = vrot.lane.b32.xlu0 %v432, 64
        %v1458 = vpop.permute.xlu0 %1457
        %1459 = vrot.lane.b32.xlu0 %v433, 64
        %v1460 = vpop.permute.xlu0 %1459
        %vm1463 = vcmask 650752
        %1464 = vst.msk [vmem:[#allocation2] sm:$0xf] %vm1463, %v1458
        %1465 = vst.msk [vmem:[#allocation2 + $0x8] sm:$0xf] %vm1463, %v1460
        %1466 = vrot.lane.b32.xlu0 %v434, 64
        %v1467 = vpop.permute.xlu0 %1466
        %1468 = vrot.lane.b32.xlu0 %v435, 64
        %v1469 = vpop.permute.xlu0 %1468
        %1472 = vst.msk [vmem:[#allocation2 + $0x10] sm:$0xf] %vm1463, %v1467
        %1473 = vst.msk [vmem:[#allocation2 + $0x18] sm:$0xf] %vm1463, %v1469
        %1474 = vrot.lane.b32.xlu0 %v436, 64
        %v1475 = vpop.permute.xlu0 %1474
        %1476 = vrot.lane.b32.xlu0 %v437, 64
        %v1477 = vpop.permute.xlu0 %1476
        %1480 = vst.msk [vmem:[#allocation2 + $0x20] sm:$0xf] %vm1463, %v1475
        %1481 = vst.msk [vmem:[#allocation2 + $0x28] sm:$0xf] %vm1463, %v1477
        %1482 = vrot.lane.b32.xlu0 %v438, 64
        %v1483 = vpop.permute.xlu0 %1482
        %1484 = vrot.lane.b32.xlu0 %v439, 64
        %v1485 = vpop.permute.xlu0 %1484
        %1488 = vst.msk [vmem:[#allocation2 + $0x30] sm:$0xf] %vm1463, %v1483
        %1489 = vst.msk [vmem:[#allocation2 + $0x38] sm:$0xf] %vm1463, %v1485
        %1490 = vrot.lane.b32.xlu0 %v440, 64
        %v1491 = vpop.permute.xlu0 %1490
        %1492 = vrot.lane.b32.xlu0 %v441, 64
        %v1493 = vpop.permute.xlu0 %1492
        %1496 = vst.msk [vmem:[#allocation2 + $0x40] sm:$0xf] %vm1463, %v1491
        %1497 = vst.msk [vmem:[#allocation2 + $0x48] sm:$0xf] %vm1463, %v1493
        %1498 = vrot.lane.b32.xlu0 %v442, 64
        %v1499 = vpop.permute.xlu0 %1498
        %1500 = vrot.lane.b32.xlu0 %v443, 64
        %v1501 = vpop.permute.xlu0 %1500
        %1504 = vst.msk [vmem:[#allocation2 + $0x50] sm:$0xf] %vm1463, %v1499
        %1505 = vst.msk [vmem:[#allocation2 + $0x58] sm:$0xf] %vm1463, %v1501
        %1506 = vrot.lane.b32.xlu0 %v444, 64
        %v1507 = vpop.permute.xlu0 %1506
        %1508 = vrot.lane.b32.xlu0 %v445, 64
        %v1509 = vpop.permute.xlu0 %1508
        %1512 = vst.msk [vmem:[#allocation2 + $0x60] sm:$0xf] %vm1463, %v1507
        %1513 = vst.msk [vmem:[#allocation2 + $0x68] sm:$0xf] %vm1463, %v1509
        %1514 = vrot.lane.b32.xlu0 %v446, 64
        %v1515 = vpop.permute.xlu0 %1514
        %1516 = vrot.lane.b32.xlu0 %v447, 64
        %v1517 = vpop.permute.xlu0 %1516
        %1520 = vst.msk [vmem:[#allocation2 + $0x70] sm:$0xf] %vm1463, %v1515
        %1521 = vst.msk [vmem:[#allocation2 + $0x78] sm:$0xf] %vm1463, %v1517
        %1522 = vrot.lane.b32.xlu0 %v448, 64
        %v1523 = vpop.permute.xlu0 %1522
        %1524 = vrot.lane.b32.xlu0 %v449, 64
        %v1525 = vpop.permute.xlu0 %1524
        %1528 = vst.msk [vmem:[#allocation2 + $0x80] sm:$0xf] %vm1463, %v1523
        %1529 = vst.msk [vmem:[#allocation2 + $0x88] sm:$0xf] %vm1463, %v1525
        %1530 = vrot.lane.b32.xlu0 %v450, 64
        %v1531 = vpop.permute.xlu0 %1530
        %1532 = vrot.lane.b32.xlu0 %v451, 64
        %v1533 = vpop.permute.xlu0 %1532
        %1536 = vst.msk [vmem:[#allocation2 + $0x90] sm:$0xf] %vm1463, %v1531
        %1537 = vst.msk [vmem:[#allocation2 + $0x98] sm:$0xf] %vm1463, %v1533
        %1538 = vrot.lane.b32.xlu0 %v452, 64
        %v1539 = vpop.permute.xlu0 %1538
        %1540 = vrot.lane.b32.xlu0 %v453, 64
        %v1541 = vpop.permute.xlu0 %1540
        %1544 = vst.msk [vmem:[#allocation2 + $0xa0] sm:$0xf] %vm1463, %v1539
        %1545 = vst.msk [vmem:[#allocation2 + $0xa8] sm:$0xf] %vm1463, %v1541
        %1546 = vrot.lane.b32.xlu0 %v454, 64
        %v1547 = vpop.permute.xlu0 %1546
        %1548 = vrot.lane.b32.xlu0 %v455, 64
        %v1549 = vpop.permute.xlu0 %1548
        %1552 = vst.msk [vmem:[#allocation2 + $0xb0] sm:$0xf] %vm1463, %v1547
        %1553 = vst.msk [vmem:[#allocation2 + $0xb8] sm:$0xf] %vm1463, %v1549
        %1554 = vrot.lane.b32.xlu0 %v456, 64
        %v1555 = vpop.permute.xlu0 %1554
        %1556 = vrot.lane.b32.xlu0 %v457, 64
        %v1557 = vpop.permute.xlu0 %1556
        %1560 = vst.msk [vmem:[#allocation2 + $0xc0] sm:$0xf] %vm1463, %v1555
        %1561 = vst.msk [vmem:[#allocation2 + $0xc8] sm:$0xf] %vm1463, %v1557
        %1562 = vrot.lane.b32.xlu0 %v458, 64
        %v1563 = vpop.permute.xlu0 %1562
        %1564 = vrot.lane.b32.xlu0 %v459, 64
        %v1565 = vpop.permute.xlu0 %1564
        %1568 = vst.msk [vmem:[#allocation2 + $0xd0] sm:$0xf] %vm1463, %v1563
        %1569 = vst.msk [vmem:[#allocation2 + $0xd8] sm:$0xf] %vm1463, %v1565
        %1570 = vrot.lane.b32.xlu0 %v460, 64
        %v1571 = vpop.permute.xlu0 %1570
        %1572 = vrot.lane.b32.xlu0 %v461, 64
        %v1573 = vpop.permute.xlu0 %1572
        %1576 = vst.msk [vmem:[#allocation2 + $0xe0] sm:$0xf] %vm1463, %v1571
        %1577 = vst.msk [vmem:[#allocation2 + $0xe8] sm:$0xf] %vm1463, %v1573
        %1580 = vrot.lane.b32.xlu0 %v462, 64
        %v1581 = vpop.permute.xlu0 %1580
        %1582 = vrot.lane.b32.xlu0 %v463, 64
        %v1583 = vpop.permute.xlu0 %1582
        %1586 = vst.msk [vmem:[#allocation2 + $0xf0] sm:$0xf] %vm1463, %v1581
        %1587 = vst.msk [vmem:[#allocation2 + $0xf8] sm:$0xf] %vm1463, %v1583
        %1588 = vrot.lane.b32.xlu0 %v995, 80
        %v1589 = vpop.permute.xlu0 %1588
        %1590 = vrot.lane.b32.xlu0 %v998, 80
        %v1591 = vpop.permute.xlu0 %1590
        %vm1594 = vcmask 781952
        %1595 = vst.msk [vmem:[#allocation2] sm:$0xf] %vm1594, %v1589
        %vm1596 = vcmask 781952
        %vm1597 = vmand %vm1596, %vm987
        %v1598 = vld [vmem:[#allocation2 + $0x8] sm:$0xf]
        %v1599 = vsel %vm1597, %v1591, %v1598
        %1600 = vst [vmem:[#allocation2 + $0x8] sm:$0xf] %v1599
        %1601 = vrot.lane.b32.xlu0 %v1017, 80
        %v1602 = vpop.permute.xlu0 %1601
        %1603 = vrot.lane.b32.xlu0 %v1020, 80
        %v1604 = vpop.permute.xlu0 %1603
        %1607 = vst.msk [vmem:[#allocation2 + $0x10] sm:$0xf] %vm1594, %v1602
        %v1608 = vld [vmem:[#allocation2 + $0x18] sm:$0xf]
        %v1609 = vsel %vm1597, %v1604, %v1608
        %1610 = vst [vmem:[#allocation2 + $0x18] sm:$0xf] %v1609
        %1611 = vrot.lane.b32.xlu0 %v1036, 80
        %v1612 = vpop.permute.xlu0 %1611
        %1613 = vrot.lane.b32.xlu0 %v1039, 80
        %v1614 = vpop.permute.xlu0 %1613
        %1617 = vst.msk [vmem:[#allocation2 + $0x20] sm:$0xf] %vm1594, %v1612
        %v1618 = vld [vmem:[#allocation2 + $0x28] sm:$0xf]
        %v1619 = vsel %vm1597, %v1614, %v1618
        %1620 = vst [vmem:[#allocation2 + $0x28] sm:$0xf] %v1619
        %1621 = vrot.lane.b32.xlu0 %v1055, 80
        %v1622 = vpop.permute.xlu0 %1621
        %1623 = vrot.lane.b32.xlu0 %v1058, 80
        %v1624 = vpop.permute.xlu0 %1623
        %1627 = vst.msk [vmem:[#allocation2 + $0x30] sm:$0xf] %vm1594, %v1622
        %v1628 = vld [vmem:[#allocation2 + $0x38] sm:$0xf]
        %v1629 = vsel %vm1597, %v1624, %v1628
        %1630 = vst [vmem:[#allocation2 + $0x38] sm:$0xf] %v1629
        %1631 = vrot.lane.b32.xlu0 %v1074, 80
        %v1632 = vpop.permute.xlu0 %1631
        %1633 = vrot.lane.b32.xlu0 %v1077, 80
        %v1634 = vpop.permute.xlu0 %1633
        %1637 = vst.msk [vmem:[#allocation2 + $0x40] sm:$0xf] %vm1594, %v1632
        %v1638 = vld [vmem:[#allocation2 + $0x48] sm:$0xf]
        %v1639 = vsel %vm1597, %v1634, %v1638
        %1640 = vst [vmem:[#allocation2 + $0x48] sm:$0xf] %v1639
        %1641 = vrot.lane.b32.xlu0 %v1093, 80
        %v1642 = vpop.permute.xlu0 %1641
        %1643 = vrot.lane.b32.xlu0 %v1096, 80
        %v1644 = vpop.permute.xlu0 %1643
        %1647 = vst.msk [vmem:[#allocation2 + $0x50] sm:$0xf] %vm1594, %v1642
        %v1648 = vld [vmem:[#allocation2 + $0x58] sm:$0xf]
        %v1649 = vsel %vm1597, %v1644, %v1648
        %1650 = vst [vmem:[#allocation2 + $0x58] sm:$0xf] %v1649
        %1651 = vrot.lane.b32.xlu0 %v1112, 80
        %v1652 = vpop.permute.xlu0 %1651
        %1653 = vrot.lane.b32.xlu0 %v1115, 80
        %v1654 = vpop.permute.xlu0 %1653
        %1657 = vst.msk [vmem:[#allocation2 + $0x60] sm:$0xf] %vm1594, %v1652
        %v1658 = vld [vmem:[#allocation2 + $0x68] sm:$0xf]
        %v1659 = vsel %vm1597, %v1654, %v1658
        %1660 = vst [vmem:[#allocation2 + $0x68] sm:$0xf] %v1659
        %1661 = vrot.lane.b32.xlu0 %v1131, 80
        %v1662 = vpop.permute.xlu0 %1661
        %1663 = vrot.lane.b32.xlu0 %v1134, 80
        %v1664 = vpop.permute.xlu0 %1663
        %1667 = vst.msk [vmem:[#allocation2 + $0x70] sm:$0xf] %vm1594, %v1662
        %v1668 = vld [vmem:[#allocation2 + $0x78] sm:$0xf]
        %v1669 = vsel %vm1597, %v1664, %v1668
        %1670 = vst [vmem:[#allocation2 + $0x78] sm:$0xf] %v1669
        %1671 = vrot.lane.b32.xlu0 %v1150, 80
        %v1672 = vpop.permute.xlu0 %1671
        %1673 = vrot.lane.b32.xlu0 %v1153, 80
        %v1674 = vpop.permute.xlu0 %1673
        %1677 = vst.msk [vmem:[#allocation2 + $0x80] sm:$0xf] %vm1594, %v1672
        %v1678 = vld [vmem:[#allocation2 + $0x88] sm:$0xf]
        %v1679 = vsel %vm1597, %v1674, %v1678
        %1680 = vst [vmem:[#allocation2 + $0x88] sm:$0xf] %v1679
        %1681 = vrot.lane.b32.xlu0 %v1169, 80
        %v1682 = vpop.permute.xlu0 %1681
        %1683 = vrot.lane.b32.xlu0 %v1172, 80
        %v1684 = vpop.permute.xlu0 %1683
        %1687 = vst.msk [vmem:[#allocation2 + $0x90] sm:$0xf] %vm1594, %v1682
        %v1688 = vld [vmem:[#allocation2 + $0x98] sm:$0xf]
        %v1689 = vsel %vm1597, %v1684, %v1688
        %1690 = vst [vmem:[#allocation2 + $0x98] sm:$0xf] %v1689
        %1691 = vrot.lane.b32.xlu0 %v1188, 80
        %v1692 = vpop.permute.xlu0 %1691
        %1693 = vrot.lane.b32.xlu0 %v1191, 80
        %v1694 = vpop.permute.xlu0 %1693
        %1697 = vst.msk [vmem:[#allocation2 + $0xa0] sm:$0xf] %vm1594, %v1692
        %v1698 = vld [vmem:[#allocation2 + $0xa8] sm:$0xf]
        %v1699 = vsel %vm1597, %v1694, %v1698
        %1700 = vst [vmem:[#allocation2 + $0xa8] sm:$0xf] %v1699
        %1701 = vrot.lane.b32.xlu0 %v1207, 80
        %v1702 = vpop.permute.xlu0 %1701
        %1703 = vrot.lane.b32.xlu0 %v1210, 80
        %v1704 = vpop.permute.xlu0 %1703
        %1707 = vst.msk [vmem:[#allocation2 + $0xb0] sm:$0xf] %vm1594, %v1702
        %v1708 = vld [vmem:[#allocation2 + $0xb8] sm:$0xf]
        %v1709 = vsel %vm1597, %v1704, %v1708
        %1710 = vst [vmem:[#allocation2 + $0xb8] sm:$0xf] %v1709
        %1711 = vrot.lane.b32.xlu0 %v1226, 80
        %v1712 = vpop.permute.xlu0 %1711
        %1713 = vrot.lane.b32.xlu0 %v1229, 80
        %v1714 = vpop.permute.xlu0 %1713
        %1717 = vst.msk [vmem:[#allocation2 + $0xc0] sm:$0xf] %vm1594, %v1712
        %v1718 = vld [vmem:[#allocation2 + $0xc8] sm:$0xf]
        %v1719 = vsel %vm1597, %v1714, %v1718
        %1720 = vst [vmem:[#allocation2 + $0xc8] sm:$0xf] %v1719
        %1721 = vrot.lane.b32.xlu0 %v1245, 80
        %v1722 = vpop.permute.xlu0 %1721
        %1723 = vrot.lane.b32.xlu0 %v1248, 80
        %v1724 = vpop.permute.xlu0 %1723
        %1727 = vst.msk [vmem:[#allocation2 + $0xd0] sm:$0xf] %vm1594, %v1722
        %v1728 = vld [vmem:[#allocation2 + $0xd8] sm:$0xf]
        %v1729 = vsel %vm1597, %v1724, %v1728
        %1730 = vst [vmem:[#allocation2 + $0xd8] sm:$0xf] %v1729
        %1731 = vrot.lane.b32.xlu0 %v1264, 80
        %v1732 = vpop.permute.xlu0 %1731
        %1733 = vrot.lane.b32.xlu0 %v1267, 80
        %v1734 = vpop.permute.xlu0 %1733
        %1737 = vst.msk [vmem:[#allocation2 + $0xe0] sm:$0xf] %vm1594, %v1732
        %v1738 = vld [vmem:[#allocation2 + $0xe8] sm:$0xf]
        %v1739 = vsel %vm1597, %v1734, %v1738
        %1740 = vst [vmem:[#allocation2 + $0xe8] sm:$0xf] %v1739
        %v1741 = vrot.slane %v1432, 4
        %v1742 = vrot.slane %v1435, 5
        %v1743 = vor.u32 %v1741, %v1742
        %v1744 = vrot.slane %v1743, 4
        %v1745 = vrot.slane %v1443, 5
        %v1746 = vsel %vm989, %v1744, %v1745
        %v1747 = vrot.slane %v1440, 4
        %v1748 = vor.u32 %v1747, %v1745
        %v1749 = vrot.slane %v1748, 4
        %1750 = vrot.lane.b32.xlu0 %v1746, 80
        %v1751 = vpop.permute.xlu0 %1750
        %1752 = vrot.lane.b32.xlu0 %v1749, 80
        %v1753 = vpop.permute.xlu0 %1752
        %1756 = vst.msk [vmem:[#allocation2 + $0xf0] sm:$0xf] %vm1594, %v1751
        %v1757 = vld [vmem:[#allocation2 + $0xf8] sm:$0xf]
        %v1758 = vsel %vm1597, %v1753, %v1757
        %1759 = vst [vmem:[#allocation2 + $0xf8] sm:$0xf] %v1758
        %1760 = vrot.lane.b32.xlu0 %v534, 96
        %v1761 = vpop.permute.xlu0 %1760
        %1762 = vrot.lane.b32.xlu0 %v543, 96
        %v1763 = vpop.permute.xlu0 %1762
        %vm1766 = vcmask 913152
        %vm1767 = vmand %vm1766, %vm521
        %v1768 = vld [vmem:[#allocation2] sm:$0xf]
        %v1769 = vsel %vm1767, %v1761, %v1768
        %1770 = vst [vmem:[#allocation2] sm:$0xf] %v1769
        %vm1771 = vcmask 913152
        %1772 = vst.msk [vmem:[#allocation2 + $0x8] sm:$0xf] %vm1771, %v1763
        %1773 = vrot.lane.b32.xlu0 %v556, 96
        %v1774 = vpop.permute.xlu0 %1773
        %1775 = vrot.lane.b32.xlu0 %v565, 96
        %v1776 = vpop.permute.xlu0 %1775
        %v1779 = vld [vmem:[#allocation2 + $0x10] sm:$0xf]
        %v1780 = vsel %vm1767, %v1774, %v1779
        %1781 = vst [vmem:[#allocation2 + $0x10] sm:$0xf] %v1780
        %1782 = vst.msk [vmem:[#allocation2 + $0x18] sm:$0xf] %vm1771, %v1776
        %1783 = vrot.lane.b32.xlu0 %v578, 96
        %v1784 = vpop.permute.xlu0 %1783
        %1785 = vrot.lane.b32.xlu0 %v587, 96
        %v1786 = vpop.permute.xlu0 %1785
        %v1789 = vld [vmem:[#allocation2 + $0x20] sm:$0xf]
        %v1790 = vsel %vm1767, %v1784, %v1789
        %1791 = vst [vmem:[#allocation2 + $0x20] sm:$0xf] %v1790
        %1792 = vst.msk [vmem:[#allocation2 + $0x28] sm:$0xf] %vm1771, %v1786
        %1793 = vrot.lane.b32.xlu0 %v600, 96
        %v1794 = vpop.permute.xlu0 %1793
        %1795 = vrot.lane.b32.xlu0 %v609, 96
        %v1796 = vpop.permute.xlu0 %1795
        %v1799 = vld [vmem:[#allocation2 + $0x30] sm:$0xf]
        %v1800 = vsel %vm1767, %v1794, %v1799
        %1801 = vst [vmem:[#allocation2 + $0x30] sm:$0xf] %v1800
        %1802 = vst.msk [vmem:[#allocation2 + $0x38] sm:$0xf] %vm1771, %v1796
        %1803 = vrot.lane.b32.xlu0 %v622, 96
        %v1804 = vpop.permute.xlu0 %1803
        %1805 = vrot.lane.b32.xlu0 %v631, 96
        %v1806 = vpop.permute.xlu0 %1805
        %v1809 = vld [vmem:[#allocation2 + $0x40] sm:$0xf]
        %v1810 = vsel %vm1767, %v1804, %v1809
        %1811 = vst [vmem:[#allocation2 + $0x40] sm:$0xf] %v1810
        %1812 = vst.msk [vmem:[#allocation2 + $0x48] sm:$0xf] %vm1771, %v1806
        %1813 = vrot.lane.b32.xlu0 %v644, 96
        %v1814 = vpop.permute.xlu0 %1813
        %1815 = vrot.lane.b32.xlu0 %v653, 96
        %v1816 = vpop.permute.xlu0 %1815
        %v1819 = vld [vmem:[#allocation2 + $0x50] sm:$0xf]
        %v1820 = vsel %vm1767, %v1814, %v1819
        %1821 = vst [vmem:[#allocation2 + $0x50] sm:$0xf] %v1820
        %1822 = vst.msk [vmem:[#allocation2 + $0x58] sm:$0xf] %vm1771, %v1816
        %1823 = vrot.lane.b32.xlu0 %v666, 96
        %v1824 = vpop.permute.xlu0 %1823
        %1825 = vrot.lane.b32.xlu0 %v675, 96
        %v1826 = vpop.permute.xlu0 %1825
        %v1829 = vld [vmem:[#allocation2 + $0x60] sm:$0xf]
        %v1830 = vsel %vm1767, %v1824, %v1829
        %1831 = vst [vmem:[#allocation2 + $0x60] sm:$0xf] %v1830
        %1832 = vst.msk [vmem:[#allocation2 + $0x68] sm:$0xf] %vm1771, %v1826
        %1833 = vrot.lane.b32.xlu0 %v688, 96
        %v1834 = vpop.permute.xlu0 %1833
        %1835 = vrot.lane.b32.xlu0 %v697, 96
        %v1836 = vpop.permute.xlu0 %1835
        %v1839 = vld [vmem:[#allocation2 + $0x70] sm:$0xf]
        %v1840 = vsel %vm1767, %v1834, %v1839
        %1841 = vst [vmem:[#allocation2 + $0x70] sm:$0xf] %v1840
        %1842 = vst.msk [vmem:[#allocation2 + $0x78] sm:$0xf] %vm1771, %v1836
        %1843 = vrot.lane.b32.xlu0 %v710, 96
        %v1844 = vpop.permute.xlu0 %1843
        %1845 = vrot.lane.b32.xlu0 %v719, 96
        %v1846 = vpop.permute.xlu0 %1845
        %v1849 = vld [vmem:[#allocation2 + $0x80] sm:$0xf]
        %v1850 = vsel %vm1767, %v1844, %v1849
        %1851 = vst [vmem:[#allocation2 + $0x80] sm:$0xf] %v1850
        %1852 = vst.msk [vmem:[#allocation2 + $0x88] sm:$0xf] %vm1771, %v1846
        %1853 = vrot.lane.b32.xlu0 %v732, 96
        %v1854 = vpop.permute.xlu0 %1853
        %1855 = vrot.lane.b32.xlu0 %v741, 96
        %v1856 = vpop.permute.xlu0 %1855
        %v1859 = vld [vmem:[#allocation2 + $0x90] sm:$0xf]
        %v1860 = vsel %vm1767, %v1854, %v1859
        %1861 = vst [vmem:[#allocation2 + $0x90] sm:$0xf] %v1860
        %1862 = vst.msk [vmem:[#allocation2 + $0x98] sm:$0xf] %vm1771, %v1856
        %1863 = vrot.lane.b32.xlu0 %v754, 96
        %v1864 = vpop.permute.xlu0 %1863
        %1865 = vrot.lane.b32.xlu0 %v763, 96
        %v1866 = vpop.permute.xlu0 %1865
        %v1869 = vld [vmem:[#allocation2 + $0xa0] sm:$0xf]
        %v1870 = vsel %vm1767, %v1864, %v1869
        %1871 = vst [vmem:[#allocation2 + $0xa0] sm:$0xf] %v1870
        %1872 = vst.msk [vmem:[#allocation2 + $0xa8] sm:$0xf] %vm1771, %v1866
        %1873 = vrot.lane.b32.xlu0 %v776, 96
        %v1874 = vpop.permute.xlu0 %1873
        %1875 = vrot.lane.b32.xlu0 %v785, 96
        %v1876 = vpop.permute.xlu0 %1875
        %v1879 = vld [vmem:[#allocation2 + $0xb0] sm:$0xf]
        %v1880 = vsel %vm1767, %v1874, %v1879
        %1881 = vst [vmem:[#allocation2 + $0xb0] sm:$0xf] %v1880
        %1882 = vst.msk [vmem:[#allocation2 + $0xb8] sm:$0xf] %vm1771, %v1876
        %1883 = vrot.lane.b32.xlu0 %v798, 96
        %v1884 = vpop.permute.xlu0 %1883
        %1885 = vrot.lane.b32.xlu0 %v807, 96
        %v1886 = vpop.permute.xlu0 %1885
        %v1889 = vld [vmem:[#allocation2 + $0xc0] sm:$0xf]
        %v1890 = vsel %vm1767, %v1884, %v1889
        %1891 = vst [vmem:[#allocation2 + $0xc0] sm:$0xf] %v1890
        %1892 = vst.msk [vmem:[#allocation2 + $0xc8] sm:$0xf] %vm1771, %v1886
        %1893 = vrot.lane.b32.xlu0 %v820, 96
        %v1894 = vpop.permute.xlu0 %1893
        %1895 = vrot.lane.b32.xlu0 %v829, 96
        %v1896 = vpop.permute.xlu0 %1895
        %v1899 = vld [vmem:[#allocation2 + $0xd0] sm:$0xf]
        %v1900 = vsel %vm1767, %v1894, %v1899
        %1901 = vst [vmem:[#allocation2 + $0xd0] sm:$0xf] %v1900
        %1902 = vst.msk [vmem:[#allocation2 + $0xd8] sm:$0xf] %vm1771, %v1896
        %1903 = vrot.lane.b32.xlu0 %v1437, 96
        %v1904 = vpop.permute.xlu0 %1903
        %1905 = vrot.lane.b32.xlu0 %v1446, 96
        %v1906 = vpop.permute.xlu0 %1905
        %v1909 = vld [vmem:[#allocation2 + $0xe0] sm:$0xf]
        %v1910 = vsel %vm1767, %v1904, %v1909
        %1911 = vst [vmem:[#allocation2 + $0xe0] sm:$0xf] %v1910
        %1912 = vst.msk [vmem:[#allocation2 + $0xe8] sm:$0xf] %vm1771, %v1906
        %1913 = vrot.lane.b32.xlu0 %v434, 112
        %v1914 = vpop.permute.xlu0 %1913
        %1915 = vrot.lane.b32.xlu0 %v435, 112
        %v1916 = vpop.permute.xlu0 %1915
        %vm1919 = vcmask 1044352
        %1920 = vst.msk [vmem:[#allocation2] sm:$0xf] %vm1919, %v1914
        %1921 = vst.msk [vmem:[#allocation2 + $0x8] sm:$0xf] %vm1919, %v1916
        %1922 = vrot.lane.b32.xlu0 %v436, 112
        %v1923 = vpop.permute.xlu0 %1922
        %1924 = vrot.lane.b32.xlu0 %v437, 112
        %v1925 = vpop.permute.xlu0 %1924
        %1928 = vst.msk [vmem:[#allocation2 + $0x10] sm:$0xf] %vm1919, %v1923
        %1929 = vst.msk [vmem:[#allocation2 + $0x18] sm:$0xf] %vm1919, %v1925
        %1930 = vrot.lane.b32.xlu0 %v438, 112
        %v1931 = vpop.permute.xlu0 %1930
        %1932 = vrot.lane.b32.xlu0 %v439, 112
        %v1933 = vpop.permute.xlu0 %1932
        %1936 = vst.msk [vmem:[#allocation2 + $0x20] sm:$0xf] %vm1919, %v1931
        %1937 = vst.msk [vmem:[#allocation2 + $0x28] sm:$0xf] %vm1919, %v1933
        %1938 = vrot.lane.b32.xlu0 %v440, 112
        %v1939 = vpop.permute.xlu0 %1938
        %1940 = vrot.lane.b32.xlu0 %v441, 112
        %v1941 = vpop.permute.xlu0 %1940
        %1944 = vst.msk [vmem:[#allocation2 + $0x30] sm:$0xf] %vm1919, %v1939
        %1945 = vst.msk [vmem:[#allocation2 + $0x38] sm:$0xf] %vm1919, %v1941
        %1946 = vrot.lane.b32.xlu0 %v442, 112
        %v1947 = vpop.permute.xlu0 %1946
        %1948 = vrot.lane.b32.xlu0 %v443, 112
        %v1949 = vpop.permute.xlu0 %1948
        %1952 = vst.msk [vmem:[#allocation2 + $0x40] sm:$0xf] %vm1919, %v1947
        %1953 = vst.msk [vmem:[#allocation2 + $0x48] sm:$0xf] %vm1919, %v1949
        %1954 = vrot.lane.b32.xlu0 %v444, 112
        %v1955 = vpop.permute.xlu0 %1954
        %1956 = vrot.lane.b32.xlu0 %v445, 112
        %v1957 = vpop.permute.xlu0 %1956
        %1960 = vst.msk [vmem:[#allocation2 + $0x50] sm:$0xf] %vm1919, %v1955
        %1961 = vst.msk [vmem:[#allocation2 + $0x58] sm:$0xf] %vm1919, %v1957
        %1962 = vrot.lane.b32.xlu0 %v446, 112
        %v1963 = vpop.permute.xlu0 %1962
        %1964 = vrot.lane.b32.xlu0 %v447, 112
        %v1965 = vpop.permute.xlu0 %1964
        %1968 = vst.msk [vmem:[#allocation2 + $0x60] sm:$0xf] %vm1919, %v1963
        %1969 = vst.msk [vmem:[#allocation2 + $0x68] sm:$0xf] %vm1919, %v1965
        %1970 = vrot.lane.b32.xlu0 %v448, 112
        %v1971 = vpop.permute.xlu0 %1970
        %1972 = vrot.lane.b32.xlu0 %v449, 112
        %v1973 = vpop.permute.xlu0 %1972
        %1976 = vst.msk [vmem:[#allocation2 + $0x70] sm:$0xf] %vm1919, %v1971
        %1977 = vst.msk [vmem:[#allocation2 + $0x78] sm:$0xf] %vm1919, %v1973
        %1978 = vrot.lane.b32.xlu0 %v450, 112
        %v1979 = vpop.permute.xlu0 %1978
        %1980 = vrot.lane.b32.xlu0 %v451, 112
        %v1981 = vpop.permute.xlu0 %1980
        %1984 = vst.msk [vmem:[#allocation2 + $0x80] sm:$0xf] %vm1919, %v1979
        %1985 = vst.msk [vmem:[#allocation2 + $0x88] sm:$0xf] %vm1919, %v1981
        %1986 = vrot.lane.b32.xlu0 %v452, 112
        %v1987 = vpop.permute.xlu0 %1986
        %1988 = vrot.lane.b32.xlu0 %v453, 112
        %v1989 = vpop.permute.xlu0 %1988
        %1992 = vst.msk [vmem:[#allocation2 + $0x90] sm:$0xf] %vm1919, %v1987
        %1993 = vst.msk [vmem:[#allocation2 + $0x98] sm:$0xf] %vm1919, %v1989
        %1994 = vrot.lane.b32.xlu0 %v454, 112
        %v1995 = vpop.permute.xlu0 %1994
        %1996 = vrot.lane.b32.xlu0 %v455, 112
        %v1997 = vpop.permute.xlu0 %1996
        %2000 = vst.msk [vmem:[#allocation2 + $0xa0] sm:$0xf] %vm1919, %v1995
        %2001 = vst.msk [vmem:[#allocation2 + $0xa8] sm:$0xf] %vm1919, %v1997
        %2002 = vrot.lane.b32.xlu0 %v456, 112
        %v2003 = vpop.permute.xlu0 %2002
        %2004 = vrot.lane.b32.xlu0 %v457, 112
        %v2005 = vpop.permute.xlu0 %2004
        %2008 = vst.msk [vmem:[#allocation2 + $0xb0] sm:$0xf] %vm1919, %v2003
        %2009 = vst.msk [vmem:[#allocation2 + $0xb8] sm:$0xf] %vm1919, %v2005
        %2010 = vrot.lane.b32.xlu0 %v458, 112
        %v2011 = vpop.permute.xlu0 %2010
        %2012 = vrot.lane.b32.xlu0 %v459, 112
        %v2013 = vpop.permute.xlu0 %2012
        %2016 = vst.msk [vmem:[#allocation2 + $0xc0] sm:$0xf] %vm1919, %v2011
        %2017 = vst.msk [vmem:[#allocation2 + $0xc8] sm:$0xf] %vm1919, %v2013
        %2018 = vrot.lane.b32.xlu0 %v460, 112
        %v2019 = vpop.permute.xlu0 %2018
        %2020 = vrot.lane.b32.xlu0 %v461, 112
        %v2021 = vpop.permute.xlu0 %2020
        %2024 = vst.msk [vmem:[#allocation2 + $0xd0] sm:$0xf] %vm1919, %v2019
        %2025 = vst.msk [vmem:[#allocation2 + $0xd8] sm:$0xf] %vm1919, %v2021
        %2026 = vrot.lane.b32.xlu0 %v462, 112
        %v2027 = vpop.permute.xlu0 %2026
        %2028 = vrot.lane.b32.xlu0 %v463, 112
        %v2029 = vpop.permute.xlu0 %2028
        %2032 = vst.msk [vmem:[#allocation2 + $0xe0] sm:$0xf] %vm1919, %v2027
        %2033 = vst.msk [vmem:[#allocation2 + $0xe8] sm:$0xf] %vm1919, %v2029
        %2036 = vst.msk [vmem:[#allocation2 + $0x4] sm:$0xf] %vm526, %v1017
        %vm2037 = vmand %vm520, %vm987
        %v2038 = vld [vmem:[#allocation2 + $0xc] sm:$0xf]
        %v2039 = vsel %vm2037, %v1020, %v2038
        %2040 = vst [vmem:[#allocation2 + $0xc] sm:$0xf] %v2039
        %2043 = vst.msk [vmem:[#allocation2 + $0x14] sm:$0xf] %vm526, %v1036
        %v2044 = vld [vmem:[#allocation2 + $0x1c] sm:$0xf]
        %v2045 = vsel %vm2037, %v1039, %v2044
        %2046 = vst [vmem:[#allocation2 + $0x1c] sm:$0xf] %v2045
        %2049 = vst.msk [vmem:[#allocation2 + $0x24] sm:$0xf] %vm526, %v1055
        %v2050 = vld [vmem:[#allocation2 + $0x2c] sm:$0xf]
        %v2051 = vsel %vm2037, %v1058, %v2050
        %2052 = vst [vmem:[#allocation2 + $0x2c] sm:$0xf] %v2051
        %2055 = vst.msk [vmem:[#allocation2 + $0x34] sm:$0xf] %vm526, %v1074
        %v2056 = vld [vmem:[#allocation2 + $0x3c] sm:$0xf]
        %v2057 = vsel %vm2037, %v1077, %v2056
        %2058 = vst [vmem:[#allocation2 + $0x3c] sm:$0xf] %v2057
        %2061 = vst.msk [vmem:[#allocation2 + $0x44] sm:$0xf] %vm526, %v1093
        %v2062 = vld [vmem:[#allocation2 + $0x4c] sm:$0xf]
        %v2063 = vsel %vm2037, %v1096, %v2062
        %2064 = vst [vmem:[#allocation2 + $0x4c] sm:$0xf] %v2063
        %2067 = vst.msk [vmem:[#allocation2 + $0x54] sm:$0xf] %vm526, %v1112
        %v2068 = vld [vmem:[#allocation2 + $0x5c] sm:$0xf]
        %v2069 = vsel %vm2037, %v1115, %v2068
        %2070 = vst [vmem:[#allocation2 + $0x5c] sm:$0xf] %v2069
        %2073 = vst.msk [vmem:[#allocation2 + $0x64] sm:$0xf] %vm526, %v1131
        %v2074 = vld [vmem:[#allocation2 + $0x6c] sm:$0xf]
        %v2075 = vsel %vm2037, %v1134, %v2074
        %2076 = vst [vmem:[#allocation2 + $0x6c] sm:$0xf] %v2075
        %2079 = vst.msk [vmem:[#allocation2 + $0x74] sm:$0xf] %vm526, %v1150
        %v2080 = vld [vmem:[#allocation2 + $0x7c] sm:$0xf]
        %v2081 = vsel %vm2037, %v1153, %v2080
        %2082 = vst [vmem:[#allocation2 + $0x7c] sm:$0xf] %v2081
        %2085 = vst.msk [vmem:[#allocation2 + $0x84] sm:$0xf] %vm526, %v1169
        %v2086 = vld [vmem:[#allocation2 + $0x8c] sm:$0xf]
        %v2087 = vsel %vm2037, %v1172, %v2086
        %2088 = vst [vmem:[#allocation2 + $0x8c] sm:$0xf] %v2087
        %2091 = vst.msk [vmem:[#allocation2 + $0x94] sm:$0xf] %vm526, %v1188
        %v2092 = vld [vmem:[#allocation2 + $0x9c] sm:$0xf]
        %v2093 = vsel %vm2037, %v1191, %v2092
        %2094 = vst [vmem:[#allocation2 + $0x9c] sm:$0xf] %v2093
        %2097 = vst.msk [vmem:[#allocation2 + $0xa4] sm:$0xf] %vm526, %v1207
        %v2098 = vld [vmem:[#allocation2 + $0xac] sm:$0xf]
        %v2099 = vsel %vm2037, %v1210, %v2098
        %2100 = vst [vmem:[#allocation2 + $0xac] sm:$0xf] %v2099
        %2103 = vst.msk [vmem:[#allocation2 + $0xb4] sm:$0xf] %vm526, %v1226
        %v2104 = vld [vmem:[#allocation2 + $0xbc] sm:$0xf]
        %v2105 = vsel %vm2037, %v1229, %v2104
        %2106 = vst [vmem:[#allocation2 + $0xbc] sm:$0xf] %v2105
        %2109 = vst.msk [vmem:[#allocation2 + $0xc4] sm:$0xf] %vm526, %v1245
        %v2110 = vld [vmem:[#allocation2 + $0xcc] sm:$0xf]
        %v2111 = vsel %vm2037, %v1248, %v2110
        %2112 = vst [vmem:[#allocation2 + $0xcc] sm:$0xf] %v2111
        %2115 = vst.msk [vmem:[#allocation2 + $0xd4] sm:$0xf] %vm526, %v1264
        %v2116 = vld [vmem:[#allocation2 + $0xdc] sm:$0xf]
        %v2117 = vsel %vm2037, %v1267, %v2116
        %2118 = vst [vmem:[#allocation2 + $0xdc] sm:$0xf] %v2117
        %2121 = vst.msk [vmem:[#allocation2 + $0xe4] sm:$0xf] %vm526, %v1746
        %v2122 = vld [vmem:[#allocation2 + $0xec] sm:$0xf]
        %v2123 = vsel %vm2037, %v1749, %v2122
        %2124 = vst [vmem:[#allocation2 + $0xec] sm:$0xf] %v2123
        %v2125 = vld [vmem:[#allocation2] sm:$0xff]
        %v2126 = vld [vmem:[#allocation2 + $0x8] sm:$0xff]
        %v2127 = vld [vmem:[#allocation2 + $0x10] sm:$0xff]
        %v2128 = vld [vmem:[#allocation2 + $0x18] sm:$0xff]
        %v2129 = vld [vmem:[#allocation2 + $0x20] sm:$0xff]
        %v2130 = vld [vmem:[#allocation2 + $0x28] sm:$0xff]
        %v2131 = vld [vmem:[#allocation2 + $0x30] sm:$0xff]
        %v2132 = vld [vmem:[#allocation2 + $0x38] sm:$0xff]
        %v2133 = vld [vmem:[#allocation2 + $0x40] sm:$0xff]
        %v2134 = vld [vmem:[#allocation2 + $0x48] sm:$0xff]
        %v2135 = vld [vmem:[#allocation2 + $0x50] sm:$0xff]
        %v2136 = vld [vmem:[#allocation2 + $0x58] sm:$0xff]
        %v2137 = vld [vmem:[#allocation2 + $0x60] sm:$0xff]
        %v2138 = vld [vmem:[#allocation2 + $0x68] sm:$0xff]
        %v2139 = vld [vmem:[#allocation2 + $0x70] sm:$0xff]
        %v2140 = vld [vmem:[#allocation2 + $0x78] sm:$0xff]
        %v2141 = vld [vmem:[#allocation2 + $0x80] sm:$0xff]
        %v2142 = vld [vmem:[#allocation2 + $0x88] sm:$0xff]
        %v2143 = vld [vmem:[#allocation2 + $0x90] sm:$0xff]
        %v2144 = vld [vmem:[#allocation2 + $0x98] sm:$0xff]
        %v2145 = vld [vmem:[#allocation2 + $0xa0] sm:$0xff]
        %v2146 = vld [vmem:[#allocation2 + $0xa8] sm:$0xff]
        %v2147 = vld [vmem:[#allocation2 + $0xb0] sm:$0xff]
        %v2148 = vld [vmem:[#allocation2 + $0xb8] sm:$0xff]
        %v2149 = vld [vmem:[#allocation2 + $0xc0] sm:$0xff]
        %v2150 = vld [vmem:[#allocation2 + $0xc8] sm:$0xff]
        %v2151 = vld [vmem:[#allocation2 + $0xd0] sm:$0xff]
        %v2152 = vld [vmem:[#allocation2 + $0xd8] sm:$0xff]
        %v2153 = vld [vmem:[#allocation2 + $0xe0] sm:$0xff]
        %v2154 = vld [vmem:[#allocation2 + $0xe8] sm:$0xff]
        %v2155 = vld [vmem:[#allocation2 + $0xf0] sm:$0xff]
        %v2156 = vld [vmem:[#allocation2 + $0xf8] sm:$0xff]
        %v2157 = vld [vmem:[%s3] sm:$0xf]
        %v2158 = vld [vmem:[%s3 + $0x4] sm:$0xf]
        %v2159 = vld [vmem:[%s3 + $0x8] sm:$0xf]
        %v2160 = vld [vmem:[%s3 + $0xc] sm:$0xf]
        %v2161 = vld [vmem:[%s3 + $0x10] sm:$0xf]
        %v2162 = vld [vmem:[%s3 + $0x14] sm:$0xf]
        %v2163 = vld [vmem:[%s3 + $0x18] sm:$0xf]
        %v2164 = vld [vmem:[%s3 + $0x1c] sm:$0xf]
        %v2165 = vld [vmem:[%s3 + $0x20] sm:$0xf]
        %v2166 = vld [vmem:[%s3 + $0x24] sm:$0xf]
        %v2167 = vld [vmem:[%s3 + $0x28] sm:$0xf]
        %v2168 = vld [vmem:[%s3 + $0x2c] sm:$0xf]
        %v2169 = vld [vmem:[%s3 + $0x30] sm:$0xf]
        %v2170 = vld [vmem:[%s3 + $0x34] sm:$0xf]
        %v2171 = vld [vmem:[%s3 + $0x38] sm:$0xf]
        %v2172 = vld [vmem:[%s3 + $0x3c] sm:$0xf]
        %v2173 = vld [vmem:[%s3 + $0x40] sm:$0xf]
        %v2174 = vld [vmem:[%s3 + $0x44] sm:$0xf]
        %v2175 = vld [vmem:[%s4] sm:$0x1]
        %v2177 = vperm.slane %v2175, 0
        %v2211 = vunpack.c.l.b16 %v2125
        %v2212 = vunpack.c.h.b16 %v2125
        %v2213 = vunpack.c.l.b16 %v2126
        %v2214 = vunpack.c.h.b16 %v2126
        %v2215 = vunpack.c.l.b16 %v2127
        %v2216 = vunpack.c.h.b16 %v2127
        %v2217 = vunpack.c.l.b16 %v2128
        %v2218 = vunpack.c.h.b16 %v2128
        %v2219 = vunpack.c.l.b16 %v2129
        %v2220 = vunpack.c.h.b16 %v2129
        %v2221 = vunpack.c.l.b16 %v2130
        %v2222 = vunpack.c.h.b16 %v2130
        %v2223 = vunpack.c.l.b16 %v2131
        %v2224 = vunpack.c.h.b16 %v2131
        %v2225 = vunpack.c.l.b16 %v2132
        %v2226 = vunpack.c.h.b16 %v2132
        %v2227 = vunpack.c.l.b16 %v2133
        %v2228 = vunpack.c.h.b16 %v2133
        %v2229 = vunpack.c.l.b16 %v2134
        %v2230 = vunpack.c.h.b16 %v2134
        %v2231 = vunpack.c.l.b16 %v2135
        %v2232 = vunpack.c.h.b16 %v2135
        %v2233 = vunpack.c.l.b16 %v2136
        %v2234 = vunpack.c.h.b16 %v2136
        %v2235 = vunpack.c.l.b16 %v2137
        %v2236 = vunpack.c.h.b16 %v2137
        %v2237 = vunpack.c.l.b16 %v2138
        %v2238 = vunpack.c.h.b16 %v2138
        %v2239 = vunpack.c.l.b16 %v2139
        %v2240 = vunpack.c.h.b16 %v2139
        %v2241 = vunpack.c.l.b16 %v2140
        %v2242 = vunpack.c.h.b16 %v2140
        %v2243 = vunpack.c.l.b16 %v2141
        %v2244 = vunpack.c.h.b16 %v2141
        %v2245 = vunpack.c.l.b16 %v2142
        %v2246 = vunpack.c.h.b16 %v2142
        %v2247 = vunpack.c.l.b16 %v2143
        %v2248 = vunpack.c.h.b16 %v2143
        %v2249 = vunpack.c.l.b16 %v2144
        %v2250 = vunpack.c.h.b16 %v2144
        %v2251 = vunpack.c.l.b16 %v2145
        %v2252 = vunpack.c.h.b16 %v2145
        %v2253 = vunpack.c.l.b16 %v2146
        %v2254 = vunpack.c.h.b16 %v2146
        %v2255 = vunpack.c.l.b16 %v2147
        %v2256 = vunpack.c.h.b16 %v2147
        %v2257 = vunpack.c.l.b16 %v2148
        %v2258 = vunpack.c.h.b16 %v2148
        %v2259 = vunpack.c.l.b16 %v2149
        %v2260 = vunpack.c.h.b16 %v2149
        %v2261 = vunpack.c.l.b16 %v2150
        %v2262 = vunpack.c.h.b16 %v2150
        %v2263 = vunpack.c.l.b16 %v2151
        %v2264 = vunpack.c.h.b16 %v2151
        %v2265 = vunpack.c.l.b16 %v2152
        %v2266 = vunpack.c.h.b16 %v2152
        %v2267 = vunpack.c.l.b16 %v2153
        %v2268 = vunpack.c.h.b16 %v2153
        %v2269 = vunpack.c.l.b16 %v2154
        %v2270 = vunpack.c.h.b16 %v2154
        %v2271 = vunpack.c.l.b16 %v2155
        %v2272 = vunpack.c.h.b16 %v2155
        %v2273 = vunpack.c.l.b16 %v2156
        %v2274 = vunpack.c.h.b16 %v2156
        %v2275 = vpack.c.b16 %v2213, %v2211
        %v2276 = vpack.c.b16 %v2214, %v2212
        %v2277 = vpack.c.b16 %v2217, %v2215
        %v2278 = vpack.c.b16 %v2218, %v2216
        %v2279 = vpack.c.b16 %v2221, %v2219
        %v2280 = vpack.c.b16 %v2222, %v2220
        %v2281 = vpack.c.b16 %v2225, %v2223
        %v2282 = vpack.c.b16 %v2226, %v2224
        %v2283 = vpack.c.b16 %v2229, %v2227
        %v2284 = vpack.c.b16 %v2230, %v2228
        %v2285 = vpack.c.b16 %v2233, %v2231
        %v2286 = vpack.c.b16 %v2234, %v2232
        %v2287 = vpack.c.b16 %v2237, %v2235
        %v2288 = vpack.c.b16 %v2238, %v2236
        %v2289 = vpack.c.b16 %v2241, %v2239
        %v2290 = vpack.c.b16 %v2242, %v2240
        %v2291 = vpack.c.b16 %v2245, %v2243
        %v2292 = vpack.c.b16 %v2246, %v2244
        %v2293 = vpack.c.b16 %v2249, %v2247
        %v2294 = vpack.c.b16 %v2250, %v2248
        %v2295 = vpack.c.b16 %v2253, %v2251
        %v2296 = vpack.c.b16 %v2254, %v2252
        %v2297 = vpack.c.b16 %v2257, %v2255
        %v2298 = vpack.c.b16 %v2258, %v2256
        %v2299 = vpack.c.b16 %v2261, %v2259
        %v2300 = vpack.c.b16 %v2262, %v2260
        %v2301 = vpack.c.b16 %v2265, %v2263
        %v2302 = vpack.c.b16 %v2266, %v2264
        %v2303 = vpack.c.b16 %v2269, %v2267
        %v2304 = vpack.c.b16 %v2270, %v2268
        %v2305 = vpack.c.b16 %v2273, %v2271
        %v2306 = vpack.c.b16 %v2274, %v2272
        %v2341 = vunpack.c.l.b16 %v2157
        %v2342 = vunpack.c.l.b16 %v2158
        %v2343 = vunpack.c.l.b16 %v2159
        %v2344 = vunpack.c.l.b16 %v2160
        %v2345 = vunpack.c.l.b16 %v2161
        %v2346 = vunpack.c.l.b16 %v2162
        %v2347 = vunpack.c.l.b16 %v2163
        %v2348 = vunpack.c.l.b16 %v2164
        %v2349 = vunpack.c.l.b16 %v2165
        %v2350 = vunpack.c.l.b16 %v2166
        %v2351 = vunpack.c.l.b16 %v2167
        %v2352 = vunpack.c.l.b16 %v2168
        %v2353 = vunpack.c.l.b16 %v2169
        %v2354 = vunpack.c.l.b16 %v2170
        %v2355 = vunpack.c.l.b16 %v2171
        %v2356 = vunpack.c.l.b16 %v2172
        %v2357 = vunpack.c.l.b16 %v2173
        %v2358 = vunpack.c.l.b16 %v2174
        %v2359 = vpack.c.b16 %v2342, %v2341
        %v2360 = vpack.c.b16 %v2344, %v2343
        %v2361 = vpack.c.b16 %v2346, %v2345
        %v2362 = vpack.c.b16 %v2348, %v2347
        %v2363 = vpack.c.b16 %v2350, %v2349
        %v2364 = vpack.c.b16 %v2352, %v2351
        %v2365 = vpack.c.b16 %v2354, %v2353
        %v2366 = vpack.c.b16 %v2356, %v2355
        %v2367 = vpack.c.b16 %v2358, %v2357
        %vm2377 = vcmask 130048
        %v2379 = vsel %vm2377, %v2276, 0
        %v2382 = vsel %vm2377, %v2278, 0
        %v2385 = vsel %vm2377, %v2280, 0
        %v2388 = vsel %vm2377, %v2282, 0
        %v2391 = vsel %vm2377, %v2284, 0
        %v2394 = vsel %vm2377, %v2286, 0
        %v2397 = vsel %vm2377, %v2288, 0
        %v2400 = vsel %vm2377, %v2290, 0
        %v2403 = vsel %vm2377, %v2292, 0
        %v2406 = vsel %vm2377, %v2294, 0
        %v2409 = vsel %vm2377, %v2296, 0
        %v2412 = vsel %vm2377, %v2298, 0
        %v2415 = vsel %vm2377, %v2300, 0
        %v2418 = vsel %vm2377, %v2302, 0
        %v2421 = vsel %vm2377, %v2304, 0
        %v2424 = vsel %vm2377, %v2306, 0
        %2426 = vmatpush.bf16.msra.mxu0 %v2366
        %2427 = vmatpush.bf16.msra.mxu0 %v2365
        %2428 = vmatpush.bf16.msra.mxu0 %v2364
        %2429 = vmatpush.bf16.msra.mxu0 %v2363
        %2430 = vmatpush.bf16.msra.mxu0 %v2362
        %2431 = vmatpush.bf16.msra.mxu0 %v2361
        %2432 = vmatpush.bf16.msra.mxu0 %v2360
        %2433 = vmatpush.bf16.msra.mxu0 %v2359
        %2434 = vmatmul.bf16.gmra.mxu0 %v2275
        %v2435 = vpop.f32.mrf.mxu0
        %v2436 = vadd.f32 %v2177, %v2435
        %v2437 = vpop.f32.mrf.mxu0
        %v2438 = vadd.f32 %v2177, %v2437
        %2439 = vmatmul.bf16.gmra.mxu0 %v2277
        %v2440 = vpop.f32.mrf.mxu0
        %v2441 = vadd.f32 %v2177, %v2440
        %v2442 = vpop.f32.mrf.mxu0
        %v2443 = vadd.f32 %v2177, %v2442
        %2444 = vmatmul.bf16.gmra.mxu0 %v2279
        %v2445 = vpop.f32.mrf.mxu0
        %v2446 = vadd.f32 %v2177, %v2445
        %v2447 = vpop.f32.mrf.mxu0
        %v2448 = vadd.f32 %v2177, %v2447
        %2449 = vmatmul.bf16.gmra.mxu0 %v2281
        %v2450 = vpop.f32.mrf.mxu0
        %v2451 = vadd.f32 %v2177, %v2450
        %v2452 = vpop.f32.mrf.mxu0
        %v2453 = vadd.f32 %v2177, %v2452
        %2454 = vmatmul.bf16.gmra.mxu0 %v2283
        %v2455 = vpop.f32.mrf.mxu0
        %v2456 = vadd.f32 %v2177, %v2455
        %v2457 = vpop.f32.mrf.mxu0
        %v2458 = vadd.f32 %v2177, %v2457
        %2459 = vmatmul.bf16.gmra.mxu0 %v2285
        %v2460 = vpop.f32.mrf.mxu0
        %v2461 = vadd.f32 %v2177, %v2460
        %v2462 = vpop.f32.mrf.mxu0
        %v2463 = vadd.f32 %v2177, %v2462
        %2464 = vmatmul.bf16.gmra.mxu0 %v2287
        %v2465 = vpop.f32.mrf.mxu0
        %v2466 = vadd.f32 %v2177, %v2465
        %v2467 = vpop.f32.mrf.mxu0
        %v2468 = vadd.f32 %v2177, %v2467
        %2469 = vmatmul.bf16.gmra.mxu0 %v2289
        %v2470 = vpop.f32.mrf.mxu0
        %v2471 = vadd.f32 %v2177, %v2470
        %v2472 = vpop.f32.mrf.mxu0
        %v2473 = vadd.f32 %v2177, %v2472
        %2474 = vmatmul.bf16.gmra.mxu0 %v2291
        %v2475 = vpop.f32.mrf.mxu0
        %v2476 = vadd.f32 %v2177, %v2475
        %v2477 = vpop.f32.mrf.mxu0
        %v2478 = vadd.f32 %v2177, %v2477
        %2479 = vmatmul.bf16.gmra.mxu0 %v2293
        %v2480 = vpop.f32.mrf.mxu0
        %v2481 = vadd.f32 %v2177, %v2480
        %v2482 = vpop.f32.mrf.mxu0
        %v2483 = vadd.f32 %v2177, %v2482
        %2484 = vmatmul.bf16.gmra.mxu0 %v2295
        %v2485 = vpop.f32.mrf.mxu0
        %v2486 = vadd.f32 %v2177, %v2485
        %v2487 = vpop.f32.mrf.mxu0
        %v2488 = vadd.f32 %v2177, %v2487
        %2489 = vmatmul.bf16.gmra.mxu0 %v2297
        %v2490 = vpop.f32.mrf.mxu0
        %v2491 = vadd.f32 %v2177, %v2490
        %v2492 = vpop.f32.mrf.mxu0
        %v2493 = vadd.f32 %v2177, %v2492
        %2494 = vmatmul.bf16.gmra.mxu0 %v2299
        %v2495 = vpop.f32.mrf.mxu0
        %v2496 = vadd.f32 %v2177, %v2495
        %v2497 = vpop.f32.mrf.mxu0
        %v2498 = vadd.f32 %v2177, %v2497
        %2499 = vmatmul.bf16.gmra.mxu0 %v2301
        %v2500 = vpop.f32.mrf.mxu0
        %v2501 = vadd.f32 %v2177, %v2500
        %v2502 = vpop.f32.mrf.mxu0
        %v2503 = vadd.f32 %v2177, %v2502
        %2504 = vmatmul.bf16.gmra.mxu0 %v2303
        %v2505 = vpop.f32.mrf.mxu0
        %v2506 = vadd.f32 %v2177, %v2505
        %v2507 = vpop.f32.mrf.mxu0
        %v2508 = vadd.f32 %v2177, %v2507
        %2509 = vmatmul.bf16.gmra.mxu0 %v2305
        %v2510 = vpop.f32.mrf.mxu0
        %v2511 = vadd.f32 %v2177, %v2510
        %v2512 = vpop.f32.mrf.mxu0
        %v2513 = vadd.f32 %v2177, %v2512
        %2514 = vdwg.mxu0
        %2515 = vmatpush.bf16.msra.mxu0 0
        %2516 = vmatpush.bf16.msra.mxu0 0
        %2517 = vmatpush.bf16.msra.mxu0 0
        %2518 = vmatpush.bf16.msra.mxu0 0
        %2519 = vmatpush.bf16.msra.mxu0 0
        %2520 = vmatpush.bf16.msra.mxu0 0
        %2521 = vmatpush.bf16.msra.mxu0 0
        %2522 = vmatpush.bf16.msra.mxu0 %v2367
        %2523 = vmatmul.bf16.gmra.mxu0 %v2379
        %v2524 = vpop.f32.mrf.mxu0
        %v2525 = vadd.f32 %v2436, %v2524
        %v2526 = vpop.f32.mrf.mxu0
        %v2527 = vadd.f32 %v2438, %v2526
        %2528 = vmatmul.bf16.gmra.mxu0 %v2382
        %v2529 = vpop.f32.mrf.mxu0
        %v2530 = vadd.f32 %v2441, %v2529
        %v2531 = vpop.f32.mrf.mxu0
        %v2532 = vadd.f32 %v2443, %v2531
        %2533 = vmatmul.bf16.gmra.mxu0 %v2385
        %v2534 = vpop.f32.mrf.mxu0
        %v2535 = vadd.f32 %v2446, %v2534
        %v2536 = vpop.f32.mrf.mxu0
        %v2537 = vadd.f32 %v2448, %v2536
        %2538 = vmatmul.bf16.gmra.mxu0 %v2388
        %v2539 = vpop.f32.mrf.mxu0
        %v2540 = vadd.f32 %v2451, %v2539
        %v2541 = vpop.f32.mrf.mxu0
        %v2542 = vadd.f32 %v2453, %v2541
        %2543 = vmatmul.bf16.gmra.mxu0 %v2391
        %v2544 = vpop.f32.mrf.mxu0
        %v2545 = vadd.f32 %v2456, %v2544
        %v2546 = vpop.f32.mrf.mxu0
        %v2547 = vadd.f32 %v2458, %v2546
        %2548 = vmatmul.bf16.gmra.mxu0 %v2394
        %v2549 = vpop.f32.mrf.mxu0
        %v2550 = vadd.f32 %v2461, %v2549
        %v2551 = vpop.f32.mrf.mxu0
        %v2552 = vadd.f32 %v2463, %v2551
        %2553 = vmatmul.bf16.gmra.mxu0 %v2397
        %v2554 = vpop.f32.mrf.mxu0
        %v2555 = vadd.f32 %v2466, %v2554
        %v2556 = vpop.f32.mrf.mxu0
        %v2557 = vadd.f32 %v2468, %v2556
        %2558 = vmatmul.bf16.gmra.mxu0 %v2400
        %v2559 = vpop.f32.mrf.mxu0
        %v2560 = vadd.f32 %v2471, %v2559
        %v2561 = vpop.f32.mrf.mxu0
        %v2562 = vadd.f32 %v2473, %v2561
        %2563 = vmatmul.bf16.gmra.mxu0 %v2403
        %v2564 = vpop.f32.mrf.mxu0
        %v2565 = vadd.f32 %v2476, %v2564
        %v2566 = vpop.f32.mrf.mxu0
        %v2567 = vadd.f32 %v2478, %v2566
        %2568 = vmatmul.bf16.gmra.mxu0 %v2406
        %v2569 = vpop.f32.mrf.mxu0
        %v2570 = vadd.f32 %v2481, %v2569
        %v2571 = vpop.f32.mrf.mxu0
        %v2572 = vadd.f32 %v2483, %v2571
        %2573 = vmatmul.bf16.gmra.mxu0 %v2409
        %v2574 = vpop.f32.mrf.mxu0
        %v2575 = vadd.f32 %v2486, %v2574
        %v2576 = vpop.f32.mrf.mxu0
        %v2577 = vadd.f32 %v2488, %v2576
        %2578 = vmatmul.bf16.gmra.mxu0 %v2412
        %v2579 = vpop.f32.mrf.mxu0
        %v2580 = vadd.f32 %v2491, %v2579
        %v2581 = vpop.f32.mrf.mxu0
        %v2582 = vadd.f32 %v2493, %v2581
        %2583 = vmatmul.bf16.gmra.mxu0 %v2415
        %v2584 = vpop.f32.mrf.mxu0
        %v2585 = vadd.f32 %v2496, %v2584
        %v2586 = vpop.f32.mrf.mxu0
        %v2587 = vadd.f32 %v2498, %v2586
        %2588 = vmatmul.bf16.gmra.mxu0 %v2418
        %v2589 = vpop.f32.mrf.mxu0
        %v2590 = vadd.f32 %v2501, %v2589
        %v2591 = vpop.f32.mrf.mxu0
        %v2592 = vadd.f32 %v2503, %v2591
        %2593 = vmatmul.bf16.gmra.mxu0 %v2421
        %v2594 = vpop.f32.mrf.mxu0
        %v2595 = vadd.f32 %v2506, %v2594
        %v2596 = vpop.f32.mrf.mxu0
        %v2597 = vadd.f32 %v2508, %v2596
        %2598 = vmatmul.bf16.gmra.mxu0 %v2424
        %v2599 = vpop.f32.mrf.mxu0
        %v2600 = vadd.f32 %v2511, %v2599
        %v2601 = vpop.f32.mrf.mxu0
        %v2602 = vadd.f32 %v2513, %v2601
        %2603 = vdwg.mxu0
        %v2604 = vtanh.pop %v2525
        %v2605 = vtanh.pop %v2527
        %v2606 = vtanh.pop %v2530
        %v2607 = vtanh.pop %v2532
        %v2608 = vtanh.pop %v2535
        %v2609 = vtanh.pop %v2537
        %v2610 = vtanh.pop %v2540
        %v2611 = vtanh.pop %v2542
        %v2612 = vtanh.pop %v2545
        %v2613 = vtanh.pop %v2547
        %v2614 = vtanh.pop %v2550
        %v2615 = vtanh.pop %v2552
        %v2616 = vtanh.pop %v2555
        %v2617 = vtanh.pop %v2557
        %v2618 = vtanh.pop %v2560
        %v2619 = vtanh.pop %v2562
        %v2620 = vtanh.pop %v2565
        %v2621 = vtanh.pop %v2567
        %v2622 = vtanh.pop %v2570
        %v2623 = vtanh.pop %v2572
        %v2624 = vtanh.pop %v2575
        %v2625 = vtanh.pop %v2577
        %v2626 = vtanh.pop %v2580
        %v2627 = vtanh.pop %v2582
        %v2628 = vtanh.pop %v2585
        %v2629 = vtanh.pop %v2587
        %v2630 = vtanh.pop %v2590
        %v2631 = vtanh.pop %v2592
        %v2632 = vtanh.pop %v2595
        %v2633 = vtanh.pop %v2597
        %v2634 = vtanh.pop %v2600
        %v2635 = vtanh.pop %v2602
        %2636 = vst [vmem:[%s262] sm:$0xff] %v2604
        %2637 = vst [vmem:[%s262 + $0x8] sm:$0xff] %v2605
        %2638 = vst [vmem:[%s262 + $0x10] sm:$0xff] %v2606
        %2639 = vst [vmem:[%s262 + $0x18] sm:$0xff] %v2607
        %2640 = vst [vmem:[%s262 + $0x20] sm:$0xff] %v2608
        %2641 = vst [vmem:[%s262 + $0x28] sm:$0xff] %v2609
        %2642 = vst [vmem:[%s262 + $0x30] sm:$0xff] %v2610
        %2643 = vst [vmem:[%s262 + $0x38] sm:$0xff] %v2611
        %2644 = vst [vmem:[%s262 + $0x40] sm:$0xff] %v2612
        %2645 = vst [vmem:[%s262 + $0x48] sm:$0xff] %v2613
        %2646 = vst [vmem:[%s262 + $0x50] sm:$0xff] %v2614
        %2647 = vst [vmem:[%s262 + $0x58] sm:$0xff] %v2615
        %2648 = vst [vmem:[%s262 + $0x60] sm:$0xff] %v2616
        %2649 = vst [vmem:[%s262 + $0x68] sm:$0xff] %v2617
        %2650 = vst [vmem:[%s262 + $0x70] sm:$0xff] %v2618
        %2651 = vst [vmem:[%s262 + $0x78] sm:$0xff] %v2619
        %2652 = vst [vmem:[%s262 + $0x80] sm:$0xff] %v2620
        %2653 = vst [vmem:[%s262 + $0x88] sm:$0xff] %v2621
        %2654 = vst [vmem:[%s262 + $0x90] sm:$0xff] %v2622
        %2655 = vst [vmem:[%s262 + $0x98] sm:$0xff] %v2623
        %2656 = vst [vmem:[%s262 + $0xa0] sm:$0xff] %v2624
        %2657 = vst [vmem:[%s262 + $0xa8] sm:$0xff] %v2625
        %2658 = vst [vmem:[%s262 + $0xb0] sm:$0xff] %v2626
        %2659 = vst [vmem:[%s262 + $0xb8] sm:$0xff] %v2627
        %2660 = vst [vmem:[%s262 + $0xc0] sm:$0xff] %v2628
        %2661 = vst [vmem:[%s262 + $0xc8] sm:$0xff] %v2629
        %2662 = vst [vmem:[%s262 + $0xd0] sm:$0xff] %v2630
        %2663 = vst [vmem:[%s262 + $0xd8] sm:$0xff] %v2631
        %2664 = vst [vmem:[%s262 + $0xe0] sm:$0xff] %v2632
        %2665 = vst [vmem:[%s262 + $0xe8] sm:$0xff] %v2633
        %2666 = vst [vmem:[%s262 + $0xf0] sm:$0xff] %v2634
        %2667 = vst [vmem:[%s262 + $0xf8] sm:$0xff] %v2635
        %v2668 = vadd.f32 %v2604, %v2605
        %v2669 = vadd.f32 %v2668, %v2606
        %v2670 = vadd.f32 %v2669, %v2607
        %v2671 = vadd.f32 %v2670, %v2608
        %v2672 = vadd.f32 %v2671, %v2609
        %v2673 = vadd.f32 %v2672, %v2610
        %v2674 = vadd.f32 %v2673, %v2611
        %v2675 = vadd.f32 %v2674, %v2612
        %v2676 = vadd.f32 %v2675, %v2613
        %v2677 = vadd.f32 %v2676, %v2614
        %v2678 = vadd.f32 %v2677, %v2615
        %v2679 = vadd.f32 %v2678, %v2616
        %v2680 = vadd.f32 %v2679, %v2617
        %v2681 = vadd.f32 %v2680, %v2618
        %v2682 = vadd.f32 %v2681, %v2619
        %v2683 = vadd.f32 %v2682, %v2620
        %v2684 = vadd.f32 %v2683, %v2621
        %v2685 = vadd.f32 %v2684, %v2622
        %v2686 = vadd.f32 %v2685, %v2623
        %v2687 = vadd.f32 %v2686, %v2624
        %v2688 = vadd.f32 %v2687, %v2625
        %v2689 = vadd.f32 %v2688, %v2626
        %v2690 = vadd.f32 %v2689, %v2627
        %v2691 = vadd.f32 %v2690, %v2628
        %v2692 = vadd.f32 %v2691, %v2629
        %v2693 = vadd.f32 %v2692, %v2630
        %v2694 = vadd.f32 %v2693, %v2631
        %v2695 = vadd.f32 %v2694, %v2632
        %v2696 = vadd.f32 %v2695, %v2633
        %v2697 = vadd.f32 %v2696, %v2634
        %v2698 = vadd.f32 %v2697, %v2635
        %v2699 = vrot.slane %v2698, 4
        %v2700 = vadd.f32 %v2698, %v2699
        %v2701 = vrot.slane %v2700, 2
        %v2702 = vadd.f32 %v2700, %v2701
        %v2703 = vrot.slane %v2702, 1
        %v2704 = vadd.f32 %v2702, %v2703
        %2705 = vst [vmem:[%s252] sm:$0x1] %v2704
        %v2706 = vmul.f32 %v2604, %v2604
        %v2707 = vmul.f32 %v2605, %v2605
        %v2708 = vmul.f32 %v2606, %v2606
        %v2709 = vmul.f32 %v2607, %v2607
        %v2710 = vmul.f32 %v2608, %v2608
        %v2711 = vmul.f32 %v2609, %v2609
        %v2712 = vmul.f32 %v2610, %v2610
        %v2713 = vmul.f32 %v2611, %v2611
        %v2714 = vmul.f32 %v2612, %v2612
        %v2715 = vmul.f32 %v2613, %v2613
        %v2716 = vmul.f32 %v2614, %v2614
        %v2717 = vmul.f32 %v2615, %v2615
        %v2718 = vmul.f32 %v2616, %v2616
        %v2719 = vmul.f32 %v2617, %v2617
        %v2720 = vmul.f32 %v2618, %v2618
        %v2721 = vmul.f32 %v2619, %v2619
        %v2722 = vmul.f32 %v2620, %v2620
        %v2723 = vmul.f32 %v2621, %v2621
        %v2724 = vmul.f32 %v2622, %v2622
        %v2725 = vmul.f32 %v2623, %v2623
        %v2726 = vmul.f32 %v2624, %v2624
        %v2727 = vmul.f32 %v2625, %v2625
        %v2728 = vmul.f32 %v2626, %v2626
        %v2729 = vmul.f32 %v2627, %v2627
        %v2730 = vmul.f32 %v2628, %v2628
        %v2731 = vmul.f32 %v2629, %v2629
        %v2732 = vmul.f32 %v2630, %v2630
        %v2733 = vmul.f32 %v2631, %v2631
        %v2734 = vmul.f32 %v2632, %v2632
        %v2735 = vmul.f32 %v2633, %v2633
        %v2736 = vmul.f32 %v2634, %v2634
        %v2737 = vmul.f32 %v2635, %v2635
        %v2738 = vadd.f32 %v2706, %v2707
        %v2739 = vadd.f32 %v2738, %v2708
        %v2740 = vadd.f32 %v2739, %v2709
        %v2741 = vadd.f32 %v2740, %v2710
        %v2742 = vadd.f32 %v2741, %v2711
        %v2743 = vadd.f32 %v2742, %v2712
        %v2744 = vadd.f32 %v2743, %v2713
        %v2745 = vadd.f32 %v2744, %v2714
        %v2746 = vadd.f32 %v2745, %v2715
        %v2747 = vadd.f32 %v2746, %v2716
        %v2748 = vadd.f32 %v2747, %v2717
        %v2749 = vadd.f32 %v2748, %v2718
        %v2750 = vadd.f32 %v2749, %v2719
        %v2751 = vadd.f32 %v2750, %v2720
        %v2752 = vadd.f32 %v2751, %v2721
        %v2753 = vadd.f32 %v2752, %v2722
        %v2754 = vadd.f32 %v2753, %v2723
        %v2755 = vadd.f32 %v2754, %v2724
        %v2756 = vadd.f32 %v2755, %v2725
        %v2757 = vadd.f32 %v2756, %v2726
        %v2758 = vadd.f32 %v2757, %v2727
        %v2759 = vadd.f32 %v2758, %v2728
        %v2760 = vadd.f32 %v2759, %v2729
        %v2761 = vadd.f32 %v2760, %v2730
        %v2762 = vadd.f32 %v2761, %v2731
        %v2763 = vadd.f32 %v2762, %v2732
        %v2764 = vadd.f32 %v2763, %v2733
        %v2765 = vadd.f32 %v2764, %v2734
        %v2766 = vadd.f32 %v2765, %v2735
        %v2767 = vadd.f32 %v2766, %v2736
        %v2768 = vadd.f32 %v2767, %v2737
        %v2769 = vrot.slane %v2768, 4
        %v2770 = vadd.f32 %v2768, %v2769
        %v2771 = vrot.slane %v2770, 2
        %v2772 = vadd.f32 %v2770, %v2771
        %v2773 = vrot.slane %v2772, 1
        %v2774 = vadd.f32 %v2772, %v2773
        %2775 = vst [vmem:[%s252 + $0x1] sm:$0x1] %v2774
        %p2776 = scmp.lt.s32.totalorder %s21, 1
        %s2777 = scalar_select %p2776, %s21, 1
        %s2778 = smul.addr %s2777, 32
        %s2779 = smul.addr %s2778, 8
        %s2780 = scalar_lea.vmem %s5, %s2779
        %s2781 = sand.u32 %s165, 1
        %s2782 = scalar_lea.sflag [#allocation4], %s2781
        %s2783 = sand.u32 %s165, 1
        %s2784 = smul.addr %s2783, 2
        %s2785 = scalar_lea.vmem [#allocation3], %s2784
        // Predicated region
        $region41: #{generator_forward.7} parent=39 // pred_check
          %p2786 = pneg %p149
        $region42: #{generator_forward.7} parent=39 // pred_check_branch
          %2788 = sbr.rel (%p2786) target = $region44
        $region43: #{generator_forward.7} parent=39 // pred_region
          _
        $region44: #{generator_forward.7} parent=39 // pred_fallthru
          _
        // Predicated region
        $region45: #{generator_forward.7} parent=39 // pred_check
          %p2789 = pneg %p175
        $region46: #{generator_forward.7} parent=39 // pred_check_branch
          %2791 = sbr.rel (%p2789) target = $region48
        $region47: #{generator_forward.7} parent=39 // pred_region
          %2793 = vsyncadd %s2782, 0
          %s2794 = smul.addr %s21, 2
          %s2795 = scalar_lea.hbm %s6, %s2794
          %s2797 = sshll.u32 %s2785, 4
          %s2798 = int_to_ptr.vmem [resolvable:$true] %s2797
          %s2799 = sshll.u32 %s2795, 4
          %s2800 = int_to_ptr.hbm [resolvable:$true] %s2799
          %2802 = dma.vmem_to_hbm [thread:$0]  %s2798, 32, %s2800, %s2782
        $region48: #{generator_forward.7} parent=39 // pred_fallthru
          _
      $region40: #{generator_forward.7} parent=5 // pred_fallthru
        _
      %p2803 = scmp.le.s32.totalorder 2, %s16
      // Predicated region
      $region49: #{generator_forward.7} parent=5 // pred_check
        %p2804 = pneg %p2803
      $region50: #{generator_forward.7} parent=5 // pred_check_branch
        %2806 = sbr.rel (%p2804) target = $region52
      $region51: #{generator_forward.7} parent=5 // pred_region
        %s2807 = ssub.s32 %s16, 2
        // Predicated region
        $region53: #{generator_forward.7} parent=51 // pred_check
          %p2808 = pneg %p155
        $region54: #{generator_forward.7} parent=51 // pred_check_branch
          %2810 = sbr.rel (%p2808) target = $region56
        $region55: #{generator_forward.7} parent=51 // pred_region
          %p2811 = scmp.lt.s32.totalorder %s22, 1
          %s2812 = scalar_select %p2811, %s22, 1
          %s2813 = smul.addr %s2812, 32
          %s2814 = smul.addr %s2813, 8
          %s2815 = scalar_lea.vmem %s5, %s2814
        $region56: #{generator_forward.7} parent=51 // pred_fallthru
          _
        // Predicated region
        $region57: #{generator_forward.7} parent=51 // pred_check
          %p2816 = pneg %p181
        $region58: #{generator_forward.7} parent=51 // pred_check_branch
          %2818 = sbr.rel (%p2816) target = $region60
        $region59: #{generator_forward.7} parent=51 // pred_region
          %s2819 = sand.u32 %s166, 1
          %s2820 = scalar_lea.sflag [#allocation4], %s2819
          %s2821 = sand.u32 %s166, 1
          %s2822 = smul.addr %s2821, 2
          %s2823 = scalar_lea.vmem [#allocation3], %s2822
          %2825 = dma.done %s2820, 32
        $region60: #{generator_forward.7} parent=51 // pred_fallthru
          _
      $region52: #{generator_forward.7} parent=5 // pred_fallthru
        _
    $region6: #{generator_forward.7} parent=1 // loop_footer
      %s20 = sadd.s32 1, %s16
    $region7: #{generator_forward.7} parent=1 // loop_footer_branch
      %15 = sbr.rel target = $region3
    $region8: #{generator_forward.7} parent=1 // loop_exit
      _
    %2826 = vsyncpa [#allocation4], 1
    %s2827 = scalar_lea.sflag [#allocation4], 1
    %2828 = vsyncpa %s2827, 1

</llo_original>
